<compile_context>
chip_gen: v5e
topology: v5e:2x2
jax: 0.10.0
libtpu: 0.0.40
codegen_flags: <defaults>
</compile_context>

<pallas_src>
import functools

import jax
import jax.numpy as jnp
from jax.experimental import pallas as pl
from jax.experimental.pallas import tpu as pltpu


_VMEM_LIMIT = 48 * 1024 * 1024  # > 32 MiB scoped default, < v7x 64 MiB physical
_CPARAMS_1D = pltpu.CompilerParams(
    dimension_semantics=("parallel",), vmem_limit_bytes=_VMEM_LIMIT)


# ---------------------------------------------------------------------------
# Kernels
# ---------------------------------------------------------------------------
def _mm_bias_silu_kernel(x_ref, w_ref, b_ref, o_ref):
    # bf16 operands on the MXU, f32 accumulate, f32 epilogue.
    y = jnp.dot(x_ref[...], w_ref[...], preferred_element_type=jnp.float32)
    y = y + b_ref[...]
    o_ref[...] = (y * jax.nn.sigmoid(y)).astype(o_ref.dtype)


def _dual_mm_bias_silu_kernel(x_ref, w1_ref, b1_ref, w2_ref, b2_ref,
                              o1_ref, o2_ref):
    # One read of x, two 1x1 conv outputs (C3.cv1 and C3.cv2).
    x = x_ref[...]
    y1 = jnp.dot(x, w1_ref[...], preferred_element_type=jnp.float32) + b1_ref[...]
    o1_ref[...] = (y1 * jax.nn.sigmoid(y1)).astype(o1_ref.dtype)
    y2 = jnp.dot(x, w2_ref[...], preferred_element_type=jnp.float32) + b2_ref[...]
    o2_ref[...] = (y2 * jax.nn.sigmoid(y2)).astype(o2_ref.dtype)


def _concat_mm_bias_silu_kernel(a_ref, b_ref, wa_ref, wb_ref, bias_ref, o_ref):
    # cv3 on the virtual channel-concat [a, b]: [a b] @ W == a@Wa + b@Wb.
    y = jnp.dot(a_ref[...], wa_ref[...], preferred_element_type=jnp.float32)
    y = y + jnp.dot(b_ref[...], wb_ref[...], preferred_element_type=jnp.float32)
    y = y + bias_ref[...]
    o_ref[...] = (y * jax.nn.sigmoid(y)).astype(o_ref.dtype)


def _conv3x3_body(x_ref, w_ref, b_ref, o_ref, r_ref=None):
    # x_ref: (1, H+2, W+2, Cin) bf16 (spatially padded), w_ref: (9, Cin, Cout)
    # bf16, b_ref: (1, Cout) f32, optional r_ref: (1, H, W, Cout) f32 residual.
    _, hp2, wp2, cin = x_ref.shape
    H, W = hp2 - 2, wp2 - 2
    cout = o_ref.shape[-1]
    x = x_ref[...]          # (1, H+2, W+2, Cin)
    w = w_ref[...]          # (9, Cin, Cout)
    acc = jnp.zeros((H * W, cout), jnp.float32)
    for ky in range(3):     # 9 accumulating MXU matmuls — no im2col
        for kx in range(3):
            patch = x[0, ky:ky + H, kx:kx + W, :].reshape(H * W, cin)
            acc = acc + jnp.dot(patch, w[ky * 3 + kx],
                                preferred_element_type=jnp.float32)
    y = acc + b_ref[...]
    y = y * jax.nn.sigmoid(y)
    if r_ref is not None:   # YOLO shortcut: added AFTER the activation
        y = y + r_ref[...].reshape(H * W, cout)
    o_ref[...] = y.reshape(1, H, W, cout).astype(o_ref.dtype)


def _conv3x3_kernel(x_ref, w_ref, b_ref, o_ref):
    _conv3x3_body(x_ref, w_ref, b_ref, o_ref)


def _conv3x3_res_kernel(x_ref, w_ref, b_ref, r_ref, o_ref):
    _conv3x3_body(x_ref, w_ref, b_ref, o_ref, r_ref)


# ---------------------------------------------------------------------------
# Wrappers (tiling, padding, bf16 casting, cost estimates)
# ---------------------------------------------------------------------------
def _tiles(M, target=512):
    """Pick a row tile (multiple of 8) and padded M; prefer >=2 grid steps."""
    n_tiles = max(1, -(-M // target))
    if n_tiles == 1 and M >= 512:
        n_tiles = 2                      # give v7x's 2 TensorCores work to split
    tm = -(-M // n_tiles)
    tm = max(8, ((tm + 7) // 8) * 8)
    m_pad = -(-M // tm) * tm
    return tm, m_pad


def _pad_rows(x2d, m_pad):
    M = x2d.shape[0]
    return x2d if m_pad == M else jnp.pad(x2d, ((0, m_pad - M), (0, 0)))


def conv1x1_bn_silu(x2d, w2d, bias, *, tm_target=512):
    """Fused 1x1 Conv(+BN folded)+SiLU: (M, K) @ (K, Cout) + bias, SiLU."""
    M, K = x2d.shape
    cout = w2d.shape[1]
    tm, m_pad = _tiles(M, tm_target)
    xp = _pad_rows(x2d, m_pad).astype(jnp.bfloat16)
    wb = w2d.astype(jnp.bfloat16)
    br = bias.reshape(1, cout).astype(jnp.float32)
    cost = pl.CostEstimate(flops=2 * m_pad * K * cout,
                           transcendentals=m_pad * cout,
                           bytes_accessed=xp.size * 2 + wb.size * 2
                           + br.size * 4 + m_pad * cout * 4)
    out = pl.pallas_call(
        _mm_bias_silu_kernel,
        out_shape=jax.ShapeDtypeStruct((m_pad, cout), jnp.float32),
        grid=(m_pad // tm,),
        in_specs=[pl.BlockSpec((tm, K), lambda i: (i, 0)),
                  pl.BlockSpec((K, cout), lambda i: (0, 0)),
                  pl.BlockSpec((1, cout), lambda i: (0, 0))],
        out_specs=pl.BlockSpec((tm, cout), lambda i: (i, 0)),
        compiler_params=_CPARAMS_1D,
        cost_estimate=cost,
    )(xp, wb, br)
    return out[:M] if m_pad != M else out


def conv1x1_dual_bn_silu(x2d, w1, b1, w2, b2, *, tm_target=512):
    """Two fused 1x1 convs (C3.cv1, C3.cv2) sharing one read of x."""
    M, K = x2d.shape
    c1o, c2o = w1.shape[1], w2.shape[1]
    tm, m_pad = _tiles(M, tm_target)
    xp = _pad_rows(x2d, m_pad).astype(jnp.bfloat16)
    w1b, w2b = w1.astype(jnp.bfloat16), w2.astype(jnp.bfloat16)
    b1r = b1.reshape(1, c1o).astype(jnp.float32)
    b2r = b2.reshape(1, c2o).astype(jnp.float32)
    cost = pl.CostEstimate(flops=2 * m_pad * K * (c1o + c2o),
                           transcendentals=m_pad * (c1o + c2o),
                           bytes_accessed=xp.size * 2
                           + (w1b.size + w2b.size) * 2
                           + m_pad * (c1o + c2o) * 4)
    y1, y2 = pl.pallas_call(
        _dual_mm_bias_silu_kernel,
        out_shape=(jax.ShapeDtypeStruct((m_pad, c1o), jnp.float32),
                   jax.ShapeDtypeStruct((m_pad, c2o), jnp.float32)),
        grid=(m_pad // tm,),
        in_specs=[pl.BlockSpec((tm, K), lambda i: (i, 0)),
                  pl.BlockSpec((K, c1o), lambda i: (0, 0)),
                  pl.BlockSpec((1, c1o), lambda i: (0, 0)),
                  pl.BlockSpec((K, c2o), lambda i: (0, 0)),
                  pl.BlockSpec((1, c2o), lambda i: (0, 0))],
        out_specs=(pl.BlockSpec((tm, c1o), lambda i: (i, 0)),
                   pl.BlockSpec((tm, c2o), lambda i: (i, 0))),
        compiler_params=_CPARAMS_1D,
        cost_estimate=cost,
    )(xp, w1b, b1r, w2b, b2r)
    if m_pad != M:
        y1, y2 = y1[:M], y2[:M]
    return y1, y2


def conv1x1_concat_bn_silu(a2d, b2d, wa, wb, bias, *, tm_target=512):
    """cv3 on the virtual concat [a, b] along channels (no HBM concatenate)."""
    M, ca = a2d.shape
    cb = b2d.shape[1]
    cout = wa.shape[1]
    tm, m_pad = _tiles(M, tm_target)
    ab = _pad_rows(a2d, m_pad).astype(jnp.bfloat16)
    bb = _pad_rows(b2d, m_pad).astype(jnp.bfloat16)
    wab, wbb = wa.astype(jnp.bfloat16), wb.astype(jnp.bfloat16)
    br = bias.reshape(1, cout).astype(jnp.float32)
    cost = pl.CostEstimate(flops=2 * m_pad * (ca + cb) * cout,
                           transcendentals=m_pad * cout,
                           bytes_accessed=(ab.size + bb.size) * 2
                           + (wab.size + wbb.size) * 2 + m_pad * cout * 4)
    out = pl.pallas_call(
        _concat_mm_bias_silu_kernel,
        out_shape=jax.ShapeDtypeStruct((m_pad, cout), jnp.float32),
        grid=(m_pad // tm,),
        in_specs=[pl.BlockSpec((tm, ca), lambda i: (i, 0)),
                  pl.BlockSpec((tm, cb), lambda i: (i, 0)),
                  pl.BlockSpec((ca, cout), lambda i: (0, 0)),
                  pl.BlockSpec((cb, cout), lambda i: (0, 0)),
                  pl.BlockSpec((1, cout), lambda i: (0, 0))],
        out_specs=pl.BlockSpec((tm, cout), lambda i: (i, 0)),
        compiler_params=_CPARAMS_1D,
        cost_estimate=cost,
    )(ab, bb, wab, wbb, br)
    return out[:M] if m_pad != M else out


def conv3x3_bn_silu(x_nhwc, w9, bias, residual=None):
    """Fused 3x3 / stride-1 / pad-1 Conv(+BN)+SiLU (+post-activation residual).

    x_nhwc: (N, H, W, Cin); w9: (9, Cin, Cout) with tap index ky*3+kx;
    residual: optional (N, H, W, Cout) f32 added after the activation.
    The 9 taps are accumulated inside the kernel (no im2col materialization).
    """
    N, H, W, cin = x_nhwc.shape
    cout = w9.shape[-1]
    xpad = jnp.pad(x_nhwc, ((0, 0), (1, 1), (1, 1), (0, 0))).astype(jnp.bfloat16)
    w9b = w9.astype(jnp.bfloat16)
    br = bias.reshape(1, cout).astype(jnp.float32)

    in_specs = [pl.BlockSpec((1, H + 2, W + 2, cin), lambda n: (n, 0, 0, 0)),
                pl.BlockSpec((9, cin, cout), lambda n: (0, 0, 0)),
                pl.BlockSpec((1, cout), lambda n: (0, 0))]
    args = [xpad, w9b, br]
    if residual is not None:
        kernel = _conv3x3_res_kernel
        in_specs.append(pl.BlockSpec((1, H, W, cout), lambda n: (n, 0, 0, 0)))
        args.append(residual.astype(jnp.float32))
    else:
        kernel = _conv3x3_kernel
    out_bytes = N * H * W * cout * 4
    cost = pl.CostEstimate(
        flops=2 * N * H * W * 9 * cin * cout,
        transcendentals=N * H * W * cout,
        bytes_accessed=xpad.size * 2 + w9b.size * 2 + out_bytes
        + (out_bytes if residual is not None else 0))
    return pl.pallas_call(
        kernel,
        out_shape=jax.ShapeDtypeStruct((N, H, W, cout), jnp.float32),
        grid=(N,),
        in_specs=in_specs,
        out_specs=pl.BlockSpec((1, H, W, cout), lambda n: (n, 0, 0, 0)),
        compiler_params=_CPARAMS_1D,
        cost_estimate=cost,
    )(*args)


# ---------------------------------------------------------------------------
# Parameters (Conv2d no-bias + BatchNorm2d folded, eval mode)
# ---------------------------------------------------------------------------
def _make_conv_params(key, cin, cout, k):
    kw, kb, kg, km, kv = jax.random.split(key, 5)
    w = jax.random.normal(kw, (cout, cin, k, k), jnp.float32) * 0.1   # OIHW
    gamma = jax.random.uniform(kg, (cout,), jnp.float32, 0.5, 1.5)
    beta = jax.random.normal(kb, (cout,), jnp.float32) * 0.1
    mean = jax.random.normal(km, (cout,), jnp.float32) * 0.1
    var = jax.random.uniform(kv, (cout,), jnp.float32, 0.5, 1.5)
    eps = 1e-3                                 # Ultralytics Conv BN eps
    scale = gamma / jnp.sqrt(var + eps)
    w_f = w * scale[:, None, None, None]
    bias = beta - mean * scale
    if k == 1:
        wm = w_f.reshape(cout, cin).T                                   # (Cin, Cout)
    else:
        wm = jnp.transpose(w_f, (2, 3, 1, 0)).reshape(k * k, cin, cout)  # (9, Cin, Cout)
    return wm, bias


def init_c3_params(key, c1, c2, n=1, e=0.5):
    c_ = int(c2 * e)
    keys = jax.random.split(key, 3 + 2 * n)
    params = {
        "cv1": _make_conv_params(keys[0], c1, c_, 1),
        "cv2": _make_conv_params(keys[1], c1, c_, 1),
        "cv3": _make_conv_params(keys[2], 2 * c_, c2, 1),
        "m": [],
    }
    for i in range(n):
        m_cv1 = _make_conv_params(keys[3 + 2 * i], c_, c_, 1)   # Bottleneck.cv1 1x1
        m_cv2 = _make_conv_params(keys[4 + 2 * i], c_, c_, 3)   # Bottleneck.cv2 3x3
        params["m"].append((m_cv1, m_cv2))
    return params


# ---------------------------------------------------------------------------
# C3 forward:  cv3( cat( m(cv1(x)), cv2(x) ) )
# ---------------------------------------------------------------------------
def c3_forward(x_nchw, params, shortcut=True):
    N, C1, H, W = x_nchw.shape
    c_ = params["cv1"][0].shape[1]
    c2_out = params["cv3"][0].shape[1]
    M = N * H * W

    # TODO(synk): keep the surrounding network NHWC end-to-end to drop these
    # boundary transposes (kept here only to match the PyTorch NCHW interface).
    x = jnp.transpose(x_nchw, (0, 2, 3, 1))                     # NHWC
    x2d = x.reshape(M, C1)

    # cv1(x), cv2(x): two 1x1 convs fused into one dual-output kernel.
    (w1, b1), (w2, b2) = params["cv1"], params["cv2"]
    y1, y2 = conv1x1_dual_bn_silu(x2d, w1, b1, w2, b2)          # (M,c_), (M,c_)

    # m: n x Bottleneck(c_, c_, shortcut, k=((1,1),(3,3)), e=1.0)
    a = y1.reshape(N, H, W, c_)
    for (wc1, bc1), (wc2, bc2) in params["m"]:
        h = conv1x1_bn_silu(a.reshape(M, c_), wc1, bc1).reshape(N, H, W, c_)
        res = a if shortcut else None        # add = shortcut and c1 == c2
        a = conv3x3_bn_silu(h, wc2, bc2, residual=res)

    # cv3 on the virtual channel-concat [m(cv1(x)), cv2(x)] (fused, no concat).
    w3, b3 = params["cv3"]
    out2d = conv1x1_concat_bn_silu(a.reshape(M, c_), y2, w3[:c_], w3[c_:], b3)
    out = out2d.reshape(N, H, W, c2_out)
    return jnp.transpose(out, (0, 3, 1, 2))                     # back to NCHW


# ---------------------------------------------------------------------------
# Pure-JAX f32 reference (same folded params) for a correctness sanity check
# ---------------------------------------------------------------------------
def _silu(x):
    return x * jax.nn.sigmoid(x)


def c3_reference(x_nchw, params, shortcut=True):
    N, C1, H, W = x_nchw.shape
    c_ = params["cv1"][0].shape[1]
    x = jnp.transpose(x_nchw, (0, 2, 3, 1))
    x2d = x.reshape(-1, C1)
    y1 = _silu(x2d @ params["cv1"][0] + params["cv1"][1]).reshape(N, H, W, c_)
    y2 = _silu(x2d @ params["cv2"][0] + params["cv2"][1])
    a = y1
    for (wc1, bc1), (w9, bc2) in params["m"]:
        h = _silu(a.reshape(-1, c_) @ wc1 + bc1).reshape(N, H, W, c_)
        hp = jnp.pad(h, ((0, 0), (1, 1), (1, 1), (0, 0)))
        acc = jnp.zeros((N, H, W, c_), jnp.float32)
        for ky in range(3):
            for kx in range(3):
                acc = acc + jnp.einsum("nhwc,cd->nhwd",
                                       hp[:, ky:ky + H, kx:kx + W, :],
                                       w9[ky * 3 + kx])
        o = _silu(acc + bc2)
        a = a + o if shortcut else o
    z = jnp.concatenate([a.reshape(-1, c_), y2], axis=-1)
    out = _silu(z @ params["cv3"][0] + params["cv3"][1]).reshape(N, H, W, -1)
    return jnp.transpose(out, (0, 3, 1, 2))


if __name__ == "__main__":
    key = jax.random.PRNGKey(0)
    kx, kp = jax.random.split(key)

    N, C_IN, C_OUT, H, W = 2, 4, 4, 16, 16       # C3(c1=4, c2=4, n=1) -> c_ = 2
    x = jax.random.normal(kx, (N, C_IN, H, W), jnp.float32)
    params = init_c3_params(kp, C_IN, C_OUT, n=1, e=0.5)

    fwd = jax.jit(functools.partial(c3_forward, shortcut=True))
    out = jax.block_until_ready(fwd(x, params))

    assert out.shape == (N, C_OUT, H, W)
    assert bool(jnp.all(jnp.isfinite(out)))

    ref = jax.block_until_ready(c3_reference(x, params, shortcut=True))
    assert bool(jnp.allclose(out, ref, atol=5e-2, rtol=5e-2)), (
        "Pallas C3 output deviates from f32 reference")

    print("KERNEL_OK")
</pallas_src>

<mosaic_0001>
module attributes {stable_mosaic.version = 11 : i64} {
  func.func @_mm_bias_silu_kernel(%arg0: i32, %arg1: memref<256x2xbf16, #tpu.memory_space<vmem>>, %arg2: memref<2x2xbf16, #tpu.memory_space<vmem>>, %arg3: memref<1x2xf32, #tpu.memory_space<vmem>>, %arg4: memref<256x2xf32, #tpu.memory_space<vmem>>) attributes {dimension_semantics = [#tpu.dimension_semantics<parallel>], iteration_bounds = array<i64: 2>, scalar_prefetch = 0 : i64, scratch_operands = 0 : i64, tpu.core_type = #tpu.core_type<tc>, window_params = [{transform_indices = @transform_0, window_bounds = array<i64: 256, 2>}, {pipeline_mode = #tpu.pipeline_mode<synchronous>, transform_indices = @transform_1, window_bounds = array<i64: 2, 2>}, {pipeline_mode = #tpu.pipeline_mode<synchronous>, transform_indices = @transform_2, window_bounds = array<i64: 1, 2>}, {transform_indices = @transform_3, window_bounds = array<i64: 256, 2>}]} {
    %c0 = arith.constant 0 : index
    %c0_0 = arith.constant 0 : index
    %0 = vector.load %arg1[%c0, %c0_0] : memref<256x2xbf16, #tpu.memory_space<vmem>>, vector<256x2xbf16>
    %c0_1 = arith.constant 0 : index
    %c0_2 = arith.constant 0 : index
    %1 = vector.load %arg2[%c0_1, %c0_2] : memref<2x2xbf16, #tpu.memory_space<vmem>>, vector<2x2xbf16>
    %cst = arith.constant dense<0.000000e+00> : vector<256x2xf32>
    %2 = tpu.matmul %0, %1, %cst {dimension_numbers = #tpu.dot_dimension_numbers<[1], [0], [0], [1], [0, 0, 1, 1], [], []>} : vector<256x2xbf16>, vector<2x2xbf16>, vector<256x2xf32> -> vector<256x2xf32>
    %c0_3 = arith.constant 0 : index
    %c0_4 = arith.constant 0 : index
    %3 = vector.load %arg3[%c0_3, %c0_4] : memref<1x2xf32, #tpu.memory_space<vmem>>, vector<1x2xf32>
    %4 = vector.broadcast %3 : vector<1x2xf32> to vector<256x2xf32>
    %5 = arith.addf %2, %4 : vector<256x2xf32>
    %6 = arith.negf %5 : vector<256x2xf32>
    %7 = math.exp %6 : vector<256x2xf32>
    %cst_5 = arith.constant 1.000000e+00 : f32
    %8 = vector.broadcast %cst_5 : f32 to vector<256x2xf32>
    %9 = arith.addf %8, %7 : vector<256x2xf32>
    %10 = arith.divf %8, %9 : vector<256x2xf32>
    %11 = arith.mulf %5, %10 : vector<256x2xf32>
    %c0_6 = arith.constant 0 : index
    %c0_7 = arith.constant 0 : index
    %12 = vector.load %arg4[%c0_6, %c0_7] : memref<256x2xf32, #tpu.memory_space<vmem>>, vector<256x2xf32>
    tpu.vector_store %arg4[%c0_6, %c0_7], %11 {strides = array<i32>} : memref<256x2xf32, #tpu.memory_space<vmem>>, vector<256x2xf32>,
    return
  }
  func.func @transform_0(%arg0: i32) -> (i32, i32) {
    %c0_i32 = arith.constant 0 : i32
    %c0_i32_0 = arith.constant 0 : i32
    return %arg0, %c0_i32 : i32, i32
  }
  func.func @transform_1(%arg0: i32) -> (i32, i32) {
    %c0_i32 = arith.constant 0 : i32
    %c0_i32_0 = arith.constant 0 : i32
    %c0_i32_1 = arith.constant 0 : i32
    return %c0_i32, %c0_i32_0 : i32, i32
  }
  func.func @transform_2(%arg0: i32) -> (i32, i32) {
    %c0_i32 = arith.constant 0 : i32
    %c0_i32_0 = arith.constant 0 : i32
    %c0_i32_1 = arith.constant 0 : i32
    return %c0_i32, %c0_i32_0 : i32, i32
  }
  func.func @transform_3(%arg0: i32) -> (i32, i32) {
    %c0_i32 = arith.constant 0 : i32
    %c0_i32_0 = arith.constant 0 : i32
    return %arg0, %c0_i32 : i32, i32
  }
}

module attributes {stable_mosaic.version = 11 : i64} {
  func.func @_dual_mm_bias_silu_kernel(%arg0: i32, %arg1: memref<256x4xbf16, #tpu.memory_space<vmem>>, %arg2: memref<4x2xbf16, #tpu.memory_space<vmem>>, %arg3: memref<1x2xf32, #tpu.memory_space<vmem>>, %arg4: memref<4x2xbf16, #tpu.memory_space<vmem>>, %arg5: memref<1x2xf32, #tpu.memory_space<vmem>>, %arg6: memref<256x2xf32, #tpu.memory_space<vmem>>, %arg7: memref<256x2xf32, #tpu.memory_space<vmem>>) attributes {dimension_semantics = [#tpu.dimension_semantics<parallel>], iteration_bounds = array<i64: 2>, scalar_prefetch = 0 : i64, scratch_operands = 0 : i64, tpu.core_type = #tpu.core_type<tc>, window_params = [{transform_indices = @transform_0, window_bounds = array<i64: 256, 4>}, {pipeline_mode = #tpu.pipeline_mode<synchronous>, transform_indices = @transform_1, window_bounds = array<i64: 4, 2>}, {pipeline_mode = #tpu.pipeline_mode<synchronous>, transform_indices = @transform_2, window_bounds = array<i64: 1, 2>}, {pipeline_mode = #tpu.pipeline_mode<synchronous>, transform_indices = @transform_3, window_bounds = array<i64: 4, 2>}, {pipeline_mode = #tpu.pipeline_mode<synchronous>, transform_indices = @transform_4, window_bounds = array<i64: 1, 2>}, {transform_indices = @transform_5, window_bounds = array<i64: 256, 2>}, {transform_indices = @transform_6, window_bounds = array<i64: 256, 2>}]} {
    %c0 = arith.constant 0 : index
    %c0_0 = arith.constant 0 : index
    %0 = vector.load %arg1[%c0, %c0_0] : memref<256x4xbf16, #tpu.memory_space<vmem>>, vector<256x4xbf16>
    %c0_1 = arith.constant 0 : index
    %c0_2 = arith.constant 0 : index
    %1 = vector.load %arg2[%c0_1, %c0_2] : memref<4x2xbf16, #tpu.memory_space<vmem>>, vector<4x2xbf16>
    %cst = arith.constant dense<0.000000e+00> : vector<256x2xf32>
    %2 = tpu.matmul %0, %1, %cst {dimension_numbers = #tpu.dot_dimension_numbers<[1], [0], [0], [1], [0, 0, 1, 1], [], []>} : vector<256x4xbf16>, vector<4x2xbf16>, vector<256x2xf32> -> vector<256x2xf32>
    %c0_3 = arith.constant 0 : index
    %c0_4 = arith.constant 0 : index
    %3 = vector.load %arg3[%c0_3, %c0_4] : memref<1x2xf32, #tpu.memory_space<vmem>>, vector<1x2xf32>
    %4 = vector.broadcast %3 : vector<1x2xf32> to vector<256x2xf32>
    %5 = arith.addf %2, %4 : vector<256x2xf32>
    %6 = arith.negf %5 : vector<256x2xf32>
    %7 = math.exp %6 : vector<256x2xf32>
    %cst_5 = arith.constant 1.000000e+00 : f32
    %8 = vector.broadcast %cst_5 : f32 to vector<256x2xf32>
    %9 = arith.addf %8, %7 : vector<256x2xf32>
    %10 = arith.divf %8, %9 : vector<256x2xf32>
    %11 = arith.mulf %5, %10 : vector<256x2xf32>
    %c0_6 = arith.constant 0 : index
    %c0_7 = arith.constant 0 : index
    %12 = vector.load %arg6[%c0_6, %c0_7] : memref<256x2xf32, #tpu.memory_space<vmem>>, vector<256x2xf32>
    tpu.vector_store %arg6[%c0_6, %c0_7], %11 {strides = array<i32>} : memref<256x2xf32, #tpu.memory_space<vmem>>, vector<256x2xf32>,
    %c0_8 = arith.constant 0 : index
    %c0_9 = arith.constant 0 : index
    %13 = vector.load %arg4[%c0_8, %c0_9] : memref<4x2xbf16, #tpu.memory_space<vmem>>, vector<4x2xbf16>
    %cst_10 = arith.constant dense<0.000000e+00> : vector<256x2xf32>
    %14 = tpu.matmul %0, %13, %cst_10 {dimension_numbers = #tpu.dot_dimension_numbers<[1], [0], [0], [1], [0, 0, 1, 1], [], []>} : vector<256x4xbf16>, vector<4x2xbf16>, vector<256x2xf32> -> vector<256x2xf32>
    %c0_11 = arith.constant 0 : index
    %c0_12 = arith.constant 0 : index
    %15 = vector.load %arg5[%c0_11, %c0_12] : memref<1x2xf32, #tpu.memory_space<vmem>>, vector<1x2xf32>
    %16 = vector.broadcast %15 : vector<1x2xf32> to vector<256x2xf32>
    %17 = arith.addf %14, %16 : vector<256x2xf32>
    %18 = arith.negf %17 : vector<256x2xf32>
    %19 = math.exp %18 : vector<256x2xf32>
    %cst_13 = arith.constant 1.000000e+00 : f32
    %20 = vector.broadcast %cst_13 : f32 to vector<256x2xf32>
    %21 = arith.addf %20, %19 : vector<256x2xf32>
    %22 = arith.divf %20, %21 : vector<256x2xf32>
    %23 = arith.mulf %17, %22 : vector<256x2xf32>
    %c0_14 = arith.constant 0 : index
    %c0_15 = arith.constant 0 : index
    %24 = vector.load %arg7[%c0_14, %c0_15] : memref<256x2xf32, #tpu.memory_space<vmem>>, vector<256x2xf32>
    tpu.vector_store %arg7[%c0_14, %c0_15], %23 {strides = array<i32>} : memref<256x2xf32, #tpu.memory_space<vmem>>, vector<256x2xf32>,
    return
  }
  func.func @transform_0(%arg0: i32) -> (i32, i32) {
    %c0_i32 = arith.constant 0 : i32
    %c0_i32_0 = arith.constant 0 : i32
    return %arg0, %c0_i32 : i32, i32
  }
  func.func @transform_1(%arg0: i32) -> (i32, i32) {
    %c0_i32 = arith.constant 0 : i32
    %c0_i32_0 = arith.constant 0 : i32
    %c0_i32_1 = arith.constant 0 : i32
    return %c0_i32, %c0_i32_0 : i32, i32
  }
  func.func @transform_2(%arg0: i32) -> (i32, i32) {
    %c0_i32 = arith.constant 0 : i32
    %c0_i32_0 = arith.constant 0 : i32
    %c0_i32_1 = arith.constant 0 : i32
    return %c0_i32, %c0_i32_0 : i32, i32
  }
  func.func @transform_3(%arg0: i32) -> (i32, i32) {
    %c0_i32 = arith.constant 0 : i32
    %c0_i32_0 = arith.constant 0 : i32
    %c0_i32_1 = arith.constant 0 : i32
    return %c0_i32, %c0_i32_0 : i32, i32
  }
  func.func @transform_4(%arg0: i32) -> (i32, i32) {
    %c0_i32 = arith.constant 0 : i32
    %c0_i32_0 = arith.constant 0 : i32
    %c0_i32_1 = arith.constant 0 : i32
    return %c0_i32, %c0_i32_0 : i32, i32
  }
  func.func @transform_5(%arg0: i32) -> (i32, i32) {
    %c0_i32 = arith.constant 0 : i32
    %c0_i32_0 = arith.constant 0 : i32
    return %arg0, %c0_i32 : i32, i32
  }
  func.func @transform_6(%arg0: i32) -> (i32, i32) {
    %c0_i32 = arith.constant 0 : i32
    %c0_i32_0 = arith.constant 0 : i32
    return %arg0, %c0_i32 : i32, i32
  }
}

module attributes {stable_mosaic.version = 11 : i64} {
  func.func @_conv3x3_res_kernel(%arg0: i32, %arg1: memref<1x18x18x2xbf16, #tpu.memory_space<vmem>>, %arg2: memref<9x2x2xbf16, #tpu.memory_space<vmem>>, %arg3: memref<1x2xf32, #tpu.memory_space<vmem>>, %arg4: memref<1x16x16x2xf32, #tpu.memory_space<vmem>>, %arg5: memref<1x16x16x2xf32, #tpu.memory_space<vmem>>) attributes {dimension_semantics = [#tpu.dimension_semantics<parallel>], iteration_bounds = array<i64: 2>, scalar_prefetch = 0 : i64, scratch_operands = 0 : i64, tpu.core_type = #tpu.core_type<tc>, window_params = [{transform_indices = @transform_0, window_bounds = array<i64: 1, 18, 18, 2>}, {pipeline_mode = #tpu.pipeline_mode<synchronous>, transform_indices = @transform_1, window_bounds = array<i64: 9, 2, 2>}, {pipeline_mode = #tpu.pipeline_mode<synchronous>, transform_indices = @transform_2, window_bounds = array<i64: 1, 2>}, {transform_indices = @transform_3, window_bounds = array<i64: 1, 16, 16, 2>}, {transform_indices = @transform_4, window_bounds = array<i64: 1, 16, 16, 2>}]} {
    %c0 = arith.constant 0 : index
    %c0_0 = arith.constant 0 : index
    %c0_1 = arith.constant 0 : index
    %c0_2 = arith.constant 0 : index
    %0 = vector.load %arg1[%c0, %c0_0, %c0_1, %c0_2] : memref<1x18x18x2xbf16, #tpu.memory_space<vmem>>, vector<1x18x18x2xbf16>
    %c0_3 = arith.constant 0 : index
    %c0_4 = arith.constant 0 : index
    %c0_5 = arith.constant 0 : index
    %1 = vector.load %arg2[%c0_3, %c0_4, %c0_5] : memref<9x2x2xbf16, #tpu.memory_space<vmem>>, vector<9x2x2xbf16>
    %cst = arith.constant 0.000000e+00 : f32
    %2 = vector.broadcast %cst : f32 to vector<256x2xf32>
    %3 = vector.extract_strided_slice %0 {offsets = [0, 0, 0, 0], sizes = [1, 16, 16, 2], strides = [1, 1, 1, 1]} : vector<1x18x18x2xbf16> to vector<1x16x16x2xbf16>
    %4 = vector.shape_cast %3 : vector<1x16x16x2xbf16> to vector<16x16x2xbf16>
    %5 = vector.shape_cast %4 : vector<16x16x2xbf16> to vector<256x2xbf16>
    %6 = vector.extract_strided_slice %1 {offsets = [0, 0, 0], sizes = [1, 2, 2], strides = [1, 1, 1]} : vector<9x2x2xbf16> to vector<1x2x2xbf16>
    %7 = vector.shape_cast %6 : vector<1x2x2xbf16> to vector<2x2xbf16>
    %cst_6 = arith.constant dense<0.000000e+00> : vector<256x2xf32>
    %8 = tpu.matmul %5, %7, %cst_6 {dimension_numbers = #tpu.dot_dimension_numbers<[1], [0], [0], [1], [0, 0, 1, 1], [], []>} : vector<256x2xbf16>, vector<2x2xbf16>, vector<256x2xf32> -> vector<256x2xf32>
    %9 = arith.addf %2, %8 : vector<256x2xf32>
    %10 = vector.extract_strided_slice %0 {offsets = [0, 0, 1, 0], sizes = [1, 16, 16, 2], strides = [1, 1, 1, 1]} : vector<1x18x18x2xbf16> to vector<1x16x16x2xbf16>
    %11 = vector.shape_cast %10 : vector<1x16x16x2xbf16> to vector<16x16x2xbf16>
    %12 = vector.shape_cast %11 : vector<16x16x2xbf16> to vector<256x2xbf16>
    %13 = vector.extract_strided_slice %1 {offsets = [1, 0, 0], sizes = [1, 2, 2], strides = [1, 1, 1]} : vector<9x2x2xbf16> to vector<1x2x2xbf16>
    %14 = vector.shape_cast %13 : vector<1x2x2xbf16> to vector<2x2xbf16>
    %cst_7 = arith.constant dense<0.000000e+00> : vector<256x2xf32>
    %15 = tpu.matmul %12, %14, %cst_7 {dimension_numbers = #tpu.dot_dimension_numbers<[1], [0], [0], [1], [0, 0, 1, 1], [], []>} : vector<256x2xbf16>, vector<2x2xbf16>, vector<256x2xf32> -> vector<256x2xf32>
    %16 = arith.addf %9, %15 : vector<256x2xf32>
    %17 = vector.extract_strided_slice %0 {offsets = [0, 0, 2, 0], sizes = [1, 16, 16, 2], strides = [1, 1, 1, 1]} : vector<1x18x18x2xbf16> to vector<1x16x16x2xbf16>
    %18 = vector.shape_cast %17 : vector<1x16x16x2xbf16> to vector<16x16x2xbf16>
    %19 = vector.shape_cast %18 : vector<16x16x2xbf16> to vector<256x2xbf16>
    %20 = vector.extract_strided_slice %1 {offsets = [2, 0, 0], sizes = [1, 2, 2], strides = [1, 1, 1]} : vector<9x2x2xbf16> to vector<1x2x2xbf16>
    %21 = vector.shape_cast %20 : vector<1x2x2xbf16> to vector<2x2xbf16>
    %cst_8 = arith.constant dense<0.000000e+00> : vector<256x2xf32>
    %22 = tpu.matmul %19, %21, %cst_8 {dimension_numbers = #tpu.dot_dimension_numbers<[1], [0], [0], [1], [0, 0, 1, 1], [], []>} : vector<256x2xbf16>, vector<2x2xbf16>, vector<256x2xf32> -> vector<256x2xf32>
    %23 = arith.addf %16, %22 : vector<256x2xf32>
    %24 = vector.extract_strided_slice %0 {offsets = [0, 1, 0, 0], sizes = [1, 16, 16, 2], strides = [1, 1, 1, 1]} : vector<1x18x18x2xbf16> to vector<1x16x16x2xbf16>
    %25 = vector.shape_cast %24 : vector<1x16x16x2xbf16> to vector<16x16x2xbf16>
    %26 = vector.shape_cast %25 : vector<16x16x2xbf16> to vector<256x2xbf16>
    %27 = vector.extract_strided_slice %1 {offsets = [3, 0, 0], sizes = [1, 2, 2], strides = [1, 1, 1]} : vector<9x2x2xbf16> to vector<1x2x2xbf16>
    %28 = vector.shape_cast %27 : vector<1x2x2xbf16> to vector<2x2xbf16>
    %cst_9 = arith.constant dense<0.000000e+00> : vector<256x2xf32>
    %29 = tpu.matmul %26, %28, %cst_9 {dimension_numbers = #tpu.dot_dimension_numbers<[1], [0], [0], [1], [0, 0, 1, 1], [], []>} : vector<256x2xbf16>, vector<2x2xbf16>, vector<256x2xf32> -> vector<256x2xf32>
    %30 = arith.addf %23, %29 : vector<256x2xf32>
    %31 = vector.extract_strided_slice %0 {offsets = [0, 1, 1, 0], sizes = [1, 16, 16, 2], strides = [1, 1, 1, 1]} : vector<1x18x18x2xbf16> to vector<1x16x16x2xbf16>
    %32 = vector.shape_cast %31 : vector<1x16x16x2xbf16> to vector<16x16x2xbf16>
    %33 = vector.shape_cast %32 : vector<16x16x2xbf16> to vector<256x2xbf16>
    %34 = vector.extract_strided_slice %1 {offsets = [4, 0, 0], sizes = [1, 2, 2], strides = [1, 1, 1]} : vector<9x2x2xbf16> to vector<1x2x2xbf16>
    %35 = vector.shape_cast %34 : vector<1x2x2xbf16> to vector<2x2xbf16>
    %cst_10 = arith.constant dense<0.000000e+00> : vector<256x2xf32>
    %36 = tpu.matmul %33, %35, %cst_10 {dimension_numbers = #tpu.dot_dimension_numbers<[1], [0], [0], [1], [0, 0, 1, 1], [], []>} : vector<256x2xbf16>, vector<2x2xbf16>, vector<256x2xf32> -> vector<256x2xf32>
    %37 = arith.addf %30, %36 : vector<256x2xf32>
    %38 = vector.extract_strided_slice %0 {offsets = [0, 1, 2, 0], sizes = [1, 16, 16, 2], strides = [1, 1, 1, 1]} : vector<1x18x18x2xbf16> to vector<1x16x16x2xbf16>
    %39 = vector.shape_cast %38 : vector<1x16x16x2xbf16> to vector<16x16x2xbf16>
    %40 = vector.shape_cast %39 : vector<16x16x2xbf16> to vector<256x2xbf16>
    %41 = vector.extract_strided_slice %1 {offsets = [5, 0, 0], sizes = [1, 2, 2], strides = [1, 1, 1]} : vector<9x2x2xbf16> to vector<1x2x2xbf16>
    %42 = vector.shape_cast %41 : vector<1x2x2xbf16> to vector<2x2xbf16>
    %cst_11 = arith.constant dense<0.000000e+00> : vector<256x2xf32>
    %43 = tpu.matmul %40, %42, %cst_11 {dimension_numbers = #tpu.dot_dimension_numbers<[1], [0], [0], [1], [0, 0, 1, 1], [], []>} : vector<256x2xbf16>, vector<2x2xbf16>, vector<256x2xf32> -> vector<256x2xf32>
    %44 = arith.addf %37, %43 : vector<256x2xf32>
    %45 = vector.extract_strided_slice %0 {offsets = [0, 2, 0, 0], sizes = [1, 16, 16, 2], strides = [1, 1, 1, 1]} : vector<1x18x18x2xbf16> to vector<1x16x16x2xbf16>
    %46 = vector.shape_cast %45 : vector<1x16x16x2xbf16> to vector<16x16x2xbf16>
    %47 = vector.shape_cast %46 : vector<16x16x2xbf16> to vector<256x2xbf16>
    %48 = vector.extract_strided_slice %1 {offsets = [6, 0, 0], sizes = [1, 2, 2], strides = [1, 1, 1]} : vector<9x2x2xbf16> to vector<1x2x2xbf16>
    %49 = vector.shape_cast %48 : vector<1x2x2xbf16> to vector<2x2xbf16>
    %cst_12 = arith.constant dense<0.000000e+00> : vector<256x2xf32>
    %50 = tpu.matmul %47, %49, %cst_12 {dimension_numbers = #tpu.dot_dimension_numbers<[1], [0], [0], [1], [0, 0, 1, 1], [], []>} : vector<256x2xbf16>, vector<2x2xbf16>, vector<256x2xf32> -> vector<256x2xf32>
    %51 = arith.addf %44, %50 : vector<256x2xf32>
    %52 = vector.extract_strided_slice %0 {offsets = [0, 2, 1, 0], sizes = [1, 16, 16, 2], strides = [1, 1, 1, 1]} : vector<1x18x18x2xbf16> to vector<1x16x16x2xbf16>
    %53 = vector.shape_cast %52 : vector<1x16x16x2xbf16> to vector<16x16x2xbf16>
    %54 = vector.shape_cast %53 : vector<16x16x2xbf16> to vector<256x2xbf16>
    %55 = vector.extract_strided_slice %1 {offsets = [7, 0, 0], sizes = [1, 2, 2], strides = [1, 1, 1]} : vector<9x2x2xbf16> to vector<1x2x2xbf16>
    %56 = vector.shape_cast %55 : vector<1x2x2xbf16> to vector<2x2xbf16>
    %cst_13 = arith.constant dense<0.000000e+00> : vector<256x2xf32>
    %57 = tpu.matmul %54, %56, %cst_13 {dimension_numbers = #tpu.dot_dimension_numbers<[1], [0], [0], [1], [0, 0, 1, 1], [], []>} : vector<256x2xbf16>, vector<2x2xbf16>, vector<256x2xf32> -> vector<256x2xf32>
    %58 = arith.addf %51, %57 : vector<256x2xf32>
    %59 = vector.extract_strided_slice %0 {offsets = [0, 2, 2, 0], sizes = [1, 16, 16, 2], strides = [1, 1, 1, 1]} : vector<1x18x18x2xbf16> to vector<1x16x16x2xbf16>
    %60 = vector.shape_cast %59 : vector<1x16x16x2xbf16> to vector<16x16x2xbf16>
    %61 = vector.shape_cast %60 : vector<16x16x2xbf16> to vector<256x2xbf16>
    %62 = vector.extract_strided_slice %1 {offsets = [8, 0, 0], sizes = [1, 2, 2], strides = [1, 1, 1]} : vector<9x2x2xbf16> to vector<1x2x2xbf16>
    %63 = vector.shape_cast %62 : vector<1x2x2xbf16> to vector<2x2xbf16>
    %cst_14 = arith.constant dense<0.000000e+00> : vector<256x2xf32>
    %64 = tpu.matmul %61, %63, %cst_14 {dimension_numbers = #tpu.dot_dimension_numbers<[1], [0], [0], [1], [0, 0, 1, 1], [], []>} : vector<256x2xbf16>, vector<2x2xbf16>, vector<256x2xf32> -> vector<256x2xf32>
    %65 = arith.addf %58, %64 : vector<256x2xf32>
    %c0_15 = arith.constant 0 : index
    %c0_16 = arith.constant 0 : index
    %66 = vector.load %arg3[%c0_15, %c0_16] : memref<1x2xf32, #tpu.memory_space<vmem>>, vector<1x2xf32>
    %67 = vector.broadcast %66 : vector<1x2xf32> to vector<256x2xf32>
    %68 = arith.addf %65, %67 : vector<256x2xf32>
    %69 = arith.negf %68 : vector<256x2xf32>
    %70 = math.exp %69 : vector<256x2xf32>
    %cst_17 = arith.constant 1.000000e+00 : f32
    %71 = vector.broadcast %cst_17 : f32 to vector<256x2xf32>
    %72 = arith.addf %71, %70 : vector<256x2xf32>
    %73 = arith.divf %71, %72 : vector<256x2xf32>
    %74 = arith.mulf %68, %73 : vector<256x2xf32>
    %c0_18 = arith.constant 0 : index
    %c0_19 = arith.constant 0 : index
    %c0_20 = arith.constant 0 : index
    %c0_21 = arith.constant 0 : index
    %75 = vector.load %arg4[%c0_18, %c0_19, %c0_20, %c0_21] : memref<1x16x16x2xf32, #tpu.memory_space<vmem>>, vector<1x16x16x2xf32>
    %76 = vector.shape_cast %75 : vector<1x16x16x2xf32> to vector<256x2xf32>
    %77 = arith.addf %74, %76 : vector<256x2xf32>
    %78 = vector.shape_cast %77 : vector<256x2xf32> to vector<1x16x16x2xf32>
    %c0_22 = arith.constant 0 : index
    %c0_23 = arith.constant 0 : index
    %c0_24 = arith.constant 0 : index
    %c0_25 = arith.constant 0 : index
    %79 = vector.load %arg5[%c0_22, %c0_23, %c0_24, %c0_25] : memref<1x16x16x2xf32, #tpu.memory_space<vmem>>, vector<1x16x16x2xf32>
    tpu.vector_store %arg5[%c0_22, %c0_23, %c0_24, %c0_25], %78 {strides = array<i32>} : memref<1x16x16x2xf32, #tpu.memory_space<vmem>>, vector<1x16x16x2xf32>,
    return
  }
  func.func @transform_0(%arg0: i32) -> (i32, i32, i32, i32) {
    %c0_i32 = arith.constant 0 : i32
    %c0_i32_0 = arith.constant 0 : i32
    %c0_i32_1 = arith.constant 0 : i32
    %c0_i32_2 = arith.constant 0 : i32
    return %arg0, %c0_i32, %c0_i32_0, %c0_i32_1 : i32, i32, i32, i32
  }
  func.func @transform_1(%arg0: i32) -> (i32, i32, i32) {
    %c0_i32 = arith.constant 0 : i32
    %c0_i32_0 = arith.constant 0 : i32
    %c0_i32_1 = arith.constant 0 : i32
    %c0_i32_2 = arith.constant 0 : i32
    return %c0_i32, %c0_i32_0, %c0_i32_1 : i32, i32, i32
  }
  func.func @transform_2(%arg0: i32) -> (i32, i32) {
    %c0_i32 = arith.constant 0 : i32
    %c0_i32_0 = arith.constant 0 : i32
    %c0_i32_1 = arith.constant 0 : i32
    return %c0_i32, %c0_i32_0 : i32, i32
  }
  func.func @transform_3(%arg0: i32) -> (i32, i32, i32, i32) {
    %c0_i32 = arith.constant 0 : i32
    %c0_i32_0 = arith.constant 0 : i32
    %c0_i32_1 = arith.constant 0 : i32
    %c0_i32_2 = arith.constant 0 : i32
    return %arg0, %c0_i32, %c0_i32_0, %c0_i32_1 : i32, i32, i32, i32
  }
  func.func @transform_4(%arg0: i32) -> (i32, i32, i32, i32) {
    %c0_i32 = arith.constant 0 : i32
    %c0_i32_0 = arith.constant 0 : i32
    %c0_i32_1 = arith.constant 0 : i32
    %c0_i32_2 = arith.constant 0 : i32
    return %arg0, %c0_i32, %c0_i32_0, %c0_i32_1 : i32, i32, i32, i32
  }
}

module attributes {stable_mosaic.version = 11 : i64} {
  func.func @_concat_mm_bias_silu_kernel(%arg0: i32, %arg1: memref<256x2xbf16, #tpu.memory_space<vmem>>, %arg2: memref<256x2xbf16, #tpu.memory_space<vmem>>, %arg3: memref<2x4xbf16, #tpu.memory_space<vmem>>, %arg4: memref<2x4xbf16, #tpu.memory_space<vmem>>, %arg5: memref<1x4xf32, #tpu.memory_space<vmem>>, %arg6: memref<256x4xf32, #tpu.memory_space<vmem>>) attributes {dimension_semantics = [#tpu.dimension_semantics<parallel>], iteration_bounds = array<i64: 2>, scalar_prefetch = 0 : i64, scratch_operands = 0 : i64, tpu.core_type = #tpu.core_type<tc>, window_params = [{transform_indices = @transform_0, window_bounds = array<i64: 256, 2>}, {transform_indices = @transform_1, window_bounds = array<i64: 256, 2>}, {pipeline_mode = #tpu.pipeline_mode<synchronous>, transform_indices = @transform_2, window_bounds = array<i64: 2, 4>}, {pipeline_mode = #tpu.pipeline_mode<synchronous>, transform_indices = @transform_3, window_bounds = array<i64: 2, 4>}, {pipeline_mode = #tpu.pipeline_mode<synchronous>, transform_indices = @transform_4, window_bounds = array<i64: 1, 4>}, {transform_indices = @transform_5, window_bounds = array<i64: 256, 4>}]} {
    %c0 = arith.constant 0 : index
    %c0_0 = arith.constant 0 : index
    %0 = vector.load %arg1[%c0, %c0_0] : memref<256x2xbf16, #tpu.memory_space<vmem>>, vector<256x2xbf16>
    %c0_1 = arith.constant 0 : index
    %c0_2 = arith.constant 0 : index
    %1 = vector.load %arg3[%c0_1, %c0_2] : memref<2x4xbf16, #tpu.memory_space<vmem>>, vector<2x4xbf16>
    %cst = arith.constant dense<0.000000e+00> : vector<256x4xf32>
    %2 = tpu.matmul %0, %1, %cst {dimension_numbers = #tpu.dot_dimension_numbers<[1], [0], [0], [1], [0, 0, 1, 1], [], []>} : vector<256x2xbf16>, vector<2x4xbf16>, vector<256x4xf32> -> vector<256x4xf32>
    %c0_3 = arith.constant 0 : index
    %c0_4 = arith.constant 0 : index
    %3 = vector.load %arg2[%c0_3, %c0_4] : memref<256x2xbf16, #tpu.memory_space<vmem>>, vector<256x2xbf16>
    %c0_5 = arith.constant 0 : index
    %c0_6 = arith.constant 0 : index
    %4 = vector.load %arg4[%c0_5, %c0_6] : memref<2x4xbf16, #tpu.memory_space<vmem>>, vector<2x4xbf16>
    %cst_7 = arith.constant dense<0.000000e+00> : vector<256x4xf32>
    %5 = tpu.matmul %3, %4, %cst_7 {dimension_numbers = #tpu.dot_dimension_numbers<[1], [0], [0], [1], [0, 0, 1, 1], [], []>} : vector<256x2xbf16>, vector<2x4xbf16>, vector<256x4xf32> -> vector<256x4xf32>
    %6 = arith.addf %2, %5 : vector<256x4xf32>
    %c0_8 = arith.constant 0 : index
    %c0_9 = arith.constant 0 : index
    %7 = vector.load %arg5[%c0_8, %c0_9] : memref<1x4xf32, #tpu.memory_space<vmem>>, vector<1x4xf32>
    %8 = vector.broadcast %7 : vector<1x4xf32> to vector<256x4xf32>
    %9 = arith.addf %6, %8 : vector<256x4xf32>
    %10 = arith.negf %9 : vector<256x4xf32>
    %11 = math.exp %10 : vector<256x4xf32>
    %cst_10 = arith.constant 1.000000e+00 : f32
    %12 = vector.broadcast %cst_10 : f32 to vector<256x4xf32>
    %13 = arith.addf %12, %11 : vector<256x4xf32>
    %14 = arith.divf %12, %13 : vector<256x4xf32>
    %15 = arith.mulf %9, %14 : vector<256x4xf32>
    %c0_11 = arith.constant 0 : index
    %c0_12 = arith.constant 0 : index
    %16 = vector.load %arg6[%c0_11, %c0_12] : memref<256x4xf32, #tpu.memory_space<vmem>>, vector<256x4xf32>
    tpu.vector_store %arg6[%c0_11, %c0_12], %15 {strides = array<i32>} : memref<256x4xf32, #tpu.memory_space<vmem>>, vector<256x4xf32>,
    return
  }
  func.func @transform_0(%arg0: i32) -> (i32, i32) {
    %c0_i32 = arith.constant 0 : i32
    %c0_i32_0 = arith.constant 0 : i32
    return %arg0, %c0_i32 : i32, i32
  }
  func.func @transform_1(%arg0: i32) -> (i32, i32) {
    %c0_i32 = arith.constant 0 : i32
    %c0_i32_0 = arith.constant 0 : i32
    return %arg0, %c0_i32 : i32, i32
  }
  func.func @transform_2(%arg0: i32) -> (i32, i32) {
    %c0_i32 = arith.constant 0 : i32
    %c0_i32_0 = arith.constant 0 : i32
    %c0_i32_1 = arith.constant 0 : i32
    return %c0_i32, %c0_i32_0 : i32, i32
  }
  func.func @transform_3(%arg0: i32) -> (i32, i32) {
    %c0_i32 = arith.constant 0 : i32
    %c0_i32_0 = arith.constant 0 : i32
    %c0_i32_1 = arith.constant 0 : i32
    return %c0_i32, %c0_i32_0 : i32, i32
  }
  func.func @transform_4(%arg0: i32) -> (i32, i32) {
    %c0_i32 = arith.constant 0 : i32
    %c0_i32_0 = arith.constant 0 : i32
    %c0_i32_1 = arith.constant 0 : i32
    return %c0_i32, %c0_i32_0 : i32, i32
  }
  func.func @transform_5(%arg0: i32) -> (i32, i32) {
    %c0_i32 = arith.constant 0 : i32
    %c0_i32_0 = arith.constant 0 : i32
    return %arg0, %c0_i32 : i32, i32
  }
}

</mosaic_0001>

<llo_original>
// kernel: c3_forward.5
$region0: #{c3_forward.5}
  #allocation0 [shape = 'u32[]', space=smem, size = 0x4, offset = 0x4, fixed_abs, tag = 'smem constant byte address 0x4 - core index']
  #allocation1 [shape = 'u32[72,128]{1,0:T(1,128)}', space=vmem, size = 0x9000, scoped, tag = 'internal scratch']
  %s0 = inlined_call_operand.vmem [shape: bf16[512,2], index: 0, kind: input, shape index: {}]
  %s1 = inlined_call_operand.vmem [shape: bf16[2,2], index: 1, kind: input, shape index: {}]
  %s2 = inlined_call_operand.vmem [shape: f32[1,2], index: 2, kind: input, shape index: {}]
  %s3 = inlined_call_operand.vmem [shape: f32[512,2], index: 3, kind: output, shape index: {}]
  %s4 = sld [smem:[#allocation0]]
  $region45: #{c3_forward.5} parent=0
    _
  %s6 = ssub.s32 1, %s4
  %s7 = scalar_select 0, %s6, %s4
  loop: start=0, step=1, limit=4
  $region2: #{c3_forward.5} parent=0 // loop_pre_header
    _
  $region3: #{c3_forward.5} parent=0 // loop_header
    %s9 = sphi 0, %s13
    %p10 = scmp.ge.s32.totalorder %s9, 4
    %s19 = sphi 0, %s21
    %s22 = sphi 0, %s19
    %s23 = sphi 0, %s22
    %s39 = sphi 0, %s23
    %s43 = sphi 0, %s43
    %s45 = sphi 0, %s43
    %s46 = sphi 0, %s45
    %s60 = sphi 0, %s46
    %s64 = sphi 0, %s64
    %s66 = sphi 0, %s64
    %s67 = sphi 0, %s66
    %s81 = sphi 0, %s67
    %s87 = sphi 0, %s89
    %s90 = sphi 0, %s87
    %s91 = sphi 0, %s90
    %s107 = sphi 0, %s91
  $region4: #{c3_forward.5} parent=0 // loop_header_branch
    %12 = sbr.rel (%p10) target = $region8
  $region5: #{c3_forward.5} parent=0 // loop_body
    %s14 = ssub.s32 %s9, 1
    %s15 = ssub.s32 %s9, 2
    %s16 = sadd.s32 %s9, 1
    %s17 = ssub.s32 %s9, %s16
    %p18 = scmp.eq.s32.totalorder %s17, 0
    %s20 = sadd.s32 %s19, 1
    %s21 = scalar_select %p18, %s19, %s20
    %p24 = pneg %p18
    %p25 = scmp.eq.s32.totalorder %s9, 1
    %p26 = por %p24, %p25
    %p27 = scmp.ne.s32.totalorder %s19, %s22
    %p28 = scmp.eq.s32.totalorder %s9, 0
    %p29 = por %p27, %p28
    %p30 = scmp.ne.s32.totalorder %s19, %s22
    %p31 = scmp.eq.s32.totalorder %s14, 1
    %p32 = por %p30, %p31
    %p33 = scmp.ne.s32.totalorder %s22, %s23
    %p34 = scmp.eq.s32.totalorder %s14, 0
    %p35 = por %p33, %p34
    %p36 = scmp.ne.s32.totalorder %s22, %s23
    %p37 = scmp.eq.s32.totalorder %s15, 1
    %p38 = por %p36, %p37
    %p40 = scmp.ne.s32.totalorder %s23, %s39
    %p41 = scmp.eq.s32.totalorder %s15, 0
    %p42 = por %p40, %p41
    %s44 = sadd.s32 %s43, 1
    %p47 = scmp.eq.s32.totalorder %s9, 1
    %p48 = scmp.ne.s32.totalorder %s43, %s45
    %p49 = scmp.eq.s32.totalorder %s9, 0
    %p50 = por %p48, %p49
    %p51 = scmp.ne.s32.totalorder %s43, %s45
    %p52 = scmp.eq.s32.totalorder %s14, 1
    %p53 = por %p51, %p52
    %p54 = scmp.ne.s32.totalorder %s45, %s46
    %p55 = scmp.eq.s32.totalorder %s14, 0
    %p56 = por %p54, %p55
    %p57 = scmp.ne.s32.totalorder %s45, %s46
    %p58 = scmp.eq.s32.totalorder %s15, 1
    %p59 = por %p57, %p58
    %p61 = scmp.ne.s32.totalorder %s46, %s60
    %p62 = scmp.eq.s32.totalorder %s15, 0
    %p63 = por %p61, %p62
    %s65 = sadd.s32 %s64, 1
    %p68 = scmp.eq.s32.totalorder %s9, 1
    %p69 = scmp.ne.s32.totalorder %s64, %s66
    %p70 = scmp.eq.s32.totalorder %s9, 0
    %p71 = por %p69, %p70
    %p72 = scmp.ne.s32.totalorder %s64, %s66
    %p73 = scmp.eq.s32.totalorder %s14, 1
    %p74 = por %p72, %p73
    %p75 = scmp.ne.s32.totalorder %s66, %s67
    %p76 = scmp.eq.s32.totalorder %s14, 0
    %p77 = por %p75, %p76
    %p78 = scmp.ne.s32.totalorder %s66, %s67
    %p79 = scmp.eq.s32.totalorder %s15, 1
    %p80 = por %p78, %p79
    %p82 = scmp.ne.s32.totalorder %s67, %s81
    %p83 = scmp.eq.s32.totalorder %s15, 0
    %p84 = por %p82, %p83
    %s85 = ssub.s32 %s9, %s16
    %p86 = scmp.eq.s32.totalorder %s85, 0
    %s88 = sadd.s32 %s87, 1
    %s89 = scalar_select %p86, %s87, %s88
    %p92 = pneg %p86
    %p93 = scmp.eq.s32.totalorder %s9, 1
    %p94 = por %p92, %p93
    %p95 = scmp.ne.s32.totalorder %s87, %s90
    %p96 = scmp.eq.s32.totalorder %s9, 0
    %p97 = por %p95, %p96
    %p98 = scmp.ne.s32.totalorder %s87, %s90
    %p99 = scmp.eq.s32.totalorder %s14, 1
    %p100 = por %p98, %p99
    %p101 = scmp.ne.s32.totalorder %s90, %s91
    %p102 = scmp.eq.s32.totalorder %s14, 0
    %p103 = por %p101, %p102
    %p104 = scmp.ne.s32.totalorder %s90, %s91
    %p105 = scmp.eq.s32.totalorder %s15, 1
    %p106 = por %p104, %p105
    %p108 = scmp.ne.s32.totalorder %s91, %s107
    %p109 = scmp.eq.s32.totalorder %s15, 0
    %p110 = por %p108, %p109
    %p111 = scmp.le.s32.totalorder 1, %s9
    %p112 = scmp.lt.s32.totalorder %s9, 3
    %p113 = pnand %p111, %p112
    %p114 = pneg %p113
    // Predicated region
    $region9: #{c3_forward.5} parent=5 // pred_check
      _
    $region10: #{c3_forward.5} parent=5 // pred_check_branch
      %116 = sbr.rel (%p113) target = $region12
    $region11: #{c3_forward.5} parent=5 // pred_region
      %s117 = ssub.s32 %s9, 1
      // Predicated region
      $region13: #{c3_forward.5} parent=11 // pred_check
        %p118 = pneg %p56
      $region14: #{c3_forward.5} parent=11 // pred_check_branch
        %120 = sbr.rel (%p118) target = $region16
      $region15: #{c3_forward.5} parent=11 // pred_region
        _
      $region16: #{c3_forward.5} parent=11 // pred_fallthru
        _
      // Predicated region
      $region17: #{c3_forward.5} parent=11 // pred_check
        %p121 = pneg %p77
      $region18: #{c3_forward.5} parent=11 // pred_check_branch
        %123 = sbr.rel (%p121) target = $region20
      $region19: #{c3_forward.5} parent=11 // pred_region
        _
      $region20: #{c3_forward.5} parent=11 // pred_fallthru
        _
    $region12: #{c3_forward.5} parent=5 // pred_fallthru
      _
    %p124 = scmp.lt.s32.totalorder %s9, 2
    // Predicated region
    $region21: #{c3_forward.5} parent=5 // pred_check
      %p125 = pneg %p124
    $region22: #{c3_forward.5} parent=5 // pred_check_branch
      %127 = sbr.rel (%p125) target = $region24
    $region23: #{c3_forward.5} parent=5 // pred_region
      // Predicated region
      $region25: #{c3_forward.5} parent=23 // pred_check
        %p128 = pneg %p29
      $region26: #{c3_forward.5} parent=23 // pred_check_branch
        %130 = sbr.rel (%p128) target = $region28
      $region27: #{c3_forward.5} parent=23 // pred_region
        %s131 = smul.u32 32, %s9
        %p132 = scmp.lt.s32.totalorder %s131, 63
        %s133 = scalar_select %p132, %s131, 63
        %s134 = smul.addr %s133, 4
        %s135 = scalar_lea.vmem %s0, %s134
        %s136 = smul.u32 32, %s9
      $region28: #{c3_forward.5} parent=23 // pred_fallthru
        _
    $region24: #{c3_forward.5} parent=5 // pred_fallthru
      _
    %p137 = scmp.le.s32.totalorder 1, %s9
    %p138 = scmp.lt.s32.totalorder %s9, 3
    %p139 = pnand %p137, %p138
    %p140 = pneg %p139
    // Predicated region
    $region29: #{c3_forward.5} parent=5 // pred_check
      _
    $region30: #{c3_forward.5} parent=5 // pred_check_branch
      %142 = sbr.rel (%p139) target = $region32
    $region31: #{c3_forward.5} parent=5 // pred_region
      %s143 = ssub.s32 %s9, 1
      %s144 = smul.u32 32, %s14
      %p145 = scmp.lt.s32.totalorder %s144, 63
      %s146 = scalar_select %p145, %s144, 63
      %s147 = smul.addr %s146, 4
      %s148 = scalar_lea.vmem %s0, %s147
      %p149 = pneg %p35
      %p150 = pneg %p32
      %p151 = pneg %p56
      %p152 = pneg %p53
      %p153 = pneg %p77
      %p154 = pneg %p74
      %p155 = pneg %p103
      %p156 = pneg %p100
      %s157 = smul.u32 32, %s14
      %p158 = scmp.lt.s32.totalorder %s157, 63
      %s159 = scalar_select %p158, %s157, 63
      %s160 = smul.addr %s159, 8
      %s161 = scalar_lea.vmem %s3, %s160
      %s162 = smul.u32 32, %s14
      %p163 = scmp.lt.s32.totalorder %s162, 63
      %s164 = scalar_select %p163, %s162, 63
      %s165 = smul.addr %s164, 4
      %s166 = scalar_lea.vmem %s0, %s165
      %s167 = smul.u32 32, %s14
      %s168 = smul.u32 32, %s14
      %p169 = scmp.lt.s32.totalorder %s168, 63
      %s170 = scalar_select %p169, %s168, 63
      %s171 = smul.addr %s170, 8
      %s172 = scalar_lea.vmem %s3, %s171
      %s173 = smul.u32 32, %s14
      %v175 = vld [vmem:[%s166] sm:$0xf]
      %v176 = vld [vmem:[%s166 + $0x4] sm:$0xf]
      %v177 = vld [vmem:[%s166 + $0x8] sm:$0xf]
      %v178 = vld [vmem:[%s166 + $0xc] sm:$0xf]
      %v179 = vld [vmem:[%s166 + $0x10] sm:$0xf]
      %v180 = vld [vmem:[%s166 + $0x14] sm:$0xf]
      %v181 = vld [vmem:[%s166 + $0x18] sm:$0xf]
      %v182 = vld [vmem:[%s166 + $0x1c] sm:$0xf]
      %v183 = vld [vmem:[%s166 + $0x20] sm:$0xf]
      %v184 = vld [vmem:[%s166 + $0x24] sm:$0xf]
      %v185 = vld [vmem:[%s166 + $0x28] sm:$0xf]
      %v186 = vld [vmem:[%s166 + $0x2c] sm:$0xf]
      %v187 = vld [vmem:[%s166 + $0x30] sm:$0xf]
      %v188 = vld [vmem:[%s166 + $0x34] sm:$0xf]
      %v189 = vld [vmem:[%s166 + $0x38] sm:$0xf]
      %v190 = vld [vmem:[%s166 + $0x3c] sm:$0xf]
      %v191 = vld [vmem:[%s166 + $0x40] sm:$0xf]
      %v192 = vld [vmem:[%s166 + $0x44] sm:$0xf]
      %v193 = vld [vmem:[%s166 + $0x48] sm:$0xf]
      %v194 = vld [vmem:[%s166 + $0x4c] sm:$0xf]
      %v195 = vld [vmem:[%s166 + $0x50] sm:$0xf]
      %v196 = vld [vmem:[%s166 + $0x54] sm:$0xf]
      %v197 = vld [vmem:[%s166 + $0x58] sm:$0xf]
      %v198 = vld [vmem:[%s166 + $0x5c] sm:$0xf]
      %v199 = vld [vmem:[%s166 + $0x60] sm:$0xf]
      %v200 = vld [vmem:[%s166 + $0x64] sm:$0xf]
      %v201 = vld [vmem:[%s166 + $0x68] sm:$0xf]
      %v202 = vld [vmem:[%s166 + $0x6c] sm:$0xf]
      %v203 = vld [vmem:[%s166 + $0x70] sm:$0xf]
      %v204 = vld [vmem:[%s166 + $0x74] sm:$0xf]
      %v205 = vld [vmem:[%s166 + $0x78] sm:$0xf]
      %v206 = vld [vmem:[%s166 + $0x7c] sm:$0xf]
      %v207 = vld [vmem:[%s1] sm:$0x1]
      %v208 = vld [vmem:[%s2] sm:$0x1]
      %v210 = vperm.slane %v208, 0
      %v244 = vunpack.c.l.b16 %v175
      %v245 = vunpack.c.l.b16 %v176
      %v246 = vunpack.c.l.b16 %v177
      %v247 = vunpack.c.l.b16 %v178
      %v248 = vunpack.c.l.b16 %v179
      %v249 = vunpack.c.l.b16 %v180
      %v250 = vunpack.c.l.b16 %v181
      %v251 = vunpack.c.l.b16 %v182
      %v252 = vunpack.c.l.b16 %v183
      %v253 = vunpack.c.l.b16 %v184
      %v254 = vunpack.c.l.b16 %v185
      %v255 = vunpack.c.l.b16 %v186
      %v256 = vunpack.c.l.b16 %v187
      %v257 = vunpack.c.l.b16 %v188
      %v258 = vunpack.c.l.b16 %v189
      %v259 = vunpack.c.l.b16 %v190
      %v260 = vunpack.c.l.b16 %v191
      %v261 = vunpack.c.l.b16 %v192
      %v262 = vunpack.c.l.b16 %v193
      %v263 = vunpack.c.l.b16 %v194
      %v264 = vunpack.c.l.b16 %v195
      %v265 = vunpack.c.l.b16 %v196
      %v266 = vunpack.c.l.b16 %v197
      %v267 = vunpack.c.l.b16 %v198
      %v268 = vunpack.c.l.b16 %v199
      %v269 = vunpack.c.l.b16 %v200
      %v270 = vunpack.c.l.b16 %v201
      %v271 = vunpack.c.l.b16 %v202
      %v272 = vunpack.c.l.b16 %v203
      %v273 = vunpack.c.l.b16 %v204
      %v274 = vunpack.c.l.b16 %v205
      %v275 = vunpack.c.l.b16 %v206
      %v276 = vpack.c.b16 %v245, %v244
      %v277 = vpack.c.b16 %v247, %v246
      %v278 = vpack.c.b16 %v249, %v248
      %v279 = vpack.c.b16 %v251, %v250
      %v280 = vpack.c.b16 %v253, %v252
      %v281 = vpack.c.b16 %v255, %v254
      %v282 = vpack.c.b16 %v257, %v256
      %v283 = vpack.c.b16 %v259, %v258
      %v284 = vpack.c.b16 %v261, %v260
      %v285 = vpack.c.b16 %v263, %v262
      %v286 = vpack.c.b16 %v265, %v264
      %v287 = vpack.c.b16 %v267, %v266
      %v288 = vpack.c.b16 %v269, %v268
      %v289 = vpack.c.b16 %v271, %v270
      %v290 = vpack.c.b16 %v273, %v272
      %v291 = vpack.c.b16 %v275, %v274
      %vm292 = vcmask 15360
      %v294 = vsel %vm292, %v276, 0
      %v297 = vsel %vm292, %v277, 0
      %v300 = vsel %vm292, %v278, 0
      %v303 = vsel %vm292, %v279, 0
      %v306 = vsel %vm292, %v280, 0
      %v309 = vsel %vm292, %v281, 0
      %v312 = vsel %vm292, %v282, 0
      %v315 = vsel %vm292, %v283, 0
      %v318 = vsel %vm292, %v284, 0
      %v321 = vsel %vm292, %v285, 0
      %v324 = vsel %vm292, %v286, 0
      %v327 = vsel %vm292, %v287, 0
      %v330 = vsel %vm292, %v288, 0
      %v333 = vsel %vm292, %v289, 0
      %v336 = vsel %vm292, %v290, 0
      %v339 = vsel %vm292, %v291, 0
      %vm341 = vcmask 1040384
      %v343 = vsel %vm341, %v207, 0
      %345 = vmatpush.bf16.msra.mxu0 0
      %346 = vmatpush.bf16.msra.mxu0 0
      %347 = vmatpush.bf16.msra.mxu0 0
      %348 = vmatpush.bf16.msra.mxu0 0
      %349 = vmatpush.bf16.msra.mxu0 0
      %350 = vmatpush.bf16.msra.mxu0 0
      %351 = vmatpush.bf16.msra.mxu0 0
      %352 = vmatpush.bf16.msra.mxu0 %v343
      %353 = vmatmul.bf16.gmra.mxu0 %v294
      %v354 = vpop.f32.mrf.mxu0
      %v355 = vadd.f32 %v210, %v354
      %v356 = vpop.f32.mrf.mxu0
      %v357 = vadd.f32 %v210, %v356
      %358 = vmatmul.bf16.gmra.mxu0 %v297
      %v359 = vpop.f32.mrf.mxu0
      %v360 = vadd.f32 %v210, %v359
      %v361 = vpop.f32.mrf.mxu0
      %v362 = vadd.f32 %v210, %v361
      %363 = vmatmul.bf16.gmra.mxu0 %v300
      %v364 = vpop.f32.mrf.mxu0
      %v365 = vadd.f32 %v210, %v364
      %v366 = vpop.f32.mrf.mxu0
      %v367 = vadd.f32 %v210, %v366
      %368 = vmatmul.bf16.gmra.mxu0 %v303
      %v369 = vpop.f32.mrf.mxu0
      %v370 = vadd.f32 %v210, %v369
      %v371 = vpop.f32.mrf.mxu0
      %v372 = vadd.f32 %v210, %v371
      %373 = vmatmul.bf16.gmra.mxu0 %v306
      %v374 = vpop.f32.mrf.mxu0
      %v375 = vadd.f32 %v210, %v374
      %v376 = vpop.f32.mrf.mxu0
      %v377 = vadd.f32 %v210, %v376
      %378 = vmatmul.bf16.gmra.mxu0 %v309
      %v379 = vpop.f32.mrf.mxu0
      %v380 = vadd.f32 %v210, %v379
      %v381 = vpop.f32.mrf.mxu0
      %v382 = vadd.f32 %v210, %v381
      %383 = vmatmul.bf16.gmra.mxu0 %v312
      %v384 = vpop.f32.mrf.mxu0
      %v385 = vadd.f32 %v210, %v384
      %v386 = vpop.f32.mrf.mxu0
      %v387 = vadd.f32 %v210, %v386
      %388 = vmatmul.bf16.gmra.mxu0 %v315
      %v389 = vpop.f32.mrf.mxu0
      %v390 = vadd.f32 %v210, %v389
      %v391 = vpop.f32.mrf.mxu0
      %v392 = vadd.f32 %v210, %v391
      %393 = vmatmul.bf16.gmra.mxu0 %v318
      %v394 = vpop.f32.mrf.mxu0
      %v395 = vadd.f32 %v210, %v394
      %v396 = vpop.f32.mrf.mxu0
      %v397 = vadd.f32 %v210, %v396
      %398 = vmatmul.bf16.gmra.mxu0 %v321
      %v399 = vpop.f32.mrf.mxu0
      %v400 = vadd.f32 %v210, %v399
      %v401 = vpop.f32.mrf.mxu0
      %v402 = vadd.f32 %v210, %v401
      %403 = vmatmul.bf16.gmra.mxu0 %v324
      %v404 = vpop.f32.mrf.mxu0
      %v405 = vadd.f32 %v210, %v404
      %v406 = vpop.f32.mrf.mxu0
      %v407 = vadd.f32 %v210, %v406
      %408 = vmatmul.bf16.gmra.mxu0 %v327
      %v409 = vpop.f32.mrf.mxu0
      %v410 = vadd.f32 %v210, %v409
      %v411 = vpop.f32.mrf.mxu0
      %v412 = vadd.f32 %v210, %v411
      %413 = vmatmul.bf16.gmra.mxu0 %v330
      %v414 = vpop.f32.mrf.mxu0
      %v415 = vadd.f32 %v210, %v414
      %v416 = vpop.f32.mrf.mxu0
      %v417 = vadd.f32 %v210, %v416
      %418 = vmatmul.bf16.gmra.mxu0 %v333
      %v419 = vpop.f32.mrf.mxu0
      %v420 = vadd.f32 %v210, %v419
      %v421 = vpop.f32.mrf.mxu0
      %v422 = vadd.f32 %v210, %v421
      %423 = vmatmul.bf16.gmra.mxu0 %v336
      %v424 = vpop.f32.mrf.mxu0
      %v425 = vadd.f32 %v210, %v424
      %v426 = vpop.f32.mrf.mxu0
      %v427 = vadd.f32 %v210, %v426
      %428 = vmatmul.bf16.gmra.mxu0 %v339
      %v429 = vpop.f32.mrf.mxu0
      %v430 = vadd.f32 %v210, %v429
      %v431 = vpop.f32.mrf.mxu0
      %v432 = vadd.f32 %v210, %v431
      %433 = vdwg.mxu0
      %v434 = vxor.u32 %v355, 2147483648
      %v435 = vxor.u32 %v357, 2147483648
      %v436 = vxor.u32 %v360, 2147483648
      %v437 = vxor.u32 %v362, 2147483648
      %v438 = vxor.u32 %v365, 2147483648
      %v439 = vxor.u32 %v367, 2147483648
      %v440 = vxor.u32 %v370, 2147483648
      %v441 = vxor.u32 %v372, 2147483648
      %v442 = vxor.u32 %v375, 2147483648
      %v443 = vxor.u32 %v377, 2147483648
      %v444 = vxor.u32 %v380, 2147483648
      %v445 = vxor.u32 %v382, 2147483648
      %v446 = vxor.u32 %v385, 2147483648
      %v447 = vxor.u32 %v387, 2147483648
      %v448 = vxor.u32 %v390, 2147483648
      %v449 = vxor.u32 %v392, 2147483648
      %v450 = vxor.u32 %v395, 2147483648
      %v451 = vxor.u32 %v397, 2147483648
      %v452 = vxor.u32 %v400, 2147483648
      %v453 = vxor.u32 %v402, 2147483648
      %v454 = vxor.u32 %v405, 2147483648
      %v455 = vxor.u32 %v407, 2147483648
      %v456 = vxor.u32 %v410, 2147483648
      %v457 = vxor.u32 %v412, 2147483648
      %v458 = vxor.u32 %v415, 2147483648
      %v459 = vxor.u32 %v417, 2147483648
      %v460 = vxor.u32 %v420, 2147483648
      %v461 = vxor.u32 %v422, 2147483648
      %v462 = vxor.u32 %v425, 2147483648
      %v463 = vxor.u32 %v427, 2147483648
      %v464 = vxor.u32 %v430, 2147483648
      %v465 = vxor.u32 %v432, 2147483648
      %v466 = vmul.f32 %v434, 1.442695
      %v467 = vpow.pop %v466
      %v468 = vmul.f32 %v435, 1.442695
      %v469 = vpow.pop %v468
      %v470 = vmul.f32 %v436, 1.442695
      %v471 = vpow.pop %v470
      %v472 = vmul.f32 %v437, 1.442695
      %v473 = vpow.pop %v472
      %v474 = vmul.f32 %v438, 1.442695
      %v475 = vpow.pop %v474
      %v476 = vmul.f32 %v439, 1.442695
      %v477 = vpow.pop %v476
      %v478 = vmul.f32 %v440, 1.442695
      %v479 = vpow.pop %v478
      %v480 = vmul.f32 %v441, 1.442695
      %v481 = vpow.pop %v480
      %v482 = vmul.f32 %v442, 1.442695
      %v483 = vpow.pop %v482
      %v484 = vmul.f32 %v443, 1.442695
      %v485 = vpow.pop %v484
      %v486 = vmul.f32 %v444, 1.442695
      %v487 = vpow.pop %v486
      %v488 = vmul.f32 %v445, 1.442695
      %v489 = vpow.pop %v488
      %v490 = vmul.f32 %v446, 1.442695
      %v491 = vpow.pop %v490
      %v492 = vmul.f32 %v447, 1.442695
      %v493 = vpow.pop %v492
      %v494 = vmul.f32 %v448, 1.442695
      %v495 = vpow.pop %v494
      %v496 = vmul.f32 %v449, 1.442695
      %v497 = vpow.pop %v496
      %v498 = vmul.f32 %v450, 1.442695
      %v499 = vpow.pop %v498
      %v500 = vmul.f32 %v451, 1.442695
      %v501 = vpow.pop %v500
      %v502 = vmul.f32 %v452, 1.442695
      %v503 = vpow.pop %v502
      %v504 = vmul.f32 %v453, 1.442695
      %v505 = vpow.pop %v504
      %v506 = vmul.f32 %v454, 1.442695
      %v507 = vpow.pop %v506
      %v508 = vmul.f32 %v455, 1.442695
      %v509 = vpow.pop %v508
      %v510 = vmul.f32 %v456, 1.442695
      %v511 = vpow.pop %v510
      %v512 = vmul.f32 %v457, 1.442695
      %v513 = vpow.pop %v512
      %v514 = vmul.f32 %v458, 1.442695
      %v515 = vpow.pop %v514
      %v516 = vmul.f32 %v459, 1.442695
      %v517 = vpow.pop %v516
      %v518 = vmul.f32 %v460, 1.442695
      %v519 = vpow.pop %v518
      %v520 = vmul.f32 %v461, 1.442695
      %v521 = vpow.pop %v520
      %v522 = vmul.f32 %v462, 1.442695
      %v523 = vpow.pop %v522
      %v524 = vmul.f32 %v463, 1.442695
      %v525 = vpow.pop %v524
      %v526 = vmul.f32 %v464, 1.442695
      %v527 = vpow.pop %v526
      %v528 = vmul.f32 %v465, 1.442695
      %v529 = vpow.pop %v528
      %v530 = vadd.f32 %v467, 1.0
      %v531 = vadd.f32 %v469, 1.0
      %v532 = vadd.f32 %v471, 1.0
      %v533 = vadd.f32 %v473, 1.0
      %v534 = vadd.f32 %v475, 1.0
      %v535 = vadd.f32 %v477, 1.0
      %v536 = vadd.f32 %v479, 1.0
      %v537 = vadd.f32 %v481, 1.0
      %v538 = vadd.f32 %v483, 1.0
      %v539 = vadd.f32 %v485, 1.0
      %v540 = vadd.f32 %v487, 1.0
      %v541 = vadd.f32 %v489, 1.0
      %v542 = vadd.f32 %v491, 1.0
      %v543 = vadd.f32 %v493, 1.0
      %v544 = vadd.f32 %v495, 1.0
      %v545 = vadd.f32 %v497, 1.0
      %v546 = vadd.f32 %v499, 1.0
      %v547 = vadd.f32 %v501, 1.0
      %v548 = vadd.f32 %v503, 1.0
      %v549 = vadd.f32 %v505, 1.0
      %v550 = vadd.f32 %v507, 1.0
      %v551 = vadd.f32 %v509, 1.0
      %v552 = vadd.f32 %v511, 1.0
      %v553 = vadd.f32 %v513, 1.0
      %v554 = vadd.f32 %v515, 1.0
      %v555 = vadd.f32 %v517, 1.0
      %v556 = vadd.f32 %v519, 1.0
      %v557 = vadd.f32 %v521, 1.0
      %v558 = vadd.f32 %v523, 1.0
      %v559 = vadd.f32 %v525, 1.0
      %v560 = vadd.f32 %v527, 1.0
      %v561 = vadd.f32 %v529, 1.0
      %v562 = vrcp.pop %v530
      %v563 = vmul.f32 %v530, %v562
      %v564 = vsub.f32 1.0, %v563
      %v565 = vmul.f32 %v562, %v564
      %v566 = vadd.f32 %v562, %v565
      %vm567 = vweird.f32 %v530
      %vm568 = vweird.f32 %v562
      %vm569 = vmor %vm567, %vm568
      %v570 = vsel %vm569, %v562, %v566
      %v571 = vand.u32 2147483647, %v530
      %vm572 = vcmp.eq.f32.partialorder %v571, 8.507059e+37
      %v573 = vand.u32 %v530, 2147483648
      %v574 = vor.u32 1.1754944e-38, %v573
      %v575 = vsel %vm572, %v574, %v570
      %v576 = vmul.f32 1.0, %v575
      %v577 = vrcp.pop %v531
      %v578 = vmul.f32 %v531, %v577
      %v579 = vsub.f32 1.0, %v578
      %v580 = vmul.f32 %v577, %v579
      %v581 = vadd.f32 %v577, %v580
      %vm582 = vweird.f32 %v531
      %vm583 = vweird.f32 %v577
      %vm584 = vmor %vm582, %vm583
      %v585 = vsel %vm584, %v577, %v581
      %v586 = vand.u32 2147483647, %v531
      %vm587 = vcmp.eq.f32.partialorder %v586, 8.507059e+37
      %v588 = vand.u32 %v531, 2147483648
      %v589 = vor.u32 1.1754944e-38, %v588
      %v590 = vsel %vm587, %v589, %v585
      %v591 = vmul.f32 1.0, %v590
      %v592 = vrcp.pop %v532
      %v593 = vmul.f32 %v532, %v592
      %v594 = vsub.f32 1.0, %v593
      %v595 = vmul.f32 %v592, %v594
      %v596 = vadd.f32 %v592, %v595
      %vm597 = vweird.f32 %v532
      %vm598 = vweird.f32 %v592
      %vm599 = vmor %vm597, %vm598
      %v600 = vsel %vm599, %v592, %v596
      %v601 = vand.u32 2147483647, %v532
      %vm602 = vcmp.eq.f32.partialorder %v601, 8.507059e+37
      %v603 = vand.u32 %v532, 2147483648
      %v604 = vor.u32 1.1754944e-38, %v603
      %v605 = vsel %vm602, %v604, %v600
      %v606 = vmul.f32 1.0, %v605
      %v607 = vrcp.pop %v533
      %v608 = vmul.f32 %v533, %v607
      %v609 = vsub.f32 1.0, %v608
      %v610 = vmul.f32 %v607, %v609
      %v611 = vadd.f32 %v607, %v610
      %vm612 = vweird.f32 %v533
      %vm613 = vweird.f32 %v607
      %vm614 = vmor %vm612, %vm613
      %v615 = vsel %vm614, %v607, %v611
      %v616 = vand.u32 2147483647, %v533
      %vm617 = vcmp.eq.f32.partialorder %v616, 8.507059e+37
      %v618 = vand.u32 %v533, 2147483648
      %v619 = vor.u32 1.1754944e-38, %v618
      %v620 = vsel %vm617, %v619, %v615
      %v621 = vmul.f32 1.0, %v620
      %v622 = vrcp.pop %v534
      %v623 = vmul.f32 %v534, %v622
      %v624 = vsub.f32 1.0, %v623
      %v625 = vmul.f32 %v622, %v624
      %v626 = vadd.f32 %v622, %v625
      %vm627 = vweird.f32 %v534
      %vm628 = vweird.f32 %v622
      %vm629 = vmor %vm627, %vm628
      %v630 = vsel %vm629, %v622, %v626
      %v631 = vand.u32 2147483647, %v534
      %vm632 = vcmp.eq.f32.partialorder %v631, 8.507059e+37
      %v633 = vand.u32 %v534, 2147483648
      %v634 = vor.u32 1.1754944e-38, %v633
      %v635 = vsel %vm632, %v634, %v630
      %v636 = vmul.f32 1.0, %v635
      %v637 = vrcp.pop %v535
      %v638 = vmul.f32 %v535, %v637
      %v639 = vsub.f32 1.0, %v638
      %v640 = vmul.f32 %v637, %v639
      %v641 = vadd.f32 %v637, %v640
      %vm642 = vweird.f32 %v535
      %vm643 = vweird.f32 %v637
      %vm644 = vmor %vm642, %vm643
      %v645 = vsel %vm644, %v637, %v641
      %v646 = vand.u32 2147483647, %v535
      %vm647 = vcmp.eq.f32.partialorder %v646, 8.507059e+37
      %v648 = vand.u32 %v535, 2147483648
      %v649 = vor.u32 1.1754944e-38, %v648
      %v650 = vsel %vm647, %v649, %v645
      %v651 = vmul.f32 1.0, %v650
      %v652 = vrcp.pop %v536
      %v653 = vmul.f32 %v536, %v652
      %v654 = vsub.f32 1.0, %v653
      %v655 = vmul.f32 %v652, %v654
      %v656 = vadd.f32 %v652, %v655
      %vm657 = vweird.f32 %v536
      %vm658 = vweird.f32 %v652
      %vm659 = vmor %vm657, %vm658
      %v660 = vsel %vm659, %v652, %v656
      %v661 = vand.u32 2147483647, %v536
      %vm662 = vcmp.eq.f32.partialorder %v661, 8.507059e+37
      %v663 = vand.u32 %v536, 2147483648
      %v664 = vor.u32 1.1754944e-38, %v663
      %v665 = vsel %vm662, %v664, %v660
      %v666 = vmul.f32 1.0, %v665
      %v667 = vrcp.pop %v537
      %v668 = vmul.f32 %v537, %v667
      %v669 = vsub.f32 1.0, %v668
      %v670 = vmul.f32 %v667, %v669
      %v671 = vadd.f32 %v667, %v670
      %vm672 = vweird.f32 %v537
      %vm673 = vweird.f32 %v667
      %vm674 = vmor %vm672, %vm673
      %v675 = vsel %vm674, %v667, %v671
      %v676 = vand.u32 2147483647, %v537
      %vm677 = vcmp.eq.f32.partialorder %v676, 8.507059e+37
      %v678 = vand.u32 %v537, 2147483648
      %v679 = vor.u32 1.1754944e-38, %v678
      %v680 = vsel %vm677, %v679, %v675
      %v681 = vmul.f32 1.0, %v680
      %v682 = vrcp.pop %v538
      %v683 = vmul.f32 %v538, %v682
      %v684 = vsub.f32 1.0, %v683
      %v685 = vmul.f32 %v682, %v684
      %v686 = vadd.f32 %v682, %v685
      %vm687 = vweird.f32 %v538
      %vm688 = vweird.f32 %v682
      %vm689 = vmor %vm687, %vm688
      %v690 = vsel %vm689, %v682, %v686
      %v691 = vand.u32 2147483647, %v538
      %vm692 = vcmp.eq.f32.partialorder %v691, 8.507059e+37
      %v693 = vand.u32 %v538, 2147483648
      %v694 = vor.u32 1.1754944e-38, %v693
      %v695 = vsel %vm692, %v694, %v690
      %v696 = vmul.f32 1.0, %v695
      %v697 = vrcp.pop %v539
      %v698 = vmul.f32 %v539, %v697
      %v699 = vsub.f32 1.0, %v698
      %v700 = vmul.f32 %v697, %v699
      %v701 = vadd.f32 %v697, %v700
      %vm702 = vweird.f32 %v539
      %vm703 = vweird.f32 %v697
      %vm704 = vmor %vm702, %vm703
      %v705 = vsel %vm704, %v697, %v701
      %v706 = vand.u32 2147483647, %v539
      %vm707 = vcmp.eq.f32.partialorder %v706, 8.507059e+37
      %v708 = vand.u32 %v539, 2147483648
      %v709 = vor.u32 1.1754944e-38, %v708
      %v710 = vsel %vm707, %v709, %v705
      %v711 = vmul.f32 1.0, %v710
      %v712 = vrcp.pop %v540
      %v713 = vmul.f32 %v540, %v712
      %v714 = vsub.f32 1.0, %v713
      %v715 = vmul.f32 %v712, %v714
      %v716 = vadd.f32 %v712, %v715
      %vm717 = vweird.f32 %v540
      %vm718 = vweird.f32 %v712
      %vm719 = vmor %vm717, %vm718
      %v720 = vsel %vm719, %v712, %v716
      %v721 = vand.u32 2147483647, %v540
      %vm722 = vcmp.eq.f32.partialorder %v721, 8.507059e+37
      %v723 = vand.u32 %v540, 2147483648
      %v724 = vor.u32 1.1754944e-38, %v723
      %v725 = vsel %vm722, %v724, %v720
      %v726 = vmul.f32 1.0, %v725
      %v727 = vrcp.pop %v541
      %v728 = vmul.f32 %v541, %v727
      %v729 = vsub.f32 1.0, %v728
      %v730 = vmul.f32 %v727, %v729
      %v731 = vadd.f32 %v727, %v730
      %vm732 = vweird.f32 %v541
      %vm733 = vweird.f32 %v727
      %vm734 = vmor %vm732, %vm733
      %v735 = vsel %vm734, %v727, %v731
      %v736 = vand.u32 2147483647, %v541
      %vm737 = vcmp.eq.f32.partialorder %v736, 8.507059e+37
      %v738 = vand.u32 %v541, 2147483648
      %v739 = vor.u32 1.1754944e-38, %v738
      %v740 = vsel %vm737, %v739, %v735
      %v741 = vmul.f32 1.0, %v740
      %v742 = vrcp.pop %v542
      %v743 = vmul.f32 %v542, %v742
      %v744 = vsub.f32 1.0, %v743
      %v745 = vmul.f32 %v742, %v744
      %v746 = vadd.f32 %v742, %v745
      %vm747 = vweird.f32 %v542
      %vm748 = vweird.f32 %v742
      %vm749 = vmor %vm747, %vm748
      %v750 = vsel %vm749, %v742, %v746
      %v751 = vand.u32 2147483647, %v542
      %vm752 = vcmp.eq.f32.partialorder %v751, 8.507059e+37
      %v753 = vand.u32 %v542, 2147483648
      %v754 = vor.u32 1.1754944e-38, %v753
      %v755 = vsel %vm752, %v754, %v750
      %v756 = vmul.f32 1.0, %v755
      %v757 = vrcp.pop %v543
      %v758 = vmul.f32 %v543, %v757
      %v759 = vsub.f32 1.0, %v758
      %v760 = vmul.f32 %v757, %v759
      %v761 = vadd.f32 %v757, %v760
      %vm762 = vweird.f32 %v543
      %vm763 = vweird.f32 %v757
      %vm764 = vmor %vm762, %vm763
      %v765 = vsel %vm764, %v757, %v761
      %v766 = vand.u32 2147483647, %v543
      %vm767 = vcmp.eq.f32.partialorder %v766, 8.507059e+37
      %v768 = vand.u32 %v543, 2147483648
      %v769 = vor.u32 1.1754944e-38, %v768
      %v770 = vsel %vm767, %v769, %v765
      %v771 = vmul.f32 1.0, %v770
      %v772 = vrcp.pop %v544
      %v773 = vmul.f32 %v544, %v772
      %v774 = vsub.f32 1.0, %v773
      %v775 = vmul.f32 %v772, %v774
      %v776 = vadd.f32 %v772, %v775
      %vm777 = vweird.f32 %v544
      %vm778 = vweird.f32 %v772
      %vm779 = vmor %vm777, %vm778
      %v780 = vsel %vm779, %v772, %v776
      %v781 = vand.u32 2147483647, %v544
      %vm782 = vcmp.eq.f32.partialorder %v781, 8.507059e+37
      %v783 = vand.u32 %v544, 2147483648
      %v784 = vor.u32 1.1754944e-38, %v783
      %v785 = vsel %vm782, %v784, %v780
      %v786 = vmul.f32 1.0, %v785
      %v787 = vrcp.pop %v545
      %v788 = vmul.f32 %v545, %v787
      %v789 = vsub.f32 1.0, %v788
      %v790 = vmul.f32 %v787, %v789
      %v791 = vadd.f32 %v787, %v790
      %vm792 = vweird.f32 %v545
      %vm793 = vweird.f32 %v787
      %vm794 = vmor %vm792, %vm793
      %v795 = vsel %vm794, %v787, %v791
      %v796 = vand.u32 2147483647, %v545
      %vm797 = vcmp.eq.f32.partialorder %v796, 8.507059e+37
      %v798 = vand.u32 %v545, 2147483648
      %v799 = vor.u32 1.1754944e-38, %v798
      %v800 = vsel %vm797, %v799, %v795
      %v801 = vmul.f32 1.0, %v800
      %v802 = vrcp.pop %v546
      %v803 = vmul.f32 %v546, %v802
      %v804 = vsub.f32 1.0, %v803
      %v805 = vmul.f32 %v802, %v804
      %v806 = vadd.f32 %v802, %v805
      %vm807 = vweird.f32 %v546
      %vm808 = vweird.f32 %v802
      %vm809 = vmor %vm807, %vm808
      %v810 = vsel %vm809, %v802, %v806
      %v811 = vand.u32 2147483647, %v546
      %vm812 = vcmp.eq.f32.partialorder %v811, 8.507059e+37
      %v813 = vand.u32 %v546, 2147483648
      %v814 = vor.u32 1.1754944e-38, %v813
      %v815 = vsel %vm812, %v814, %v810
      %v816 = vmul.f32 1.0, %v815
      %v817 = vrcp.pop %v547
      %v818 = vmul.f32 %v547, %v817
      %v819 = vsub.f32 1.0, %v818
      %v820 = vmul.f32 %v817, %v819
      %v821 = vadd.f32 %v817, %v820
      %vm822 = vweird.f32 %v547
      %vm823 = vweird.f32 %v817
      %vm824 = vmor %vm822, %vm823
      %v825 = vsel %vm824, %v817, %v821
      %v826 = vand.u32 2147483647, %v547
      %vm827 = vcmp.eq.f32.partialorder %v826, 8.507059e+37
      %v828 = vand.u32 %v547, 2147483648
      %v829 = vor.u32 1.1754944e-38, %v828
      %v830 = vsel %vm827, %v829, %v825
      %v831 = vmul.f32 1.0, %v830
      %v832 = vrcp.pop %v548
      %v833 = vmul.f32 %v548, %v832
      %v834 = vsub.f32 1.0, %v833
      %v835 = vmul.f32 %v832, %v834
      %v836 = vadd.f32 %v832, %v835
      %vm837 = vweird.f32 %v548
      %vm838 = vweird.f32 %v832
      %vm839 = vmor %vm837, %vm838
      %v840 = vsel %vm839, %v832, %v836
      %v841 = vand.u32 2147483647, %v548
      %vm842 = vcmp.eq.f32.partialorder %v841, 8.507059e+37
      %v843 = vand.u32 %v548, 2147483648
      %v844 = vor.u32 1.1754944e-38, %v843
      %v845 = vsel %vm842, %v844, %v840
      %v846 = vmul.f32 1.0, %v845
      %v847 = vrcp.pop %v549
      %v848 = vmul.f32 %v549, %v847
      %v849 = vsub.f32 1.0, %v848
      %v850 = vmul.f32 %v847, %v849
      %v851 = vadd.f32 %v847, %v850
      %vm852 = vweird.f32 %v549
      %vm853 = vweird.f32 %v847
      %vm854 = vmor %vm852, %vm853
      %v855 = vsel %vm854, %v847, %v851
      %v856 = vand.u32 2147483647, %v549
      %vm857 = vcmp.eq.f32.partialorder %v856, 8.507059e+37
      %v858 = vand.u32 %v549, 2147483648
      %v859 = vor.u32 1.1754944e-38, %v858
      %v860 = vsel %vm857, %v859, %v855
      %v861 = vmul.f32 1.0, %v860
      %v862 = vrcp.pop %v550
      %v863 = vmul.f32 %v550, %v862
      %v864 = vsub.f32 1.0, %v863
      %v865 = vmul.f32 %v862, %v864
      %v866 = vadd.f32 %v862, %v865
      %vm867 = vweird.f32 %v550
      %vm868 = vweird.f32 %v862
      %vm869 = vmor %vm867, %vm868
      %v870 = vsel %vm869, %v862, %v866
      %v871 = vand.u32 2147483647, %v550
      %vm872 = vcmp.eq.f32.partialorder %v871, 8.507059e+37
      %v873 = vand.u32 %v550, 2147483648
      %v874 = vor.u32 1.1754944e-38, %v873
      %v875 = vsel %vm872, %v874, %v870
      %v876 = vmul.f32 1.0, %v875
      %v877 = vrcp.pop %v551
      %v878 = vmul.f32 %v551, %v877
      %v879 = vsub.f32 1.0, %v878
      %v880 = vmul.f32 %v877, %v879
      %v881 = vadd.f32 %v877, %v880
      %vm882 = vweird.f32 %v551
      %vm883 = vweird.f32 %v877
      %vm884 = vmor %vm882, %vm883
      %v885 = vsel %vm884, %v877, %v881
      %v886 = vand.u32 2147483647, %v551
      %vm887 = vcmp.eq.f32.partialorder %v886, 8.507059e+37
      %v888 = vand.u32 %v551, 2147483648
      %v889 = vor.u32 1.1754944e-38, %v888
      %v890 = vsel %vm887, %v889, %v885
      %v891 = vmul.f32 1.0, %v890
      %v892 = vrcp.pop %v552
      %v893 = vmul.f32 %v552, %v892
      %v894 = vsub.f32 1.0, %v893
      %v895 = vmul.f32 %v892, %v894
      %v896 = vadd.f32 %v892, %v895
      %vm897 = vweird.f32 %v552
      %vm898 = vweird.f32 %v892
      %vm899 = vmor %vm897, %vm898
      %v900 = vsel %vm899, %v892, %v896
      %v901 = vand.u32 2147483647, %v552
      %vm902 = vcmp.eq.f32.partialorder %v901, 8.507059e+37
      %v903 = vand.u32 %v552, 2147483648
      %v904 = vor.u32 1.1754944e-38, %v903
      %v905 = vsel %vm902, %v904, %v900
      %v906 = vmul.f32 1.0, %v905
      %v907 = vrcp.pop %v553
      %v908 = vmul.f32 %v553, %v907
      %v909 = vsub.f32 1.0, %v908
      %v910 = vmul.f32 %v907, %v909
      %v911 = vadd.f32 %v907, %v910
      %vm912 = vweird.f32 %v553
      %vm913 = vweird.f32 %v907
      %vm914 = vmor %vm912, %vm913
      %v915 = vsel %vm914, %v907, %v911
      %v916 = vand.u32 2147483647, %v553
      %vm917 = vcmp.eq.f32.partialorder %v916, 8.507059e+37
      %v918 = vand.u32 %v553, 2147483648
      %v919 = vor.u32 1.1754944e-38, %v918
      %v920 = vsel %vm917, %v919, %v915
      %v921 = vmul.f32 1.0, %v920
      %v922 = vrcp.pop %v554
      %v923 = vmul.f32 %v554, %v922
      %v924 = vsub.f32 1.0, %v923
      %v925 = vmul.f32 %v922, %v924
      %v926 = vadd.f32 %v922, %v925
      %vm927 = vweird.f32 %v554
      %vm928 = vweird.f32 %v922
      %vm929 = vmor %vm927, %vm928
      %v930 = vsel %vm929, %v922, %v926
      %v931 = vand.u32 2147483647, %v554
      %vm932 = vcmp.eq.f32.partialorder %v931, 8.507059e+37
      %v933 = vand.u32 %v554, 2147483648
      %v934 = vor.u32 1.1754944e-38, %v933
      %v935 = vsel %vm932, %v934, %v930
      %v936 = vmul.f32 1.0, %v935
      %v937 = vrcp.pop %v555
      %v938 = vmul.f32 %v555, %v937
      %v939 = vsub.f32 1.0, %v938
      %v940 = vmul.f32 %v937, %v939
      %v941 = vadd.f32 %v937, %v940
      %vm942 = vweird.f32 %v555
      %vm943 = vweird.f32 %v937
      %vm944 = vmor %vm942, %vm943
      %v945 = vsel %vm944, %v937, %v941
      %v946 = vand.u32 2147483647, %v555
      %vm947 = vcmp.eq.f32.partialorder %v946, 8.507059e+37
      %v948 = vand.u32 %v555, 2147483648
      %v949 = vor.u32 1.1754944e-38, %v948
      %v950 = vsel %vm947, %v949, %v945
      %v951 = vmul.f32 1.0, %v950
      %v952 = vrcp.pop %v556
      %v953 = vmul.f32 %v556, %v952
      %v954 = vsub.f32 1.0, %v953
      %v955 = vmul.f32 %v952, %v954
      %v956 = vadd.f32 %v952, %v955
      %vm957 = vweird.f32 %v556
      %vm958 = vweird.f32 %v952
      %vm959 = vmor %vm957, %vm958
      %v960 = vsel %vm959, %v952, %v956
      %v961 = vand.u32 2147483647, %v556
      %vm962 = vcmp.eq.f32.partialorder %v961, 8.507059e+37
      %v963 = vand.u32 %v556, 2147483648
      %v964 = vor.u32 1.1754944e-38, %v963
      %v965 = vsel %vm962, %v964, %v960
      %v966 = vmul.f32 1.0, %v965
      %v967 = vrcp.pop %v557
      %v968 = vmul.f32 %v557, %v967
      %v969 = vsub.f32 1.0, %v968
      %v970 = vmul.f32 %v967, %v969
      %v971 = vadd.f32 %v967, %v970
      %vm972 = vweird.f32 %v557
      %vm973 = vweird.f32 %v967
      %vm974 = vmor %vm972, %vm973
      %v975 = vsel %vm974, %v967, %v971
      %v976 = vand.u32 2147483647, %v557
      %vm977 = vcmp.eq.f32.partialorder %v976, 8.507059e+37
      %v978 = vand.u32 %v557, 2147483648
      %v979 = vor.u32 1.1754944e-38, %v978
      %v980 = vsel %vm977, %v979, %v975
      %v981 = vmul.f32 1.0, %v980
      %v982 = vrcp.pop %v558
      %v983 = vmul.f32 %v558, %v982
      %v984 = vsub.f32 1.0, %v983
      %v985 = vmul.f32 %v982, %v984
      %v986 = vadd.f32 %v982, %v985
      %vm987 = vweird.f32 %v558
      %vm988 = vweird.f32 %v982
      %vm989 = vmor %vm987, %vm988
      %v990 = vsel %vm989, %v982, %v986
      %v991 = vand.u32 2147483647, %v558
      %vm992 = vcmp.eq.f32.partialorder %v991, 8.507059e+37
      %v993 = vand.u32 %v558, 2147483648
      %v994 = vor.u32 1.1754944e-38, %v993
      %v995 = vsel %vm992, %v994, %v990
      %v996 = vmul.f32 1.0, %v995
      %v997 = vrcp.pop %v559
      %v998 = vmul.f32 %v559, %v997
      %v999 = vsub.f32 1.0, %v998
      %v1000 = vmul.f32 %v997, %v999
      %v1001 = vadd.f32 %v997, %v1000
      %vm1002 = vweird.f32 %v559
      %vm1003 = vweird.f32 %v997
      %vm1004 = vmor %vm1002, %vm1003
      %v1005 = vsel %vm1004, %v997, %v1001
      %v1006 = vand.u32 2147483647, %v559
      %vm1007 = vcmp.eq.f32.partialorder %v1006, 8.507059e+37
      %v1008 = vand.u32 %v559, 2147483648
      %v1009 = vor.u32 1.1754944e-38, %v1008
      %v1010 = vsel %vm1007, %v1009, %v1005
      %v1011 = vmul.f32 1.0, %v1010
      %v1012 = vrcp.pop %v560
      %v1013 = vmul.f32 %v560, %v1012
      %v1014 = vsub.f32 1.0, %v1013
      %v1015 = vmul.f32 %v1012, %v1014
      %v1016 = vadd.f32 %v1012, %v1015
      %vm1017 = vweird.f32 %v560
      %vm1018 = vweird.f32 %v1012
      %vm1019 = vmor %vm1017, %vm1018
      %v1020 = vsel %vm1019, %v1012, %v1016
      %v1021 = vand.u32 2147483647, %v560
      %vm1022 = vcmp.eq.f32.partialorder %v1021, 8.507059e+37
      %v1023 = vand.u32 %v560, 2147483648
      %v1024 = vor.u32 1.1754944e-38, %v1023
      %v1025 = vsel %vm1022, %v1024, %v1020
      %v1026 = vmul.f32 1.0, %v1025
      %v1027 = vrcp.pop %v561
      %v1028 = vmul.f32 %v561, %v1027
      %v1029 = vsub.f32 1.0, %v1028
      %v1030 = vmul.f32 %v1027, %v1029
      %v1031 = vadd.f32 %v1027, %v1030
      %vm1032 = vweird.f32 %v561
      %vm1033 = vweird.f32 %v1027
      %vm1034 = vmor %vm1032, %vm1033
      %v1035 = vsel %vm1034, %v1027, %v1031
      %v1036 = vand.u32 2147483647, %v561
      %vm1037 = vcmp.eq.f32.partialorder %v1036, 8.507059e+37
      %v1038 = vand.u32 %v561, 2147483648
      %v1039 = vor.u32 1.1754944e-38, %v1038
      %v1040 = vsel %vm1037, %v1039, %v1035
      %v1041 = vmul.f32 1.0, %v1040
      %v1042 = vmul.f32 %v355, %v576
      %v1043 = vmul.f32 %v357, %v591
      %v1044 = vmul.f32 %v360, %v606
      %v1045 = vmul.f32 %v362, %v621
      %v1046 = vmul.f32 %v365, %v636
      %v1047 = vmul.f32 %v367, %v651
      %v1048 = vmul.f32 %v370, %v666
      %v1049 = vmul.f32 %v372, %v681
      %v1050 = vmul.f32 %v375, %v696
      %v1051 = vmul.f32 %v377, %v711
      %v1052 = vmul.f32 %v380, %v726
      %v1053 = vmul.f32 %v382, %v741
      %v1054 = vmul.f32 %v385, %v756
      %v1055 = vmul.f32 %v387, %v771
      %v1056 = vmul.f32 %v390, %v786
      %v1057 = vmul.f32 %v392, %v801
      %v1058 = vmul.f32 %v395, %v816
      %v1059 = vmul.f32 %v397, %v831
      %v1060 = vmul.f32 %v400, %v846
      %v1061 = vmul.f32 %v402, %v861
      %v1062 = vmul.f32 %v405, %v876
      %v1063 = vmul.f32 %v407, %v891
      %v1064 = vmul.f32 %v410, %v906
      %v1065 = vmul.f32 %v412, %v921
      %v1066 = vmul.f32 %v415, %v936
      %v1067 = vmul.f32 %v417, %v951
      %v1068 = vmul.f32 %v420, %v966
      %v1069 = vmul.f32 %v422, %v981
      %v1070 = vmul.f32 %v425, %v996
      %v1071 = vmul.f32 %v427, %v1011
      %v1072 = vmul.f32 %v430, %v1026
      %v1073 = vmul.f32 %v432, %v1041
      %1074 = vst.msk [vmem:[%s172] sm:$0xff] %vm292, %v1042
      %1075 = vst.msk [vmem:[%s172 + $0x8] sm:$0xff] %vm292, %v1043
      %1076 = vst.msk [vmem:[%s172 + $0x10] sm:$0xff] %vm292, %v1044
      %1077 = vst.msk [vmem:[%s172 + $0x18] sm:$0xff] %vm292, %v1045
      %1078 = vst.msk [vmem:[%s172 + $0x20] sm:$0xff] %vm292, %v1046
      %1079 = vst.msk [vmem:[%s172 + $0x28] sm:$0xff] %vm292, %v1047
      %1080 = vst.msk [vmem:[%s172 + $0x30] sm:$0xff] %vm292, %v1048
      %1081 = vst.msk [vmem:[%s172 + $0x38] sm:$0xff] %vm292, %v1049
      %1082 = vst.msk [vmem:[%s172 + $0x40] sm:$0xff] %vm292, %v1050
      %1083 = vst.msk [vmem:[%s172 + $0x48] sm:$0xff] %vm292, %v1051
      %1084 = vst.msk [vmem:[%s172 + $0x50] sm:$0xff] %vm292, %v1052
      %1085 = vst.msk [vmem:[%s172 + $0x58] sm:$0xff] %vm292, %v1053
      %1086 = vst.msk [vmem:[%s172 + $0x60] sm:$0xff] %vm292, %v1054
      %1087 = vst.msk [vmem:[%s172 + $0x68] sm:$0xff] %vm292, %v1055
      %1088 = vst.msk [vmem:[%s172 + $0x70] sm:$0xff] %vm292, %v1056
      %1089 = vst.msk [vmem:[%s172 + $0x78] sm:$0xff] %vm292, %v1057
      %1090 = vst.msk [vmem:[%s172 + $0x80] sm:$0xff] %vm292, %v1058
      %1091 = vst.msk [vmem:[%s172 + $0x88] sm:$0xff] %vm292, %v1059
      %1092 = vst.msk [vmem:[%s172 + $0x90] sm:$0xff] %vm292, %v1060
      %1093 = vst.msk [vmem:[%s172 + $0x98] sm:$0xff] %vm292, %v1061
      %1094 = vst.msk [vmem:[%s172 + $0xa0] sm:$0xff] %vm292, %v1062
      %1095 = vst.msk [vmem:[%s172 + $0xa8] sm:$0xff] %vm292, %v1063
      %1096 = vst.msk [vmem:[%s172 + $0xb0] sm:$0xff] %vm292, %v1064
      %1097 = vst.msk [vmem:[%s172 + $0xb8] sm:$0xff] %vm292, %v1065
      %1098 = vst.msk [vmem:[%s172 + $0xc0] sm:$0xff] %vm292, %v1066
      %1099 = vst.msk [vmem:[%s172 + $0xc8] sm:$0xff] %vm292, %v1067
      %1100 = vst.msk [vmem:[%s172 + $0xd0] sm:$0xff] %vm292, %v1068
      %1101 = vst.msk [vmem:[%s172 + $0xd8] sm:$0xff] %vm292, %v1069
      %1102 = vst.msk [vmem:[%s172 + $0xe0] sm:$0xff] %vm292, %v1070
      %1103 = vst.msk [vmem:[%s172 + $0xe8] sm:$0xff] %vm292, %v1071
      %1104 = vst.msk [vmem:[%s172 + $0xf0] sm:$0xff] %vm292, %v1072
      %1105 = vst.msk [vmem:[%s172 + $0xf8] sm:$0xff] %vm292, %v1073
      %s1106 = smul.u32 32, %s14
      %p1107 = scmp.lt.s32.totalorder %s1106, 63
      %s1108 = scalar_select %p1107, %s1106, 63
      %s1109 = smul.addr %s1108, 8
      %s1110 = scalar_lea.vmem %s3, %s1109
      // Predicated region
      $region33: #{c3_forward.5} parent=31 // pred_check
        %p1111 = pneg %p100
      $region34: #{c3_forward.5} parent=31 // pred_check_branch
        %1113 = sbr.rel (%p1111) target = $region36
      $region35: #{c3_forward.5} parent=31 // pred_region
        %s1114 = smul.u32 32, %s14
      $region36: #{c3_forward.5} parent=31 // pred_fallthru
        _
    $region32: #{c3_forward.5} parent=5 // pred_fallthru
      _
    %p1115 = scmp.le.s32.totalorder 2, %s9
    // Predicated region
    $region37: #{c3_forward.5} parent=5 // pred_check
      %p1116 = pneg %p1115
    $region38: #{c3_forward.5} parent=5 // pred_check_branch
      %1118 = sbr.rel (%p1116) target = $region40
    $region39: #{c3_forward.5} parent=5 // pred_region
      %s1119 = ssub.s32 %s9, 2
      // Predicated region
      $region41: #{c3_forward.5} parent=39 // pred_check
        %p1120 = pneg %p106
      $region42: #{c3_forward.5} parent=39 // pred_check_branch
        %1122 = sbr.rel (%p1120) target = $region44
      $region43: #{c3_forward.5} parent=39 // pred_region
        %s1123 = smul.u32 32, %s15
        %p1124 = scmp.lt.s32.totalorder %s1123, 63
        %s1125 = scalar_select %p1124, %s1123, 63
        %s1126 = smul.addr %s1125, 8
        %s1127 = scalar_lea.vmem %s3, %s1126
      $region44: #{c3_forward.5} parent=39 // pred_fallthru
        _
    $region40: #{c3_forward.5} parent=5 // pred_fallthru
      _
  $region6: #{c3_forward.5} parent=0 // loop_footer
    %s13 = sadd.s32 1, %s9
  $region7: #{c3_forward.5} parent=0 // loop_footer_branch
    %8 = sbr.rel target = $region3
  $region8: #{c3_forward.5} parent=0 // loop_exit
    _

// kernel: c3_forward.4
$region0: #{c3_forward.4}
  #allocation0 [shape = 'u32[]', space=smem, size = 0x4, offset = 0x4, fixed_abs, tag = 'smem constant byte address 0x4 - core index']
  #allocation1 [shape = 'u32[72,128]{1,0:T(1,128)}', space=vmem, size = 0x9000, scoped, tag = 'internal scratch']
  %s0 = inlined_call_operand.vmem [shape: bf16[512,4], index: 0, kind: input, shape index: {}]
  %s1 = inlined_call_operand.vmem [shape: bf16[4,2], index: 1, kind: input, shape index: {}]
  %s2 = inlined_call_operand.vmem [shape: f32[1,2], index: 2, kind: input, shape index: {}]
  %s3 = inlined_call_operand.vmem [shape: bf16[4,2], index: 3, kind: input, shape index: {}]
  %s4 = inlined_call_operand.vmem [shape: f32[1,2], index: 4, kind: input, shape index: {}]
  %s5 = inlined_call_operand.vmem [shape: f32[512,2], index: 5, kind: output, shape index: {0}]
  %s6 = inlined_call_operand.vmem [shape: f32[512,2], index: 6, kind: output, shape index: {1}]
  %7 = xla_tuple %s5, %s6
  %s8 = sld [smem:[#allocation0]]
  $region61: #{c3_forward.4} parent=0
    _
  %s10 = ssub.s32 1, %s8
  %s11 = scalar_select 0, %s10, %s8
  loop: start=0, step=1, limit=4
  $region2: #{c3_forward.4} parent=0 // loop_pre_header
    _
  $region3: #{c3_forward.4} parent=0 // loop_header
    %s13 = sphi 0, %s17
    %p14 = scmp.ge.s32.totalorder %s13, 4
    %s23 = sphi 0, %s25
    %s26 = sphi 0, %s23
    %s27 = sphi 0, %s26
    %s43 = sphi 0, %s27
    %s47 = sphi 0, %s47
    %s49 = sphi 0, %s47
    %s50 = sphi 0, %s49
    %s64 = sphi 0, %s50
    %s68 = sphi 0, %s68
    %s70 = sphi 0, %s68
    %s71 = sphi 0, %s70
    %s85 = sphi 0, %s71
    %s89 = sphi 0, %s89
    %s91 = sphi 0, %s89
    %s92 = sphi 0, %s91
    %s106 = sphi 0, %s92
    %s110 = sphi 0, %s110
    %s112 = sphi 0, %s110
    %s113 = sphi 0, %s112
    %s127 = sphi 0, %s113
    %s133 = sphi 0, %s135
    %s136 = sphi 0, %s133
    %s137 = sphi 0, %s136
    %s153 = sphi 0, %s137
    %s159 = sphi 0, %s161
    %s162 = sphi 0, %s159
    %s163 = sphi 0, %s162
    %s179 = sphi 0, %s163
  $region4: #{c3_forward.4} parent=0 // loop_header_branch
    %16 = sbr.rel (%p14) target = $region8
  $region5: #{c3_forward.4} parent=0 // loop_body
    %s18 = ssub.s32 %s13, 1
    %s19 = ssub.s32 %s13, 2
    %s20 = sadd.s32 %s13, 1
    %s21 = ssub.s32 %s13, %s20
    %p22 = scmp.eq.s32.totalorder %s21, 0
    %s24 = sadd.s32 %s23, 1
    %s25 = scalar_select %p22, %s23, %s24
    %p28 = pneg %p22
    %p29 = scmp.eq.s32.totalorder %s13, 1
    %p30 = por %p28, %p29
    %p31 = scmp.ne.s32.totalorder %s23, %s26
    %p32 = scmp.eq.s32.totalorder %s13, 0
    %p33 = por %p31, %p32
    %p34 = scmp.ne.s32.totalorder %s23, %s26
    %p35 = scmp.eq.s32.totalorder %s18, 1
    %p36 = por %p34, %p35
    %p37 = scmp.ne.s32.totalorder %s26, %s27
    %p38 = scmp.eq.s32.totalorder %s18, 0
    %p39 = por %p37, %p38
    %p40 = scmp.ne.s32.totalorder %s26, %s27
    %p41 = scmp.eq.s32.totalorder %s19, 1
    %p42 = por %p40, %p41
    %p44 = scmp.ne.s32.totalorder %s27, %s43
    %p45 = scmp.eq.s32.totalorder %s19, 0
    %p46 = por %p44, %p45
    %s48 = sadd.s32 %s47, 1
    %p51 = scmp.eq.s32.totalorder %s13, 1
    %p52 = scmp.ne.s32.totalorder %s47, %s49
    %p53 = scmp.eq.s32.totalorder %s13, 0
    %p54 = por %p52, %p53
    %p55 = scmp.ne.s32.totalorder %s47, %s49
    %p56 = scmp.eq.s32.totalorder %s18, 1
    %p57 = por %p55, %p56
    %p58 = scmp.ne.s32.totalorder %s49, %s50
    %p59 = scmp.eq.s32.totalorder %s18, 0
    %p60 = por %p58, %p59
    %p61 = scmp.ne.s32.totalorder %s49, %s50
    %p62 = scmp.eq.s32.totalorder %s19, 1
    %p63 = por %p61, %p62
    %p65 = scmp.ne.s32.totalorder %s50, %s64
    %p66 = scmp.eq.s32.totalorder %s19, 0
    %p67 = por %p65, %p66
    %s69 = sadd.s32 %s68, 1
    %p72 = scmp.eq.s32.totalorder %s13, 1
    %p73 = scmp.ne.s32.totalorder %s68, %s70
    %p74 = scmp.eq.s32.totalorder %s13, 0
    %p75 = por %p73, %p74
    %p76 = scmp.ne.s32.totalorder %s68, %s70
    %p77 = scmp.eq.s32.totalorder %s18, 1
    %p78 = por %p76, %p77
    %p79 = scmp.ne.s32.totalorder %s70, %s71
    %p80 = scmp.eq.s32.totalorder %s18, 0
    %p81 = por %p79, %p80
    %p82 = scmp.ne.s32.totalorder %s70, %s71
    %p83 = scmp.eq.s32.totalorder %s19, 1
    %p84 = por %p82, %p83
    %p86 = scmp.ne.s32.totalorder %s71, %s85
    %p87 = scmp.eq.s32.totalorder %s19, 0
    %p88 = por %p86, %p87
    %s90 = sadd.s32 %s89, 1
    %p93 = scmp.eq.s32.totalorder %s13, 1
    %p94 = scmp.ne.s32.totalorder %s89, %s91
    %p95 = scmp.eq.s32.totalorder %s13, 0
    %p96 = por %p94, %p95
    %p97 = scmp.ne.s32.totalorder %s89, %s91
    %p98 = scmp.eq.s32.totalorder %s18, 1
    %p99 = por %p97, %p98
    %p100 = scmp.ne.s32.totalorder %s91, %s92
    %p101 = scmp.eq.s32.totalorder %s18, 0
    %p102 = por %p100, %p101
    %p103 = scmp.ne.s32.totalorder %s91, %s92
    %p104 = scmp.eq.s32.totalorder %s19, 1
    %p105 = por %p103, %p104
    %p107 = scmp.ne.s32.totalorder %s92, %s106
    %p108 = scmp.eq.s32.totalorder %s19, 0
    %p109 = por %p107, %p108
    %s111 = sadd.s32 %s110, 1
    %p114 = scmp.eq.s32.totalorder %s13, 1
    %p115 = scmp.ne.s32.totalorder %s110, %s112
    %p116 = scmp.eq.s32.totalorder %s13, 0
    %p117 = por %p115, %p116
    %p118 = scmp.ne.s32.totalorder %s110, %s112
    %p119 = scmp.eq.s32.totalorder %s18, 1
    %p120 = por %p118, %p119
    %p121 = scmp.ne.s32.totalorder %s112, %s113
    %p122 = scmp.eq.s32.totalorder %s18, 0
    %p123 = por %p121, %p122
    %p124 = scmp.ne.s32.totalorder %s112, %s113
    %p125 = scmp.eq.s32.totalorder %s19, 1
    %p126 = por %p124, %p125
    %p128 = scmp.ne.s32.totalorder %s113, %s127
    %p129 = scmp.eq.s32.totalorder %s19, 0
    %p130 = por %p128, %p129
    %s131 = ssub.s32 %s13, %s20
    %p132 = scmp.eq.s32.totalorder %s131, 0
    %s134 = sadd.s32 %s133, 1
    %s135 = scalar_select %p132, %s133, %s134
    %p138 = pneg %p132
    %p139 = scmp.eq.s32.totalorder %s13, 1
    %p140 = por %p138, %p139
    %p141 = scmp.ne.s32.totalorder %s133, %s136
    %p142 = scmp.eq.s32.totalorder %s13, 0
    %p143 = por %p141, %p142
    %p144 = scmp.ne.s32.totalorder %s133, %s136
    %p145 = scmp.eq.s32.totalorder %s18, 1
    %p146 = por %p144, %p145
    %p147 = scmp.ne.s32.totalorder %s136, %s137
    %p148 = scmp.eq.s32.totalorder %s18, 0
    %p149 = por %p147, %p148
    %p150 = scmp.ne.s32.totalorder %s136, %s137
    %p151 = scmp.eq.s32.totalorder %s19, 1
    %p152 = por %p150, %p151
    %p154 = scmp.ne.s32.totalorder %s137, %s153
    %p155 = scmp.eq.s32.totalorder %s19, 0
    %p156 = por %p154, %p155
    %s157 = ssub.s32 %s13, %s20
    %p158 = scmp.eq.s32.totalorder %s157, 0
    %s160 = sadd.s32 %s159, 1
    %s161 = scalar_select %p158, %s159, %s160
    %p164 = pneg %p158
    %p165 = scmp.eq.s32.totalorder %s13, 1
    %p166 = por %p164, %p165
    %p167 = scmp.ne.s32.totalorder %s159, %s162
    %p168 = scmp.eq.s32.totalorder %s13, 0
    %p169 = por %p167, %p168
    %p170 = scmp.ne.s32.totalorder %s159, %s162
    %p171 = scmp.eq.s32.totalorder %s18, 1
    %p172 = por %p170, %p171
    %p173 = scmp.ne.s32.totalorder %s162, %s163
    %p174 = scmp.eq.s32.totalorder %s18, 0
    %p175 = por %p173, %p174
    %p176 = scmp.ne.s32.totalorder %s162, %s163
    %p177 = scmp.eq.s32.totalorder %s19, 1
    %p178 = por %p176, %p177
    %p180 = scmp.ne.s32.totalorder %s163, %s179
    %p181 = scmp.eq.s32.totalorder %s19, 0
    %p182 = por %p180, %p181
    %p183 = scmp.le.s32.totalorder 1, %s13
    %p184 = scmp.lt.s32.totalorder %s13, 3
    %p185 = pnand %p183, %p184
    %p186 = pneg %p185
    // Predicated region
    $region9: #{c3_forward.4} parent=5 // pred_check
      _
    $region10: #{c3_forward.4} parent=5 // pred_check_branch
      %188 = sbr.rel (%p185) target = $region12
    $region11: #{c3_forward.4} parent=5 // pred_region
      %s189 = ssub.s32 %s13, 1
      // Predicated region
      $region13: #{c3_forward.4} parent=11 // pred_check
        %p190 = pneg %p60
      $region14: #{c3_forward.4} parent=11 // pred_check_branch
        %192 = sbr.rel (%p190) target = $region16
      $region15: #{c3_forward.4} parent=11 // pred_region
        _
      $region16: #{c3_forward.4} parent=11 // pred_fallthru
        _
      // Predicated region
      $region17: #{c3_forward.4} parent=11 // pred_check
        %p193 = pneg %p81
      $region18: #{c3_forward.4} parent=11 // pred_check_branch
        %195 = sbr.rel (%p193) target = $region20
      $region19: #{c3_forward.4} parent=11 // pred_region
        _
      $region20: #{c3_forward.4} parent=11 // pred_fallthru
        _
      // Predicated region
      $region21: #{c3_forward.4} parent=11 // pred_check
        %p196 = pneg %p102
      $region22: #{c3_forward.4} parent=11 // pred_check_branch
        %198 = sbr.rel (%p196) target = $region24
      $region23: #{c3_forward.4} parent=11 // pred_region
        _
      $region24: #{c3_forward.4} parent=11 // pred_fallthru
        _
      // Predicated region
      $region25: #{c3_forward.4} parent=11 // pred_check
        %p199 = pneg %p123
      $region26: #{c3_forward.4} parent=11 // pred_check_branch
        %201 = sbr.rel (%p199) target = $region28
      $region27: #{c3_forward.4} parent=11 // pred_region
        _
      $region28: #{c3_forward.4} parent=11 // pred_fallthru
        _
    $region12: #{c3_forward.4} parent=5 // pred_fallthru
      _
    %p202 = scmp.lt.s32.totalorder %s13, 2
    // Predicated region
    $region29: #{c3_forward.4} parent=5 // pred_check
      %p203 = pneg %p202
    $region30: #{c3_forward.4} parent=5 // pred_check_branch
      %205 = sbr.rel (%p203) target = $region32
    $region31: #{c3_forward.4} parent=5 // pred_region
      // Predicated region
      $region33: #{c3_forward.4} parent=31 // pred_check
        %p206 = pneg %p33
      $region34: #{c3_forward.4} parent=31 // pred_check_branch
        %208 = sbr.rel (%p206) target = $region36
      $region35: #{c3_forward.4} parent=31 // pred_region
        %s209 = smul.u32 32, %s13
        %p210 = scmp.lt.s32.totalorder %s209, 63
        %s211 = scalar_select %p210, %s209, 63
        %s212 = smul.addr %s211, 4
        %s213 = scalar_lea.vmem %s0, %s212
        %s214 = smul.u32 32, %s13
      $region36: #{c3_forward.4} parent=31 // pred_fallthru
        _
    $region32: #{c3_forward.4} parent=5 // pred_fallthru
      _
    %p215 = scmp.le.s32.totalorder 1, %s13
    %p216 = scmp.lt.s32.totalorder %s13, 3
    %p217 = pnand %p215, %p216
    %p218 = pneg %p217
    // Predicated region
    $region37: #{c3_forward.4} parent=5 // pred_check
      _
    $region38: #{c3_forward.4} parent=5 // pred_check_branch
      %220 = sbr.rel (%p217) target = $region40
    $region39: #{c3_forward.4} parent=5 // pred_region
      %s221 = ssub.s32 %s13, 1
      %s222 = smul.u32 32, %s18
      %p223 = scmp.lt.s32.totalorder %s222, 63
      %s224 = scalar_select %p223, %s222, 63
      %s225 = smul.addr %s224, 4
      %s226 = scalar_lea.vmem %s0, %s225
      %p227 = pneg %p39
      %p228 = pneg %p36
      %p229 = pneg %p60
      %p230 = pneg %p57
      %p231 = pneg %p81
      %p232 = pneg %p78
      %p233 = pneg %p102
      %p234 = pneg %p99
      %p235 = pneg %p123
      %p236 = pneg %p120
      %p237 = pneg %p149
      %p238 = pneg %p146
      %s239 = smul.u32 32, %s18
      %p240 = scmp.lt.s32.totalorder %s239, 63
      %s241 = scalar_select %p240, %s239, 63
      %s242 = smul.addr %s241, 8
      %s243 = scalar_lea.vmem %s5, %s242
      %p244 = pneg %p175
      %p245 = pneg %p172
      %s246 = smul.u32 32, %s18
      %p247 = scmp.lt.s32.totalorder %s246, 63
      %s248 = scalar_select %p247, %s246, 63
      %s249 = smul.addr %s248, 8
      %s250 = scalar_lea.vmem %s6, %s249
      %s251 = smul.u32 32, %s18
      %p252 = scmp.lt.s32.totalorder %s251, 63
      %s253 = scalar_select %p252, %s251, 63
      %s254 = smul.addr %s253, 4
      %s255 = scalar_lea.vmem %s0, %s254
      %s256 = smul.u32 32, %s18
      %s257 = smul.u32 32, %s18
      %p258 = scmp.lt.s32.totalorder %s257, 63
      %s259 = scalar_select %p258, %s257, 63
      %s260 = smul.addr %s259, 8
      %s261 = scalar_lea.vmem %s5, %s260
      %s262 = smul.u32 32, %s18
      %s263 = smul.u32 32, %s18
      %p264 = scmp.lt.s32.totalorder %s263, 63
      %s265 = scalar_select %p264, %s263, 63
      %s266 = smul.addr %s265, 8
      %s267 = scalar_lea.vmem %s6, %s266
      %s268 = smul.u32 32, %s18
      %v270 = vld [vmem:[%s255] sm:$0xf]
      %v271 = vld [vmem:[%s255 + $0x4] sm:$0xf]
      %v272 = vld [vmem:[%s255 + $0x8] sm:$0xf]
      %v273 = vld [vmem:[%s255 + $0xc] sm:$0xf]
      %v274 = vld [vmem:[%s255 + $0x10] sm:$0xf]
      %v275 = vld [vmem:[%s255 + $0x14] sm:$0xf]
      %v276 = vld [vmem:[%s255 + $0x18] sm:$0xf]
      %v277 = vld [vmem:[%s255 + $0x1c] sm:$0xf]
      %v278 = vld [vmem:[%s255 + $0x20] sm:$0xf]
      %v279 = vld [vmem:[%s255 + $0x24] sm:$0xf]
      %v280 = vld [vmem:[%s255 + $0x28] sm:$0xf]
      %v281 = vld [vmem:[%s255 + $0x2c] sm:$0xf]
      %v282 = vld [vmem:[%s255 + $0x30] sm:$0xf]
      %v283 = vld [vmem:[%s255 + $0x34] sm:$0xf]
      %v284 = vld [vmem:[%s255 + $0x38] sm:$0xf]
      %v285 = vld [vmem:[%s255 + $0x3c] sm:$0xf]
      %v286 = vld [vmem:[%s255 + $0x40] sm:$0xf]
      %v287 = vld [vmem:[%s255 + $0x44] sm:$0xf]
      %v288 = vld [vmem:[%s255 + $0x48] sm:$0xf]
      %v289 = vld [vmem:[%s255 + $0x4c] sm:$0xf]
      %v290 = vld [vmem:[%s255 + $0x50] sm:$0xf]
      %v291 = vld [vmem:[%s255 + $0x54] sm:$0xf]
      %v292 = vld [vmem:[%s255 + $0x58] sm:$0xf]
      %v293 = vld [vmem:[%s255 + $0x5c] sm:$0xf]
      %v294 = vld [vmem:[%s255 + $0x60] sm:$0xf]
      %v295 = vld [vmem:[%s255 + $0x64] sm:$0xf]
      %v296 = vld [vmem:[%s255 + $0x68] sm:$0xf]
      %v297 = vld [vmem:[%s255 + $0x6c] sm:$0xf]
      %v298 = vld [vmem:[%s255 + $0x70] sm:$0xf]
      %v299 = vld [vmem:[%s255 + $0x74] sm:$0xf]
      %v300 = vld [vmem:[%s255 + $0x78] sm:$0xf]
      %v301 = vld [vmem:[%s255 + $0x7c] sm:$0xf]
      %v302 = vld [vmem:[%s1] sm:$0x3]
      %v303 = vld [vmem:[%s2] sm:$0x1]
      %v305 = vperm.slane %v303, 0
      %v339 = vunpack.c.l.b16 %v270
      %v340 = vunpack.c.l.b16 %v271
      %v341 = vunpack.c.l.b16 %v272
      %v342 = vunpack.c.l.b16 %v273
      %v343 = vunpack.c.l.b16 %v274
      %v344 = vunpack.c.l.b16 %v275
      %v345 = vunpack.c.l.b16 %v276
      %v346 = vunpack.c.l.b16 %v277
      %v347 = vunpack.c.l.b16 %v278
      %v348 = vunpack.c.l.b16 %v279
      %v349 = vunpack.c.l.b16 %v280
      %v350 = vunpack.c.l.b16 %v281
      %v351 = vunpack.c.l.b16 %v282
      %v352 = vunpack.c.l.b16 %v283
      %v353 = vunpack.c.l.b16 %v284
      %v354 = vunpack.c.l.b16 %v285
      %v355 = vunpack.c.l.b16 %v286
      %v356 = vunpack.c.l.b16 %v287
      %v357 = vunpack.c.l.b16 %v288
      %v358 = vunpack.c.l.b16 %v289
      %v359 = vunpack.c.l.b16 %v290
      %v360 = vunpack.c.l.b16 %v291
      %v361 = vunpack.c.l.b16 %v292
      %v362 = vunpack.c.l.b16 %v293
      %v363 = vunpack.c.l.b16 %v294
      %v364 = vunpack.c.l.b16 %v295
      %v365 = vunpack.c.l.b16 %v296
      %v366 = vunpack.c.l.b16 %v297
      %v367 = vunpack.c.l.b16 %v298
      %v368 = vunpack.c.l.b16 %v299
      %v369 = vunpack.c.l.b16 %v300
      %v370 = vunpack.c.l.b16 %v301
      %v371 = vpack.c.b16 %v340, %v339
      %v372 = vpack.c.b16 %v342, %v341
      %v373 = vpack.c.b16 %v344, %v343
      %v374 = vpack.c.b16 %v346, %v345
      %v375 = vpack.c.b16 %v348, %v347
      %v376 = vpack.c.b16 %v350, %v349
      %v377 = vpack.c.b16 %v352, %v351
      %v378 = vpack.c.b16 %v354, %v353
      %v379 = vpack.c.b16 %v356, %v355
      %v380 = vpack.c.b16 %v358, %v357
      %v381 = vpack.c.b16 %v360, %v359
      %v382 = vpack.c.b16 %v362, %v361
      %v383 = vpack.c.b16 %v364, %v363
      %v384 = vpack.c.b16 %v366, %v365
      %v385 = vpack.c.b16 %v368, %v367
      %v386 = vpack.c.b16 %v370, %v369
      %vm387 = vcmask 31744
      %v389 = vsel %vm387, %v371, 0
      %v392 = vsel %vm387, %v372, 0
      %v395 = vsel %vm387, %v373, 0
      %v398 = vsel %vm387, %v374, 0
      %v401 = vsel %vm387, %v375, 0
      %v404 = vsel %vm387, %v376, 0
      %v407 = vsel %vm387, %v377, 0
      %v410 = vsel %vm387, %v378, 0
      %v413 = vsel %vm387, %v379, 0
      %v416 = vsel %vm387, %v380, 0
      %v419 = vsel %vm387, %v381, 0
      %v422 = vsel %vm387, %v382, 0
      %v425 = vsel %vm387, %v383, 0
      %v428 = vsel %vm387, %v384, 0
      %v431 = vsel %vm387, %v385, 0
      %v434 = vsel %vm387, %v386, 0
      %vm436 = vcmask 1041408
      %v438 = vsel %vm436, %v302, 0
      %440 = vmatpush.bf16.msra.mxu0 0
      %441 = vmatpush.bf16.msra.mxu0 0
      %442 = vmatpush.bf16.msra.mxu0 0
      %443 = vmatpush.bf16.msra.mxu0 0
      %444 = vmatpush.bf16.msra.mxu0 0
      %445 = vmatpush.bf16.msra.mxu0 0
      %446 = vmatpush.bf16.msra.mxu0 0
      %447 = vmatpush.bf16.msra.mxu0 %v438
      %448 = vmatmul.bf16.gmra.mxu0 %v389
      %v449 = vpop.f32.mrf.mxu0
      %v450 = vadd.f32 %v305, %v449
      %v451 = vpop.f32.mrf.mxu0
      %v452 = vadd.f32 %v305, %v451
      %453 = vmatmul.bf16.gmra.mxu0 %v392
      %v454 = vpop.f32.mrf.mxu0
      %v455 = vadd.f32 %v305, %v454
      %v456 = vpop.f32.mrf.mxu0
      %v457 = vadd.f32 %v305, %v456
      %458 = vmatmul.bf16.gmra.mxu0 %v395
      %v459 = vpop.f32.mrf.mxu0
      %v460 = vadd.f32 %v305, %v459
      %v461 = vpop.f32.mrf.mxu0
      %v462 = vadd.f32 %v305, %v461
      %463 = vmatmul.bf16.gmra.mxu0 %v398
      %v464 = vpop.f32.mrf.mxu0
      %v465 = vadd.f32 %v305, %v464
      %v466 = vpop.f32.mrf.mxu0
      %v467 = vadd.f32 %v305, %v466
      %468 = vmatmul.bf16.gmra.mxu0 %v401
      %v469 = vpop.f32.mrf.mxu0
      %v470 = vadd.f32 %v305, %v469
      %v471 = vpop.f32.mrf.mxu0
      %v472 = vadd.f32 %v305, %v471
      %473 = vmatmul.bf16.gmra.mxu0 %v404
      %v474 = vpop.f32.mrf.mxu0
      %v475 = vadd.f32 %v305, %v474
      %v476 = vpop.f32.mrf.mxu0
      %v477 = vadd.f32 %v305, %v476
      %478 = vmatmul.bf16.gmra.mxu0 %v407
      %v479 = vpop.f32.mrf.mxu0
      %v480 = vadd.f32 %v305, %v479
      %v481 = vpop.f32.mrf.mxu0
      %v482 = vadd.f32 %v305, %v481
      %483 = vmatmul.bf16.gmra.mxu0 %v410
      %v484 = vpop.f32.mrf.mxu0
      %v485 = vadd.f32 %v305, %v484
      %v486 = vpop.f32.mrf.mxu0
      %v487 = vadd.f32 %v305, %v486
      %488 = vmatmul.bf16.gmra.mxu0 %v413
      %v489 = vpop.f32.mrf.mxu0
      %v490 = vadd.f32 %v305, %v489
      %v491 = vpop.f32.mrf.mxu0
      %v492 = vadd.f32 %v305, %v491
      %493 = vmatmul.bf16.gmra.mxu0 %v416
      %v494 = vpop.f32.mrf.mxu0
      %v495 = vadd.f32 %v305, %v494
      %v496 = vpop.f32.mrf.mxu0
      %v497 = vadd.f32 %v305, %v496
      %498 = vmatmul.bf16.gmra.mxu0 %v419
      %v499 = vpop.f32.mrf.mxu0
      %v500 = vadd.f32 %v305, %v499
      %v501 = vpop.f32.mrf.mxu0
      %v502 = vadd.f32 %v305, %v501
      %503 = vmatmul.bf16.gmra.mxu0 %v422
      %v504 = vpop.f32.mrf.mxu0
      %v505 = vadd.f32 %v305, %v504
      %v506 = vpop.f32.mrf.mxu0
      %v507 = vadd.f32 %v305, %v506
      %508 = vmatmul.bf16.gmra.mxu0 %v425
      %v509 = vpop.f32.mrf.mxu0
      %v510 = vadd.f32 %v305, %v509
      %v511 = vpop.f32.mrf.mxu0
      %v512 = vadd.f32 %v305, %v511
      %513 = vmatmul.bf16.gmra.mxu0 %v428
      %v514 = vpop.f32.mrf.mxu0
      %v515 = vadd.f32 %v305, %v514
      %v516 = vpop.f32.mrf.mxu0
      %v517 = vadd.f32 %v305, %v516
      %518 = vmatmul.bf16.gmra.mxu0 %v431
      %v519 = vpop.f32.mrf.mxu0
      %v520 = vadd.f32 %v305, %v519
      %v521 = vpop.f32.mrf.mxu0
      %v522 = vadd.f32 %v305, %v521
      %523 = vmatmul.bf16.gmra.mxu0 %v434
      %v524 = vpop.f32.mrf.mxu0
      %v525 = vadd.f32 %v305, %v524
      %v526 = vpop.f32.mrf.mxu0
      %v527 = vadd.f32 %v305, %v526
      %528 = vdwg.mxu0
      %v529 = vxor.u32 %v450, 2147483648
      %v530 = vxor.u32 %v452, 2147483648
      %v531 = vxor.u32 %v455, 2147483648
      %v532 = vxor.u32 %v457, 2147483648
      %v533 = vxor.u32 %v460, 2147483648
      %v534 = vxor.u32 %v462, 2147483648
      %v535 = vxor.u32 %v465, 2147483648
      %v536 = vxor.u32 %v467, 2147483648
      %v537 = vxor.u32 %v470, 2147483648
      %v538 = vxor.u32 %v472, 2147483648
      %v539 = vxor.u32 %v475, 2147483648
      %v540 = vxor.u32 %v477, 2147483648
      %v541 = vxor.u32 %v480, 2147483648
      %v542 = vxor.u32 %v482, 2147483648
      %v543 = vxor.u32 %v485, 2147483648
      %v544 = vxor.u32 %v487, 2147483648
      %v545 = vxor.u32 %v490, 2147483648
      %v546 = vxor.u32 %v492, 2147483648
      %v547 = vxor.u32 %v495, 2147483648
      %v548 = vxor.u32 %v497, 2147483648
      %v549 = vxor.u32 %v500, 2147483648
      %v550 = vxor.u32 %v502, 2147483648
      %v551 = vxor.u32 %v505, 2147483648
      %v552 = vxor.u32 %v507, 2147483648
      %v553 = vxor.u32 %v510, 2147483648
      %v554 = vxor.u32 %v512, 2147483648
      %v555 = vxor.u32 %v515, 2147483648
      %v556 = vxor.u32 %v517, 2147483648
      %v557 = vxor.u32 %v520, 2147483648
      %v558 = vxor.u32 %v522, 2147483648
      %v559 = vxor.u32 %v525, 2147483648
      %v560 = vxor.u32 %v527, 2147483648
      %v561 = vmul.f32 %v529, 1.442695
      %v562 = vpow.pop %v561
      %v563 = vmul.f32 %v530, 1.442695
      %v564 = vpow.pop %v563
      %v565 = vmul.f32 %v531, 1.442695
      %v566 = vpow.pop %v565
      %v567 = vmul.f32 %v532, 1.442695
      %v568 = vpow.pop %v567
      %v569 = vmul.f32 %v533, 1.442695
      %v570 = vpow.pop %v569
      %v571 = vmul.f32 %v534, 1.442695
      %v572 = vpow.pop %v571
      %v573 = vmul.f32 %v535, 1.442695
      %v574 = vpow.pop %v573
      %v575 = vmul.f32 %v536, 1.442695
      %v576 = vpow.pop %v575
      %v577 = vmul.f32 %v537, 1.442695
      %v578 = vpow.pop %v577
      %v579 = vmul.f32 %v538, 1.442695
      %v580 = vpow.pop %v579
      %v581 = vmul.f32 %v539, 1.442695
      %v582 = vpow.pop %v581
      %v583 = vmul.f32 %v540, 1.442695
      %v584 = vpow.pop %v583
      %v585 = vmul.f32 %v541, 1.442695
      %v586 = vpow.pop %v585
      %v587 = vmul.f32 %v542, 1.442695
      %v588 = vpow.pop %v587
      %v589 = vmul.f32 %v543, 1.442695
      %v590 = vpow.pop %v589
      %v591 = vmul.f32 %v544, 1.442695
      %v592 = vpow.pop %v591
      %v593 = vmul.f32 %v545, 1.442695
      %v594 = vpow.pop %v593
      %v595 = vmul.f32 %v546, 1.442695
      %v596 = vpow.pop %v595
      %v597 = vmul.f32 %v547, 1.442695
      %v598 = vpow.pop %v597
      %v599 = vmul.f32 %v548, 1.442695
      %v600 = vpow.pop %v599
      %v601 = vmul.f32 %v549, 1.442695
      %v602 = vpow.pop %v601
      %v603 = vmul.f32 %v550, 1.442695
      %v604 = vpow.pop %v603
      %v605 = vmul.f32 %v551, 1.442695
      %v606 = vpow.pop %v605
      %v607 = vmul.f32 %v552, 1.442695
      %v608 = vpow.pop %v607
      %v609 = vmul.f32 %v553, 1.442695
      %v610 = vpow.pop %v609
      %v611 = vmul.f32 %v554, 1.442695
      %v612 = vpow.pop %v611
      %v613 = vmul.f32 %v555, 1.442695
      %v614 = vpow.pop %v613
      %v615 = vmul.f32 %v556, 1.442695
      %v616 = vpow.pop %v615
      %v617 = vmul.f32 %v557, 1.442695
      %v618 = vpow.pop %v617
      %v619 = vmul.f32 %v558, 1.442695
      %v620 = vpow.pop %v619
      %v621 = vmul.f32 %v559, 1.442695
      %v622 = vpow.pop %v621
      %v623 = vmul.f32 %v560, 1.442695
      %v624 = vpow.pop %v623
      %v625 = vadd.f32 %v562, 1.0
      %v626 = vadd.f32 %v564, 1.0
      %v627 = vadd.f32 %v566, 1.0
      %v628 = vadd.f32 %v568, 1.0
      %v629 = vadd.f32 %v570, 1.0
      %v630 = vadd.f32 %v572, 1.0
      %v631 = vadd.f32 %v574, 1.0
      %v632 = vadd.f32 %v576, 1.0
      %v633 = vadd.f32 %v578, 1.0
      %v634 = vadd.f32 %v580, 1.0
      %v635 = vadd.f32 %v582, 1.0
      %v636 = vadd.f32 %v584, 1.0
      %v637 = vadd.f32 %v586, 1.0
      %v638 = vadd.f32 %v588, 1.0
      %v639 = vadd.f32 %v590, 1.0
      %v640 = vadd.f32 %v592, 1.0
      %v641 = vadd.f32 %v594, 1.0
      %v642 = vadd.f32 %v596, 1.0
      %v643 = vadd.f32 %v598, 1.0
      %v644 = vadd.f32 %v600, 1.0
      %v645 = vadd.f32 %v602, 1.0
      %v646 = vadd.f32 %v604, 1.0
      %v647 = vadd.f32 %v606, 1.0
      %v648 = vadd.f32 %v608, 1.0
      %v649 = vadd.f32 %v610, 1.0
      %v650 = vadd.f32 %v612, 1.0
      %v651 = vadd.f32 %v614, 1.0
      %v652 = vadd.f32 %v616, 1.0
      %v653 = vadd.f32 %v618, 1.0
      %v654 = vadd.f32 %v620, 1.0
      %v655 = vadd.f32 %v622, 1.0
      %v656 = vadd.f32 %v624, 1.0
      %v657 = vrcp.pop %v625
      %v658 = vmul.f32 %v625, %v657
      %v659 = vsub.f32 1.0, %v658
      %v660 = vmul.f32 %v657, %v659
      %v661 = vadd.f32 %v657, %v660
      %vm662 = vweird.f32 %v625
      %vm663 = vweird.f32 %v657
      %vm664 = vmor %vm662, %vm663
      %v665 = vsel %vm664, %v657, %v661
      %v666 = vand.u32 2147483647, %v625
      %vm667 = vcmp.eq.f32.partialorder %v666, 8.507059e+37
      %v668 = vand.u32 %v625, 2147483648
      %v669 = vor.u32 1.1754944e-38, %v668
      %v670 = vsel %vm667, %v669, %v665
      %v671 = vmul.f32 1.0, %v670
      %v672 = vrcp.pop %v626
      %v673 = vmul.f32 %v626, %v672
      %v674 = vsub.f32 1.0, %v673
      %v675 = vmul.f32 %v672, %v674
      %v676 = vadd.f32 %v672, %v675
      %vm677 = vweird.f32 %v626
      %vm678 = vweird.f32 %v672
      %vm679 = vmor %vm677, %vm678
      %v680 = vsel %vm679, %v672, %v676
      %v681 = vand.u32 2147483647, %v626
      %vm682 = vcmp.eq.f32.partialorder %v681, 8.507059e+37
      %v683 = vand.u32 %v626, 2147483648
      %v684 = vor.u32 1.1754944e-38, %v683
      %v685 = vsel %vm682, %v684, %v680
      %v686 = vmul.f32 1.0, %v685
      %v687 = vrcp.pop %v627
      %v688 = vmul.f32 %v627, %v687
      %v689 = vsub.f32 1.0, %v688
      %v690 = vmul.f32 %v687, %v689
      %v691 = vadd.f32 %v687, %v690
      %vm692 = vweird.f32 %v627
      %vm693 = vweird.f32 %v687
      %vm694 = vmor %vm692, %vm693
      %v695 = vsel %vm694, %v687, %v691
      %v696 = vand.u32 2147483647, %v627
      %vm697 = vcmp.eq.f32.partialorder %v696, 8.507059e+37
      %v698 = vand.u32 %v627, 2147483648
      %v699 = vor.u32 1.1754944e-38, %v698
      %v700 = vsel %vm697, %v699, %v695
      %v701 = vmul.f32 1.0, %v700
      %v702 = vrcp.pop %v628
      %v703 = vmul.f32 %v628, %v702
      %v704 = vsub.f32 1.0, %v703
      %v705 = vmul.f32 %v702, %v704
      %v706 = vadd.f32 %v702, %v705
      %vm707 = vweird.f32 %v628
      %vm708 = vweird.f32 %v702
      %vm709 = vmor %vm707, %vm708
      %v710 = vsel %vm709, %v702, %v706
      %v711 = vand.u32 2147483647, %v628
      %vm712 = vcmp.eq.f32.partialorder %v711, 8.507059e+37
      %v713 = vand.u32 %v628, 2147483648
      %v714 = vor.u32 1.1754944e-38, %v713
      %v715 = vsel %vm712, %v714, %v710
      %v716 = vmul.f32 1.0, %v715
      %v717 = vrcp.pop %v629
      %v718 = vmul.f32 %v629, %v717
      %v719 = vsub.f32 1.0, %v718
      %v720 = vmul.f32 %v717, %v719
      %v721 = vadd.f32 %v717, %v720
      %vm722 = vweird.f32 %v629
      %vm723 = vweird.f32 %v717
      %vm724 = vmor %vm722, %vm723
      %v725 = vsel %vm724, %v717, %v721
      %v726 = vand.u32 2147483647, %v629
      %vm727 = vcmp.eq.f32.partialorder %v726, 8.507059e+37
      %v728 = vand.u32 %v629, 2147483648
      %v729 = vor.u32 1.1754944e-38, %v728
      %v730 = vsel %vm727, %v729, %v725
      %v731 = vmul.f32 1.0, %v730
      %v732 = vrcp.pop %v630
      %v733 = vmul.f32 %v630, %v732
      %v734 = vsub.f32 1.0, %v733
      %v735 = vmul.f32 %v732, %v734
      %v736 = vadd.f32 %v732, %v735
      %vm737 = vweird.f32 %v630
      %vm738 = vweird.f32 %v732
      %vm739 = vmor %vm737, %vm738
      %v740 = vsel %vm739, %v732, %v736
      %v741 = vand.u32 2147483647, %v630
      %vm742 = vcmp.eq.f32.partialorder %v741, 8.507059e+37
      %v743 = vand.u32 %v630, 2147483648
      %v744 = vor.u32 1.1754944e-38, %v743
      %v745 = vsel %vm742, %v744, %v740
      %v746 = vmul.f32 1.0, %v745
      %v747 = vrcp.pop %v631
      %v748 = vmul.f32 %v631, %v747
      %v749 = vsub.f32 1.0, %v748
      %v750 = vmul.f32 %v747, %v749
      %v751 = vadd.f32 %v747, %v750
      %vm752 = vweird.f32 %v631
      %vm753 = vweird.f32 %v747
      %vm754 = vmor %vm752, %vm753
      %v755 = vsel %vm754, %v747, %v751
      %v756 = vand.u32 2147483647, %v631
      %vm757 = vcmp.eq.f32.partialorder %v756, 8.507059e+37
      %v758 = vand.u32 %v631, 2147483648
      %v759 = vor.u32 1.1754944e-38, %v758
      %v760 = vsel %vm757, %v759, %v755
      %v761 = vmul.f32 1.0, %v760
      %v762 = vrcp.pop %v632
      %v763 = vmul.f32 %v632, %v762
      %v764 = vsub.f32 1.0, %v763
      %v765 = vmul.f32 %v762, %v764
      %v766 = vadd.f32 %v762, %v765
      %vm767 = vweird.f32 %v632
      %vm768 = vweird.f32 %v762
      %vm769 = vmor %vm767, %vm768
      %v770 = vsel %vm769, %v762, %v766
      %v771 = vand.u32 2147483647, %v632
      %vm772 = vcmp.eq.f32.partialorder %v771, 8.507059e+37
      %v773 = vand.u32 %v632, 2147483648
      %v774 = vor.u32 1.1754944e-38, %v773
      %v775 = vsel %vm772, %v774, %v770
      %v776 = vmul.f32 1.0, %v775
      %v777 = vrcp.pop %v633
      %v778 = vmul.f32 %v633, %v777
      %v779 = vsub.f32 1.0, %v778
      %v780 = vmul.f32 %v777, %v779
      %v781 = vadd.f32 %v777, %v780
      %vm782 = vweird.f32 %v633
      %vm783 = vweird.f32 %v777
      %vm784 = vmor %vm782, %vm783
      %v785 = vsel %vm784, %v777, %v781
      %v786 = vand.u32 2147483647, %v633
      %vm787 = vcmp.eq.f32.partialorder %v786, 8.507059e+37
      %v788 = vand.u32 %v633, 2147483648
      %v789 = vor.u32 1.1754944e-38, %v788
      %v790 = vsel %vm787, %v789, %v785
      %v791 = vmul.f32 1.0, %v790
      %v792 = vrcp.pop %v634
      %v793 = vmul.f32 %v634, %v792
      %v794 = vsub.f32 1.0, %v793
      %v795 = vmul.f32 %v792, %v794
      %v796 = vadd.f32 %v792, %v795
      %vm797 = vweird.f32 %v634
      %vm798 = vweird.f32 %v792
      %vm799 = vmor %vm797, %vm798
      %v800 = vsel %vm799, %v792, %v796
      %v801 = vand.u32 2147483647, %v634
      %vm802 = vcmp.eq.f32.partialorder %v801, 8.507059e+37
      %v803 = vand.u32 %v634, 2147483648
      %v804 = vor.u32 1.1754944e-38, %v803
      %v805 = vsel %vm802, %v804, %v800
      %v806 = vmul.f32 1.0, %v805
      %v807 = vrcp.pop %v635
      %v808 = vmul.f32 %v635, %v807
      %v809 = vsub.f32 1.0, %v808
      %v810 = vmul.f32 %v807, %v809
      %v811 = vadd.f32 %v807, %v810
      %vm812 = vweird.f32 %v635
      %vm813 = vweird.f32 %v807
      %vm814 = vmor %vm812, %vm813
      %v815 = vsel %vm814, %v807, %v811
      %v816 = vand.u32 2147483647, %v635
      %vm817 = vcmp.eq.f32.partialorder %v816, 8.507059e+37
      %v818 = vand.u32 %v635, 2147483648
      %v819 = vor.u32 1.1754944e-38, %v818
      %v820 = vsel %vm817, %v819, %v815
      %v821 = vmul.f32 1.0, %v820
      %v822 = vrcp.pop %v636
      %v823 = vmul.f32 %v636, %v822
      %v824 = vsub.f32 1.0, %v823
      %v825 = vmul.f32 %v822, %v824
      %v826 = vadd.f32 %v822, %v825
      %vm827 = vweird.f32 %v636
      %vm828 = vweird.f32 %v822
      %vm829 = vmor %vm827, %vm828
      %v830 = vsel %vm829, %v822, %v826
      %v831 = vand.u32 2147483647, %v636
      %vm832 = vcmp.eq.f32.partialorder %v831, 8.507059e+37
      %v833 = vand.u32 %v636, 2147483648
      %v834 = vor.u32 1.1754944e-38, %v833
      %v835 = vsel %vm832, %v834, %v830
      %v836 = vmul.f32 1.0, %v835
      %v837 = vrcp.pop %v637
      %v838 = vmul.f32 %v637, %v837
      %v839 = vsub.f32 1.0, %v838
      %v840 = vmul.f32 %v837, %v839
      %v841 = vadd.f32 %v837, %v840
      %vm842 = vweird.f32 %v637
      %vm843 = vweird.f32 %v837
      %vm844 = vmor %vm842, %vm843
      %v845 = vsel %vm844, %v837, %v841
      %v846 = vand.u32 2147483647, %v637
      %vm847 = vcmp.eq.f32.partialorder %v846, 8.507059e+37
      %v848 = vand.u32 %v637, 2147483648
      %v849 = vor.u32 1.1754944e-38, %v848
      %v850 = vsel %vm847, %v849, %v845
      %v851 = vmul.f32 1.0, %v850
      %v852 = vrcp.pop %v638
      %v853 = vmul.f32 %v638, %v852
      %v854 = vsub.f32 1.0, %v853
      %v855 = vmul.f32 %v852, %v854
      %v856 = vadd.f32 %v852, %v855
      %vm857 = vweird.f32 %v638
      %vm858 = vweird.f32 %v852
      %vm859 = vmor %vm857, %vm858
      %v860 = vsel %vm859, %v852, %v856
      %v861 = vand.u32 2147483647, %v638
      %vm862 = vcmp.eq.f32.partialorder %v861, 8.507059e+37
      %v863 = vand.u32 %v638, 2147483648
      %v864 = vor.u32 1.1754944e-38, %v863
      %v865 = vsel %vm862, %v864, %v860
      %v866 = vmul.f32 1.0, %v865
      %v867 = vrcp.pop %v639
      %v868 = vmul.f32 %v639, %v867
      %v869 = vsub.f32 1.0, %v868
      %v870 = vmul.f32 %v867, %v869
      %v871 = vadd.f32 %v867, %v870
      %vm872 = vweird.f32 %v639
      %vm873 = vweird.f32 %v867
      %vm874 = vmor %vm872, %vm873
      %v875 = vsel %vm874, %v867, %v871
      %v876 = vand.u32 2147483647, %v639
      %vm877 = vcmp.eq.f32.partialorder %v876, 8.507059e+37
      %v878 = vand.u32 %v639, 2147483648
      %v879 = vor.u32 1.1754944e-38, %v878
      %v880 = vsel %vm877, %v879, %v875
      %v881 = vmul.f32 1.0, %v880
      %v882 = vrcp.pop %v640
      %v883 = vmul.f32 %v640, %v882
      %v884 = vsub.f32 1.0, %v883
      %v885 = vmul.f32 %v882, %v884
      %v886 = vadd.f32 %v882, %v885
      %vm887 = vweird.f32 %v640
      %vm888 = vweird.f32 %v882
      %vm889 = vmor %vm887, %vm888
      %v890 = vsel %vm889, %v882, %v886
      %v891 = vand.u32 2147483647, %v640
      %vm892 = vcmp.eq.f32.partialorder %v891, 8.507059e+37
      %v893 = vand.u32 %v640, 2147483648
      %v894 = vor.u32 1.1754944e-38, %v893
      %v895 = vsel %vm892, %v894, %v890
      %v896 = vmul.f32 1.0, %v895
      %v897 = vrcp.pop %v641
      %v898 = vmul.f32 %v641, %v897
      %v899 = vsub.f32 1.0, %v898
      %v900 = vmul.f32 %v897, %v899
      %v901 = vadd.f32 %v897, %v900
      %vm902 = vweird.f32 %v641
      %vm903 = vweird.f32 %v897
      %vm904 = vmor %vm902, %vm903
      %v905 = vsel %vm904, %v897, %v901
      %v906 = vand.u32 2147483647, %v641
      %vm907 = vcmp.eq.f32.partialorder %v906, 8.507059e+37
      %v908 = vand.u32 %v641, 2147483648
      %v909 = vor.u32 1.1754944e-38, %v908
      %v910 = vsel %vm907, %v909, %v905
      %v911 = vmul.f32 1.0, %v910
      %v912 = vrcp.pop %v642
      %v913 = vmul.f32 %v642, %v912
      %v914 = vsub.f32 1.0, %v913
      %v915 = vmul.f32 %v912, %v914
      %v916 = vadd.f32 %v912, %v915
      %vm917 = vweird.f32 %v642
      %vm918 = vweird.f32 %v912
      %vm919 = vmor %vm917, %vm918
      %v920 = vsel %vm919, %v912, %v916
      %v921 = vand.u32 2147483647, %v642
      %vm922 = vcmp.eq.f32.partialorder %v921, 8.507059e+37
      %v923 = vand.u32 %v642, 2147483648
      %v924 = vor.u32 1.1754944e-38, %v923
      %v925 = vsel %vm922, %v924, %v920
      %v926 = vmul.f32 1.0, %v925
      %v927 = vrcp.pop %v643
      %v928 = vmul.f32 %v643, %v927
      %v929 = vsub.f32 1.0, %v928
      %v930 = vmul.f32 %v927, %v929
      %v931 = vadd.f32 %v927, %v930
      %vm932 = vweird.f32 %v643
      %vm933 = vweird.f32 %v927
      %vm934 = vmor %vm932, %vm933
      %v935 = vsel %vm934, %v927, %v931
      %v936 = vand.u32 2147483647, %v643
      %vm937 = vcmp.eq.f32.partialorder %v936, 8.507059e+37
      %v938 = vand.u32 %v643, 2147483648
      %v939 = vor.u32 1.1754944e-38, %v938
      %v940 = vsel %vm937, %v939, %v935
      %v941 = vmul.f32 1.0, %v940
      %v942 = vrcp.pop %v644
      %v943 = vmul.f32 %v644, %v942
      %v944 = vsub.f32 1.0, %v943
      %v945 = vmul.f32 %v942, %v944
      %v946 = vadd.f32 %v942, %v945
      %vm947 = vweird.f32 %v644
      %vm948 = vweird.f32 %v942
      %vm949 = vmor %vm947, %vm948
      %v950 = vsel %vm949, %v942, %v946
      %v951 = vand.u32 2147483647, %v644
      %vm952 = vcmp.eq.f32.partialorder %v951, 8.507059e+37
      %v953 = vand.u32 %v644, 2147483648
      %v954 = vor.u32 1.1754944e-38, %v953
      %v955 = vsel %vm952, %v954, %v950
      %v956 = vmul.f32 1.0, %v955
      %v957 = vrcp.pop %v645
      %v958 = vmul.f32 %v645, %v957
      %v959 = vsub.f32 1.0, %v958
      %v960 = vmul.f32 %v957, %v959
      %v961 = vadd.f32 %v957, %v960
      %vm962 = vweird.f32 %v645
      %vm963 = vweird.f32 %v957
      %vm964 = vmor %vm962, %vm963
      %v965 = vsel %vm964, %v957, %v961
      %v966 = vand.u32 2147483647, %v645
      %vm967 = vcmp.eq.f32.partialorder %v966, 8.507059e+37
      %v968 = vand.u32 %v645, 2147483648
      %v969 = vor.u32 1.1754944e-38, %v968
      %v970 = vsel %vm967, %v969, %v965
      %v971 = vmul.f32 1.0, %v970
      %v972 = vrcp.pop %v646
      %v973 = vmul.f32 %v646, %v972
      %v974 = vsub.f32 1.0, %v973
      %v975 = vmul.f32 %v972, %v974
      %v976 = vadd.f32 %v972, %v975
      %vm977 = vweird.f32 %v646
      %vm978 = vweird.f32 %v972
      %vm979 = vmor %vm977, %vm978
      %v980 = vsel %vm979, %v972, %v976
      %v981 = vand.u32 2147483647, %v646
      %vm982 = vcmp.eq.f32.partialorder %v981, 8.507059e+37
      %v983 = vand.u32 %v646, 2147483648
      %v984 = vor.u32 1.1754944e-38, %v983
      %v985 = vsel %vm982, %v984, %v980
      %v986 = vmul.f32 1.0, %v985
      %v987 = vrcp.pop %v647
      %v988 = vmul.f32 %v647, %v987
      %v989 = vsub.f32 1.0, %v988
      %v990 = vmul.f32 %v987, %v989
      %v991 = vadd.f32 %v987, %v990
      %vm992 = vweird.f32 %v647
      %vm993 = vweird.f32 %v987
      %vm994 = vmor %vm992, %vm993
      %v995 = vsel %vm994, %v987, %v991
      %v996 = vand.u32 2147483647, %v647
      %vm997 = vcmp.eq.f32.partialorder %v996, 8.507059e+37
      %v998 = vand.u32 %v647, 2147483648
      %v999 = vor.u32 1.1754944e-38, %v998
      %v1000 = vsel %vm997, %v999, %v995
      %v1001 = vmul.f32 1.0, %v1000
      %v1002 = vrcp.pop %v648
      %v1003 = vmul.f32 %v648, %v1002
      %v1004 = vsub.f32 1.0, %v1003
      %v1005 = vmul.f32 %v1002, %v1004
      %v1006 = vadd.f32 %v1002, %v1005
      %vm1007 = vweird.f32 %v648
      %vm1008 = vweird.f32 %v1002
      %vm1009 = vmor %vm1007, %vm1008
      %v1010 = vsel %vm1009, %v1002, %v1006
      %v1011 = vand.u32 2147483647, %v648
      %vm1012 = vcmp.eq.f32.partialorder %v1011, 8.507059e+37
      %v1013 = vand.u32 %v648, 2147483648
      %v1014 = vor.u32 1.1754944e-38, %v1013
      %v1015 = vsel %vm1012, %v1014, %v1010
      %v1016 = vmul.f32 1.0, %v1015
      %v1017 = vrcp.pop %v649
      %v1018 = vmul.f32 %v649, %v1017
      %v1019 = vsub.f32 1.0, %v1018
      %v1020 = vmul.f32 %v1017, %v1019
      %v1021 = vadd.f32 %v1017, %v1020
      %vm1022 = vweird.f32 %v649
      %vm1023 = vweird.f32 %v1017
      %vm1024 = vmor %vm1022, %vm1023
      %v1025 = vsel %vm1024, %v1017, %v1021
      %v1026 = vand.u32 2147483647, %v649
      %vm1027 = vcmp.eq.f32.partialorder %v1026, 8.507059e+37
      %v1028 = vand.u32 %v649, 2147483648
      %v1029 = vor.u32 1.1754944e-38, %v1028
      %v1030 = vsel %vm1027, %v1029, %v1025
      %v1031 = vmul.f32 1.0, %v1030
      %v1032 = vrcp.pop %v650
      %v1033 = vmul.f32 %v650, %v1032
      %v1034 = vsub.f32 1.0, %v1033
      %v1035 = vmul.f32 %v1032, %v1034
      %v1036 = vadd.f32 %v1032, %v1035
      %vm1037 = vweird.f32 %v650
      %vm1038 = vweird.f32 %v1032
      %vm1039 = vmor %vm1037, %vm1038
      %v1040 = vsel %vm1039, %v1032, %v1036
      %v1041 = vand.u32 2147483647, %v650
      %vm1042 = vcmp.eq.f32.partialorder %v1041, 8.507059e+37
      %v1043 = vand.u32 %v650, 2147483648
      %v1044 = vor.u32 1.1754944e-38, %v1043
      %v1045 = vsel %vm1042, %v1044, %v1040
      %v1046 = vmul.f32 1.0, %v1045
      %v1047 = vrcp.pop %v651
      %v1048 = vmul.f32 %v651, %v1047
      %v1049 = vsub.f32 1.0, %v1048
      %v1050 = vmul.f32 %v1047, %v1049
      %v1051 = vadd.f32 %v1047, %v1050
      %vm1052 = vweird.f32 %v651
      %vm1053 = vweird.f32 %v1047
      %vm1054 = vmor %vm1052, %vm1053
      %v1055 = vsel %vm1054, %v1047, %v1051
      %v1056 = vand.u32 2147483647, %v651
      %vm1057 = vcmp.eq.f32.partialorder %v1056, 8.507059e+37
      %v1058 = vand.u32 %v651, 2147483648
      %v1059 = vor.u32 1.1754944e-38, %v1058
      %v1060 = vsel %vm1057, %v1059, %v1055
      %v1061 = vmul.f32 1.0, %v1060
      %v1062 = vrcp.pop %v652
      %v1063 = vmul.f32 %v652, %v1062
      %v1064 = vsub.f32 1.0, %v1063
      %v1065 = vmul.f32 %v1062, %v1064
      %v1066 = vadd.f32 %v1062, %v1065
      %vm1067 = vweird.f32 %v652
      %vm1068 = vweird.f32 %v1062
      %vm1069 = vmor %vm1067, %vm1068
      %v1070 = vsel %vm1069, %v1062, %v1066
      %v1071 = vand.u32 2147483647, %v652
      %vm1072 = vcmp.eq.f32.partialorder %v1071, 8.507059e+37
      %v1073 = vand.u32 %v652, 2147483648
      %v1074 = vor.u32 1.1754944e-38, %v1073
      %v1075 = vsel %vm1072, %v1074, %v1070
      %v1076 = vmul.f32 1.0, %v1075
      %v1077 = vrcp.pop %v653
      %v1078 = vmul.f32 %v653, %v1077
      %v1079 = vsub.f32 1.0, %v1078
      %v1080 = vmul.f32 %v1077, %v1079
      %v1081 = vadd.f32 %v1077, %v1080
      %vm1082 = vweird.f32 %v653
      %vm1083 = vweird.f32 %v1077
      %vm1084 = vmor %vm1082, %vm1083
      %v1085 = vsel %vm1084, %v1077, %v1081
      %v1086 = vand.u32 2147483647, %v653
      %vm1087 = vcmp.eq.f32.partialorder %v1086, 8.507059e+37
      %v1088 = vand.u32 %v653, 2147483648
      %v1089 = vor.u32 1.1754944e-38, %v1088
      %v1090 = vsel %vm1087, %v1089, %v1085
      %v1091 = vmul.f32 1.0, %v1090
      %v1092 = vrcp.pop %v654
      %v1093 = vmul.f32 %v654, %v1092
      %v1094 = vsub.f32 1.0, %v1093
      %v1095 = vmul.f32 %v1092, %v1094
      %v1096 = vadd.f32 %v1092, %v1095
      %vm1097 = vweird.f32 %v654
      %vm1098 = vweird.f32 %v1092
      %vm1099 = vmor %vm1097, %vm1098
      %v1100 = vsel %vm1099, %v1092, %v1096
      %v1101 = vand.u32 2147483647, %v654
      %vm1102 = vcmp.eq.f32.partialorder %v1101, 8.507059e+37
      %v1103 = vand.u32 %v654, 2147483648
      %v1104 = vor.u32 1.1754944e-38, %v1103
      %v1105 = vsel %vm1102, %v1104, %v1100
      %v1106 = vmul.f32 1.0, %v1105
      %v1107 = vrcp.pop %v655
      %v1108 = vmul.f32 %v655, %v1107
      %v1109 = vsub.f32 1.0, %v1108
      %v1110 = vmul.f32 %v1107, %v1109
      %v1111 = vadd.f32 %v1107, %v1110
      %vm1112 = vweird.f32 %v655
      %vm1113 = vweird.f32 %v1107
      %vm1114 = vmor %vm1112, %vm1113
      %v1115 = vsel %vm1114, %v1107, %v1111
      %v1116 = vand.u32 2147483647, %v655
      %vm1117 = vcmp.eq.f32.partialorder %v1116, 8.507059e+37
      %v1118 = vand.u32 %v655, 2147483648
      %v1119 = vor.u32 1.1754944e-38, %v1118
      %v1120 = vsel %vm1117, %v1119, %v1115
      %v1121 = vmul.f32 1.0, %v1120
      %v1122 = vrcp.pop %v656
      %v1123 = vmul.f32 %v656, %v1122
      %v1124 = vsub.f32 1.0, %v1123
      %v1125 = vmul.f32 %v1122, %v1124
      %v1126 = vadd.f32 %v1122, %v1125
      %vm1127 = vweird.f32 %v656
      %vm1128 = vweird.f32 %v1122
      %vm1129 = vmor %vm1127, %vm1128
      %v1130 = vsel %vm1129, %v1122, %v1126
      %v1131 = vand.u32 2147483647, %v656
      %vm1132 = vcmp.eq.f32.partialorder %v1131, 8.507059e+37
      %v1133 = vand.u32 %v656, 2147483648
      %v1134 = vor.u32 1.1754944e-38, %v1133
      %v1135 = vsel %vm1132, %v1134, %v1130
      %v1136 = vmul.f32 1.0, %v1135
      %v1137 = vmul.f32 %v450, %v671
      %v1138 = vmul.f32 %v452, %v686
      %v1139 = vmul.f32 %v455, %v701
      %v1140 = vmul.f32 %v457, %v716
      %v1141 = vmul.f32 %v460, %v731
      %v1142 = vmul.f32 %v462, %v746
      %v1143 = vmul.f32 %v465, %v761
      %v1144 = vmul.f32 %v467, %v776
      %v1145 = vmul.f32 %v470, %v791
      %v1146 = vmul.f32 %v472, %v806
      %v1147 = vmul.f32 %v475, %v821
      %v1148 = vmul.f32 %v477, %v836
      %v1149 = vmul.f32 %v480, %v851
      %v1150 = vmul.f32 %v482, %v866
      %v1151 = vmul.f32 %v485, %v881
      %v1152 = vmul.f32 %v487, %v896
      %v1153 = vmul.f32 %v490, %v911
      %v1154 = vmul.f32 %v492, %v926
      %v1155 = vmul.f32 %v495, %v941
      %v1156 = vmul.f32 %v497, %v956
      %v1157 = vmul.f32 %v500, %v971
      %v1158 = vmul.f32 %v502, %v986
      %v1159 = vmul.f32 %v505, %v1001
      %v1160 = vmul.f32 %v507, %v1016
      %v1161 = vmul.f32 %v510, %v1031
      %v1162 = vmul.f32 %v512, %v1046
      %v1163 = vmul.f32 %v515, %v1061
      %v1164 = vmul.f32 %v517, %v1076
      %v1165 = vmul.f32 %v520, %v1091
      %v1166 = vmul.f32 %v522, %v1106
      %v1167 = vmul.f32 %v525, %v1121
      %v1168 = vmul.f32 %v527, %v1136
      %vm1169 = vcmask 15360
      %1170 = vst.msk [vmem:[%s261] sm:$0xff] %vm1169, %v1137
      %1171 = vst.msk [vmem:[%s261 + $0x8] sm:$0xff] %vm1169, %v1138
      %1172 = vst.msk [vmem:[%s261 + $0x10] sm:$0xff] %vm1169, %v1139
      %1173 = vst.msk [vmem:[%s261 + $0x18] sm:$0xff] %vm1169, %v1140
      %1174 = vst.msk [vmem:[%s261 + $0x20] sm:$0xff] %vm1169, %v1141
      %1175 = vst.msk [vmem:[%s261 + $0x28] sm:$0xff] %vm1169, %v1142
      %1176 = vst.msk [vmem:[%s261 + $0x30] sm:$0xff] %vm1169, %v1143
      %1177 = vst.msk [vmem:[%s261 + $0x38] sm:$0xff] %vm1169, %v1144
      %1178 = vst.msk [vmem:[%s261 + $0x40] sm:$0xff] %vm1169, %v1145
      %1179 = vst.msk [vmem:[%s261 + $0x48] sm:$0xff] %vm1169, %v1146
      %1180 = vst.msk [vmem:[%s261 + $0x50] sm:$0xff] %vm1169, %v1147
      %1181 = vst.msk [vmem:[%s261 + $0x58] sm:$0xff] %vm1169, %v1148
      %1182 = vst.msk [vmem:[%s261 + $0x60] sm:$0xff] %vm1169, %v1149
      %1183 = vst.msk [vmem:[%s261 + $0x68] sm:$0xff] %vm1169, %v1150
      %1184 = vst.msk [vmem:[%s261 + $0x70] sm:$0xff] %vm1169, %v1151
      %1185 = vst.msk [vmem:[%s261 + $0x78] sm:$0xff] %vm1169, %v1152
      %1186 = vst.msk [vmem:[%s261 + $0x80] sm:$0xff] %vm1169, %v1153
      %1187 = vst.msk [vmem:[%s261 + $0x88] sm:$0xff] %vm1169, %v1154
      %1188 = vst.msk [vmem:[%s261 + $0x90] sm:$0xff] %vm1169, %v1155
      %1189 = vst.msk [vmem:[%s261 + $0x98] sm:$0xff] %vm1169, %v1156
      %1190 = vst.msk [vmem:[%s261 + $0xa0] sm:$0xff] %vm1169, %v1157
      %1191 = vst.msk [vmem:[%s261 + $0xa8] sm:$0xff] %vm1169, %v1158
      %1192 = vst.msk [vmem:[%s261 + $0xb0] sm:$0xff] %vm1169, %v1159
      %1193 = vst.msk [vmem:[%s261 + $0xb8] sm:$0xff] %vm1169, %v1160
      %1194 = vst.msk [vmem:[%s261 + $0xc0] sm:$0xff] %vm1169, %v1161
      %1195 = vst.msk [vmem:[%s261 + $0xc8] sm:$0xff] %vm1169, %v1162
      %1196 = vst.msk [vmem:[%s261 + $0xd0] sm:$0xff] %vm1169, %v1163
      %1197 = vst.msk [vmem:[%s261 + $0xd8] sm:$0xff] %vm1169, %v1164
      %1198 = vst.msk [vmem:[%s261 + $0xe0] sm:$0xff] %vm1169, %v1165
      %1199 = vst.msk [vmem:[%s261 + $0xe8] sm:$0xff] %vm1169, %v1166
      %1200 = vst.msk [vmem:[%s261 + $0xf0] sm:$0xff] %vm1169, %v1167
      %1201 = vst.msk [vmem:[%s261 + $0xf8] sm:$0xff] %vm1169, %v1168
      %v1202 = vld [vmem:[%s3] sm:$0x3]
      %v1203 = vld [vmem:[%s4] sm:$0x1]
      %v1205 = vperm.slane %v1203, 0
      %v1208 = vsel %vm436, %v1202, 0
      %1210 = vmatpush.bf16.msra.mxu0 0
      %1211 = vmatpush.bf16.msra.mxu0 0
      %1212 = vmatpush.bf16.msra.mxu0 0
      %1213 = vmatpush.bf16.msra.mxu0 0
      %1214 = vmatpush.bf16.msra.mxu0 0
      %1215 = vmatpush.bf16.msra.mxu0 0
      %1216 = vmatpush.bf16.msra.mxu0 0
      %1217 = vmatpush.bf16.msra.mxu0 %v1208
      %1218 = vmatmul.bf16.gmra.mxu0 %v389
      %v1219 = vpop.f32.mrf.mxu0
      %v1220 = vadd.f32 %v1205, %v1219
      %v1221 = vpop.f32.mrf.mxu0
      %v1222 = vadd.f32 %v1205, %v1221
      %1223 = vmatmul.bf16.gmra.mxu0 %v392
      %v1224 = vpop.f32.mrf.mxu0
      %v1225 = vadd.f32 %v1205, %v1224
      %v1226 = vpop.f32.mrf.mxu0
      %v1227 = vadd.f32 %v1205, %v1226
      %1228 = vmatmul.bf16.gmra.mxu0 %v395
      %v1229 = vpop.f32.mrf.mxu0
      %v1230 = vadd.f32 %v1205, %v1229
      %v1231 = vpop.f32.mrf.mxu0
      %v1232 = vadd.f32 %v1205, %v1231
      %1233 = vmatmul.bf16.gmra.mxu0 %v398
      %v1234 = vpop.f32.mrf.mxu0
      %v1235 = vadd.f32 %v1205, %v1234
      %v1236 = vpop.f32.mrf.mxu0
      %v1237 = vadd.f32 %v1205, %v1236
      %1238 = vmatmul.bf16.gmra.mxu0 %v401
      %v1239 = vpop.f32.mrf.mxu0
      %v1240 = vadd.f32 %v1205, %v1239
      %v1241 = vpop.f32.mrf.mxu0
      %v1242 = vadd.f32 %v1205, %v1241
      %1243 = vmatmul.bf16.gmra.mxu0 %v404
      %v1244 = vpop.f32.mrf.mxu0
      %v1245 = vadd.f32 %v1205, %v1244
      %v1246 = vpop.f32.mrf.mxu0
      %v1247 = vadd.f32 %v1205, %v1246
      %1248 = vmatmul.bf16.gmra.mxu0 %v407
      %v1249 = vpop.f32.mrf.mxu0
      %v1250 = vadd.f32 %v1205, %v1249
      %v1251 = vpop.f32.mrf.mxu0
      %v1252 = vadd.f32 %v1205, %v1251
      %1253 = vmatmul.bf16.gmra.mxu0 %v410
      %v1254 = vpop.f32.mrf.mxu0
      %v1255 = vadd.f32 %v1205, %v1254
      %v1256 = vpop.f32.mrf.mxu0
      %v1257 = vadd.f32 %v1205, %v1256
      %1258 = vmatmul.bf16.gmra.mxu0 %v413
      %v1259 = vpop.f32.mrf.mxu0
      %v1260 = vadd.f32 %v1205, %v1259
      %v1261 = vpop.f32.mrf.mxu0
      %v1262 = vadd.f32 %v1205, %v1261
      %1263 = vmatmul.bf16.gmra.mxu0 %v416
      %v1264 = vpop.f32.mrf.mxu0
      %v1265 = vadd.f32 %v1205, %v1264
      %v1266 = vpop.f32.mrf.mxu0
      %v1267 = vadd.f32 %v1205, %v1266
      %1268 = vmatmul.bf16.gmra.mxu0 %v419
      %v1269 = vpop.f32.mrf.mxu0
      %v1270 = vadd.f32 %v1205, %v1269
      %v1271 = vpop.f32.mrf.mxu0
      %v1272 = vadd.f32 %v1205, %v1271
      %1273 = vmatmul.bf16.gmra.mxu0 %v422
      %v1274 = vpop.f32.mrf.mxu0
      %v1275 = vadd.f32 %v1205, %v1274
      %v1276 = vpop.f32.mrf.mxu0
      %v1277 = vadd.f32 %v1205, %v1276
      %1278 = vmatmul.bf16.gmra.mxu0 %v425
      %v1279 = vpop.f32.mrf.mxu0
      %v1280 = vadd.f32 %v1205, %v1279
      %v1281 = vpop.f32.mrf.mxu0
      %v1282 = vadd.f32 %v1205, %v1281
      %1283 = vmatmul.bf16.gmra.mxu0 %v428
      %v1284 = vpop.f32.mrf.mxu0
      %v1285 = vadd.f32 %v1205, %v1284
      %v1286 = vpop.f32.mrf.mxu0
      %v1287 = vadd.f32 %v1205, %v1286
      %1288 = vmatmul.bf16.gmra.mxu0 %v431
      %v1289 = vpop.f32.mrf.mxu0
      %v1290 = vadd.f32 %v1205, %v1289
      %v1291 = vpop.f32.mrf.mxu0
      %v1292 = vadd.f32 %v1205, %v1291
      %1293 = vmatmul.bf16.gmra.mxu0 %v434
      %v1294 = vpop.f32.mrf.mxu0
      %v1295 = vadd.f32 %v1205, %v1294
      %v1296 = vpop.f32.mrf.mxu0
      %v1297 = vadd.f32 %v1205, %v1296
      %1298 = vdwg.mxu0
      %v1299 = vxor.u32 %v1220, 2147483648
      %v1300 = vxor.u32 %v1222, 2147483648
      %v1301 = vxor.u32 %v1225, 2147483648
      %v1302 = vxor.u32 %v1227, 2147483648
      %v1303 = vxor.u32 %v1230, 2147483648
      %v1304 = vxor.u32 %v1232, 2147483648
      %v1305 = vxor.u32 %v1235, 2147483648
      %v1306 = vxor.u32 %v1237, 2147483648
      %v1307 = vxor.u32 %v1240, 2147483648
      %v1308 = vxor.u32 %v1242, 2147483648
      %v1309 = vxor.u32 %v1245, 2147483648
      %v1310 = vxor.u32 %v1247, 2147483648
      %v1311 = vxor.u32 %v1250, 2147483648
      %v1312 = vxor.u32 %v1252, 2147483648
      %v1313 = vxor.u32 %v1255, 2147483648
      %v1314 = vxor.u32 %v1257, 2147483648
      %v1315 = vxor.u32 %v1260, 2147483648
      %v1316 = vxor.u32 %v1262, 2147483648
      %v1317 = vxor.u32 %v1265, 2147483648
      %v1318 = vxor.u32 %v1267, 2147483648
      %v1319 = vxor.u32 %v1270, 2147483648
      %v1320 = vxor.u32 %v1272, 2147483648
      %v1321 = vxor.u32 %v1275, 2147483648
      %v1322 = vxor.u32 %v1277, 2147483648
      %v1323 = vxor.u32 %v1280, 2147483648
      %v1324 = vxor.u32 %v1282, 2147483648
      %v1325 = vxor.u32 %v1285, 2147483648
      %v1326 = vxor.u32 %v1287, 2147483648
      %v1327 = vxor.u32 %v1290, 2147483648
      %v1328 = vxor.u32 %v1292, 2147483648
      %v1329 = vxor.u32 %v1295, 2147483648
      %v1330 = vxor.u32 %v1297, 2147483648
      %v1331 = vmul.f32 %v1299, 1.442695
      %v1332 = vpow.pop %v1331
      %v1333 = vmul.f32 %v1300, 1.442695
      %v1334 = vpow.pop %v1333
      %v1335 = vmul.f32 %v1301, 1.442695
      %v1336 = vpow.pop %v1335
      %v1337 = vmul.f32 %v1302, 1.442695
      %v1338 = vpow.pop %v1337
      %v1339 = vmul.f32 %v1303, 1.442695
      %v1340 = vpow.pop %v1339
      %v1341 = vmul.f32 %v1304, 1.442695
      %v1342 = vpow.pop %v1341
      %v1343 = vmul.f32 %v1305, 1.442695
      %v1344 = vpow.pop %v1343
      %v1345 = vmul.f32 %v1306, 1.442695
      %v1346 = vpow.pop %v1345
      %v1347 = vmul.f32 %v1307, 1.442695
      %v1348 = vpow.pop %v1347
      %v1349 = vmul.f32 %v1308, 1.442695
      %v1350 = vpow.pop %v1349
      %v1351 = vmul.f32 %v1309, 1.442695
      %v1352 = vpow.pop %v1351
      %v1353 = vmul.f32 %v1310, 1.442695
      %v1354 = vpow.pop %v1353
      %v1355 = vmul.f32 %v1311, 1.442695
      %v1356 = vpow.pop %v1355
      %v1357 = vmul.f32 %v1312, 1.442695
      %v1358 = vpow.pop %v1357
      %v1359 = vmul.f32 %v1313, 1.442695
      %v1360 = vpow.pop %v1359
      %v1361 = vmul.f32 %v1314, 1.442695
      %v1362 = vpow.pop %v1361
      %v1363 = vmul.f32 %v1315, 1.442695
      %v1364 = vpow.pop %v1363
      %v1365 = vmul.f32 %v1316, 1.442695
      %v1366 = vpow.pop %v1365
      %v1367 = vmul.f32 %v1317, 1.442695
      %v1368 = vpow.pop %v1367
      %v1369 = vmul.f32 %v1318, 1.442695
      %v1370 = vpow.pop %v1369
      %v1371 = vmul.f32 %v1319, 1.442695
      %v1372 = vpow.pop %v1371
      %v1373 = vmul.f32 %v1320, 1.442695
      %v1374 = vpow.pop %v1373
      %v1375 = vmul.f32 %v1321, 1.442695
      %v1376 = vpow.pop %v1375
      %v1377 = vmul.f32 %v1322, 1.442695
      %v1378 = vpow.pop %v1377
      %v1379 = vmul.f32 %v1323, 1.442695
      %v1380 = vpow.pop %v1379
      %v1381 = vmul.f32 %v1324, 1.442695
      %v1382 = vpow.pop %v1381
      %v1383 = vmul.f32 %v1325, 1.442695
      %v1384 = vpow.pop %v1383
      %v1385 = vmul.f32 %v1326, 1.442695
      %v1386 = vpow.pop %v1385
      %v1387 = vmul.f32 %v1327, 1.442695
      %v1388 = vpow.pop %v1387
      %v1389 = vmul.f32 %v1328, 1.442695
      %v1390 = vpow.pop %v1389
      %v1391 = vmul.f32 %v1329, 1.442695
      %v1392 = vpow.pop %v1391
      %v1393 = vmul.f32 %v1330, 1.442695
      %v1394 = vpow.pop %v1393
      %v1395 = vadd.f32 %v1332, 1.0
      %v1396 = vadd.f32 %v1334, 1.0
      %v1397 = vadd.f32 %v1336, 1.0
      %v1398 = vadd.f32 %v1338, 1.0
      %v1399 = vadd.f32 %v1340, 1.0
      %v1400 = vadd.f32 %v1342, 1.0
      %v1401 = vadd.f32 %v1344, 1.0
      %v1402 = vadd.f32 %v1346, 1.0
      %v1403 = vadd.f32 %v1348, 1.0
      %v1404 = vadd.f32 %v1350, 1.0
      %v1405 = vadd.f32 %v1352, 1.0
      %v1406 = vadd.f32 %v1354, 1.0
      %v1407 = vadd.f32 %v1356, 1.0
      %v1408 = vadd.f32 %v1358, 1.0
      %v1409 = vadd.f32 %v1360, 1.0
      %v1410 = vadd.f32 %v1362, 1.0
      %v1411 = vadd.f32 %v1364, 1.0
      %v1412 = vadd.f32 %v1366, 1.0
      %v1413 = vadd.f32 %v1368, 1.0
      %v1414 = vadd.f32 %v1370, 1.0
      %v1415 = vadd.f32 %v1372, 1.0
      %v1416 = vadd.f32 %v1374, 1.0
      %v1417 = vadd.f32 %v1376, 1.0
      %v1418 = vadd.f32 %v1378, 1.0
      %v1419 = vadd.f32 %v1380, 1.0
      %v1420 = vadd.f32 %v1382, 1.0
      %v1421 = vadd.f32 %v1384, 1.0
      %v1422 = vadd.f32 %v1386, 1.0
      %v1423 = vadd.f32 %v1388, 1.0
      %v1424 = vadd.f32 %v1390, 1.0
      %v1425 = vadd.f32 %v1392, 1.0
      %v1426 = vadd.f32 %v1394, 1.0
      %v1427 = vrcp.pop %v1395
      %v1428 = vmul.f32 %v1395, %v1427
      %v1429 = vsub.f32 1.0, %v1428
      %v1430 = vmul.f32 %v1427, %v1429
      %v1431 = vadd.f32 %v1427, %v1430
      %vm1432 = vweird.f32 %v1395
      %vm1433 = vweird.f32 %v1427
      %vm1434 = vmor %vm1432, %vm1433
      %v1435 = vsel %vm1434, %v1427, %v1431
      %v1436 = vand.u32 2147483647, %v1395
      %vm1437 = vcmp.eq.f32.partialorder %v1436, 8.507059e+37
      %v1438 = vand.u32 %v1395, 2147483648
      %v1439 = vor.u32 1.1754944e-38, %v1438
      %v1440 = vsel %vm1437, %v1439, %v1435
      %v1441 = vmul.f32 1.0, %v1440
      %v1442 = vrcp.pop %v1396
      %v1443 = vmul.f32 %v1396, %v1442
      %v1444 = vsub.f32 1.0, %v1443
      %v1445 = vmul.f32 %v1442, %v1444
      %v1446 = vadd.f32 %v1442, %v1445
      %vm1447 = vweird.f32 %v1396
      %vm1448 = vweird.f32 %v1442
      %vm1449 = vmor %vm1447, %vm1448
      %v1450 = vsel %vm1449, %v1442, %v1446
      %v1451 = vand.u32 2147483647, %v1396
      %vm1452 = vcmp.eq.f32.partialorder %v1451, 8.507059e+37
      %v1453 = vand.u32 %v1396, 2147483648
      %v1454 = vor.u32 1.1754944e-38, %v1453
      %v1455 = vsel %vm1452, %v1454, %v1450
      %v1456 = vmul.f32 1.0, %v1455
      %v1457 = vrcp.pop %v1397
      %v1458 = vmul.f32 %v1397, %v1457
      %v1459 = vsub.f32 1.0, %v1458
      %v1460 = vmul.f32 %v1457, %v1459
      %v1461 = vadd.f32 %v1457, %v1460
      %vm1462 = vweird.f32 %v1397
      %vm1463 = vweird.f32 %v1457
      %vm1464 = vmor %vm1462, %vm1463
      %v1465 = vsel %vm1464, %v1457, %v1461
      %v1466 = vand.u32 2147483647, %v1397
      %vm1467 = vcmp.eq.f32.partialorder %v1466, 8.507059e+37
      %v1468 = vand.u32 %v1397, 2147483648
      %v1469 = vor.u32 1.1754944e-38, %v1468
      %v1470 = vsel %vm1467, %v1469, %v1465
      %v1471 = vmul.f32 1.0, %v1470
      %v1472 = vrcp.pop %v1398
      %v1473 = vmul.f32 %v1398, %v1472
      %v1474 = vsub.f32 1.0, %v1473
      %v1475 = vmul.f32 %v1472, %v1474
      %v1476 = vadd.f32 %v1472, %v1475
      %vm1477 = vweird.f32 %v1398
      %vm1478 = vweird.f32 %v1472
      %vm1479 = vmor %vm1477, %vm1478
      %v1480 = vsel %vm1479, %v1472, %v1476
      %v1481 = vand.u32 2147483647, %v1398
      %vm1482 = vcmp.eq.f32.partialorder %v1481, 8.507059e+37
      %v1483 = vand.u32 %v1398, 2147483648
      %v1484 = vor.u32 1.1754944e-38, %v1483
      %v1485 = vsel %vm1482, %v1484, %v1480
      %v1486 = vmul.f32 1.0, %v1485
      %v1487 = vrcp.pop %v1399
      %v1488 = vmul.f32 %v1399, %v1487
      %v1489 = vsub.f32 1.0, %v1488
      %v1490 = vmul.f32 %v1487, %v1489
      %v1491 = vadd.f32 %v1487, %v1490
      %vm1492 = vweird.f32 %v1399
      %vm1493 = vweird.f32 %v1487
      %vm1494 = vmor %vm1492, %vm1493
      %v1495 = vsel %vm1494, %v1487, %v1491
      %v1496 = vand.u32 2147483647, %v1399
      %vm1497 = vcmp.eq.f32.partialorder %v1496, 8.507059e+37
      %v1498 = vand.u32 %v1399, 2147483648
      %v1499 = vor.u32 1.1754944e-38, %v1498
      %v1500 = vsel %vm1497, %v1499, %v1495
      %v1501 = vmul.f32 1.0, %v1500
      %v1502 = vrcp.pop %v1400
      %v1503 = vmul.f32 %v1400, %v1502
      %v1504 = vsub.f32 1.0, %v1503
      %v1505 = vmul.f32 %v1502, %v1504
      %v1506 = vadd.f32 %v1502, %v1505
      %vm1507 = vweird.f32 %v1400
      %vm1508 = vweird.f32 %v1502
      %vm1509 = vmor %vm1507, %vm1508
      %v1510 = vsel %vm1509, %v1502, %v1506
      %v1511 = vand.u32 2147483647, %v1400
      %vm1512 = vcmp.eq.f32.partialorder %v1511, 8.507059e+37
      %v1513 = vand.u32 %v1400, 2147483648
      %v1514 = vor.u32 1.1754944e-38, %v1513
      %v1515 = vsel %vm1512, %v1514, %v1510
      %v1516 = vmul.f32 1.0, %v1515
      %v1517 = vrcp.pop %v1401
      %v1518 = vmul.f32 %v1401, %v1517
      %v1519 = vsub.f32 1.0, %v1518
      %v1520 = vmul.f32 %v1517, %v1519
      %v1521 = vadd.f32 %v1517, %v1520
      %vm1522 = vweird.f32 %v1401
      %vm1523 = vweird.f32 %v1517
      %vm1524 = vmor %vm1522, %vm1523
      %v1525 = vsel %vm1524, %v1517, %v1521
      %v1526 = vand.u32 2147483647, %v1401
      %vm1527 = vcmp.eq.f32.partialorder %v1526, 8.507059e+37
      %v1528 = vand.u32 %v1401, 2147483648
      %v1529 = vor.u32 1.1754944e-38, %v1528
      %v1530 = vsel %vm1527, %v1529, %v1525
      %v1531 = vmul.f32 1.0, %v1530
      %v1532 = vrcp.pop %v1402
      %v1533 = vmul.f32 %v1402, %v1532
      %v1534 = vsub.f32 1.0, %v1533
      %v1535 = vmul.f32 %v1532, %v1534
      %v1536 = vadd.f32 %v1532, %v1535
      %vm1537 = vweird.f32 %v1402
      %vm1538 = vweird.f32 %v1532
      %vm1539 = vmor %vm1537, %vm1538
      %v1540 = vsel %vm1539, %v1532, %v1536
      %v1541 = vand.u32 2147483647, %v1402
      %vm1542 = vcmp.eq.f32.partialorder %v1541, 8.507059e+37
      %v1543 = vand.u32 %v1402, 2147483648
      %v1544 = vor.u32 1.1754944e-38, %v1543
      %v1545 = vsel %vm1542, %v1544, %v1540
      %v1546 = vmul.f32 1.0, %v1545
      %v1547 = vrcp.pop %v1403
      %v1548 = vmul.f32 %v1403, %v1547
      %v1549 = vsub.f32 1.0, %v1548
      %v1550 = vmul.f32 %v1547, %v1549
      %v1551 = vadd.f32 %v1547, %v1550
      %vm1552 = vweird.f32 %v1403
      %vm1553 = vweird.f32 %v1547
      %vm1554 = vmor %vm1552, %vm1553
      %v1555 = vsel %vm1554, %v1547, %v1551
      %v1556 = vand.u32 2147483647, %v1403
      %vm1557 = vcmp.eq.f32.partialorder %v1556, 8.507059e+37
      %v1558 = vand.u32 %v1403, 2147483648
      %v1559 = vor.u32 1.1754944e-38, %v1558
      %v1560 = vsel %vm1557, %v1559, %v1555
      %v1561 = vmul.f32 1.0, %v1560
      %v1562 = vrcp.pop %v1404
      %v1563 = vmul.f32 %v1404, %v1562
      %v1564 = vsub.f32 1.0, %v1563
      %v1565 = vmul.f32 %v1562, %v1564
      %v1566 = vadd.f32 %v1562, %v1565
      %vm1567 = vweird.f32 %v1404
      %vm1568 = vweird.f32 %v1562
      %vm1569 = vmor %vm1567, %vm1568
      %v1570 = vsel %vm1569, %v1562, %v1566
      %v1571 = vand.u32 2147483647, %v1404
      %vm1572 = vcmp.eq.f32.partialorder %v1571, 8.507059e+37
      %v1573 = vand.u32 %v1404, 2147483648
      %v1574 = vor.u32 1.1754944e-38, %v1573
      %v1575 = vsel %vm1572, %v1574, %v1570
      %v1576 = vmul.f32 1.0, %v1575
      %v1577 = vrcp.pop %v1405
      %v1578 = vmul.f32 %v1405, %v1577
      %v1579 = vsub.f32 1.0, %v1578
      %v1580 = vmul.f32 %v1577, %v1579
      %v1581 = vadd.f32 %v1577, %v1580
      %vm1582 = vweird.f32 %v1405
      %vm1583 = vweird.f32 %v1577
      %vm1584 = vmor %vm1582, %vm1583
      %v1585 = vsel %vm1584, %v1577, %v1581
      %v1586 = vand.u32 2147483647, %v1405
      %vm1587 = vcmp.eq.f32.partialorder %v1586, 8.507059e+37
      %v1588 = vand.u32 %v1405, 2147483648
      %v1589 = vor.u32 1.1754944e-38, %v1588
      %v1590 = vsel %vm1587, %v1589, %v1585
      %v1591 = vmul.f32 1.0, %v1590
      %v1592 = vrcp.pop %v1406
      %v1593 = vmul.f32 %v1406, %v1592
      %v1594 = vsub.f32 1.0, %v1593
      %v1595 = vmul.f32 %v1592, %v1594
      %v1596 = vadd.f32 %v1592, %v1595
      %vm1597 = vweird.f32 %v1406
      %vm1598 = vweird.f32 %v1592
      %vm1599 = vmor %vm1597, %vm1598
      %v1600 = vsel %vm1599, %v1592, %v1596
      %v1601 = vand.u32 2147483647, %v1406
      %vm1602 = vcmp.eq.f32.partialorder %v1601, 8.507059e+37
      %v1603 = vand.u32 %v1406, 2147483648
      %v1604 = vor.u32 1.1754944e-38, %v1603
      %v1605 = vsel %vm1602, %v1604, %v1600
      %v1606 = vmul.f32 1.0, %v1605
      %v1607 = vrcp.pop %v1407
      %v1608 = vmul.f32 %v1407, %v1607
      %v1609 = vsub.f32 1.0, %v1608
      %v1610 = vmul.f32 %v1607, %v1609
      %v1611 = vadd.f32 %v1607, %v1610
      %vm1612 = vweird.f32 %v1407
      %vm1613 = vweird.f32 %v1607
      %vm1614 = vmor %vm1612, %vm1613
      %v1615 = vsel %vm1614, %v1607, %v1611
      %v1616 = vand.u32 2147483647, %v1407
      %vm1617 = vcmp.eq.f32.partialorder %v1616, 8.507059e+37
      %v1618 = vand.u32 %v1407, 2147483648
      %v1619 = vor.u32 1.1754944e-38, %v1618
      %v1620 = vsel %vm1617, %v1619, %v1615
      %v1621 = vmul.f32 1.0, %v1620
      %v1622 = vrcp.pop %v1408
      %v1623 = vmul.f32 %v1408, %v1622
      %v1624 = vsub.f32 1.0, %v1623
      %v1625 = vmul.f32 %v1622, %v1624
      %v1626 = vadd.f32 %v1622, %v1625
      %vm1627 = vweird.f32 %v1408
      %vm1628 = vweird.f32 %v1622
      %vm1629 = vmor %vm1627, %vm1628
      %v1630 = vsel %vm1629, %v1622, %v1626
      %v1631 = vand.u32 2147483647, %v1408
      %vm1632 = vcmp.eq.f32.partialorder %v1631, 8.507059e+37
      %v1633 = vand.u32 %v1408, 2147483648
      %v1634 = vor.u32 1.1754944e-38, %v1633
      %v1635 = vsel %vm1632, %v1634, %v1630
      %v1636 = vmul.f32 1.0, %v1635
      %v1637 = vrcp.pop %v1409
      %v1638 = vmul.f32 %v1409, %v1637
      %v1639 = vsub.f32 1.0, %v1638
      %v1640 = vmul.f32 %v1637, %v1639
      %v1641 = vadd.f32 %v1637, %v1640
      %vm1642 = vweird.f32 %v1409
      %vm1643 = vweird.f32 %v1637
      %vm1644 = vmor %vm1642, %vm1643
      %v1645 = vsel %vm1644, %v1637, %v1641
      %v1646 = vand.u32 2147483647, %v1409
      %vm1647 = vcmp.eq.f32.partialorder %v1646, 8.507059e+37
      %v1648 = vand.u32 %v1409, 2147483648
      %v1649 = vor.u32 1.1754944e-38, %v1648
      %v1650 = vsel %vm1647, %v1649, %v1645
      %v1651 = vmul.f32 1.0, %v1650
      %v1652 = vrcp.pop %v1410
      %v1653 = vmul.f32 %v1410, %v1652
      %v1654 = vsub.f32 1.0, %v1653
      %v1655 = vmul.f32 %v1652, %v1654
      %v1656 = vadd.f32 %v1652, %v1655
      %vm1657 = vweird.f32 %v1410
      %vm1658 = vweird.f32 %v1652
      %vm1659 = vmor %vm1657, %vm1658
      %v1660 = vsel %vm1659, %v1652, %v1656
      %v1661 = vand.u32 2147483647, %v1410
      %vm1662 = vcmp.eq.f32.partialorder %v1661, 8.507059e+37
      %v1663 = vand.u32 %v1410, 2147483648
      %v1664 = vor.u32 1.1754944e-38, %v1663
      %v1665 = vsel %vm1662, %v1664, %v1660
      %v1666 = vmul.f32 1.0, %v1665
      %v1667 = vrcp.pop %v1411
      %v1668 = vmul.f32 %v1411, %v1667
      %v1669 = vsub.f32 1.0, %v1668
      %v1670 = vmul.f32 %v1667, %v1669
      %v1671 = vadd.f32 %v1667, %v1670
      %vm1672 = vweird.f32 %v1411
      %vm1673 = vweird.f32 %v1667
      %vm1674 = vmor %vm1672, %vm1673
      %v1675 = vsel %vm1674, %v1667, %v1671
      %v1676 = vand.u32 2147483647, %v1411
      %vm1677 = vcmp.eq.f32.partialorder %v1676, 8.507059e+37
      %v1678 = vand.u32 %v1411, 2147483648
      %v1679 = vor.u32 1.1754944e-38, %v1678
      %v1680 = vsel %vm1677, %v1679, %v1675
      %v1681 = vmul.f32 1.0, %v1680
      %v1682 = vrcp.pop %v1412
      %v1683 = vmul.f32 %v1412, %v1682
      %v1684 = vsub.f32 1.0, %v1683
      %v1685 = vmul.f32 %v1682, %v1684
      %v1686 = vadd.f32 %v1682, %v1685
      %vm1687 = vweird.f32 %v1412
      %vm1688 = vweird.f32 %v1682
      %vm1689 = vmor %vm1687, %vm1688
      %v1690 = vsel %vm1689, %v1682, %v1686
      %v1691 = vand.u32 2147483647, %v1412
      %vm1692 = vcmp.eq.f32.partialorder %v1691, 8.507059e+37
      %v1693 = vand.u32 %v1412, 2147483648
      %v1694 = vor.u32 1.1754944e-38, %v1693
      %v1695 = vsel %vm1692, %v1694, %v1690
      %v1696 = vmul.f32 1.0, %v1695
      %v1697 = vrcp.pop %v1413
      %v1698 = vmul.f32 %v1413, %v1697
      %v1699 = vsub.f32 1.0, %v1698
      %v1700 = vmul.f32 %v1697, %v1699
      %v1701 = vadd.f32 %v1697, %v1700
      %vm1702 = vweird.f32 %v1413
      %vm1703 = vweird.f32 %v1697
      %vm1704 = vmor %vm1702, %vm1703
      %v1705 = vsel %vm1704, %v1697, %v1701
      %v1706 = vand.u32 2147483647, %v1413
      %vm1707 = vcmp.eq.f32.partialorder %v1706, 8.507059e+37
      %v1708 = vand.u32 %v1413, 2147483648
      %v1709 = vor.u32 1.1754944e-38, %v1708
      %v1710 = vsel %vm1707, %v1709, %v1705
      %v1711 = vmul.f32 1.0, %v1710
      %v1712 = vrcp.pop %v1414
      %v1713 = vmul.f32 %v1414, %v1712
      %v1714 = vsub.f32 1.0, %v1713
      %v1715 = vmul.f32 %v1712, %v1714
      %v1716 = vadd.f32 %v1712, %v1715
      %vm1717 = vweird.f32 %v1414
      %vm1718 = vweird.f32 %v1712
      %vm1719 = vmor %vm1717, %vm1718
      %v1720 = vsel %vm1719, %v1712, %v1716
      %v1721 = vand.u32 2147483647, %v1414
      %vm1722 = vcmp.eq.f32.partialorder %v1721, 8.507059e+37
      %v1723 = vand.u32 %v1414, 2147483648
      %v1724 = vor.u32 1.1754944e-38, %v1723
      %v1725 = vsel %vm1722, %v1724, %v1720
      %v1726 = vmul.f32 1.0, %v1725
      %v1727 = vrcp.pop %v1415
      %v1728 = vmul.f32 %v1415, %v1727
      %v1729 = vsub.f32 1.0, %v1728
      %v1730 = vmul.f32 %v1727, %v1729
      %v1731 = vadd.f32 %v1727, %v1730
      %vm1732 = vweird.f32 %v1415
      %vm1733 = vweird.f32 %v1727
      %vm1734 = vmor %vm1732, %vm1733
      %v1735 = vsel %vm1734, %v1727, %v1731
      %v1736 = vand.u32 2147483647, %v1415
      %vm1737 = vcmp.eq.f32.partialorder %v1736, 8.507059e+37
      %v1738 = vand.u32 %v1415, 2147483648
      %v1739 = vor.u32 1.1754944e-38, %v1738
      %v1740 = vsel %vm1737, %v1739, %v1735
      %v1741 = vmul.f32 1.0, %v1740
      %v1742 = vrcp.pop %v1416
      %v1743 = vmul.f32 %v1416, %v1742
      %v1744 = vsub.f32 1.0, %v1743
      %v1745 = vmul.f32 %v1742, %v1744
      %v1746 = vadd.f32 %v1742, %v1745
      %vm1747 = vweird.f32 %v1416
      %vm1748 = vweird.f32 %v1742
      %vm1749 = vmor %vm1747, %vm1748
      %v1750 = vsel %vm1749, %v1742, %v1746
      %v1751 = vand.u32 2147483647, %v1416
      %vm1752 = vcmp.eq.f32.partialorder %v1751, 8.507059e+37
      %v1753 = vand.u32 %v1416, 2147483648
      %v1754 = vor.u32 1.1754944e-38, %v1753
      %v1755 = vsel %vm1752, %v1754, %v1750
      %v1756 = vmul.f32 1.0, %v1755
      %v1757 = vrcp.pop %v1417
      %v1758 = vmul.f32 %v1417, %v1757
      %v1759 = vsub.f32 1.0, %v1758
      %v1760 = vmul.f32 %v1757, %v1759
      %v1761 = vadd.f32 %v1757, %v1760
      %vm1762 = vweird.f32 %v1417
      %vm1763 = vweird.f32 %v1757
      %vm1764 = vmor %vm1762, %vm1763
      %v1765 = vsel %vm1764, %v1757, %v1761
      %v1766 = vand.u32 2147483647, %v1417
      %vm1767 = vcmp.eq.f32.partialorder %v1766, 8.507059e+37
      %v1768 = vand.u32 %v1417, 2147483648
      %v1769 = vor.u32 1.1754944e-38, %v1768
      %v1770 = vsel %vm1767, %v1769, %v1765
      %v1771 = vmul.f32 1.0, %v1770
      %v1772 = vrcp.pop %v1418
      %v1773 = vmul.f32 %v1418, %v1772
      %v1774 = vsub.f32 1.0, %v1773
      %v1775 = vmul.f32 %v1772, %v1774
      %v1776 = vadd.f32 %v1772, %v1775
      %vm1777 = vweird.f32 %v1418
      %vm1778 = vweird.f32 %v1772
      %vm1779 = vmor %vm1777, %vm1778
      %v1780 = vsel %vm1779, %v1772, %v1776
      %v1781 = vand.u32 2147483647, %v1418
      %vm1782 = vcmp.eq.f32.partialorder %v1781, 8.507059e+37
      %v1783 = vand.u32 %v1418, 2147483648
      %v1784 = vor.u32 1.1754944e-38, %v1783
      %v1785 = vsel %vm1782, %v1784, %v1780
      %v1786 = vmul.f32 1.0, %v1785
      %v1787 = vrcp.pop %v1419
      %v1788 = vmul.f32 %v1419, %v1787
      %v1789 = vsub.f32 1.0, %v1788
      %v1790 = vmul.f32 %v1787, %v1789
      %v1791 = vadd.f32 %v1787, %v1790
      %vm1792 = vweird.f32 %v1419
      %vm1793 = vweird.f32 %v1787
      %vm1794 = vmor %vm1792, %vm1793
      %v1795 = vsel %vm1794, %v1787, %v1791
      %v1796 = vand.u32 2147483647, %v1419
      %vm1797 = vcmp.eq.f32.partialorder %v1796, 8.507059e+37
      %v1798 = vand.u32 %v1419, 2147483648
      %v1799 = vor.u32 1.1754944e-38, %v1798
      %v1800 = vsel %vm1797, %v1799, %v1795
      %v1801 = vmul.f32 1.0, %v1800
      %v1802 = vrcp.pop %v1420
      %v1803 = vmul.f32 %v1420, %v1802
      %v1804 = vsub.f32 1.0, %v1803
      %v1805 = vmul.f32 %v1802, %v1804
      %v1806 = vadd.f32 %v1802, %v1805
      %vm1807 = vweird.f32 %v1420
      %vm1808 = vweird.f32 %v1802
      %vm1809 = vmor %vm1807, %vm1808
      %v1810 = vsel %vm1809, %v1802, %v1806
      %v1811 = vand.u32 2147483647, %v1420
      %vm1812 = vcmp.eq.f32.partialorder %v1811, 8.507059e+37
      %v1813 = vand.u32 %v1420, 2147483648
      %v1814 = vor.u32 1.1754944e-38, %v1813
      %v1815 = vsel %vm1812, %v1814, %v1810
      %v1816 = vmul.f32 1.0, %v1815
      %v1817 = vrcp.pop %v1421
      %v1818 = vmul.f32 %v1421, %v1817
      %v1819 = vsub.f32 1.0, %v1818
      %v1820 = vmul.f32 %v1817, %v1819
      %v1821 = vadd.f32 %v1817, %v1820
      %vm1822 = vweird.f32 %v1421
      %vm1823 = vweird.f32 %v1817
      %vm1824 = vmor %vm1822, %vm1823
      %v1825 = vsel %vm1824, %v1817, %v1821
      %v1826 = vand.u32 2147483647, %v1421
      %vm1827 = vcmp.eq.f32.partialorder %v1826, 8.507059e+37
      %v1828 = vand.u32 %v1421, 2147483648
      %v1829 = vor.u32 1.1754944e-38, %v1828
      %v1830 = vsel %vm1827, %v1829, %v1825
      %v1831 = vmul.f32 1.0, %v1830
      %v1832 = vrcp.pop %v1422
      %v1833 = vmul.f32 %v1422, %v1832
      %v1834 = vsub.f32 1.0, %v1833
      %v1835 = vmul.f32 %v1832, %v1834
      %v1836 = vadd.f32 %v1832, %v1835
      %vm1837 = vweird.f32 %v1422
      %vm1838 = vweird.f32 %v1832
      %vm1839 = vmor %vm1837, %vm1838
      %v1840 = vsel %vm1839, %v1832, %v1836
      %v1841 = vand.u32 2147483647, %v1422
      %vm1842 = vcmp.eq.f32.partialorder %v1841, 8.507059e+37
      %v1843 = vand.u32 %v1422, 2147483648
      %v1844 = vor.u32 1.1754944e-38, %v1843
      %v1845 = vsel %vm1842, %v1844, %v1840
      %v1846 = vmul.f32 1.0, %v1845
      %v1847 = vrcp.pop %v1423
      %v1848 = vmul.f32 %v1423, %v1847
      %v1849 = vsub.f32 1.0, %v1848
      %v1850 = vmul.f32 %v1847, %v1849
      %v1851 = vadd.f32 %v1847, %v1850
      %vm1852 = vweird.f32 %v1423
      %vm1853 = vweird.f32 %v1847
      %vm1854 = vmor %vm1852, %vm1853
      %v1855 = vsel %vm1854, %v1847, %v1851
      %v1856 = vand.u32 2147483647, %v1423
      %vm1857 = vcmp.eq.f32.partialorder %v1856, 8.507059e+37
      %v1858 = vand.u32 %v1423, 2147483648
      %v1859 = vor.u32 1.1754944e-38, %v1858
      %v1860 = vsel %vm1857, %v1859, %v1855
      %v1861 = vmul.f32 1.0, %v1860
      %v1862 = vrcp.pop %v1424
      %v1863 = vmul.f32 %v1424, %v1862
      %v1864 = vsub.f32 1.0, %v1863
      %v1865 = vmul.f32 %v1862, %v1864
      %v1866 = vadd.f32 %v1862, %v1865
      %vm1867 = vweird.f32 %v1424
      %vm1868 = vweird.f32 %v1862
      %vm1869 = vmor %vm1867, %vm1868
      %v1870 = vsel %vm1869, %v1862, %v1866
      %v1871 = vand.u32 2147483647, %v1424
      %vm1872 = vcmp.eq.f32.partialorder %v1871, 8.507059e+37
      %v1873 = vand.u32 %v1424, 2147483648
      %v1874 = vor.u32 1.1754944e-38, %v1873
      %v1875 = vsel %vm1872, %v1874, %v1870
      %v1876 = vmul.f32 1.0, %v1875
      %v1877 = vrcp.pop %v1425
      %v1878 = vmul.f32 %v1425, %v1877
      %v1879 = vsub.f32 1.0, %v1878
      %v1880 = vmul.f32 %v1877, %v1879
      %v1881 = vadd.f32 %v1877, %v1880
      %vm1882 = vweird.f32 %v1425
      %vm1883 = vweird.f32 %v1877
      %vm1884 = vmor %vm1882, %vm1883
      %v1885 = vsel %vm1884, %v1877, %v1881
      %v1886 = vand.u32 2147483647, %v1425
      %vm1887 = vcmp.eq.f32.partialorder %v1886, 8.507059e+37
      %v1888 = vand.u32 %v1425, 2147483648
      %v1889 = vor.u32 1.1754944e-38, %v1888
      %v1890 = vsel %vm1887, %v1889, %v1885
      %v1891 = vmul.f32 1.0, %v1890
      %v1892 = vrcp.pop %v1426
      %v1893 = vmul.f32 %v1426, %v1892
      %v1894 = vsub.f32 1.0, %v1893
      %v1895 = vmul.f32 %v1892, %v1894
      %v1896 = vadd.f32 %v1892, %v1895
      %vm1897 = vweird.f32 %v1426
      %vm1898 = vweird.f32 %v1892
      %vm1899 = vmor %vm1897, %vm1898
      %v1900 = vsel %vm1899, %v1892, %v1896
      %v1901 = vand.u32 2147483647, %v1426
      %vm1902 = vcmp.eq.f32.partialorder %v1901, 8.507059e+37
      %v1903 = vand.u32 %v1426, 2147483648
      %v1904 = vor.u32 1.1754944e-38, %v1903
      %v1905 = vsel %vm1902, %v1904, %v1900
      %v1906 = vmul.f32 1.0, %v1905
      %v1907 = vmul.f32 %v1220, %v1441
      %v1908 = vmul.f32 %v1222, %v1456
      %v1909 = vmul.f32 %v1225, %v1471
      %v1910 = vmul.f32 %v1227, %v1486
      %v1911 = vmul.f32 %v1230, %v1501
      %v1912 = vmul.f32 %v1232, %v1516
      %v1913 = vmul.f32 %v1235, %v1531
      %v1914 = vmul.f32 %v1237, %v1546
      %v1915 = vmul.f32 %v1240, %v1561
      %v1916 = vmul.f32 %v1242, %v1576
      %v1917 = vmul.f32 %v1245, %v1591
      %v1918 = vmul.f32 %v1247, %v1606
      %v1919 = vmul.f32 %v1250, %v1621
      %v1920 = vmul.f32 %v1252, %v1636
      %v1921 = vmul.f32 %v1255, %v1651
      %v1922 = vmul.f32 %v1257, %v1666
      %v1923 = vmul.f32 %v1260, %v1681
      %v1924 = vmul.f32 %v1262, %v1696
      %v1925 = vmul.f32 %v1265, %v1711
      %v1926 = vmul.f32 %v1267, %v1726
      %v1927 = vmul.f32 %v1270, %v1741
      %v1928 = vmul.f32 %v1272, %v1756
      %v1929 = vmul.f32 %v1275, %v1771
      %v1930 = vmul.f32 %v1277, %v1786
      %v1931 = vmul.f32 %v1280, %v1801
      %v1932 = vmul.f32 %v1282, %v1816
      %v1933 = vmul.f32 %v1285, %v1831
      %v1934 = vmul.f32 %v1287, %v1846
      %v1935 = vmul.f32 %v1290, %v1861
      %v1936 = vmul.f32 %v1292, %v1876
      %v1937 = vmul.f32 %v1295, %v1891
      %v1938 = vmul.f32 %v1297, %v1906
      %1939 = vst.msk [vmem:[%s267] sm:$0xff] %vm1169, %v1907
      %1940 = vst.msk [vmem:[%s267 + $0x8] sm:$0xff] %vm1169, %v1908
      %1941 = vst.msk [vmem:[%s267 + $0x10] sm:$0xff] %vm1169, %v1909
      %1942 = vst.msk [vmem:[%s267 + $0x18] sm:$0xff] %vm1169, %v1910
      %1943 = vst.msk [vmem:[%s267 + $0x20] sm:$0xff] %vm1169, %v1911
      %1944 = vst.msk [vmem:[%s267 + $0x28] sm:$0xff] %vm1169, %v1912
      %1945 = vst.msk [vmem:[%s267 + $0x30] sm:$0xff] %vm1169, %v1913
      %1946 = vst.msk [vmem:[%s267 + $0x38] sm:$0xff] %vm1169, %v1914
      %1947 = vst.msk [vmem:[%s267 + $0x40] sm:$0xff] %vm1169, %v1915
      %1948 = vst.msk [vmem:[%s267 + $0x48] sm:$0xff] %vm1169, %v1916
      %1949 = vst.msk [vmem:[%s267 + $0x50] sm:$0xff] %vm1169, %v1917
      %1950 = vst.msk [vmem:[%s267 + $0x58] sm:$0xff] %vm1169, %v1918
      %1951 = vst.msk [vmem:[%s267 + $0x60] sm:$0xff] %vm1169, %v1919
      %1952 = vst.msk [vmem:[%s267 + $0x68] sm:$0xff] %vm1169, %v1920
      %1953 = vst.msk [vmem:[%s267 + $0x70] sm:$0xff] %vm1169, %v1921
      %1954 = vst.msk [vmem:[%s267 + $0x78] sm:$0xff] %vm1169, %v1922
      %1955 = vst.msk [vmem:[%s267 + $0x80] sm:$0xff] %vm1169, %v1923
      %1956 = vst.msk [vmem:[%s267 + $0x88] sm:$0xff] %vm1169, %v1924
      %1957 = vst.msk [vmem:[%s267 + $0x90] sm:$0xff] %vm1169, %v1925
      %1958 = vst.msk [vmem:[%s267 + $0x98] sm:$0xff] %vm1169, %v1926
      %1959 = vst.msk [vmem:[%s267 + $0xa0] sm:$0xff] %vm1169, %v1927
      %1960 = vst.msk [vmem:[%s267 + $0xa8] sm:$0xff] %vm1169, %v1928
      %1961 = vst.msk [vmem:[%s267 + $0xb0] sm:$0xff] %vm1169, %v1929
      %1962 = vst.msk [vmem:[%s267 + $0xb8] sm:$0xff] %vm1169, %v1930
      %1963 = vst.msk [vmem:[%s267 + $0xc0] sm:$0xff] %vm1169, %v1931
      %1964 = vst.msk [vmem:[%s267 + $0xc8] sm:$0xff] %vm1169, %v1932
      %1965 = vst.msk [vmem:[%s267 + $0xd0] sm:$0xff] %vm1169, %v1933
      %1966 = vst.msk [vmem:[%s267 + $0xd8] sm:$0xff] %vm1169, %v1934
      %1967 = vst.msk [vmem:[%s267 + $0xe0] sm:$0xff] %vm1169, %v1935
      %1968 = vst.msk [vmem:[%s267 + $0xe8] sm:$0xff] %vm1169, %v1936
      %1969 = vst.msk [vmem:[%s267 + $0xf0] sm:$0xff] %vm1169, %v1937
      %1970 = vst.msk [vmem:[%s267 + $0xf8] sm:$0xff] %vm1169, %v1938
      %s1971 = smul.u32 32, %s18
      %p1972 = scmp.lt.s32.totalorder %s1971, 63
      %s1973 = scalar_select %p1972, %s1971, 63
      %s1974 = smul.addr %s1973, 8
      %s1975 = scalar_lea.vmem %s5, %s1974
      %s1976 = smul.u32 32, %s18
      %p1977 = scmp.lt.s32.totalorder %s1976, 63
      %s1978 = scalar_select %p1977, %s1976, 63
      %s1979 = smul.addr %s1978, 8
      %s1980 = scalar_lea.vmem %s6, %s1979
      // Predicated region
      $region41: #{c3_forward.4} parent=39 // pred_check
        %p1981 = pneg %p146
      $region42: #{c3_forward.4} parent=39 // pred_check_branch
        %1983 = sbr.rel (%p1981) target = $region44
      $region43: #{c3_forward.4} parent=39 // pred_region
        %s1984 = smul.u32 32, %s18
      $region44: #{c3_forward.4} parent=39 // pred_fallthru
        _
      // Predicated region
      $region45: #{c3_forward.4} parent=39 // pred_check
        %p1985 = pneg %p172
      $region46: #{c3_forward.4} parent=39 // pred_check_branch
        %1987 = sbr.rel (%p1985) target = $region48
      $region47: #{c3_forward.4} parent=39 // pred_region
        %s1988 = smul.u32 32, %s18
      $region48: #{c3_forward.4} parent=39 // pred_fallthru
        _
    $region40: #{c3_forward.4} parent=5 // pred_fallthru
      _
    %p1989 = scmp.le.s32.totalorder 2, %s13
    // Predicated region
    $region49: #{c3_forward.4} parent=5 // pred_check
      %p1990 = pneg %p1989
    $region50: #{c3_forward.4} parent=5 // pred_check_branch
      %1992 = sbr.rel (%p1990) target = $region52
    $region51: #{c3_forward.4} parent=5 // pred_region
      %s1993 = ssub.s32 %s13, 2
      // Predicated region
      $region53: #{c3_forward.4} parent=51 // pred_check
        %p1994 = pneg %p152
      $region54: #{c3_forward.4} parent=51 // pred_check_branch
        %1996 = sbr.rel (%p1994) target = $region56
      $region55: #{c3_forward.4} parent=51 // pred_region
        %s1997 = smul.u32 32, %s19
        %p1998 = scmp.lt.s32.totalorder %s1997, 63
        %s1999 = scalar_select %p1998, %s1997, 63
        %s2000 = smul.addr %s1999, 8
        %s2001 = scalar_lea.vmem %s5, %s2000
      $region56: #{c3_forward.4} parent=51 // pred_fallthru
        _
      // Predicated region
      $region57: #{c3_forward.4} parent=51 // pred_check
        %p2002 = pneg %p178
      $region58: #{c3_forward.4} parent=51 // pred_check_branch
        %2004 = sbr.rel (%p2002) target = $region60
      $region59: #{c3_forward.4} parent=51 // pred_region
        %s2005 = smul.u32 32, %s19
        %p2006 = scmp.lt.s32.totalorder %s2005, 63
        %s2007 = scalar_select %p2006, %s2005, 63
        %s2008 = smul.addr %s2007, 8
        %s2009 = scalar_lea.vmem %s6, %s2008
      $region60: #{c3_forward.4} parent=51 // pred_fallthru
        _
    $region52: #{c3_forward.4} parent=5 // pred_fallthru
      _
  $region6: #{c3_forward.4} parent=0 // loop_footer
    %s17 = sadd.s32 1, %s13
  $region7: #{c3_forward.4} parent=0 // loop_footer_branch
    %12 = sbr.rel target = $region3
  $region8: #{c3_forward.4} parent=0 // loop_exit
    _

// kernel: c3_forward.7
$region0: #{c3_forward.7}
  #allocation0 [shape = 'u32[]', space=smem, size = 0x4, offset = 0x4, fixed_abs, tag = 'smem constant byte address 0x4 - core index']
  #allocation1 [shape = 'u32[72,128]{1,0:T(1,128)}', space=vmem, size = 0x9000, scoped, tag = 'internal scratch']
  %s0 = inlined_call_operand.vmem [shape: bf16[512,2], index: 0, kind: input, shape index: {}]
  %s1 = inlined_call_operand.vmem [shape: bf16[512,2], index: 1, kind: input, shape index: {}]
  %s2 = inlined_call_operand.vmem [shape: bf16[2,4], index: 2, kind: input, shape index: {}]
  %s3 = inlined_call_operand.vmem [shape: bf16[2,4], index: 3, kind: input, shape index: {}]
  %s4 = inlined_call_operand.vmem [shape: f32[1,4], index: 4, kind: input, shape index: {}]
  %s5 = inlined_call_operand.vmem [shape: f32[512,4], index: 5, kind: output, shape index: {}]
  %s6 = sld [smem:[#allocation0]]
  $region53: #{c3_forward.7} parent=0
    _
  %s8 = ssub.s32 1, %s6
  %s9 = scalar_select 0, %s8, %s6
  loop: start=0, step=1, limit=4
  $region2: #{c3_forward.7} parent=0 // loop_pre_header
    _
  $region3: #{c3_forward.7} parent=0 // loop_header
    %s11 = sphi 0, %s15
    %p12 = scmp.ge.s32.totalorder %s11, 4
    %s21 = sphi 0, %s23
    %s24 = sphi 0, %s21
    %s25 = sphi 0, %s24
    %s41 = sphi 0, %s25
    %s47 = sphi 0, %s49
    %s50 = sphi 0, %s47
    %s51 = sphi 0, %s50
    %s67 = sphi 0, %s51
    %s71 = sphi 0, %s71
    %s73 = sphi 0, %s71
    %s74 = sphi 0, %s73
    %s88 = sphi 0, %s74
    %s92 = sphi 0, %s92
    %s94 = sphi 0, %s92
    %s95 = sphi 0, %s94
    %s109 = sphi 0, %s95
    %s113 = sphi 0, %s113
    %s115 = sphi 0, %s113
    %s116 = sphi 0, %s115
    %s130 = sphi 0, %s116
    %s136 = sphi 0, %s138
    %s139 = sphi 0, %s136
    %s140 = sphi 0, %s139
    %s156 = sphi 0, %s140
  $region4: #{c3_forward.7} parent=0 // loop_header_branch
    %14 = sbr.rel (%p12) target = $region8
  $region5: #{c3_forward.7} parent=0 // loop_body
    %s16 = ssub.s32 %s11, 1
    %s17 = ssub.s32 %s11, 2
    %s18 = sadd.s32 %s11, 1
    %s19 = ssub.s32 %s11, %s18
    %p20 = scmp.eq.s32.totalorder %s19, 0
    %s22 = sadd.s32 %s21, 1
    %s23 = scalar_select %p20, %s21, %s22
    %p26 = pneg %p20
    %p27 = scmp.eq.s32.totalorder %s11, 1
    %p28 = por %p26, %p27
    %p29 = scmp.ne.s32.totalorder %s21, %s24
    %p30 = scmp.eq.s32.totalorder %s11, 0
    %p31 = por %p29, %p30
    %p32 = scmp.ne.s32.totalorder %s21, %s24
    %p33 = scmp.eq.s32.totalorder %s16, 1
    %p34 = por %p32, %p33
    %p35 = scmp.ne.s32.totalorder %s24, %s25
    %p36 = scmp.eq.s32.totalorder %s16, 0
    %p37 = por %p35, %p36
    %p38 = scmp.ne.s32.totalorder %s24, %s25
    %p39 = scmp.eq.s32.totalorder %s17, 1
    %p40 = por %p38, %p39
    %p42 = scmp.ne.s32.totalorder %s25, %s41
    %p43 = scmp.eq.s32.totalorder %s17, 0
    %p44 = por %p42, %p43
    %s45 = ssub.s32 %s11, %s18
    %p46 = scmp.eq.s32.totalorder %s45, 0
    %s48 = sadd.s32 %s47, 1
    %s49 = scalar_select %p46, %s47, %s48
    %p52 = pneg %p46
    %p53 = scmp.eq.s32.totalorder %s11, 1
    %p54 = por %p52, %p53
    %p55 = scmp.ne.s32.totalorder %s47, %s50
    %p56 = scmp.eq.s32.totalorder %s11, 0
    %p57 = por %p55, %p56
    %p58 = scmp.ne.s32.totalorder %s47, %s50
    %p59 = scmp.eq.s32.totalorder %s16, 1
    %p60 = por %p58, %p59
    %p61 = scmp.ne.s32.totalorder %s50, %s51
    %p62 = scmp.eq.s32.totalorder %s16, 0
    %p63 = por %p61, %p62
    %p64 = scmp.ne.s32.totalorder %s50, %s51
    %p65 = scmp.eq.s32.totalorder %s17, 1
    %p66 = por %p64, %p65
    %p68 = scmp.ne.s32.totalorder %s51, %s67
    %p69 = scmp.eq.s32.totalorder %s17, 0
    %p70 = por %p68, %p69
    %s72 = sadd.s32 %s71, 1
    %p75 = scmp.eq.s32.totalorder %s11, 1
    %p76 = scmp.ne.s32.totalorder %s71, %s73
    %p77 = scmp.eq.s32.totalorder %s11, 0
    %p78 = por %p76, %p77
    %p79 = scmp.ne.s32.totalorder %s71, %s73
    %p80 = scmp.eq.s32.totalorder %s16, 1
    %p81 = por %p79, %p80
    %p82 = scmp.ne.s32.totalorder %s73, %s74
    %p83 = scmp.eq.s32.totalorder %s16, 0
    %p84 = por %p82, %p83
    %p85 = scmp.ne.s32.totalorder %s73, %s74
    %p86 = scmp.eq.s32.totalorder %s17, 1
    %p87 = por %p85, %p86
    %p89 = scmp.ne.s32.totalorder %s74, %s88
    %p90 = scmp.eq.s32.totalorder %s17, 0
    %p91 = por %p89, %p90
    %s93 = sadd.s32 %s92, 1
    %p96 = scmp.eq.s32.totalorder %s11, 1
    %p97 = scmp.ne.s32.totalorder %s92, %s94
    %p98 = scmp.eq.s32.totalorder %s11, 0
    %p99 = por %p97, %p98
    %p100 = scmp.ne.s32.totalorder %s92, %s94
    %p101 = scmp.eq.s32.totalorder %s16, 1
    %p102 = por %p100, %p101
    %p103 = scmp.ne.s32.totalorder %s94, %s95
    %p104 = scmp.eq.s32.totalorder %s16, 0
    %p105 = por %p103, %p104
    %p106 = scmp.ne.s32.totalorder %s94, %s95
    %p107 = scmp.eq.s32.totalorder %s17, 1
    %p108 = por %p106, %p107
    %p110 = scmp.ne.s32.totalorder %s95, %s109
    %p111 = scmp.eq.s32.totalorder %s17, 0
    %p112 = por %p110, %p111
    %s114 = sadd.s32 %s113, 1
    %p117 = scmp.eq.s32.totalorder %s11, 1
    %p118 = scmp.ne.s32.totalorder %s113, %s115
    %p119 = scmp.eq.s32.totalorder %s11, 0
    %p120 = por %p118, %p119
    %p121 = scmp.ne.s32.totalorder %s113, %s115
    %p122 = scmp.eq.s32.totalorder %s16, 1
    %p123 = por %p121, %p122
    %p124 = scmp.ne.s32.totalorder %s115, %s116
    %p125 = scmp.eq.s32.totalorder %s16, 0
    %p126 = por %p124, %p125
    %p127 = scmp.ne.s32.totalorder %s115, %s116
    %p128 = scmp.eq.s32.totalorder %s17, 1
    %p129 = por %p127, %p128
    %p131 = scmp.ne.s32.totalorder %s116, %s130
    %p132 = scmp.eq.s32.totalorder %s17, 0
    %p133 = por %p131, %p132
    %s134 = ssub.s32 %s11, %s18
    %p135 = scmp.eq.s32.totalorder %s134, 0
    %s137 = sadd.s32 %s136, 1
    %s138 = scalar_select %p135, %s136, %s137
    %p141 = pneg %p135
    %p142 = scmp.eq.s32.totalorder %s11, 1
    %p143 = por %p141, %p142
    %p144 = scmp.ne.s32.totalorder %s136, %s139
    %p145 = scmp.eq.s32.totalorder %s11, 0
    %p146 = por %p144, %p145
    %p147 = scmp.ne.s32.totalorder %s136, %s139
    %p148 = scmp.eq.s32.totalorder %s16, 1
    %p149 = por %p147, %p148
    %p150 = scmp.ne.s32.totalorder %s139, %s140
    %p151 = scmp.eq.s32.totalorder %s16, 0
    %p152 = por %p150, %p151
    %p153 = scmp.ne.s32.totalorder %s139, %s140
    %p154 = scmp.eq.s32.totalorder %s17, 1
    %p155 = por %p153, %p154
    %p157 = scmp.ne.s32.totalorder %s140, %s156
    %p158 = scmp.eq.s32.totalorder %s17, 0
    %p159 = por %p157, %p158
    %p160 = scmp.le.s32.totalorder 1, %s11
    %p161 = scmp.lt.s32.totalorder %s11, 3
    %p162 = pnand %p160, %p161
    %p163 = pneg %p162
    // Predicated region
    $region9: #{c3_forward.7} parent=5 // pred_check
      _
    $region10: #{c3_forward.7} parent=5 // pred_check_branch
      %165 = sbr.rel (%p162) target = $region12
    $region11: #{c3_forward.7} parent=5 // pred_region
      %s166 = ssub.s32 %s11, 1
      // Predicated region
      $region13: #{c3_forward.7} parent=11 // pred_check
        %p167 = pneg %p84
      $region14: #{c3_forward.7} parent=11 // pred_check_branch
        %169 = sbr.rel (%p167) target = $region16
      $region15: #{c3_forward.7} parent=11 // pred_region
        _
      $region16: #{c3_forward.7} parent=11 // pred_fallthru
        _
      // Predicated region
      $region17: #{c3_forward.7} parent=11 // pred_check
        %p170 = pneg %p105
      $region18: #{c3_forward.7} parent=11 // pred_check_branch
        %172 = sbr.rel (%p170) target = $region20
      $region19: #{c3_forward.7} parent=11 // pred_region
        _
      $region20: #{c3_forward.7} parent=11 // pred_fallthru
        _
      // Predicated region
      $region21: #{c3_forward.7} parent=11 // pred_check
        %p173 = pneg %p126
      $region22: #{c3_forward.7} parent=11 // pred_check_branch
        %175 = sbr.rel (%p173) target = $region24
      $region23: #{c3_forward.7} parent=11 // pred_region
        _
      $region24: #{c3_forward.7} parent=11 // pred_fallthru
        _
    $region12: #{c3_forward.7} parent=5 // pred_fallthru
      _
    %p176 = scmp.lt.s32.totalorder %s11, 2
    // Predicated region
    $region25: #{c3_forward.7} parent=5 // pred_check
      %p177 = pneg %p176
    $region26: #{c3_forward.7} parent=5 // pred_check_branch
      %179 = sbr.rel (%p177) target = $region28
    $region27: #{c3_forward.7} parent=5 // pred_region
      // Predicated region
      $region29: #{c3_forward.7} parent=27 // pred_check
        %p180 = pneg %p31
      $region30: #{c3_forward.7} parent=27 // pred_check_branch
        %182 = sbr.rel (%p180) target = $region32
      $region31: #{c3_forward.7} parent=27 // pred_region
        %s183 = smul.u32 32, %s11
        %p184 = scmp.lt.s32.totalorder %s183, 63
        %s185 = scalar_select %p184, %s183, 63
        %s186 = smul.addr %s185, 4
        %s187 = scalar_lea.vmem %s0, %s186
        %s188 = smul.u32 32, %s11
      $region32: #{c3_forward.7} parent=27 // pred_fallthru
        _
      // Predicated region
      $region33: #{c3_forward.7} parent=27 // pred_check
        %p189 = pneg %p57
      $region34: #{c3_forward.7} parent=27 // pred_check_branch
        %191 = sbr.rel (%p189) target = $region36
      $region35: #{c3_forward.7} parent=27 // pred_region
        %s192 = smul.u32 32, %s11
        %p193 = scmp.lt.s32.totalorder %s192, 63
        %s194 = scalar_select %p193, %s192, 63
        %s195 = smul.addr %s194, 4
        %s196 = scalar_lea.vmem %s1, %s195
        %s197 = smul.u32 32, %s11
      $region36: #{c3_forward.7} parent=27 // pred_fallthru
        _
    $region28: #{c3_forward.7} parent=5 // pred_fallthru
      _
    %p198 = scmp.le.s32.totalorder 1, %s11
    %p199 = scmp.lt.s32.totalorder %s11, 3
    %p200 = pnand %p198, %p199
    %p201 = pneg %p200
    // Predicated region
    $region37: #{c3_forward.7} parent=5 // pred_check
      _
    $region38: #{c3_forward.7} parent=5 // pred_check_branch
      %203 = sbr.rel (%p200) target = $region40
    $region39: #{c3_forward.7} parent=5 // pred_region
      %s204 = ssub.s32 %s11, 1
      %s205 = smul.u32 32, %s16
      %p206 = scmp.lt.s32.totalorder %s205, 63
      %s207 = scalar_select %p206, %s205, 63
      %s208 = smul.addr %s207, 4
      %s209 = scalar_lea.vmem %s0, %s208
      %p210 = pneg %p37
      %p211 = pneg %p34
      %s212 = smul.u32 32, %s16
      %p213 = scmp.lt.s32.totalorder %s212, 63
      %s214 = scalar_select %p213, %s212, 63
      %s215 = smul.addr %s214, 4
      %s216 = scalar_lea.vmem %s1, %s215
      %p217 = pneg %p63
      %p218 = pneg %p60
      %p219 = pneg %p84
      %p220 = pneg %p81
      %p221 = pneg %p105
      %p222 = pneg %p102
      %p223 = pneg %p126
      %p224 = pneg %p123
      %p225 = pneg %p152
      %p226 = pneg %p149
      %s227 = smul.u32 32, %s16
      %p228 = scmp.lt.s32.totalorder %s227, 63
      %s229 = scalar_select %p228, %s227, 63
      %s230 = smul.addr %s229, 8
      %s231 = scalar_lea.vmem %s5, %s230
      %s232 = smul.u32 32, %s16
      %p233 = scmp.lt.s32.totalorder %s232, 63
      %s234 = scalar_select %p233, %s232, 63
      %s235 = smul.addr %s234, 4
      %s236 = scalar_lea.vmem %s0, %s235
      %s237 = smul.u32 32, %s16
      %s238 = smul.u32 32, %s16
      %p239 = scmp.lt.s32.totalorder %s238, 63
      %s240 = scalar_select %p239, %s238, 63
      %s241 = smul.addr %s240, 4
      %s242 = scalar_lea.vmem %s1, %s241
      %s243 = smul.u32 32, %s16
      %s244 = smul.u32 32, %s16
      %p245 = scmp.lt.s32.totalorder %s244, 63
      %s246 = scalar_select %p245, %s244, 63
      %s247 = smul.addr %s246, 8
      %s248 = scalar_lea.vmem %s5, %s247
      %s249 = smul.u32 32, %s16
      %v251 = vld [vmem:[%s236] sm:$0xf]
      %v252 = vld [vmem:[%s236 + $0x4] sm:$0xf]
      %v253 = vld [vmem:[%s236 + $0x8] sm:$0xf]
      %v254 = vld [vmem:[%s236 + $0xc] sm:$0xf]
      %v255 = vld [vmem:[%s236 + $0x10] sm:$0xf]
      %v256 = vld [vmem:[%s236 + $0x14] sm:$0xf]
      %v257 = vld [vmem:[%s236 + $0x18] sm:$0xf]
      %v258 = vld [vmem:[%s236 + $0x1c] sm:$0xf]
      %v259 = vld [vmem:[%s236 + $0x20] sm:$0xf]
      %v260 = vld [vmem:[%s236 + $0x24] sm:$0xf]
      %v261 = vld [vmem:[%s236 + $0x28] sm:$0xf]
      %v262 = vld [vmem:[%s236 + $0x2c] sm:$0xf]
      %v263 = vld [vmem:[%s236 + $0x30] sm:$0xf]
      %v264 = vld [vmem:[%s236 + $0x34] sm:$0xf]
      %v265 = vld [vmem:[%s236 + $0x38] sm:$0xf]
      %v266 = vld [vmem:[%s236 + $0x3c] sm:$0xf]
      %v267 = vld [vmem:[%s236 + $0x40] sm:$0xf]
      %v268 = vld [vmem:[%s236 + $0x44] sm:$0xf]
      %v269 = vld [vmem:[%s236 + $0x48] sm:$0xf]
      %v270 = vld [vmem:[%s236 + $0x4c] sm:$0xf]
      %v271 = vld [vmem:[%s236 + $0x50] sm:$0xf]
      %v272 = vld [vmem:[%s236 + $0x54] sm:$0xf]
      %v273 = vld [vmem:[%s236 + $0x58] sm:$0xf]
      %v274 = vld [vmem:[%s236 + $0x5c] sm:$0xf]
      %v275 = vld [vmem:[%s236 + $0x60] sm:$0xf]
      %v276 = vld [vmem:[%s236 + $0x64] sm:$0xf]
      %v277 = vld [vmem:[%s236 + $0x68] sm:$0xf]
      %v278 = vld [vmem:[%s236 + $0x6c] sm:$0xf]
      %v279 = vld [vmem:[%s236 + $0x70] sm:$0xf]
      %v280 = vld [vmem:[%s236 + $0x74] sm:$0xf]
      %v281 = vld [vmem:[%s236 + $0x78] sm:$0xf]
      %v282 = vld [vmem:[%s236 + $0x7c] sm:$0xf]
      %v283 = vld [vmem:[%s2] sm:$0x1]
      %v284 = vld [vmem:[%s242] sm:$0xf]
      %v285 = vld [vmem:[%s242 + $0x4] sm:$0xf]
      %v286 = vld [vmem:[%s242 + $0x8] sm:$0xf]
      %v287 = vld [vmem:[%s242 + $0xc] sm:$0xf]
      %v288 = vld [vmem:[%s242 + $0x10] sm:$0xf]
      %v289 = vld [vmem:[%s242 + $0x14] sm:$0xf]
      %v290 = vld [vmem:[%s242 + $0x18] sm:$0xf]
      %v291 = vld [vmem:[%s242 + $0x1c] sm:$0xf]
      %v292 = vld [vmem:[%s242 + $0x20] sm:$0xf]
      %v293 = vld [vmem:[%s242 + $0x24] sm:$0xf]
      %v294 = vld [vmem:[%s242 + $0x28] sm:$0xf]
      %v295 = vld [vmem:[%s242 + $0x2c] sm:$0xf]
      %v296 = vld [vmem:[%s242 + $0x30] sm:$0xf]
      %v297 = vld [vmem:[%s242 + $0x34] sm:$0xf]
      %v298 = vld [vmem:[%s242 + $0x38] sm:$0xf]
      %v299 = vld [vmem:[%s242 + $0x3c] sm:$0xf]
      %v300 = vld [vmem:[%s242 + $0x40] sm:$0xf]
      %v301 = vld [vmem:[%s242 + $0x44] sm:$0xf]
      %v302 = vld [vmem:[%s242 + $0x48] sm:$0xf]
      %v303 = vld [vmem:[%s242 + $0x4c] sm:$0xf]
      %v304 = vld [vmem:[%s242 + $0x50] sm:$0xf]
      %v305 = vld [vmem:[%s242 + $0x54] sm:$0xf]
      %v306 = vld [vmem:[%s242 + $0x58] sm:$0xf]
      %v307 = vld [vmem:[%s242 + $0x5c] sm:$0xf]
      %v308 = vld [vmem:[%s242 + $0x60] sm:$0xf]
      %v309 = vld [vmem:[%s242 + $0x64] sm:$0xf]
      %v310 = vld [vmem:[%s242 + $0x68] sm:$0xf]
      %v311 = vld [vmem:[%s242 + $0x6c] sm:$0xf]
      %v312 = vld [vmem:[%s242 + $0x70] sm:$0xf]
      %v313 = vld [vmem:[%s242 + $0x74] sm:$0xf]
      %v314 = vld [vmem:[%s242 + $0x78] sm:$0xf]
      %v315 = vld [vmem:[%s242 + $0x7c] sm:$0xf]
      %v316 = vld [vmem:[%s3] sm:$0x1]
      %v349 = vunpack.c.l.b16 %v284
      %v350 = vunpack.c.l.b16 %v285
      %v351 = vunpack.c.l.b16 %v286
      %v352 = vunpack.c.l.b16 %v287
      %v353 = vunpack.c.l.b16 %v288
      %v354 = vunpack.c.l.b16 %v289
      %v355 = vunpack.c.l.b16 %v290
      %v356 = vunpack.c.l.b16 %v291
      %v357 = vunpack.c.l.b16 %v292
      %v358 = vunpack.c.l.b16 %v293
      %v359 = vunpack.c.l.b16 %v294
      %v360 = vunpack.c.l.b16 %v295
      %v361 = vunpack.c.l.b16 %v296
      %v362 = vunpack.c.l.b16 %v297
      %v363 = vunpack.c.l.b16 %v298
      %v364 = vunpack.c.l.b16 %v299
      %v365 = vunpack.c.l.b16 %v300
      %v366 = vunpack.c.l.b16 %v301
      %v367 = vunpack.c.l.b16 %v302
      %v368 = vunpack.c.l.b16 %v303
      %v369 = vunpack.c.l.b16 %v304
      %v370 = vunpack.c.l.b16 %v305
      %v371 = vunpack.c.l.b16 %v306
      %v372 = vunpack.c.l.b16 %v307
      %v373 = vunpack.c.l.b16 %v308
      %v374 = vunpack.c.l.b16 %v309
      %v375 = vunpack.c.l.b16 %v310
      %v376 = vunpack.c.l.b16 %v311
      %v377 = vunpack.c.l.b16 %v312
      %v378 = vunpack.c.l.b16 %v313
      %v379 = vunpack.c.l.b16 %v314
      %v380 = vunpack.c.l.b16 %v315
      %v381 = vpack.c.b16 %v350, %v349
      %v382 = vpack.c.b16 %v352, %v351
      %v383 = vpack.c.b16 %v354, %v353
      %v384 = vpack.c.b16 %v356, %v355
      %v385 = vpack.c.b16 %v358, %v357
      %v386 = vpack.c.b16 %v360, %v359
      %v387 = vpack.c.b16 %v362, %v361
      %v388 = vpack.c.b16 %v364, %v363
      %v389 = vpack.c.b16 %v366, %v365
      %v390 = vpack.c.b16 %v368, %v367
      %v391 = vpack.c.b16 %v370, %v369
      %v392 = vpack.c.b16 %v372, %v371
      %v393 = vpack.c.b16 %v374, %v373
      %v394 = vpack.c.b16 %v376, %v375
      %v395 = vpack.c.b16 %v378, %v377
      %v396 = vpack.c.b16 %v380, %v379
      %vm397 = vcmask 15360
      %v399 = vsel %vm397, %v381, 0
      %v402 = vsel %vm397, %v382, 0
      %v405 = vsel %vm397, %v383, 0
      %v408 = vsel %vm397, %v384, 0
      %v411 = vsel %vm397, %v385, 0
      %v414 = vsel %vm397, %v386, 0
      %v417 = vsel %vm397, %v387, 0
      %v420 = vsel %vm397, %v388, 0
      %v423 = vsel %vm397, %v389, 0
      %v426 = vsel %vm397, %v390, 0
      %v429 = vsel %vm397, %v391, 0
      %v432 = vsel %vm397, %v392, 0
      %v435 = vsel %vm397, %v393, 0
      %v438 = vsel %vm397, %v394, 0
      %v441 = vsel %vm397, %v395, 0
      %v444 = vsel %vm397, %v396, 0
      %vm446 = vcmask 1040384
      %v448 = vsel %vm446, %v316, 0
      %450 = vmatpush.bf16.msra.mxu0 0
      %451 = vmatpush.bf16.msra.mxu0 0
      %452 = vmatpush.bf16.msra.mxu0 0
      %453 = vmatpush.bf16.msra.mxu0 0
      %454 = vmatpush.bf16.msra.mxu0 0
      %455 = vmatpush.bf16.msra.mxu0 0
      %456 = vmatpush.bf16.msra.mxu0 0
      %457 = vmatpush.bf16.msra.mxu0 %v448
      %458 = vmatmul.bf16.gmra.mxu0 %v399
      %v459 = vpop.f32.mrf.mxu0
      %v460 = vadd.f32 0.0, %v459
      %v461 = vpop.f32.mrf.mxu0
      %v462 = vadd.f32 0.0, %v461
      %463 = vmatmul.bf16.gmra.mxu0 %v402
      %v464 = vpop.f32.mrf.mxu0
      %v465 = vadd.f32 0.0, %v464
      %v466 = vpop.f32.mrf.mxu0
      %v467 = vadd.f32 0.0, %v466
      %468 = vmatmul.bf16.gmra.mxu0 %v405
      %v469 = vpop.f32.mrf.mxu0
      %v470 = vadd.f32 0.0, %v469
      %v471 = vpop.f32.mrf.mxu0
      %v472 = vadd.f32 0.0, %v471
      %473 = vmatmul.bf16.gmra.mxu0 %v408
      %v474 = vpop.f32.mrf.mxu0
      %v475 = vadd.f32 0.0, %v474
      %v476 = vpop.f32.mrf.mxu0
      %v477 = vadd.f32 0.0, %v476
      %478 = vmatmul.bf16.gmra.mxu0 %v411
      %v479 = vpop.f32.mrf.mxu0
      %v480 = vadd.f32 0.0, %v479
      %v481 = vpop.f32.mrf.mxu0
      %v482 = vadd.f32 0.0, %v481
      %483 = vmatmul.bf16.gmra.mxu0 %v414
      %v484 = vpop.f32.mrf.mxu0
      %v485 = vadd.f32 0.0, %v484
      %v486 = vpop.f32.mrf.mxu0
      %v487 = vadd.f32 0.0, %v486
      %488 = vmatmul.bf16.gmra.mxu0 %v417
      %v489 = vpop.f32.mrf.mxu0
      %v490 = vadd.f32 0.0, %v489
      %v491 = vpop.f32.mrf.mxu0
      %v492 = vadd.f32 0.0, %v491
      %493 = vmatmul.bf16.gmra.mxu0 %v420
      %v494 = vpop.f32.mrf.mxu0
      %v495 = vadd.f32 0.0, %v494
      %v496 = vpop.f32.mrf.mxu0
      %v497 = vadd.f32 0.0, %v496
      %498 = vmatmul.bf16.gmra.mxu0 %v423
      %v499 = vpop.f32.mrf.mxu0
      %v500 = vadd.f32 0.0, %v499
      %v501 = vpop.f32.mrf.mxu0
      %v502 = vadd.f32 0.0, %v501
      %503 = vmatmul.bf16.gmra.mxu0 %v426
      %v504 = vpop.f32.mrf.mxu0
      %v505 = vadd.f32 0.0, %v504
      %v506 = vpop.f32.mrf.mxu0
      %v507 = vadd.f32 0.0, %v506
      %508 = vmatmul.bf16.gmra.mxu0 %v429
      %v509 = vpop.f32.mrf.mxu0
      %v510 = vadd.f32 0.0, %v509
      %v511 = vpop.f32.mrf.mxu0
      %v512 = vadd.f32 0.0, %v511
      %513 = vmatmul.bf16.gmra.mxu0 %v432
      %v514 = vpop.f32.mrf.mxu0
      %v515 = vadd.f32 0.0, %v514
      %v516 = vpop.f32.mrf.mxu0
      %v517 = vadd.f32 0.0, %v516
      %518 = vmatmul.bf16.gmra.mxu0 %v435
      %v519 = vpop.f32.mrf.mxu0
      %v520 = vadd.f32 0.0, %v519
      %v521 = vpop.f32.mrf.mxu0
      %v522 = vadd.f32 0.0, %v521
      %523 = vmatmul.bf16.gmra.mxu0 %v438
      %v524 = vpop.f32.mrf.mxu0
      %v525 = vadd.f32 0.0, %v524
      %v526 = vpop.f32.mrf.mxu0
      %v527 = vadd.f32 0.0, %v526
      %528 = vmatmul.bf16.gmra.mxu0 %v441
      %v529 = vpop.f32.mrf.mxu0
      %v530 = vadd.f32 0.0, %v529
      %v531 = vpop.f32.mrf.mxu0
      %v532 = vadd.f32 0.0, %v531
      %533 = vmatmul.bf16.gmra.mxu0 %v444
      %v534 = vpop.f32.mrf.mxu0
      %v535 = vadd.f32 0.0, %v534
      %v536 = vpop.f32.mrf.mxu0
      %v537 = vadd.f32 0.0, %v536
      %538 = vdwg.mxu0
      %v571 = vunpack.c.l.b16 %v251
      %v572 = vunpack.c.l.b16 %v252
      %v573 = vunpack.c.l.b16 %v253
      %v574 = vunpack.c.l.b16 %v254
      %v575 = vunpack.c.l.b16 %v255
      %v576 = vunpack.c.l.b16 %v256
      %v577 = vunpack.c.l.b16 %v257
      %v578 = vunpack.c.l.b16 %v258
      %v579 = vunpack.c.l.b16 %v259
      %v580 = vunpack.c.l.b16 %v260
      %v581 = vunpack.c.l.b16 %v261
      %v582 = vunpack.c.l.b16 %v262
      %v583 = vunpack.c.l.b16 %v263
      %v584 = vunpack.c.l.b16 %v264
      %v585 = vunpack.c.l.b16 %v265
      %v586 = vunpack.c.l.b16 %v266
      %v587 = vunpack.c.l.b16 %v267
      %v588 = vunpack.c.l.b16 %v268
      %v589 = vunpack.c.l.b16 %v269
      %v590 = vunpack.c.l.b16 %v270
      %v591 = vunpack.c.l.b16 %v271
      %v592 = vunpack.c.l.b16 %v272
      %v593 = vunpack.c.l.b16 %v273
      %v594 = vunpack.c.l.b16 %v274
      %v595 = vunpack.c.l.b16 %v275
      %v596 = vunpack.c.l.b16 %v276
      %v597 = vunpack.c.l.b16 %v277
      %v598 = vunpack.c.l.b16 %v278
      %v599 = vunpack.c.l.b16 %v279
      %v600 = vunpack.c.l.b16 %v280
      %v601 = vunpack.c.l.b16 %v281
      %v602 = vunpack.c.l.b16 %v282
      %v603 = vpack.c.b16 %v572, %v571
      %v604 = vpack.c.b16 %v574, %v573
      %v605 = vpack.c.b16 %v576, %v575
      %v606 = vpack.c.b16 %v578, %v577
      %v607 = vpack.c.b16 %v580, %v579
      %v608 = vpack.c.b16 %v582, %v581
      %v609 = vpack.c.b16 %v584, %v583
      %v610 = vpack.c.b16 %v586, %v585
      %v611 = vpack.c.b16 %v588, %v587
      %v612 = vpack.c.b16 %v590, %v589
      %v613 = vpack.c.b16 %v592, %v591
      %v614 = vpack.c.b16 %v594, %v593
      %v615 = vpack.c.b16 %v596, %v595
      %v616 = vpack.c.b16 %v598, %v597
      %v617 = vpack.c.b16 %v600, %v599
      %v618 = vpack.c.b16 %v602, %v601
      %v620 = vsel %vm397, %v603, 0
      %v623 = vsel %vm397, %v604, 0
      %v626 = vsel %vm397, %v605, 0
      %v629 = vsel %vm397, %v606, 0
      %v632 = vsel %vm397, %v607, 0
      %v635 = vsel %vm397, %v608, 0
      %v638 = vsel %vm397, %v609, 0
      %v641 = vsel %vm397, %v610, 0
      %v644 = vsel %vm397, %v611, 0
      %v647 = vsel %vm397, %v612, 0
      %v650 = vsel %vm397, %v613, 0
      %v653 = vsel %vm397, %v614, 0
      %v656 = vsel %vm397, %v615, 0
      %v659 = vsel %vm397, %v616, 0
      %v662 = vsel %vm397, %v617, 0
      %v665 = vsel %vm397, %v618, 0
      %v668 = vsel %vm446, %v283, 0
      %670 = vmatpush.bf16.msra.mxu0 0
      %671 = vmatpush.bf16.msra.mxu0 0
      %672 = vmatpush.bf16.msra.mxu0 0
      %673 = vmatpush.bf16.msra.mxu0 0
      %674 = vmatpush.bf16.msra.mxu0 0
      %675 = vmatpush.bf16.msra.mxu0 0
      %676 = vmatpush.bf16.msra.mxu0 0
      %677 = vmatpush.bf16.msra.mxu0 %v668
      %678 = vmatmul.bf16.gmra.mxu0 %v620
      %v679 = vpop.f32.mrf.mxu0
      %v680 = vadd.f32 %v460, %v679
      %v681 = vpop.f32.mrf.mxu0
      %v682 = vadd.f32 %v462, %v681
      %683 = vmatmul.bf16.gmra.mxu0 %v623
      %v684 = vpop.f32.mrf.mxu0
      %v685 = vadd.f32 %v465, %v684
      %v686 = vpop.f32.mrf.mxu0
      %v687 = vadd.f32 %v467, %v686
      %688 = vmatmul.bf16.gmra.mxu0 %v626
      %v689 = vpop.f32.mrf.mxu0
      %v690 = vadd.f32 %v470, %v689
      %v691 = vpop.f32.mrf.mxu0
      %v692 = vadd.f32 %v472, %v691
      %693 = vmatmul.bf16.gmra.mxu0 %v629
      %v694 = vpop.f32.mrf.mxu0
      %v695 = vadd.f32 %v475, %v694
      %v696 = vpop.f32.mrf.mxu0
      %v697 = vadd.f32 %v477, %v696
      %698 = vmatmul.bf16.gmra.mxu0 %v632
      %v699 = vpop.f32.mrf.mxu0
      %v700 = vadd.f32 %v480, %v699
      %v701 = vpop.f32.mrf.mxu0
      %v702 = vadd.f32 %v482, %v701
      %703 = vmatmul.bf16.gmra.mxu0 %v635
      %v704 = vpop.f32.mrf.mxu0
      %v705 = vadd.f32 %v485, %v704
      %v706 = vpop.f32.mrf.mxu0
      %v707 = vadd.f32 %v487, %v706
      %708 = vmatmul.bf16.gmra.mxu0 %v638
      %v709 = vpop.f32.mrf.mxu0
      %v710 = vadd.f32 %v490, %v709
      %v711 = vpop.f32.mrf.mxu0
      %v712 = vadd.f32 %v492, %v711
      %713 = vmatmul.bf16.gmra.mxu0 %v641
      %v714 = vpop.f32.mrf.mxu0
      %v715 = vadd.f32 %v495, %v714
      %v716 = vpop.f32.mrf.mxu0
      %v717 = vadd.f32 %v497, %v716
      %718 = vmatmul.bf16.gmra.mxu0 %v644
      %v719 = vpop.f32.mrf.mxu0
      %v720 = vadd.f32 %v500, %v719
      %v721 = vpop.f32.mrf.mxu0
      %v722 = vadd.f32 %v502, %v721
      %723 = vmatmul.bf16.gmra.mxu0 %v647
      %v724 = vpop.f32.mrf.mxu0
      %v725 = vadd.f32 %v505, %v724
      %v726 = vpop.f32.mrf.mxu0
      %v727 = vadd.f32 %v507, %v726
      %728 = vmatmul.bf16.gmra.mxu0 %v650
      %v729 = vpop.f32.mrf.mxu0
      %v730 = vadd.f32 %v510, %v729
      %v731 = vpop.f32.mrf.mxu0
      %v732 = vadd.f32 %v512, %v731
      %733 = vmatmul.bf16.gmra.mxu0 %v653
      %v734 = vpop.f32.mrf.mxu0
      %v735 = vadd.f32 %v515, %v734
      %v736 = vpop.f32.mrf.mxu0
      %v737 = vadd.f32 %v517, %v736
      %738 = vmatmul.bf16.gmra.mxu0 %v656
      %v739 = vpop.f32.mrf.mxu0
      %v740 = vadd.f32 %v520, %v739
      %v741 = vpop.f32.mrf.mxu0
      %v742 = vadd.f32 %v522, %v741
      %743 = vmatmul.bf16.gmra.mxu0 %v659
      %v744 = vpop.f32.mrf.mxu0
      %v745 = vadd.f32 %v525, %v744
      %v746 = vpop.f32.mrf.mxu0
      %v747 = vadd.f32 %v527, %v746
      %748 = vmatmul.bf16.gmra.mxu0 %v662
      %v749 = vpop.f32.mrf.mxu0
      %v750 = vadd.f32 %v530, %v749
      %v751 = vpop.f32.mrf.mxu0
      %v752 = vadd.f32 %v532, %v751
      %753 = vmatmul.bf16.gmra.mxu0 %v665
      %v754 = vpop.f32.mrf.mxu0
      %v755 = vadd.f32 %v535, %v754
      %v756 = vpop.f32.mrf.mxu0
      %v757 = vadd.f32 %v537, %v756
      %758 = vdwg.mxu0
      %v759 = vld [vmem:[%s4] sm:$0x1]
      %v761 = vperm.slane %v759, 0
      %v763 = vadd.f32 %v680, %v761
      %v764 = vadd.f32 %v682, %v761
      %v765 = vadd.f32 %v685, %v761
      %v766 = vadd.f32 %v687, %v761
      %v767 = vadd.f32 %v690, %v761
      %v768 = vadd.f32 %v692, %v761
      %v769 = vadd.f32 %v695, %v761
      %v770 = vadd.f32 %v697, %v761
      %v771 = vadd.f32 %v700, %v761
      %v772 = vadd.f32 %v702, %v761
      %v773 = vadd.f32 %v705, %v761
      %v774 = vadd.f32 %v707, %v761
      %v775 = vadd.f32 %v710, %v761
      %v776 = vadd.f32 %v712, %v761
      %v777 = vadd.f32 %v715, %v761
      %v778 = vadd.f32 %v717, %v761
      %v779 = vadd.f32 %v720, %v761
      %v780 = vadd.f32 %v722, %v761
      %v781 = vadd.f32 %v725, %v761
      %v782 = vadd.f32 %v727, %v761
      %v783 = vadd.f32 %v730, %v761
      %v784 = vadd.f32 %v732, %v761
      %v785 = vadd.f32 %v735, %v761
      %v786 = vadd.f32 %v737, %v761
      %v787 = vadd.f32 %v740, %v761
      %v788 = vadd.f32 %v742, %v761
      %v789 = vadd.f32 %v745, %v761
      %v790 = vadd.f32 %v747, %v761
      %v791 = vadd.f32 %v750, %v761
      %v792 = vadd.f32 %v752, %v761
      %v793 = vadd.f32 %v755, %v761
      %v794 = vadd.f32 %v757, %v761
      %v795 = vxor.u32 %v763, 2147483648
      %v796 = vxor.u32 %v764, 2147483648
      %v797 = vxor.u32 %v765, 2147483648
      %v798 = vxor.u32 %v766, 2147483648
      %v799 = vxor.u32 %v767, 2147483648
      %v800 = vxor.u32 %v768, 2147483648
      %v801 = vxor.u32 %v769, 2147483648
      %v802 = vxor.u32 %v770, 2147483648
      %v803 = vxor.u32 %v771, 2147483648
      %v804 = vxor.u32 %v772, 2147483648
      %v805 = vxor.u32 %v773, 2147483648
      %v806 = vxor.u32 %v774, 2147483648
      %v807 = vxor.u32 %v775, 2147483648
      %v808 = vxor.u32 %v776, 2147483648
      %v809 = vxor.u32 %v777, 2147483648
      %v810 = vxor.u32 %v778, 2147483648
      %v811 = vxor.u32 %v779, 2147483648
      %v812 = vxor.u32 %v780, 2147483648
      %v813 = vxor.u32 %v781, 2147483648
      %v814 = vxor.u32 %v782, 2147483648
      %v815 = vxor.u32 %v783, 2147483648
      %v816 = vxor.u32 %v784, 2147483648
      %v817 = vxor.u32 %v785, 2147483648
      %v818 = vxor.u32 %v786, 2147483648
      %v819 = vxor.u32 %v787, 2147483648
      %v820 = vxor.u32 %v788, 2147483648
      %v821 = vxor.u32 %v789, 2147483648
      %v822 = vxor.u32 %v790, 2147483648
      %v823 = vxor.u32 %v791, 2147483648
      %v824 = vxor.u32 %v792, 2147483648
      %v825 = vxor.u32 %v793, 2147483648
      %v826 = vxor.u32 %v794, 2147483648
      %v827 = vmul.f32 %v795, 1.442695
      %v828 = vpow.pop %v827
      %v829 = vmul.f32 %v796, 1.442695
      %v830 = vpow.pop %v829
      %v831 = vmul.f32 %v797, 1.442695
      %v832 = vpow.pop %v831
      %v833 = vmul.f32 %v798, 1.442695
      %v834 = vpow.pop %v833
      %v835 = vmul.f32 %v799, 1.442695
      %v836 = vpow.pop %v835
      %v837 = vmul.f32 %v800, 1.442695
      %v838 = vpow.pop %v837
      %v839 = vmul.f32 %v801, 1.442695
      %v840 = vpow.pop %v839
      %v841 = vmul.f32 %v802, 1.442695
      %v842 = vpow.pop %v841
      %v843 = vmul.f32 %v803, 1.442695
      %v844 = vpow.pop %v843
      %v845 = vmul.f32 %v804, 1.442695
      %v846 = vpow.pop %v845
      %v847 = vmul.f32 %v805, 1.442695
      %v848 = vpow.pop %v847
      %v849 = vmul.f32 %v806, 1.442695
      %v850 = vpow.pop %v849
      %v851 = vmul.f32 %v807, 1.442695
      %v852 = vpow.pop %v851
      %v853 = vmul.f32 %v808, 1.442695
      %v854 = vpow.pop %v853
      %v855 = vmul.f32 %v809, 1.442695
      %v856 = vpow.pop %v855
      %v857 = vmul.f32 %v810, 1.442695
      %v858 = vpow.pop %v857
      %v859 = vmul.f32 %v811, 1.442695
      %v860 = vpow.pop %v859
      %v861 = vmul.f32 %v812, 1.442695
      %v862 = vpow.pop %v861
      %v863 = vmul.f32 %v813, 1.442695
      %v864 = vpow.pop %v863
      %v865 = vmul.f32 %v814, 1.442695
      %v866 = vpow.pop %v865
      %v867 = vmul.f32 %v815, 1.442695
      %v868 = vpow.pop %v867
      %v869 = vmul.f32 %v816, 1.442695
      %v870 = vpow.pop %v869
      %v871 = vmul.f32 %v817, 1.442695
      %v872 = vpow.pop %v871
      %v873 = vmul.f32 %v818, 1.442695
      %v874 = vpow.pop %v873
      %v875 = vmul.f32 %v819, 1.442695
      %v876 = vpow.pop %v875
      %v877 = vmul.f32 %v820, 1.442695
      %v878 = vpow.pop %v877
      %v879 = vmul.f32 %v821, 1.442695
      %v880 = vpow.pop %v879
      %v881 = vmul.f32 %v822, 1.442695
      %v882 = vpow.pop %v881
      %v883 = vmul.f32 %v823, 1.442695
      %v884 = vpow.pop %v883
      %v885 = vmul.f32 %v824, 1.442695
      %v886 = vpow.pop %v885
      %v887 = vmul.f32 %v825, 1.442695
      %v888 = vpow.pop %v887
      %v889 = vmul.f32 %v826, 1.442695
      %v890 = vpow.pop %v889
      %v891 = vadd.f32 %v828, 1.0
      %v892 = vadd.f32 %v830, 1.0
      %v893 = vadd.f32 %v832, 1.0
      %v894 = vadd.f32 %v834, 1.0
      %v895 = vadd.f32 %v836, 1.0
      %v896 = vadd.f32 %v838, 1.0
      %v897 = vadd.f32 %v840, 1.0
      %v898 = vadd.f32 %v842, 1.0
      %v899 = vadd.f32 %v844, 1.0
      %v900 = vadd.f32 %v846, 1.0
      %v901 = vadd.f32 %v848, 1.0
      %v902 = vadd.f32 %v850, 1.0
      %v903 = vadd.f32 %v852, 1.0
      %v904 = vadd.f32 %v854, 1.0
      %v905 = vadd.f32 %v856, 1.0
      %v906 = vadd.f32 %v858, 1.0
      %v907 = vadd.f32 %v860, 1.0
      %v908 = vadd.f32 %v862, 1.0
      %v909 = vadd.f32 %v864, 1.0
      %v910 = vadd.f32 %v866, 1.0
      %v911 = vadd.f32 %v868, 1.0
      %v912 = vadd.f32 %v870, 1.0
      %v913 = vadd.f32 %v872, 1.0
      %v914 = vadd.f32 %v874, 1.0
      %v915 = vadd.f32 %v876, 1.0
      %v916 = vadd.f32 %v878, 1.0
      %v917 = vadd.f32 %v880, 1.0
      %v918 = vadd.f32 %v882, 1.0
      %v919 = vadd.f32 %v884, 1.0
      %v920 = vadd.f32 %v886, 1.0
      %v921 = vadd.f32 %v888, 1.0
      %v922 = vadd.f32 %v890, 1.0
      %v923 = vrcp.pop %v891
      %v924 = vmul.f32 %v891, %v923
      %v925 = vsub.f32 1.0, %v924
      %v926 = vmul.f32 %v923, %v925
      %v927 = vadd.f32 %v923, %v926
      %vm928 = vweird.f32 %v891
      %vm929 = vweird.f32 %v923
      %vm930 = vmor %vm928, %vm929
      %v931 = vsel %vm930, %v923, %v927
      %v932 = vand.u32 2147483647, %v891
      %vm933 = vcmp.eq.f32.partialorder %v932, 8.507059e+37
      %v934 = vand.u32 %v891, 2147483648
      %v935 = vor.u32 1.1754944e-38, %v934
      %v936 = vsel %vm933, %v935, %v931
      %v937 = vmul.f32 1.0, %v936
      %v938 = vrcp.pop %v892
      %v939 = vmul.f32 %v892, %v938
      %v940 = vsub.f32 1.0, %v939
      %v941 = vmul.f32 %v938, %v940
      %v942 = vadd.f32 %v938, %v941
      %vm943 = vweird.f32 %v892
      %vm944 = vweird.f32 %v938
      %vm945 = vmor %vm943, %vm944
      %v946 = vsel %vm945, %v938, %v942
      %v947 = vand.u32 2147483647, %v892
      %vm948 = vcmp.eq.f32.partialorder %v947, 8.507059e+37
      %v949 = vand.u32 %v892, 2147483648
      %v950 = vor.u32 1.1754944e-38, %v949
      %v951 = vsel %vm948, %v950, %v946
      %v952 = vmul.f32 1.0, %v951
      %v953 = vrcp.pop %v893
      %v954 = vmul.f32 %v893, %v953
      %v955 = vsub.f32 1.0, %v954
      %v956 = vmul.f32 %v953, %v955
      %v957 = vadd.f32 %v953, %v956
      %vm958 = vweird.f32 %v893
      %vm959 = vweird.f32 %v953
      %vm960 = vmor %vm958, %vm959
      %v961 = vsel %vm960, %v953, %v957
      %v962 = vand.u32 2147483647, %v893
      %vm963 = vcmp.eq.f32.partialorder %v962, 8.507059e+37
      %v964 = vand.u32 %v893, 2147483648
      %v965 = vor.u32 1.1754944e-38, %v964
      %v966 = vsel %vm963, %v965, %v961
      %v967 = vmul.f32 1.0, %v966
      %v968 = vrcp.pop %v894
      %v969 = vmul.f32 %v894, %v968
      %v970 = vsub.f32 1.0, %v969
      %v971 = vmul.f32 %v968, %v970
      %v972 = vadd.f32 %v968, %v971
      %vm973 = vweird.f32 %v894
      %vm974 = vweird.f32 %v968
      %vm975 = vmor %vm973, %vm974
      %v976 = vsel %vm975, %v968, %v972
      %v977 = vand.u32 2147483647, %v894
      %vm978 = vcmp.eq.f32.partialorder %v977, 8.507059e+37
      %v979 = vand.u32 %v894, 2147483648
      %v980 = vor.u32 1.1754944e-38, %v979
      %v981 = vsel %vm978, %v980, %v976
      %v982 = vmul.f32 1.0, %v981
      %v983 = vrcp.pop %v895
      %v984 = vmul.f32 %v895, %v983
      %v985 = vsub.f32 1.0, %v984
      %v986 = vmul.f32 %v983, %v985
      %v987 = vadd.f32 %v983, %v986
      %vm988 = vweird.f32 %v895
      %vm989 = vweird.f32 %v983
      %vm990 = vmor %vm988, %vm989
      %v991 = vsel %vm990, %v983, %v987
      %v992 = vand.u32 2147483647, %v895
      %vm993 = vcmp.eq.f32.partialorder %v992, 8.507059e+37
      %v994 = vand.u32 %v895, 2147483648
      %v995 = vor.u32 1.1754944e-38, %v994
      %v996 = vsel %vm993, %v995, %v991
      %v997 = vmul.f32 1.0, %v996
      %v998 = vrcp.pop %v896
      %v999 = vmul.f32 %v896, %v998
      %v1000 = vsub.f32 1.0, %v999
      %v1001 = vmul.f32 %v998, %v1000
      %v1002 = vadd.f32 %v998, %v1001
      %vm1003 = vweird.f32 %v896
      %vm1004 = vweird.f32 %v998
      %vm1005 = vmor %vm1003, %vm1004
      %v1006 = vsel %vm1005, %v998, %v1002
      %v1007 = vand.u32 2147483647, %v896
      %vm1008 = vcmp.eq.f32.partialorder %v1007, 8.507059e+37
      %v1009 = vand.u32 %v896, 2147483648
      %v1010 = vor.u32 1.1754944e-38, %v1009
      %v1011 = vsel %vm1008, %v1010, %v1006
      %v1012 = vmul.f32 1.0, %v1011
      %v1013 = vrcp.pop %v897
      %v1014 = vmul.f32 %v897, %v1013
      %v1015 = vsub.f32 1.0, %v1014
      %v1016 = vmul.f32 %v1013, %v1015
      %v1017 = vadd.f32 %v1013, %v1016
      %vm1018 = vweird.f32 %v897
      %vm1019 = vweird.f32 %v1013
      %vm1020 = vmor %vm1018, %vm1019
      %v1021 = vsel %vm1020, %v1013, %v1017
      %v1022 = vand.u32 2147483647, %v897
      %vm1023 = vcmp.eq.f32.partialorder %v1022, 8.507059e+37
      %v1024 = vand.u32 %v897, 2147483648
      %v1025 = vor.u32 1.1754944e-38, %v1024
      %v1026 = vsel %vm1023, %v1025, %v1021
      %v1027 = vmul.f32 1.0, %v1026
      %v1028 = vrcp.pop %v898
      %v1029 = vmul.f32 %v898, %v1028
      %v1030 = vsub.f32 1.0, %v1029
      %v1031 = vmul.f32 %v1028, %v1030
      %v1032 = vadd.f32 %v1028, %v1031
      %vm1033 = vweird.f32 %v898
      %vm1034 = vweird.f32 %v1028
      %vm1035 = vmor %vm1033, %vm1034
      %v1036 = vsel %vm1035, %v1028, %v1032
      %v1037 = vand.u32 2147483647, %v898
      %vm1038 = vcmp.eq.f32.partialorder %v1037, 8.507059e+37
      %v1039 = vand.u32 %v898, 2147483648
      %v1040 = vor.u32 1.1754944e-38, %v1039
      %v1041 = vsel %vm1038, %v1040, %v1036
      %v1042 = vmul.f32 1.0, %v1041
      %v1043 = vrcp.pop %v899
      %v1044 = vmul.f32 %v899, %v1043
      %v1045 = vsub.f32 1.0, %v1044
      %v1046 = vmul.f32 %v1043, %v1045
      %v1047 = vadd.f32 %v1043, %v1046
      %vm1048 = vweird.f32 %v899
      %vm1049 = vweird.f32 %v1043
      %vm1050 = vmor %vm1048, %vm1049
      %v1051 = vsel %vm1050, %v1043, %v1047
      %v1052 = vand.u32 2147483647, %v899
      %vm1053 = vcmp.eq.f32.partialorder %v1052, 8.507059e+37
      %v1054 = vand.u32 %v899, 2147483648
      %v1055 = vor.u32 1.1754944e-38, %v1054
      %v1056 = vsel %vm1053, %v1055, %v1051
      %v1057 = vmul.f32 1.0, %v1056
      %v1058 = vrcp.pop %v900
      %v1059 = vmul.f32 %v900, %v1058
      %v1060 = vsub.f32 1.0, %v1059
      %v1061 = vmul.f32 %v1058, %v1060
      %v1062 = vadd.f32 %v1058, %v1061
      %vm1063 = vweird.f32 %v900
      %vm1064 = vweird.f32 %v1058
      %vm1065 = vmor %vm1063, %vm1064
      %v1066 = vsel %vm1065, %v1058, %v1062
      %v1067 = vand.u32 2147483647, %v900
      %vm1068 = vcmp.eq.f32.partialorder %v1067, 8.507059e+37
      %v1069 = vand.u32 %v900, 2147483648
      %v1070 = vor.u32 1.1754944e-38, %v1069
      %v1071 = vsel %vm1068, %v1070, %v1066
      %v1072 = vmul.f32 1.0, %v1071
      %v1073 = vrcp.pop %v901
      %v1074 = vmul.f32 %v901, %v1073
      %v1075 = vsub.f32 1.0, %v1074
      %v1076 = vmul.f32 %v1073, %v1075
      %v1077 = vadd.f32 %v1073, %v1076
      %vm1078 = vweird.f32 %v901
      %vm1079 = vweird.f32 %v1073
      %vm1080 = vmor %vm1078, %vm1079
      %v1081 = vsel %vm1080, %v1073, %v1077
      %v1082 = vand.u32 2147483647, %v901
      %vm1083 = vcmp.eq.f32.partialorder %v1082, 8.507059e+37
      %v1084 = vand.u32 %v901, 2147483648
      %v1085 = vor.u32 1.1754944e-38, %v1084
      %v1086 = vsel %vm1083, %v1085, %v1081
      %v1087 = vmul.f32 1.0, %v1086
      %v1088 = vrcp.pop %v902
      %v1089 = vmul.f32 %v902, %v1088
      %v1090 = vsub.f32 1.0, %v1089
      %v1091 = vmul.f32 %v1088, %v1090
      %v1092 = vadd.f32 %v1088, %v1091
      %vm1093 = vweird.f32 %v902
      %vm1094 = vweird.f32 %v1088
      %vm1095 = vmor %vm1093, %vm1094
      %v1096 = vsel %vm1095, %v1088, %v1092
      %v1097 = vand.u32 2147483647, %v902
      %vm1098 = vcmp.eq.f32.partialorder %v1097, 8.507059e+37
      %v1099 = vand.u32 %v902, 2147483648
      %v1100 = vor.u32 1.1754944e-38, %v1099
      %v1101 = vsel %vm1098, %v1100, %v1096
      %v1102 = vmul.f32 1.0, %v1101
      %v1103 = vrcp.pop %v903
      %v1104 = vmul.f32 %v903, %v1103
      %v1105 = vsub.f32 1.0, %v1104
      %v1106 = vmul.f32 %v1103, %v1105
      %v1107 = vadd.f32 %v1103, %v1106
      %vm1108 = vweird.f32 %v903
      %vm1109 = vweird.f32 %v1103
      %vm1110 = vmor %vm1108, %vm1109
      %v1111 = vsel %vm1110, %v1103, %v1107
      %v1112 = vand.u32 2147483647, %v903
      %vm1113 = vcmp.eq.f32.partialorder %v1112, 8.507059e+37
      %v1114 = vand.u32 %v903, 2147483648
      %v1115 = vor.u32 1.1754944e-38, %v1114
      %v1116 = vsel %vm1113, %v1115, %v1111
      %v1117 = vmul.f32 1.0, %v1116
      %v1118 = vrcp.pop %v904
      %v1119 = vmul.f32 %v904, %v1118
      %v1120 = vsub.f32 1.0, %v1119
      %v1121 = vmul.f32 %v1118, %v1120
      %v1122 = vadd.f32 %v1118, %v1121
      %vm1123 = vweird.f32 %v904
      %vm1124 = vweird.f32 %v1118
      %vm1125 = vmor %vm1123, %vm1124
      %v1126 = vsel %vm1125, %v1118, %v1122
      %v1127 = vand.u32 2147483647, %v904
      %vm1128 = vcmp.eq.f32.partialorder %v1127, 8.507059e+37
      %v1129 = vand.u32 %v904, 2147483648
      %v1130 = vor.u32 1.1754944e-38, %v1129
      %v1131 = vsel %vm1128, %v1130, %v1126
      %v1132 = vmul.f32 1.0, %v1131
      %v1133 = vrcp.pop %v905
      %v1134 = vmul.f32 %v905, %v1133
      %v1135 = vsub.f32 1.0, %v1134
      %v1136 = vmul.f32 %v1133, %v1135
      %v1137 = vadd.f32 %v1133, %v1136
      %vm1138 = vweird.f32 %v905
      %vm1139 = vweird.f32 %v1133
      %vm1140 = vmor %vm1138, %vm1139
      %v1141 = vsel %vm1140, %v1133, %v1137
      %v1142 = vand.u32 2147483647, %v905
      %vm1143 = vcmp.eq.f32.partialorder %v1142, 8.507059e+37
      %v1144 = vand.u32 %v905, 2147483648
      %v1145 = vor.u32 1.1754944e-38, %v1144
      %v1146 = vsel %vm1143, %v1145, %v1141
      %v1147 = vmul.f32 1.0, %v1146
      %v1148 = vrcp.pop %v906
      %v1149 = vmul.f32 %v906, %v1148
      %v1150 = vsub.f32 1.0, %v1149
      %v1151 = vmul.f32 %v1148, %v1150
      %v1152 = vadd.f32 %v1148, %v1151
      %vm1153 = vweird.f32 %v906
      %vm1154 = vweird.f32 %v1148
      %vm1155 = vmor %vm1153, %vm1154
      %v1156 = vsel %vm1155, %v1148, %v1152
      %v1157 = vand.u32 2147483647, %v906
      %vm1158 = vcmp.eq.f32.partialorder %v1157, 8.507059e+37
      %v1159 = vand.u32 %v906, 2147483648
      %v1160 = vor.u32 1.1754944e-38, %v1159
      %v1161 = vsel %vm1158, %v1160, %v1156
      %v1162 = vmul.f32 1.0, %v1161
      %v1163 = vrcp.pop %v907
      %v1164 = vmul.f32 %v907, %v1163
      %v1165 = vsub.f32 1.0, %v1164
      %v1166 = vmul.f32 %v1163, %v1165
      %v1167 = vadd.f32 %v1163, %v1166
      %vm1168 = vweird.f32 %v907
      %vm1169 = vweird.f32 %v1163
      %vm1170 = vmor %vm1168, %vm1169
      %v1171 = vsel %vm1170, %v1163, %v1167
      %v1172 = vand.u32 2147483647, %v907
      %vm1173 = vcmp.eq.f32.partialorder %v1172, 8.507059e+37
      %v1174 = vand.u32 %v907, 2147483648
      %v1175 = vor.u32 1.1754944e-38, %v1174
      %v1176 = vsel %vm1173, %v1175, %v1171
      %v1177 = vmul.f32 1.0, %v1176
      %v1178 = vrcp.pop %v908
      %v1179 = vmul.f32 %v908, %v1178
      %v1180 = vsub.f32 1.0, %v1179
      %v1181 = vmul.f32 %v1178, %v1180
      %v1182 = vadd.f32 %v1178, %v1181
      %vm1183 = vweird.f32 %v908
      %vm1184 = vweird.f32 %v1178
      %vm1185 = vmor %vm1183, %vm1184
      %v1186 = vsel %vm1185, %v1178, %v1182
      %v1187 = vand.u32 2147483647, %v908
      %vm1188 = vcmp.eq.f32.partialorder %v1187, 8.507059e+37
      %v1189 = vand.u32 %v908, 2147483648
      %v1190 = vor.u32 1.1754944e-38, %v1189
      %v1191 = vsel %vm1188, %v1190, %v1186
      %v1192 = vmul.f32 1.0, %v1191
      %v1193 = vrcp.pop %v909
      %v1194 = vmul.f32 %v909, %v1193
      %v1195 = vsub.f32 1.0, %v1194
      %v1196 = vmul.f32 %v1193, %v1195
      %v1197 = vadd.f32 %v1193, %v1196
      %vm1198 = vweird.f32 %v909
      %vm1199 = vweird.f32 %v1193
      %vm1200 = vmor %vm1198, %vm1199
      %v1201 = vsel %vm1200, %v1193, %v1197
      %v1202 = vand.u32 2147483647, %v909
      %vm1203 = vcmp.eq.f32.partialorder %v1202, 8.507059e+37
      %v1204 = vand.u32 %v909, 2147483648
      %v1205 = vor.u32 1.1754944e-38, %v1204
      %v1206 = vsel %vm1203, %v1205, %v1201
      %v1207 = vmul.f32 1.0, %v1206
      %v1208 = vrcp.pop %v910
      %v1209 = vmul.f32 %v910, %v1208
      %v1210 = vsub.f32 1.0, %v1209
      %v1211 = vmul.f32 %v1208, %v1210
      %v1212 = vadd.f32 %v1208, %v1211
      %vm1213 = vweird.f32 %v910
      %vm1214 = vweird.f32 %v1208
      %vm1215 = vmor %vm1213, %vm1214
      %v1216 = vsel %vm1215, %v1208, %v1212
      %v1217 = vand.u32 2147483647, %v910
      %vm1218 = vcmp.eq.f32.partialorder %v1217, 8.507059e+37
      %v1219 = vand.u32 %v910, 2147483648
      %v1220 = vor.u32 1.1754944e-38, %v1219
      %v1221 = vsel %vm1218, %v1220, %v1216
      %v1222 = vmul.f32 1.0, %v1221
      %v1223 = vrcp.pop %v911
      %v1224 = vmul.f32 %v911, %v1223
      %v1225 = vsub.f32 1.0, %v1224
      %v1226 = vmul.f32 %v1223, %v1225
      %v1227 = vadd.f32 %v1223, %v1226
      %vm1228 = vweird.f32 %v911
      %vm1229 = vweird.f32 %v1223
      %vm1230 = vmor %vm1228, %vm1229
      %v1231 = vsel %vm1230, %v1223, %v1227
      %v1232 = vand.u32 2147483647, %v911
      %vm1233 = vcmp.eq.f32.partialorder %v1232, 8.507059e+37
      %v1234 = vand.u32 %v911, 2147483648
      %v1235 = vor.u32 1.1754944e-38, %v1234
      %v1236 = vsel %vm1233, %v1235, %v1231
      %v1237 = vmul.f32 1.0, %v1236
      %v1238 = vrcp.pop %v912
      %v1239 = vmul.f32 %v912, %v1238
      %v1240 = vsub.f32 1.0, %v1239
      %v1241 = vmul.f32 %v1238, %v1240
      %v1242 = vadd.f32 %v1238, %v1241
      %vm1243 = vweird.f32 %v912
      %vm1244 = vweird.f32 %v1238
      %vm1245 = vmor %vm1243, %vm1244
      %v1246 = vsel %vm1245, %v1238, %v1242
      %v1247 = vand.u32 2147483647, %v912
      %vm1248 = vcmp.eq.f32.partialorder %v1247, 8.507059e+37
      %v1249 = vand.u32 %v912, 2147483648
      %v1250 = vor.u32 1.1754944e-38, %v1249
      %v1251 = vsel %vm1248, %v1250, %v1246
      %v1252 = vmul.f32 1.0, %v1251
      %v1253 = vrcp.pop %v913
      %v1254 = vmul.f32 %v913, %v1253
      %v1255 = vsub.f32 1.0, %v1254
      %v1256 = vmul.f32 %v1253, %v1255
      %v1257 = vadd.f32 %v1253, %v1256
      %vm1258 = vweird.f32 %v913
      %vm1259 = vweird.f32 %v1253
      %vm1260 = vmor %vm1258, %vm1259
      %v1261 = vsel %vm1260, %v1253, %v1257
      %v1262 = vand.u32 2147483647, %v913
      %vm1263 = vcmp.eq.f32.partialorder %v1262, 8.507059e+37
      %v1264 = vand.u32 %v913, 2147483648
      %v1265 = vor.u32 1.1754944e-38, %v1264
      %v1266 = vsel %vm1263, %v1265, %v1261
      %v1267 = vmul.f32 1.0, %v1266
      %v1268 = vrcp.pop %v914
      %v1269 = vmul.f32 %v914, %v1268
      %v1270 = vsub.f32 1.0, %v1269
      %v1271 = vmul.f32 %v1268, %v1270
      %v1272 = vadd.f32 %v1268, %v1271
      %vm1273 = vweird.f32 %v914
      %vm1274 = vweird.f32 %v1268
      %vm1275 = vmor %vm1273, %vm1274
      %v1276 = vsel %vm1275, %v1268, %v1272
      %v1277 = vand.u32 2147483647, %v914
      %vm1278 = vcmp.eq.f32.partialorder %v1277, 8.507059e+37
      %v1279 = vand.u32 %v914, 2147483648
      %v1280 = vor.u32 1.1754944e-38, %v1279
      %v1281 = vsel %vm1278, %v1280, %v1276
      %v1282 = vmul.f32 1.0, %v1281
      %v1283 = vrcp.pop %v915
      %v1284 = vmul.f32 %v915, %v1283
      %v1285 = vsub.f32 1.0, %v1284
      %v1286 = vmul.f32 %v1283, %v1285
      %v1287 = vadd.f32 %v1283, %v1286
      %vm1288 = vweird.f32 %v915
      %vm1289 = vweird.f32 %v1283
      %vm1290 = vmor %vm1288, %vm1289
      %v1291 = vsel %vm1290, %v1283, %v1287
      %v1292 = vand.u32 2147483647, %v915
      %vm1293 = vcmp.eq.f32.partialorder %v1292, 8.507059e+37
      %v1294 = vand.u32 %v915, 2147483648
      %v1295 = vor.u32 1.1754944e-38, %v1294
      %v1296 = vsel %vm1293, %v1295, %v1291
      %v1297 = vmul.f32 1.0, %v1296
      %v1298 = vrcp.pop %v916
      %v1299 = vmul.f32 %v916, %v1298
      %v1300 = vsub.f32 1.0, %v1299
      %v1301 = vmul.f32 %v1298, %v1300
      %v1302 = vadd.f32 %v1298, %v1301
      %vm1303 = vweird.f32 %v916
      %vm1304 = vweird.f32 %v1298
      %vm1305 = vmor %vm1303, %vm1304
      %v1306 = vsel %vm1305, %v1298, %v1302
      %v1307 = vand.u32 2147483647, %v916
      %vm1308 = vcmp.eq.f32.partialorder %v1307, 8.507059e+37
      %v1309 = vand.u32 %v916, 2147483648
      %v1310 = vor.u32 1.1754944e-38, %v1309
      %v1311 = vsel %vm1308, %v1310, %v1306
      %v1312 = vmul.f32 1.0, %v1311
      %v1313 = vrcp.pop %v917
      %v1314 = vmul.f32 %v917, %v1313
      %v1315 = vsub.f32 1.0, %v1314
      %v1316 = vmul.f32 %v1313, %v1315
      %v1317 = vadd.f32 %v1313, %v1316
      %vm1318 = vweird.f32 %v917
      %vm1319 = vweird.f32 %v1313
      %vm1320 = vmor %vm1318, %vm1319
      %v1321 = vsel %vm1320, %v1313, %v1317
      %v1322 = vand.u32 2147483647, %v917
      %vm1323 = vcmp.eq.f32.partialorder %v1322, 8.507059e+37
      %v1324 = vand.u32 %v917, 2147483648
      %v1325 = vor.u32 1.1754944e-38, %v1324
      %v1326 = vsel %vm1323, %v1325, %v1321
      %v1327 = vmul.f32 1.0, %v1326
      %v1328 = vrcp.pop %v918
      %v1329 = vmul.f32 %v918, %v1328
      %v1330 = vsub.f32 1.0, %v1329
      %v1331 = vmul.f32 %v1328, %v1330
      %v1332 = vadd.f32 %v1328, %v1331
      %vm1333 = vweird.f32 %v918
      %vm1334 = vweird.f32 %v1328
      %vm1335 = vmor %vm1333, %vm1334
      %v1336 = vsel %vm1335, %v1328, %v1332
      %v1337 = vand.u32 2147483647, %v918
      %vm1338 = vcmp.eq.f32.partialorder %v1337, 8.507059e+37
      %v1339 = vand.u32 %v918, 2147483648
      %v1340 = vor.u32 1.1754944e-38, %v1339
      %v1341 = vsel %vm1338, %v1340, %v1336
      %v1342 = vmul.f32 1.0, %v1341
      %v1343 = vrcp.pop %v919
      %v1344 = vmul.f32 %v919, %v1343
      %v1345 = vsub.f32 1.0, %v1344
      %v1346 = vmul.f32 %v1343, %v1345
      %v1347 = vadd.f32 %v1343, %v1346
      %vm1348 = vweird.f32 %v919
      %vm1349 = vweird.f32 %v1343
      %vm1350 = vmor %vm1348, %vm1349
      %v1351 = vsel %vm1350, %v1343, %v1347
      %v1352 = vand.u32 2147483647, %v919
      %vm1353 = vcmp.eq.f32.partialorder %v1352, 8.507059e+37
      %v1354 = vand.u32 %v919, 2147483648
      %v1355 = vor.u32 1.1754944e-38, %v1354
      %v1356 = vsel %vm1353, %v1355, %v1351
      %v1357 = vmul.f32 1.0, %v1356
      %v1358 = vrcp.pop %v920
      %v1359 = vmul.f32 %v920, %v1358
      %v1360 = vsub.f32 1.0, %v1359
      %v1361 = vmul.f32 %v1358, %v1360
      %v1362 = vadd.f32 %v1358, %v1361
      %vm1363 = vweird.f32 %v920
      %vm1364 = vweird.f32 %v1358
      %vm1365 = vmor %vm1363, %vm1364
      %v1366 = vsel %vm1365, %v1358, %v1362
      %v1367 = vand.u32 2147483647, %v920
      %vm1368 = vcmp.eq.f32.partialorder %v1367, 8.507059e+37
      %v1369 = vand.u32 %v920, 2147483648
      %v1370 = vor.u32 1.1754944e-38, %v1369
      %v1371 = vsel %vm1368, %v1370, %v1366
      %v1372 = vmul.f32 1.0, %v1371
      %v1373 = vrcp.pop %v921
      %v1374 = vmul.f32 %v921, %v1373
      %v1375 = vsub.f32 1.0, %v1374
      %v1376 = vmul.f32 %v1373, %v1375
      %v1377 = vadd.f32 %v1373, %v1376
      %vm1378 = vweird.f32 %v921
      %vm1379 = vweird.f32 %v1373
      %vm1380 = vmor %vm1378, %vm1379
      %v1381 = vsel %vm1380, %v1373, %v1377
      %v1382 = vand.u32 2147483647, %v921
      %vm1383 = vcmp.eq.f32.partialorder %v1382, 8.507059e+37
      %v1384 = vand.u32 %v921, 2147483648
      %v1385 = vor.u32 1.1754944e-38, %v1384
      %v1386 = vsel %vm1383, %v1385, %v1381
      %v1387 = vmul.f32 1.0, %v1386
      %v1388 = vrcp.pop %v922
      %v1389 = vmul.f32 %v922, %v1388
      %v1390 = vsub.f32 1.0, %v1389
      %v1391 = vmul.f32 %v1388, %v1390
      %v1392 = vadd.f32 %v1388, %v1391
      %vm1393 = vweird.f32 %v922
      %vm1394 = vweird.f32 %v1388
      %vm1395 = vmor %vm1393, %vm1394
      %v1396 = vsel %vm1395, %v1388, %v1392
      %v1397 = vand.u32 2147483647, %v922
      %vm1398 = vcmp.eq.f32.partialorder %v1397, 8.507059e+37
      %v1399 = vand.u32 %v922, 2147483648
      %v1400 = vor.u32 1.1754944e-38, %v1399
      %v1401 = vsel %vm1398, %v1400, %v1396
      %v1402 = vmul.f32 1.0, %v1401
      %v1403 = vmul.f32 %v763, %v937
      %v1404 = vmul.f32 %v764, %v952
      %v1405 = vmul.f32 %v765, %v967
      %v1406 = vmul.f32 %v766, %v982
      %v1407 = vmul.f32 %v767, %v997
      %v1408 = vmul.f32 %v768, %v1012
      %v1409 = vmul.f32 %v769, %v1027
      %v1410 = vmul.f32 %v770, %v1042
      %v1411 = vmul.f32 %v771, %v1057
      %v1412 = vmul.f32 %v772, %v1072
      %v1413 = vmul.f32 %v773, %v1087
      %v1414 = vmul.f32 %v774, %v1102
      %v1415 = vmul.f32 %v775, %v1117
      %v1416 = vmul.f32 %v776, %v1132
      %v1417 = vmul.f32 %v777, %v1147
      %v1418 = vmul.f32 %v778, %v1162
      %v1419 = vmul.f32 %v779, %v1177
      %v1420 = vmul.f32 %v780, %v1192
      %v1421 = vmul.f32 %v781, %v1207
      %v1422 = vmul.f32 %v782, %v1222
      %v1423 = vmul.f32 %v783, %v1237
      %v1424 = vmul.f32 %v784, %v1252
      %v1425 = vmul.f32 %v785, %v1267
      %v1426 = vmul.f32 %v786, %v1282
      %v1427 = vmul.f32 %v787, %v1297
      %v1428 = vmul.f32 %v788, %v1312
      %v1429 = vmul.f32 %v789, %v1327
      %v1430 = vmul.f32 %v790, %v1342
      %v1431 = vmul.f32 %v791, %v1357
      %v1432 = vmul.f32 %v792, %v1372
      %v1433 = vmul.f32 %v793, %v1387
      %v1434 = vmul.f32 %v794, %v1402
      %vm1435 = vcmask 31744
      %1436 = vst.msk [vmem:[%s248] sm:$0xff] %vm1435, %v1403
      %1437 = vst.msk [vmem:[%s248 + $0x8] sm:$0xff] %vm1435, %v1404
      %1438 = vst.msk [vmem:[%s248 + $0x10] sm:$0xff] %vm1435, %v1405
      %1439 = vst.msk [vmem:[%s248 + $0x18] sm:$0xff] %vm1435, %v1406
      %1440 = vst.msk [vmem:[%s248 + $0x20] sm:$0xff] %vm1435, %v1407
      %1441 = vst.msk [vmem:[%s248 + $0x28] sm:$0xff] %vm1435, %v1408
      %1442 = vst.msk [vmem:[%s248 + $0x30] sm:$0xff] %vm1435, %v1409
      %1443 = vst.msk [vmem:[%s248 + $0x38] sm:$0xff] %vm1435, %v1410
      %1444 = vst.msk [vmem:[%s248 + $0x40] sm:$0xff] %vm1435, %v1411
      %1445 = vst.msk [vmem:[%s248 + $0x48] sm:$0xff] %vm1435, %v1412
      %1446 = vst.msk [vmem:[%s248 + $0x50] sm:$0xff] %vm1435, %v1413
      %1447 = vst.msk [vmem:[%s248 + $0x58] sm:$0xff] %vm1435, %v1414
      %1448 = vst.msk [vmem:[%s248 + $0x60] sm:$0xff] %vm1435, %v1415
      %1449 = vst.msk [vmem:[%s248 + $0x68] sm:$0xff] %vm1435, %v1416
      %1450 = vst.msk [vmem:[%s248 + $0x70] sm:$0xff] %vm1435, %v1417
      %1451 = vst.msk [vmem:[%s248 + $0x78] sm:$0xff] %vm1435, %v1418
      %1452 = vst.msk [vmem:[%s248 + $0x80] sm:$0xff] %vm1435, %v1419
      %1453 = vst.msk [vmem:[%s248 + $0x88] sm:$0xff] %vm1435, %v1420
      %1454 = vst.msk [vmem:[%s248 + $0x90] sm:$0xff] %vm1435, %v1421
      %1455 = vst.msk [vmem:[%s248 + $0x98] sm:$0xff] %vm1435, %v1422
      %1456 = vst.msk [vmem:[%s248 + $0xa0] sm:$0xff] %vm1435, %v1423
      %1457 = vst.msk [vmem:[%s248 + $0xa8] sm:$0xff] %vm1435, %v1424
      %1458 = vst.msk [vmem:[%s248 + $0xb0] sm:$0xff] %vm1435, %v1425
      %1459 = vst.msk [vmem:[%s248 + $0xb8] sm:$0xff] %vm1435, %v1426
      %1460 = vst.msk [vmem:[%s248 + $0xc0] sm:$0xff] %vm1435, %v1427
      %1461 = vst.msk [vmem:[%s248 + $0xc8] sm:$0xff] %vm1435, %v1428
      %1462 = vst.msk [vmem:[%s248 + $0xd0] sm:$0xff] %vm1435, %v1429
      %1463 = vst.msk [vmem:[%s248 + $0xd8] sm:$0xff] %vm1435, %v1430
      %1464 = vst.msk [vmem:[%s248 + $0xe0] sm:$0xff] %vm1435, %v1431
      %1465 = vst.msk [vmem:[%s248 + $0xe8] sm:$0xff] %vm1435, %v1432
      %1466 = vst.msk [vmem:[%s248 + $0xf0] sm:$0xff] %vm1435, %v1433
      %1467 = vst.msk [vmem:[%s248 + $0xf8] sm:$0xff] %vm1435, %v1434
      %s1468 = smul.u32 32, %s16
      %p1469 = scmp.lt.s32.totalorder %s1468, 63
      %s1470 = scalar_select %p1469, %s1468, 63
      %s1471 = smul.addr %s1470, 8
      %s1472 = scalar_lea.vmem %s5, %s1471
      // Predicated region
      $region41: #{c3_forward.7} parent=39 // pred_check
        %p1473 = pneg %p149
      $region42: #{c3_forward.7} parent=39 // pred_check_branch
        %1475 = sbr.rel (%p1473) target = $region44
      $region43: #{c3_forward.7} parent=39 // pred_region
        %s1476 = smul.u32 32, %s16
      $region44: #{c3_forward.7} parent=39 // pred_fallthru
        _
    $region40: #{c3_forward.7} parent=5 // pred_fallthru
      _
    %p1477 = scmp.le.s32.totalorder 2, %s11
    // Predicated region
    $region45: #{c3_forward.7} parent=5 // pred_check
      %p1478 = pneg %p1477
    $region46: #{c3_forward.7} parent=5 // pred_check_branch
      %1480 = sbr.rel (%p1478) target = $region48
    $region47: #{c3_forward.7} parent=5 // pred_region
      %s1481 = ssub.s32 %s11, 2
      // Predicated region
      $region49: #{c3_forward.7} parent=47 // pred_check
        %p1482 = pneg %p155
      $region50: #{c3_forward.7} parent=47 // pred_check_branch
        %1484 = sbr.rel (%p1482) target = $region52
      $region51: #{c3_forward.7} parent=47 // pred_region
        %s1485 = smul.u32 32, %s17
        %p1486 = scmp.lt.s32.totalorder %s1485, 63
        %s1487 = scalar_select %p1486, %s1485, 63
        %s1488 = smul.addr %s1487, 8
        %s1489 = scalar_lea.vmem %s5, %s1488
      $region52: #{c3_forward.7} parent=47 // pred_fallthru
        _
    $region48: #{c3_forward.7} parent=5 // pred_fallthru
      _
  $region6: #{c3_forward.7} parent=0 // loop_footer
    %s15 = sadd.s32 1, %s11
  $region7: #{c3_forward.7} parent=0 // loop_footer_branch
    %10 = sbr.rel target = $region3
  $region8: #{c3_forward.7} parent=0 // loop_exit
    _

// kernel: c3_forward.6
$region0: #{c3_forward.6}
  #allocation0 [shape = 'u32[]', space=smem, size = 0x4, offset = 0x4, fixed_abs, tag = 'smem constant byte address 0x4 - core index']
  #allocation1 [shape = 'u32[72,128]{1,0:T(1,128)}', space=vmem, size = 0x9000, scoped, tag = 'internal scratch']
  %s0 = inlined_call_operand.vmem [shape: bf16[2,18,18,2], index: 0, kind: input, shape index: {}]
  %s1 = inlined_call_operand.vmem [shape: bf16[9,2,2], index: 1, kind: input, shape index: {}]
  %s2 = inlined_call_operand.vmem [shape: f32[1,2], index: 2, kind: input, shape index: {}]
  %s3 = inlined_call_operand.vmem [shape: f32[2,16,16,2], index: 3, kind: input, shape index: {}]
  %s4 = inlined_call_operand.vmem [shape: f32[2,16,16,2], index: 4, kind: output, shape index: {}]
  %s5 = sld [smem:[#allocation0]]
  $region49: #{c3_forward.6} parent=0
    _
  %s7 = ssub.s32 1, %s5
  %s8 = scalar_select 0, %s7, %s5
  loop: start=0, step=1, limit=4
  $region2: #{c3_forward.6} parent=0 // loop_pre_header
    _
  $region3: #{c3_forward.6} parent=0 // loop_header
    %s10 = sphi 0, %s14
    %p11 = scmp.ge.s32.totalorder %s10, 4
    %s20 = sphi 0, %s22
    %s23 = sphi 0, %s20
    %s24 = sphi 0, %s23
    %s40 = sphi 0, %s24
    %s44 = sphi 0, %s44
    %s46 = sphi 0, %s44
    %s47 = sphi 0, %s46
    %s61 = sphi 0, %s47
    %s65 = sphi 0, %s65
    %s67 = sphi 0, %s65
    %s68 = sphi 0, %s67
    %s82 = sphi 0, %s68
    %s88 = sphi 0, %s90
    %s91 = sphi 0, %s88
    %s92 = sphi 0, %s91
    %s108 = sphi 0, %s92
    %s114 = sphi 0, %s116
    %s117 = sphi 0, %s114
    %s118 = sphi 0, %s117
    %s134 = sphi 0, %s118
  $region4: #{c3_forward.6} parent=0 // loop_header_branch
    %13 = sbr.rel (%p11) target = $region8
  $region5: #{c3_forward.6} parent=0 // loop_body
    %s15 = ssub.s32 %s10, 1
    %s16 = ssub.s32 %s10, 2
    %s17 = sadd.s32 %s10, 1
    %s18 = ssub.s32 %s10, %s17
    %p19 = scmp.eq.s32.totalorder %s18, 0
    %s21 = sadd.s32 %s20, 1
    %s22 = scalar_select %p19, %s20, %s21
    %p25 = pneg %p19
    %p26 = scmp.eq.s32.totalorder %s10, 1
    %p27 = por %p25, %p26
    %p28 = scmp.ne.s32.totalorder %s20, %s23
    %p29 = scmp.eq.s32.totalorder %s10, 0
    %p30 = por %p28, %p29
    %p31 = scmp.ne.s32.totalorder %s20, %s23
    %p32 = scmp.eq.s32.totalorder %s15, 1
    %p33 = por %p31, %p32
    %p34 = scmp.ne.s32.totalorder %s23, %s24
    %p35 = scmp.eq.s32.totalorder %s15, 0
    %p36 = por %p34, %p35
    %p37 = scmp.ne.s32.totalorder %s23, %s24
    %p38 = scmp.eq.s32.totalorder %s16, 1
    %p39 = por %p37, %p38
    %p41 = scmp.ne.s32.totalorder %s24, %s40
    %p42 = scmp.eq.s32.totalorder %s16, 0
    %p43 = por %p41, %p42
    %s45 = sadd.s32 %s44, 1
    %p48 = scmp.eq.s32.totalorder %s10, 1
    %p49 = scmp.ne.s32.totalorder %s44, %s46
    %p50 = scmp.eq.s32.totalorder %s10, 0
    %p51 = por %p49, %p50
    %p52 = scmp.ne.s32.totalorder %s44, %s46
    %p53 = scmp.eq.s32.totalorder %s15, 1
    %p54 = por %p52, %p53
    %p55 = scmp.ne.s32.totalorder %s46, %s47
    %p56 = scmp.eq.s32.totalorder %s15, 0
    %p57 = por %p55, %p56
    %p58 = scmp.ne.s32.totalorder %s46, %s47
    %p59 = scmp.eq.s32.totalorder %s16, 1
    %p60 = por %p58, %p59
    %p62 = scmp.ne.s32.totalorder %s47, %s61
    %p63 = scmp.eq.s32.totalorder %s16, 0
    %p64 = por %p62, %p63
    %s66 = sadd.s32 %s65, 1
    %p69 = scmp.eq.s32.totalorder %s10, 1
    %p70 = scmp.ne.s32.totalorder %s65, %s67
    %p71 = scmp.eq.s32.totalorder %s10, 0
    %p72 = por %p70, %p71
    %p73 = scmp.ne.s32.totalorder %s65, %s67
    %p74 = scmp.eq.s32.totalorder %s15, 1
    %p75 = por %p73, %p74
    %p76 = scmp.ne.s32.totalorder %s67, %s68
    %p77 = scmp.eq.s32.totalorder %s15, 0
    %p78 = por %p76, %p77
    %p79 = scmp.ne.s32.totalorder %s67, %s68
    %p80 = scmp.eq.s32.totalorder %s16, 1
    %p81 = por %p79, %p80
    %p83 = scmp.ne.s32.totalorder %s68, %s82
    %p84 = scmp.eq.s32.totalorder %s16, 0
    %p85 = por %p83, %p84
    %s86 = ssub.s32 %s10, %s17
    %p87 = scmp.eq.s32.totalorder %s86, 0
    %s89 = sadd.s32 %s88, 1
    %s90 = scalar_select %p87, %s88, %s89
    %p93 = pneg %p87
    %p94 = scmp.eq.s32.totalorder %s10, 1
    %p95 = por %p93, %p94
    %p96 = scmp.ne.s32.totalorder %s88, %s91
    %p97 = scmp.eq.s32.totalorder %s10, 0
    %p98 = por %p96, %p97
    %p99 = scmp.ne.s32.totalorder %s88, %s91
    %p100 = scmp.eq.s32.totalorder %s15, 1
    %p101 = por %p99, %p100
    %p102 = scmp.ne.s32.totalorder %s91, %s92
    %p103 = scmp.eq.s32.totalorder %s15, 0
    %p104 = por %p102, %p103
    %p105 = scmp.ne.s32.totalorder %s91, %s92
    %p106 = scmp.eq.s32.totalorder %s16, 1
    %p107 = por %p105, %p106
    %p109 = scmp.ne.s32.totalorder %s92, %s108
    %p110 = scmp.eq.s32.totalorder %s16, 0
    %p111 = por %p109, %p110
    %s112 = ssub.s32 %s10, %s17
    %p113 = scmp.eq.s32.totalorder %s112, 0
    %s115 = sadd.s32 %s114, 1
    %s116 = scalar_select %p113, %s114, %s115
    %p119 = pneg %p113
    %p120 = scmp.eq.s32.totalorder %s10, 1
    %p121 = por %p119, %p120
    %p122 = scmp.ne.s32.totalorder %s114, %s117
    %p123 = scmp.eq.s32.totalorder %s10, 0
    %p124 = por %p122, %p123
    %p125 = scmp.ne.s32.totalorder %s114, %s117
    %p126 = scmp.eq.s32.totalorder %s15, 1
    %p127 = por %p125, %p126
    %p128 = scmp.ne.s32.totalorder %s117, %s118
    %p129 = scmp.eq.s32.totalorder %s15, 0
    %p130 = por %p128, %p129
    %p131 = scmp.ne.s32.totalorder %s117, %s118
    %p132 = scmp.eq.s32.totalorder %s16, 1
    %p133 = por %p131, %p132
    %p135 = scmp.ne.s32.totalorder %s118, %s134
    %p136 = scmp.eq.s32.totalorder %s16, 0
    %p137 = por %p135, %p136
    %p138 = scmp.le.s32.totalorder 1, %s10
    %p139 = scmp.lt.s32.totalorder %s10, 3
    %p140 = pnand %p138, %p139
    %p141 = pneg %p140
    // Predicated region
    $region9: #{c3_forward.6} parent=5 // pred_check
      _
    $region10: #{c3_forward.6} parent=5 // pred_check_branch
      %143 = sbr.rel (%p140) target = $region12
    $region11: #{c3_forward.6} parent=5 // pred_region
      %s144 = ssub.s32 %s10, 1
      // Predicated region
      $region13: #{c3_forward.6} parent=11 // pred_check
        %p145 = pneg %p57
      $region14: #{c3_forward.6} parent=11 // pred_check_branch
        %147 = sbr.rel (%p145) target = $region16
      $region15: #{c3_forward.6} parent=11 // pred_region
        _
      $region16: #{c3_forward.6} parent=11 // pred_fallthru
        _
      // Predicated region
      $region17: #{c3_forward.6} parent=11 // pred_check
        %p148 = pneg %p78
      $region18: #{c3_forward.6} parent=11 // pred_check_branch
        %150 = sbr.rel (%p148) target = $region20
      $region19: #{c3_forward.6} parent=11 // pred_region
        _
      $region20: #{c3_forward.6} parent=11 // pred_fallthru
        _
    $region12: #{c3_forward.6} parent=5 // pred_fallthru
      _
    %p151 = scmp.lt.s32.totalorder %s10, 2
    // Predicated region
    $region21: #{c3_forward.6} parent=5 // pred_check
      %p152 = pneg %p151
    $region22: #{c3_forward.6} parent=5 // pred_check_branch
      %154 = sbr.rel (%p152) target = $region24
    $region23: #{c3_forward.6} parent=5 // pred_region
      // Predicated region
      $region25: #{c3_forward.6} parent=23 // pred_check
        %p155 = pneg %p30
      $region26: #{c3_forward.6} parent=23 // pred_check_branch
        %157 = sbr.rel (%p155) target = $region28
      $region27: #{c3_forward.6} parent=23 // pred_region
        %p158 = scmp.lt.s32.totalorder %s10, 1
        %s159 = scalar_select %p158, %s10, 1
        %s160 = smul.addr %s159, 54
        %s161 = smul.addr %s160, 4
        %s162 = scalar_lea.vmem %s0, %s161
      $region28: #{c3_forward.6} parent=23 // pred_fallthru
        _
      // Predicated region
      $region29: #{c3_forward.6} parent=23 // pred_check
        %p163 = pneg %p98
      $region30: #{c3_forward.6} parent=23 // pred_check_branch
        %165 = sbr.rel (%p163) target = $region32
      $region31: #{c3_forward.6} parent=23 // pred_region
        %p166 = scmp.lt.s32.totalorder %s10, 1
        %s167 = scalar_select %p166, %s10, 1
        %s168 = smul.addr %s167, 32
        %s169 = smul.addr %s168, 8
        %s170 = scalar_lea.vmem %s3, %s169
      $region32: #{c3_forward.6} parent=23 // pred_fallthru
        _
    $region24: #{c3_forward.6} parent=5 // pred_fallthru
      _
    %p171 = scmp.le.s32.totalorder 1, %s10
    %p172 = scmp.lt.s32.totalorder %s10, 3
    %p173 = pnand %p171, %p172
    %p174 = pneg %p173
    // Predicated region
    $region33: #{c3_forward.6} parent=5 // pred_check
      _
    $region34: #{c3_forward.6} parent=5 // pred_check_branch
      %176 = sbr.rel (%p173) target = $region36
    $region35: #{c3_forward.6} parent=5 // pred_region
      %s177 = ssub.s32 %s10, 1
      %p178 = scmp.lt.s32.totalorder %s15, 1
      %s179 = scalar_select %p178, %s15, 1
      %s180 = smul.addr %s179, 54
      %s181 = smul.addr %s180, 4
      %s182 = scalar_lea.vmem %s0, %s181
      %p183 = pneg %p36
      %p184 = pneg %p33
      %p185 = pneg %p57
      %p186 = pneg %p54
      %p187 = pneg %p78
      %p188 = pneg %p75
      %p189 = scmp.lt.s32.totalorder %s15, 1
      %s190 = scalar_select %p189, %s15, 1
      %s191 = smul.addr %s190, 32
      %s192 = smul.addr %s191, 8
      %s193 = scalar_lea.vmem %s3, %s192
      %p194 = pneg %p104
      %p195 = pneg %p101
      %p196 = pneg %p130
      %p197 = pneg %p127
      %p198 = scmp.lt.s32.totalorder %s15, 1
      %s199 = scalar_select %p198, %s15, 1
      %s200 = smul.addr %s199, 32
      %s201 = smul.addr %s200, 8
      %s202 = scalar_lea.vmem %s4, %s201
      %p203 = scmp.lt.s32.totalorder %s15, 1
      %s204 = scalar_select %p203, %s15, 1
      %s205 = smul.addr %s204, 54
      %s206 = smul.addr %s205, 4
      %s207 = scalar_lea.vmem %s0, %s206
      %p208 = scmp.lt.s32.totalorder %s15, 1
      %s209 = scalar_select %p208, %s15, 1
      %s210 = smul.addr %s209, 32
      %s211 = smul.addr %s210, 8
      %s212 = scalar_lea.vmem %s3, %s211
      %p213 = scmp.lt.s32.totalorder %s15, 1
      %s214 = scalar_select %p213, %s15, 1
      %s215 = smul.addr %s214, 32
      %s216 = smul.addr %s215, 8
      %s217 = scalar_lea.vmem %s4, %s216
      %v219 = vld [vmem:[%s207] sm:$0xf]
      %v220 = vld [vmem:[%s207 + $0x4] sm:$0xf]
      %v221 = vld [vmem:[%s207 + $0x8] sm:$0x1]
      %v222 = vld [vmem:[%s207 + $0xc] sm:$0xf]
      %v223 = vld [vmem:[%s207 + $0x10] sm:$0xf]
      %v224 = vld [vmem:[%s207 + $0x14] sm:$0x1]
      %v225 = vld [vmem:[%s207 + $0x18] sm:$0xf]
      %v226 = vld [vmem:[%s207 + $0x1c] sm:$0xf]
      %v227 = vld [vmem:[%s207 + $0x20] sm:$0x1]
      %v228 = vld [vmem:[%s207 + $0x24] sm:$0xf]
      %v229 = vld [vmem:[%s207 + $0x28] sm:$0xf]
      %v230 = vld [vmem:[%s207 + $0x2c] sm:$0x1]
      %v231 = vld [vmem:[%s207 + $0x30] sm:$0xf]
      %v232 = vld [vmem:[%s207 + $0x34] sm:$0xf]
      %v233 = vld [vmem:[%s207 + $0x38] sm:$0x1]
      %v234 = vld [vmem:[%s207 + $0x3c] sm:$0xf]
      %v235 = vld [vmem:[%s207 + $0x40] sm:$0xf]
      %v236 = vld [vmem:[%s207 + $0x44] sm:$0x1]
      %v237 = vld [vmem:[%s207 + $0x48] sm:$0xf]
      %v238 = vld [vmem:[%s207 + $0x4c] sm:$0xf]
      %v239 = vld [vmem:[%s207 + $0x50] sm:$0x1]
      %v240 = vld [vmem:[%s207 + $0x54] sm:$0xf]
      %v241 = vld [vmem:[%s207 + $0x58] sm:$0xf]
      %v242 = vld [vmem:[%s207 + $0x5c] sm:$0x1]
      %v243 = vld [vmem:[%s207 + $0x60] sm:$0xf]
      %v244 = vld [vmem:[%s207 + $0x64] sm:$0xf]
      %v245 = vld [vmem:[%s207 + $0x68] sm:$0x1]
      %v246 = vld [vmem:[%s207 + $0x6c] sm:$0xf]
      %v247 = vld [vmem:[%s207 + $0x70] sm:$0xf]
      %v248 = vld [vmem:[%s207 + $0x74] sm:$0x1]
      %v249 = vld [vmem:[%s207 + $0x78] sm:$0xf]
      %v250 = vld [vmem:[%s207 + $0x7c] sm:$0xf]
      %v251 = vld [vmem:[%s207 + $0x80] sm:$0x1]
      %v252 = vld [vmem:[%s207 + $0x84] sm:$0xf]
      %v253 = vld [vmem:[%s207 + $0x88] sm:$0xf]
      %v254 = vld [vmem:[%s207 + $0x8c] sm:$0x1]
      %v255 = vld [vmem:[%s207 + $0x90] sm:$0xf]
      %v256 = vld [vmem:[%s207 + $0x94] sm:$0xf]
      %v257 = vld [vmem:[%s207 + $0x98] sm:$0x1]
      %v258 = vld [vmem:[%s207 + $0x9c] sm:$0xf]
      %v259 = vld [vmem:[%s207 + $0xa0] sm:$0xf]
      %v260 = vld [vmem:[%s207 + $0xa4] sm:$0x1]
      %v261 = vld [vmem:[%s207 + $0xa8] sm:$0xf]
      %v262 = vld [vmem:[%s207 + $0xac] sm:$0xf]
      %v263 = vld [vmem:[%s207 + $0xb0] sm:$0x1]
      %v264 = vld [vmem:[%s207 + $0xb4] sm:$0xf]
      %v265 = vld [vmem:[%s207 + $0xb8] sm:$0xf]
      %v266 = vld [vmem:[%s207 + $0xbc] sm:$0x1]
      %v267 = vld [vmem:[%s207 + $0xc0] sm:$0xf]
      %v268 = vld [vmem:[%s207 + $0xc4] sm:$0xf]
      %v269 = vld [vmem:[%s207 + $0xc8] sm:$0x1]
      %v270 = vld [vmem:[%s207 + $0xcc] sm:$0xf]
      %v271 = vld [vmem:[%s207 + $0xd0] sm:$0xf]
      %v272 = vld [vmem:[%s207 + $0xd4] sm:$0x1]
      %v273 = vld [vmem:[%s1] sm:$0x1]
      %v274 = vld [vmem:[%s1 + $0x1] sm:$0x1]
      %v275 = vld [vmem:[%s1 + $0x2] sm:$0x1]
      %v276 = vld [vmem:[%s1 + $0x3] sm:$0x1]
      %v277 = vld [vmem:[%s1 + $0x4] sm:$0x1]
      %v278 = vld [vmem:[%s1 + $0x5] sm:$0x1]
      %v279 = vld [vmem:[%s1 + $0x6] sm:$0x1]
      %v280 = vld [vmem:[%s1 + $0x7] sm:$0x1]
      %v281 = vld [vmem:[%s1 + $0x8] sm:$0x1]
      %vm282 = vsmask.f32 3328
      %vm283 = vsmask.f32 7440
      %vm284 = vmor %vm282, %vm283
      %v286 = vshrl.u32 %v219, 16
      %v288 = vrot.slane %v286, 4
      %v289 = vshll.u32 %v219, 16
      %v291 = vrot.slane %v289, 5
      %v292 = vor.u32 %v288, %v291
      %v293 = vrot.slane %v292, 4
      %v295 = vshll.u32 %v220, 16
      %v297 = vrot.slane %v295, 5
      %v298 = vsel %vm284, %v293, %v297
      %v299 = vshrl.u32 %v220, 16
      %v301 = vrot.slane %v299, 4
      %v302 = vor.u32 %v301, %v297
      %v303 = vrot.slane %v302, 4
      %v305 = vshll.u32 %v221, 16
      %v307 = vrot.slane %v305, 5
      %v308 = vsel %vm284, %v303, %v307
      %v310 = vshrl.u32 %v222, 16
      %v312 = vrot.slane %v310, 4
      %v313 = vshll.u32 %v222, 16
      %v315 = vrot.slane %v313, 5
      %v316 = vor.u32 %v312, %v315
      %v317 = vrot.slane %v316, 4
      %v319 = vshll.u32 %v223, 16
      %v321 = vrot.slane %v319, 5
      %v322 = vsel %vm284, %v317, %v321
      %v323 = vshrl.u32 %v223, 16
      %v325 = vrot.slane %v323, 4
      %v326 = vor.u32 %v325, %v321
      %v327 = vrot.slane %v326, 4
      %v329 = vshll.u32 %v224, 16
      %v331 = vrot.slane %v329, 5
      %v332 = vsel %vm284, %v327, %v331
      %v334 = vshrl.u32 %v225, 16
      %v336 = vrot.slane %v334, 4
      %v337 = vshll.u32 %v225, 16
      %v339 = vrot.slane %v337, 5
      %v340 = vor.u32 %v336, %v339
      %v341 = vrot.slane %v340, 4
      %v343 = vshll.u32 %v226, 16
      %v345 = vrot.slane %v343, 5
      %v346 = vsel %vm284, %v341, %v345
      %v347 = vshrl.u32 %v226, 16
      %v349 = vrot.slane %v347, 4
      %v350 = vor.u32 %v349, %v345
      %v351 = vrot.slane %v350, 4
      %v353 = vshll.u32 %v227, 16
      %v355 = vrot.slane %v353, 5
      %v356 = vsel %vm284, %v351, %v355
      %v358 = vshrl.u32 %v228, 16
      %v360 = vrot.slane %v358, 4
      %v361 = vshll.u32 %v228, 16
      %v363 = vrot.slane %v361, 5
      %v364 = vor.u32 %v360, %v363
      %v365 = vrot.slane %v364, 4
      %v367 = vshll.u32 %v229, 16
      %v369 = vrot.slane %v367, 5
      %v370 = vsel %vm284, %v365, %v369
      %v371 = vshrl.u32 %v229, 16
      %v373 = vrot.slane %v371, 4
      %v374 = vor.u32 %v373, %v369
      %v375 = vrot.slane %v374, 4
      %v377 = vshll.u32 %v230, 16
      %v379 = vrot.slane %v377, 5
      %v380 = vsel %vm284, %v375, %v379
      %v382 = vshrl.u32 %v231, 16
      %v384 = vrot.slane %v382, 4
      %v385 = vshll.u32 %v231, 16
      %v387 = vrot.slane %v385, 5
      %v388 = vor.u32 %v384, %v387
      %v389 = vrot.slane %v388, 4
      %v391 = vshll.u32 %v232, 16
      %v393 = vrot.slane %v391, 5
      %v394 = vsel %vm284, %v389, %v393
      %v395 = vshrl.u32 %v232, 16
      %v397 = vrot.slane %v395, 4
      %v398 = vor.u32 %v397, %v393
      %v399 = vrot.slane %v398, 4
      %v401 = vshll.u32 %v233, 16
      %v403 = vrot.slane %v401, 5
      %v404 = vsel %vm284, %v399, %v403
      %v406 = vshrl.u32 %v234, 16
      %v408 = vrot.slane %v406, 4
      %v409 = vshll.u32 %v234, 16
      %v411 = vrot.slane %v409, 5
      %v412 = vor.u32 %v408, %v411
      %v413 = vrot.slane %v412, 4
      %v415 = vshll.u32 %v235, 16
      %v417 = vrot.slane %v415, 5
      %v418 = vsel %vm284, %v413, %v417
      %v419 = vshrl.u32 %v235, 16
      %v421 = vrot.slane %v419, 4
      %v422 = vor.u32 %v421, %v417
      %v423 = vrot.slane %v422, 4
      %v425 = vshll.u32 %v236, 16
      %v427 = vrot.slane %v425, 5
      %v428 = vsel %vm284, %v423, %v427
      %v430 = vshrl.u32 %v237, 16
      %v432 = vrot.slane %v430, 4
      %v433 = vshll.u32 %v237, 16
      %v435 = vrot.slane %v433, 5
      %v436 = vor.u32 %v432, %v435
      %v437 = vrot.slane %v436, 4
      %v439 = vshll.u32 %v238, 16
      %v441 = vrot.slane %v439, 5
      %v442 = vsel %vm284, %v437, %v441
      %v443 = vshrl.u32 %v238, 16
      %v445 = vrot.slane %v443, 4
      %v446 = vor.u32 %v445, %v441
      %v447 = vrot.slane %v446, 4
      %v449 = vshll.u32 %v239, 16
      %v451 = vrot.slane %v449, 5
      %v452 = vsel %vm284, %v447, %v451
      %v454 = vshrl.u32 %v240, 16
      %v456 = vrot.slane %v454, 4
      %v457 = vshll.u32 %v240, 16
      %v459 = vrot.slane %v457, 5
      %v460 = vor.u32 %v456, %v459
      %v461 = vrot.slane %v460, 4
      %v463 = vshll.u32 %v241, 16
      %v465 = vrot.slane %v463, 5
      %v466 = vsel %vm284, %v461, %v465
      %v467 = vshrl.u32 %v241, 16
      %v469 = vrot.slane %v467, 4
      %v470 = vor.u32 %v469, %v465
      %v471 = vrot.slane %v470, 4
      %v473 = vshll.u32 %v242, 16
      %v475 = vrot.slane %v473, 5
      %v476 = vsel %vm284, %v471, %v475
      %v478 = vshrl.u32 %v243, 16
      %v480 = vrot.slane %v478, 4
      %v481 = vshll.u32 %v243, 16
      %v483 = vrot.slane %v481, 5
      %v484 = vor.u32 %v480, %v483
      %v485 = vrot.slane %v484, 4
      %v487 = vshll.u32 %v244, 16
      %v489 = vrot.slane %v487, 5
      %v490 = vsel %vm284, %v485, %v489
      %v491 = vshrl.u32 %v244, 16
      %v493 = vrot.slane %v491, 4
      %v494 = vor.u32 %v493, %v489
      %v495 = vrot.slane %v494, 4
      %v497 = vshll.u32 %v245, 16
      %v499 = vrot.slane %v497, 5
      %v500 = vsel %vm284, %v495, %v499
      %v502 = vshrl.u32 %v246, 16
      %v504 = vrot.slane %v502, 4
      %v505 = vshll.u32 %v246, 16
      %v507 = vrot.slane %v505, 5
      %v508 = vor.u32 %v504, %v507
      %v509 = vrot.slane %v508, 4
      %v511 = vshll.u32 %v247, 16
      %v513 = vrot.slane %v511, 5
      %v514 = vsel %vm284, %v509, %v513
      %v515 = vshrl.u32 %v247, 16
      %v517 = vrot.slane %v515, 4
      %v518 = vor.u32 %v517, %v513
      %v519 = vrot.slane %v518, 4
      %v521 = vshll.u32 %v248, 16
      %v523 = vrot.slane %v521, 5
      %v524 = vsel %vm284, %v519, %v523
      %v526 = vshrl.u32 %v249, 16
      %v528 = vrot.slane %v526, 4
      %v529 = vshll.u32 %v249, 16
      %v531 = vrot.slane %v529, 5
      %v532 = vor.u32 %v528, %v531
      %v533 = vrot.slane %v532, 4
      %v535 = vshll.u32 %v250, 16
      %v537 = vrot.slane %v535, 5
      %v538 = vsel %vm284, %v533, %v537
      %v539 = vshrl.u32 %v250, 16
      %v541 = vrot.slane %v539, 4
      %v542 = vor.u32 %v541, %v537
      %v543 = vrot.slane %v542, 4
      %v545 = vshll.u32 %v251, 16
      %v547 = vrot.slane %v545, 5
      %v548 = vsel %vm284, %v543, %v547
      %v550 = vshrl.u32 %v252, 16
      %v552 = vrot.slane %v550, 4
      %v553 = vshll.u32 %v252, 16
      %v555 = vrot.slane %v553, 5
      %v556 = vor.u32 %v552, %v555
      %v557 = vrot.slane %v556, 4
      %v559 = vshll.u32 %v253, 16
      %v561 = vrot.slane %v559, 5
      %v562 = vsel %vm284, %v557, %v561
      %v563 = vshrl.u32 %v253, 16
      %v565 = vrot.slane %v563, 4
      %v566 = vor.u32 %v565, %v561
      %v567 = vrot.slane %v566, 4
      %v569 = vshll.u32 %v254, 16
      %v571 = vrot.slane %v569, 5
      %v572 = vsel %vm284, %v567, %v571
      %v574 = vshrl.u32 %v255, 16
      %v576 = vrot.slane %v574, 4
      %v577 = vshll.u32 %v255, 16
      %v579 = vrot.slane %v577, 5
      %v580 = vor.u32 %v576, %v579
      %v581 = vrot.slane %v580, 4
      %v583 = vshll.u32 %v256, 16
      %v585 = vrot.slane %v583, 5
      %v586 = vsel %vm284, %v581, %v585
      %v587 = vshrl.u32 %v256, 16
      %v589 = vrot.slane %v587, 4
      %v590 = vor.u32 %v589, %v585
      %v591 = vrot.slane %v590, 4
      %v593 = vshll.u32 %v257, 16
      %v595 = vrot.slane %v593, 5
      %v596 = vsel %vm284, %v591, %v595
      %v598 = vshrl.u32 %v258, 16
      %v600 = vrot.slane %v598, 4
      %v601 = vshll.u32 %v258, 16
      %v603 = vrot.slane %v601, 5
      %v604 = vor.u32 %v600, %v603
      %v605 = vrot.slane %v604, 4
      %v607 = vshll.u32 %v259, 16
      %v609 = vrot.slane %v607, 5
      %v610 = vsel %vm284, %v605, %v609
      %v611 = vshrl.u32 %v259, 16
      %v613 = vrot.slane %v611, 4
      %v614 = vor.u32 %v613, %v609
      %v615 = vrot.slane %v614, 4
      %v617 = vshll.u32 %v260, 16
      %v619 = vrot.slane %v617, 5
      %v620 = vsel %vm284, %v615, %v619
      %v622 = vshrl.u32 %v261, 16
      %v624 = vrot.slane %v622, 4
      %v625 = vshll.u32 %v261, 16
      %v627 = vrot.slane %v625, 5
      %v628 = vor.u32 %v624, %v627
      %v629 = vrot.slane %v628, 4
      %v631 = vshll.u32 %v262, 16
      %v633 = vrot.slane %v631, 5
      %v634 = vsel %vm284, %v629, %v633
      %v635 = vshrl.u32 %v262, 16
      %v637 = vrot.slane %v635, 4
      %v638 = vor.u32 %v637, %v633
      %v639 = vrot.slane %v638, 4
      %v641 = vshll.u32 %v263, 16
      %v643 = vrot.slane %v641, 5
      %v644 = vsel %vm284, %v639, %v643
      %v646 = vshrl.u32 %v264, 16
      %v648 = vrot.slane %v646, 4
      %v649 = vshll.u32 %v264, 16
      %v651 = vrot.slane %v649, 5
      %v652 = vor.u32 %v648, %v651
      %v653 = vrot.slane %v652, 4
      %v655 = vshll.u32 %v265, 16
      %v657 = vrot.slane %v655, 5
      %v658 = vsel %vm284, %v653, %v657
      %v659 = vshrl.u32 %v265, 16
      %v661 = vrot.slane %v659, 4
      %v662 = vor.u32 %v661, %v657
      %v663 = vrot.slane %v662, 4
      %v665 = vshll.u32 %v266, 16
      %v667 = vrot.slane %v665, 5
      %v668 = vsel %vm284, %v663, %v667
      %v669 = vunpack.c.l.b16 %v298
      %v670 = vunpack.c.l.b16 %v308
      %v671 = vunpack.c.l.b16 %v322
      %v672 = vunpack.c.l.b16 %v332
      %v673 = vunpack.c.l.b16 %v346
      %v674 = vunpack.c.l.b16 %v356
      %v675 = vunpack.c.l.b16 %v370
      %v676 = vunpack.c.l.b16 %v380
      %v677 = vunpack.c.l.b16 %v394
      %v678 = vunpack.c.l.b16 %v404
      %v679 = vunpack.c.l.b16 %v418
      %v680 = vunpack.c.l.b16 %v428
      %v681 = vunpack.c.l.b16 %v442
      %v682 = vunpack.c.l.b16 %v452
      %v683 = vunpack.c.l.b16 %v466
      %v684 = vunpack.c.l.b16 %v476
      %v685 = vunpack.c.l.b16 %v490
      %v686 = vunpack.c.l.b16 %v500
      %v687 = vunpack.c.l.b16 %v514
      %v688 = vunpack.c.l.b16 %v524
      %v689 = vunpack.c.l.b16 %v538
      %v690 = vunpack.c.l.b16 %v548
      %v691 = vunpack.c.l.b16 %v562
      %v692 = vunpack.c.l.b16 %v572
      %v693 = vunpack.c.l.b16 %v586
      %v694 = vunpack.c.l.b16 %v596
      %v695 = vunpack.c.l.b16 %v610
      %v696 = vunpack.c.l.b16 %v620
      %v697 = vunpack.c.l.b16 %v634
      %v698 = vunpack.c.l.b16 %v644
      %v699 = vunpack.c.l.b16 %v658
      %v700 = vunpack.c.l.b16 %v668
      %v701 = vpack.c.b16 %v670, %v669
      %v702 = vpack.c.b16 %v672, %v671
      %v703 = vpack.c.b16 %v674, %v673
      %v704 = vpack.c.b16 %v676, %v675
      %v705 = vpack.c.b16 %v678, %v677
      %v706 = vpack.c.b16 %v680, %v679
      %v707 = vpack.c.b16 %v682, %v681
      %v708 = vpack.c.b16 %v684, %v683
      %v709 = vpack.c.b16 %v686, %v685
      %v710 = vpack.c.b16 %v688, %v687
      %v711 = vpack.c.b16 %v690, %v689
      %v712 = vpack.c.b16 %v692, %v691
      %v713 = vpack.c.b16 %v694, %v693
      %v714 = vpack.c.b16 %v696, %v695
      %v715 = vpack.c.b16 %v698, %v697
      %v716 = vpack.c.b16 %v700, %v699
      %vm717 = vcmask 15360
      %v719 = vsel %vm717, %v701, 0
      %v722 = vsel %vm717, %v702, 0
      %v725 = vsel %vm717, %v703, 0
      %v728 = vsel %vm717, %v704, 0
      %v731 = vsel %vm717, %v705, 0
      %v734 = vsel %vm717, %v706, 0
      %v737 = vsel %vm717, %v707, 0
      %v740 = vsel %vm717, %v708, 0
      %v743 = vsel %vm717, %v709, 0
      %v746 = vsel %vm717, %v710, 0
      %v749 = vsel %vm717, %v711, 0
      %v752 = vsel %vm717, %v712, 0
      %v755 = vsel %vm717, %v713, 0
      %v758 = vsel %vm717, %v714, 0
      %v761 = vsel %vm717, %v715, 0
      %v764 = vsel %vm717, %v716, 0
      %vm766 = vcmask 1040384
      %v768 = vsel %vm766, %v274, 0
      %770 = vmatpush.bf16.msra.mxu0 0
      %771 = vmatpush.bf16.msra.mxu0 0
      %772 = vmatpush.bf16.msra.mxu0 0
      %773 = vmatpush.bf16.msra.mxu0 0
      %774 = vmatpush.bf16.msra.mxu0 0
      %775 = vmatpush.bf16.msra.mxu0 0
      %776 = vmatpush.bf16.msra.mxu0 0
      %777 = vmatpush.bf16.msra.mxu0 %v768
      %778 = vmatmul.bf16.gmra.mxu0 %v719
      %v779 = vpop.f32.mrf.mxu0
      %v780 = vadd.f32 0.0, %v779
      %v781 = vpop.f32.mrf.mxu0
      %v782 = vadd.f32 0.0, %v781
      %783 = vmatmul.bf16.gmra.mxu0 %v722
      %v784 = vpop.f32.mrf.mxu0
      %v785 = vadd.f32 0.0, %v784
      %v786 = vpop.f32.mrf.mxu0
      %v787 = vadd.f32 0.0, %v786
      %788 = vmatmul.bf16.gmra.mxu0 %v725
      %v789 = vpop.f32.mrf.mxu0
      %v790 = vadd.f32 0.0, %v789
      %v791 = vpop.f32.mrf.mxu0
      %v792 = vadd.f32 0.0, %v791
      %793 = vmatmul.bf16.gmra.mxu0 %v728
      %v794 = vpop.f32.mrf.mxu0
      %v795 = vadd.f32 0.0, %v794
      %v796 = vpop.f32.mrf.mxu0
      %v797 = vadd.f32 0.0, %v796
      %798 = vmatmul.bf16.gmra.mxu0 %v731
      %v799 = vpop.f32.mrf.mxu0
      %v800 = vadd.f32 0.0, %v799
      %v801 = vpop.f32.mrf.mxu0
      %v802 = vadd.f32 0.0, %v801
      %803 = vmatmul.bf16.gmra.mxu0 %v734
      %v804 = vpop.f32.mrf.mxu0
      %v805 = vadd.f32 0.0, %v804
      %v806 = vpop.f32.mrf.mxu0
      %v807 = vadd.f32 0.0, %v806
      %808 = vmatmul.bf16.gmra.mxu0 %v737
      %v809 = vpop.f32.mrf.mxu0
      %v810 = vadd.f32 0.0, %v809
      %v811 = vpop.f32.mrf.mxu0
      %v812 = vadd.f32 0.0, %v811
      %813 = vmatmul.bf16.gmra.mxu0 %v740
      %v814 = vpop.f32.mrf.mxu0
      %v815 = vadd.f32 0.0, %v814
      %v816 = vpop.f32.mrf.mxu0
      %v817 = vadd.f32 0.0, %v816
      %818 = vmatmul.bf16.gmra.mxu0 %v743
      %v819 = vpop.f32.mrf.mxu0
      %v820 = vadd.f32 0.0, %v819
      %v821 = vpop.f32.mrf.mxu0
      %v822 = vadd.f32 0.0, %v821
      %823 = vmatmul.bf16.gmra.mxu0 %v746
      %v824 = vpop.f32.mrf.mxu0
      %v825 = vadd.f32 0.0, %v824
      %v826 = vpop.f32.mrf.mxu0
      %v827 = vadd.f32 0.0, %v826
      %828 = vmatmul.bf16.gmra.mxu0 %v749
      %v829 = vpop.f32.mrf.mxu0
      %v830 = vadd.f32 0.0, %v829
      %v831 = vpop.f32.mrf.mxu0
      %v832 = vadd.f32 0.0, %v831
      %833 = vmatmul.bf16.gmra.mxu0 %v752
      %v834 = vpop.f32.mrf.mxu0
      %v835 = vadd.f32 0.0, %v834
      %v836 = vpop.f32.mrf.mxu0
      %v837 = vadd.f32 0.0, %v836
      %838 = vmatmul.bf16.gmra.mxu0 %v755
      %v839 = vpop.f32.mrf.mxu0
      %v840 = vadd.f32 0.0, %v839
      %v841 = vpop.f32.mrf.mxu0
      %v842 = vadd.f32 0.0, %v841
      %843 = vmatmul.bf16.gmra.mxu0 %v758
      %v844 = vpop.f32.mrf.mxu0
      %v845 = vadd.f32 0.0, %v844
      %v846 = vpop.f32.mrf.mxu0
      %v847 = vadd.f32 0.0, %v846
      %848 = vmatmul.bf16.gmra.mxu0 %v761
      %v849 = vpop.f32.mrf.mxu0
      %v850 = vadd.f32 0.0, %v849
      %v851 = vpop.f32.mrf.mxu0
      %v852 = vadd.f32 0.0, %v851
      %853 = vmatmul.bf16.gmra.mxu0 %v764
      %v854 = vpop.f32.mrf.mxu0
      %v855 = vadd.f32 0.0, %v854
      %v856 = vpop.f32.mrf.mxu0
      %v857 = vadd.f32 0.0, %v856
      %858 = vdwg.mxu0
      %v891 = vunpack.c.l.b16 %v219
      %v892 = vunpack.c.l.b16 %v220
      %v893 = vunpack.c.l.b16 %v222
      %v894 = vunpack.c.l.b16 %v223
      %v895 = vunpack.c.l.b16 %v225
      %v896 = vunpack.c.l.b16 %v226
      %v897 = vunpack.c.l.b16 %v228
      %v898 = vunpack.c.l.b16 %v229
      %v899 = vunpack.c.l.b16 %v231
      %v900 = vunpack.c.l.b16 %v232
      %v901 = vunpack.c.l.b16 %v234
      %v902 = vunpack.c.l.b16 %v235
      %v903 = vunpack.c.l.b16 %v237
      %v904 = vunpack.c.l.b16 %v238
      %v905 = vunpack.c.l.b16 %v240
      %v906 = vunpack.c.l.b16 %v241
      %v907 = vunpack.c.l.b16 %v243
      %v908 = vunpack.c.l.b16 %v244
      %v909 = vunpack.c.l.b16 %v246
      %v910 = vunpack.c.l.b16 %v247
      %v911 = vunpack.c.l.b16 %v249
      %v912 = vunpack.c.l.b16 %v250
      %v913 = vunpack.c.l.b16 %v252
      %v914 = vunpack.c.l.b16 %v253
      %v915 = vunpack.c.l.b16 %v255
      %v916 = vunpack.c.l.b16 %v256
      %v917 = vunpack.c.l.b16 %v258
      %v918 = vunpack.c.l.b16 %v259
      %v919 = vunpack.c.l.b16 %v261
      %v920 = vunpack.c.l.b16 %v262
      %v921 = vunpack.c.l.b16 %v264
      %v922 = vunpack.c.l.b16 %v265
      %v923 = vpack.c.b16 %v892, %v891
      %v924 = vpack.c.b16 %v894, %v893
      %v925 = vpack.c.b16 %v896, %v895
      %v926 = vpack.c.b16 %v898, %v897
      %v927 = vpack.c.b16 %v900, %v899
      %v928 = vpack.c.b16 %v902, %v901
      %v929 = vpack.c.b16 %v904, %v903
      %v930 = vpack.c.b16 %v906, %v905
      %v931 = vpack.c.b16 %v908, %v907
      %v932 = vpack.c.b16 %v910, %v909
      %v933 = vpack.c.b16 %v912, %v911
      %v934 = vpack.c.b16 %v914, %v913
      %v935 = vpack.c.b16 %v916, %v915
      %v936 = vpack.c.b16 %v918, %v917
      %v937 = vpack.c.b16 %v920, %v919
      %v938 = vpack.c.b16 %v922, %v921
      %v940 = vsel %vm717, %v923, 0
      %v943 = vsel %vm717, %v924, 0
      %v946 = vsel %vm717, %v925, 0
      %v949 = vsel %vm717, %v926, 0
      %v952 = vsel %vm717, %v927, 0
      %v955 = vsel %vm717, %v928, 0
      %v958 = vsel %vm717, %v929, 0
      %v961 = vsel %vm717, %v930, 0
      %v964 = vsel %vm717, %v931, 0
      %v967 = vsel %vm717, %v932, 0
      %v970 = vsel %vm717, %v933, 0
      %v973 = vsel %vm717, %v934, 0
      %v976 = vsel %vm717, %v935, 0
      %v979 = vsel %vm717, %v936, 0
      %v982 = vsel %vm717, %v937, 0
      %v985 = vsel %vm717, %v938, 0
      %v988 = vsel %vm766, %v273, 0
      %990 = vmatpush.bf16.msra.mxu0 0
      %991 = vmatpush.bf16.msra.mxu0 0
      %992 = vmatpush.bf16.msra.mxu0 0
      %993 = vmatpush.bf16.msra.mxu0 0
      %994 = vmatpush.bf16.msra.mxu0 0
      %995 = vmatpush.bf16.msra.mxu0 0
      %996 = vmatpush.bf16.msra.mxu0 0
      %997 = vmatpush.bf16.msra.mxu0 %v988
      %998 = vmatmul.bf16.gmra.mxu0 %v940
      %v999 = vpop.f32.mrf.mxu0
      %v1000 = vadd.f32 %v780, %v999
      %v1001 = vpop.f32.mrf.mxu0
      %v1002 = vadd.f32 %v782, %v1001
      %1003 = vmatmul.bf16.gmra.mxu0 %v943
      %v1004 = vpop.f32.mrf.mxu0
      %v1005 = vadd.f32 %v785, %v1004
      %v1006 = vpop.f32.mrf.mxu0
      %v1007 = vadd.f32 %v787, %v1006
      %1008 = vmatmul.bf16.gmra.mxu0 %v946
      %v1009 = vpop.f32.mrf.mxu0
      %v1010 = vadd.f32 %v790, %v1009
      %v1011 = vpop.f32.mrf.mxu0
      %v1012 = vadd.f32 %v792, %v1011
      %1013 = vmatmul.bf16.gmra.mxu0 %v949
      %v1014 = vpop.f32.mrf.mxu0
      %v1015 = vadd.f32 %v795, %v1014
      %v1016 = vpop.f32.mrf.mxu0
      %v1017 = vadd.f32 %v797, %v1016
      %1018 = vmatmul.bf16.gmra.mxu0 %v952
      %v1019 = vpop.f32.mrf.mxu0
      %v1020 = vadd.f32 %v800, %v1019
      %v1021 = vpop.f32.mrf.mxu0
      %v1022 = vadd.f32 %v802, %v1021
      %1023 = vmatmul.bf16.gmra.mxu0 %v955
      %v1024 = vpop.f32.mrf.mxu0
      %v1025 = vadd.f32 %v805, %v1024
      %v1026 = vpop.f32.mrf.mxu0
      %v1027 = vadd.f32 %v807, %v1026
      %1028 = vmatmul.bf16.gmra.mxu0 %v958
      %v1029 = vpop.f32.mrf.mxu0
      %v1030 = vadd.f32 %v810, %v1029
      %v1031 = vpop.f32.mrf.mxu0
      %v1032 = vadd.f32 %v812, %v1031
      %1033 = vmatmul.bf16.gmra.mxu0 %v961
      %v1034 = vpop.f32.mrf.mxu0
      %v1035 = vadd.f32 %v815, %v1034
      %v1036 = vpop.f32.mrf.mxu0
      %v1037 = vadd.f32 %v817, %v1036
      %1038 = vmatmul.bf16.gmra.mxu0 %v964
      %v1039 = vpop.f32.mrf.mxu0
      %v1040 = vadd.f32 %v820, %v1039
      %v1041 = vpop.f32.mrf.mxu0
      %v1042 = vadd.f32 %v822, %v1041
      %1043 = vmatmul.bf16.gmra.mxu0 %v967
      %v1044 = vpop.f32.mrf.mxu0
      %v1045 = vadd.f32 %v825, %v1044
      %v1046 = vpop.f32.mrf.mxu0
      %v1047 = vadd.f32 %v827, %v1046
      %1048 = vmatmul.bf16.gmra.mxu0 %v970
      %v1049 = vpop.f32.mrf.mxu0
      %v1050 = vadd.f32 %v830, %v1049
      %v1051 = vpop.f32.mrf.mxu0
      %v1052 = vadd.f32 %v832, %v1051
      %1053 = vmatmul.bf16.gmra.mxu0 %v973
      %v1054 = vpop.f32.mrf.mxu0
      %v1055 = vadd.f32 %v835, %v1054
      %v1056 = vpop.f32.mrf.mxu0
      %v1057 = vadd.f32 %v837, %v1056
      %1058 = vmatmul.bf16.gmra.mxu0 %v976
      %v1059 = vpop.f32.mrf.mxu0
      %v1060 = vadd.f32 %v840, %v1059
      %v1061 = vpop.f32.mrf.mxu0
      %v1062 = vadd.f32 %v842, %v1061
      %1063 = vmatmul.bf16.gmra.mxu0 %v979
      %v1064 = vpop.f32.mrf.mxu0
      %v1065 = vadd.f32 %v845, %v1064
      %v1066 = vpop.f32.mrf.mxu0
      %v1067 = vadd.f32 %v847, %v1066
      %1068 = vmatmul.bf16.gmra.mxu0 %v982
      %v1069 = vpop.f32.mrf.mxu0
      %v1070 = vadd.f32 %v850, %v1069
      %v1071 = vpop.f32.mrf.mxu0
      %v1072 = vadd.f32 %v852, %v1071
      %1073 = vmatmul.bf16.gmra.mxu0 %v985
      %v1074 = vpop.f32.mrf.mxu0
      %v1075 = vadd.f32 %v855, %v1074
      %v1076 = vpop.f32.mrf.mxu0
      %v1077 = vadd.f32 %v857, %v1076
      %1078 = vdwg.mxu0
      %vm1095 = vcmask 1042432
      %vm1096 = vcmask 1046532
      %vm1097 = vmor %vm1095, %vm1096
      %v1098 = vrot.slane %v219, 5
      %v1099 = vrot.slane %v1098, 4
      %v1100 = vrot.slane %v220, 5
      %v1101 = vsel %vm1097, %v1099, %v1100
      %v1102 = vrot.slane %v1100, 4
      %v1103 = vrot.slane %v221, 5
      %v1104 = vsel %vm1097, %v1102, %v1103
      %v1105 = vrot.slane %v222, 5
      %v1106 = vrot.slane %v1105, 4
      %v1107 = vrot.slane %v223, 5
      %v1108 = vsel %vm1097, %v1106, %v1107
      %v1109 = vrot.slane %v1107, 4
      %v1110 = vrot.slane %v224, 5
      %v1111 = vsel %vm1097, %v1109, %v1110
      %v1112 = vrot.slane %v225, 5
      %v1113 = vrot.slane %v1112, 4
      %v1114 = vrot.slane %v226, 5
      %v1115 = vsel %vm1097, %v1113, %v1114
      %v1116 = vrot.slane %v1114, 4
      %v1117 = vrot.slane %v227, 5
      %v1118 = vsel %vm1097, %v1116, %v1117
      %v1119 = vrot.slane %v228, 5
      %v1120 = vrot.slane %v1119, 4
      %v1121 = vrot.slane %v229, 5
      %v1122 = vsel %vm1097, %v1120, %v1121
      %v1123 = vrot.slane %v1121, 4
      %v1124 = vrot.slane %v230, 5
      %v1125 = vsel %vm1097, %v1123, %v1124
      %v1126 = vrot.slane %v231, 5
      %v1127 = vrot.slane %v1126, 4
      %v1128 = vrot.slane %v232, 5
      %v1129 = vsel %vm1097, %v1127, %v1128
      %v1130 = vrot.slane %v1128, 4
      %v1131 = vrot.slane %v233, 5
      %v1132 = vsel %vm1097, %v1130, %v1131
      %v1133 = vrot.slane %v234, 5
      %v1134 = vrot.slane %v1133, 4
      %v1135 = vrot.slane %v235, 5
      %v1136 = vsel %vm1097, %v1134, %v1135
      %v1137 = vrot.slane %v1135, 4
      %v1138 = vrot.slane %v236, 5
      %v1139 = vsel %vm1097, %v1137, %v1138
      %v1140 = vrot.slane %v237, 5
      %v1141 = vrot.slane %v1140, 4
      %v1142 = vrot.slane %v238, 5
      %v1143 = vsel %vm1097, %v1141, %v1142
      %v1144 = vrot.slane %v1142, 4
      %v1145 = vrot.slane %v239, 5
      %v1146 = vsel %vm1097, %v1144, %v1145
      %v1147 = vrot.slane %v240, 5
      %v1148 = vrot.slane %v1147, 4
      %v1149 = vrot.slane %v241, 5
      %v1150 = vsel %vm1097, %v1148, %v1149
      %v1151 = vrot.slane %v1149, 4
      %v1152 = vrot.slane %v242, 5
      %v1153 = vsel %vm1097, %v1151, %v1152
      %v1154 = vrot.slane %v243, 5
      %v1155 = vrot.slane %v1154, 4
      %v1156 = vrot.slane %v244, 5
      %v1157 = vsel %vm1097, %v1155, %v1156
      %v1158 = vrot.slane %v1156, 4
      %v1159 = vrot.slane %v245, 5
      %v1160 = vsel %vm1097, %v1158, %v1159
      %v1161 = vrot.slane %v246, 5
      %v1162 = vrot.slane %v1161, 4
      %v1163 = vrot.slane %v247, 5
      %v1164 = vsel %vm1097, %v1162, %v1163
      %v1165 = vrot.slane %v1163, 4
      %v1166 = vrot.slane %v248, 5
      %v1167 = vsel %vm1097, %v1165, %v1166
      %v1168 = vrot.slane %v249, 5
      %v1169 = vrot.slane %v1168, 4
      %v1170 = vrot.slane %v250, 5
      %v1171 = vsel %vm1097, %v1169, %v1170
      %v1172 = vrot.slane %v1170, 4
      %v1173 = vrot.slane %v251, 5
      %v1174 = vsel %vm1097, %v1172, %v1173
      %v1175 = vrot.slane %v252, 5
      %v1176 = vrot.slane %v1175, 4
      %v1177 = vrot.slane %v253, 5
      %v1178 = vsel %vm1097, %v1176, %v1177
      %v1179 = vrot.slane %v1177, 4
      %v1180 = vrot.slane %v254, 5
      %v1181 = vsel %vm1097, %v1179, %v1180
      %v1182 = vrot.slane %v255, 5
      %v1183 = vrot.slane %v1182, 4
      %v1184 = vrot.slane %v256, 5
      %v1185 = vsel %vm1097, %v1183, %v1184
      %v1186 = vrot.slane %v1184, 4
      %v1187 = vrot.slane %v257, 5
      %v1188 = vsel %vm1097, %v1186, %v1187
      %v1189 = vrot.slane %v258, 5
      %v1190 = vrot.slane %v1189, 4
      %v1191 = vrot.slane %v259, 5
      %v1192 = vsel %vm1097, %v1190, %v1191
      %v1193 = vrot.slane %v1191, 4
      %v1194 = vrot.slane %v260, 5
      %v1195 = vsel %vm1097, %v1193, %v1194
      %v1196 = vrot.slane %v261, 5
      %v1197 = vrot.slane %v1196, 4
      %v1198 = vrot.slane %v262, 5
      %v1199 = vsel %vm1097, %v1197, %v1198
      %v1200 = vrot.slane %v1198, 4
      %v1201 = vrot.slane %v263, 5
      %v1202 = vsel %vm1097, %v1200, %v1201
      %v1203 = vrot.slane %v264, 5
      %v1204 = vrot.slane %v1203, 4
      %v1205 = vrot.slane %v265, 5
      %v1206 = vsel %vm1097, %v1204, %v1205
      %v1207 = vrot.slane %v1205, 4
      %v1208 = vrot.slane %v266, 5
      %v1209 = vsel %vm1097, %v1207, %v1208
      %v1210 = vunpack.c.l.b16 %v1101
      %v1211 = vunpack.c.l.b16 %v1104
      %v1212 = vunpack.c.l.b16 %v1108
      %v1213 = vunpack.c.l.b16 %v1111
      %v1214 = vunpack.c.l.b16 %v1115
      %v1215 = vunpack.c.l.b16 %v1118
      %v1216 = vunpack.c.l.b16 %v1122
      %v1217 = vunpack.c.l.b16 %v1125
      %v1218 = vunpack.c.l.b16 %v1129
      %v1219 = vunpack.c.l.b16 %v1132
      %v1220 = vunpack.c.l.b16 %v1136
      %v1221 = vunpack.c.l.b16 %v1139
      %v1222 = vunpack.c.l.b16 %v1143
      %v1223 = vunpack.c.l.b16 %v1146
      %v1224 = vunpack.c.l.b16 %v1150
      %v1225 = vunpack.c.l.b16 %v1153
      %v1226 = vunpack.c.l.b16 %v1157
      %v1227 = vunpack.c.l.b16 %v1160
      %v1228 = vunpack.c.l.b16 %v1164
      %v1229 = vunpack.c.l.b16 %v1167
      %v1230 = vunpack.c.l.b16 %v1171
      %v1231 = vunpack.c.l.b16 %v1174
      %v1232 = vunpack.c.l.b16 %v1178
      %v1233 = vunpack.c.l.b16 %v1181
      %v1234 = vunpack.c.l.b16 %v1185
      %v1235 = vunpack.c.l.b16 %v1188
      %v1236 = vunpack.c.l.b16 %v1192
      %v1237 = vunpack.c.l.b16 %v1195
      %v1238 = vunpack.c.l.b16 %v1199
      %v1239 = vunpack.c.l.b16 %v1202
      %v1240 = vunpack.c.l.b16 %v1206
      %v1241 = vunpack.c.l.b16 %v1209
      %v1242 = vpack.c.b16 %v1211, %v1210
      %v1243 = vpack.c.b16 %v1213, %v1212
      %v1244 = vpack.c.b16 %v1215, %v1214
      %v1245 = vpack.c.b16 %v1217, %v1216
      %v1246 = vpack.c.b16 %v1219, %v1218
      %v1247 = vpack.c.b16 %v1221, %v1220
      %v1248 = vpack.c.b16 %v1223, %v1222
      %v1249 = vpack.c.b16 %v1225, %v1224
      %v1250 = vpack.c.b16 %v1227, %v1226
      %v1251 = vpack.c.b16 %v1229, %v1228
      %v1252 = vpack.c.b16 %v1231, %v1230
      %v1253 = vpack.c.b16 %v1233, %v1232
      %v1254 = vpack.c.b16 %v1235, %v1234
      %v1255 = vpack.c.b16 %v1237, %v1236
      %v1256 = vpack.c.b16 %v1239, %v1238
      %v1257 = vpack.c.b16 %v1241, %v1240
      %v1259 = vsel %vm717, %v1242, 0
      %v1262 = vsel %vm717, %v1243, 0
      %v1265 = vsel %vm717, %v1244, 0
      %v1268 = vsel %vm717, %v1245, 0
      %v1271 = vsel %vm717, %v1246, 0
      %v1274 = vsel %vm717, %v1247, 0
      %v1277 = vsel %vm717, %v1248, 0
      %v1280 = vsel %vm717, %v1249, 0
      %v1283 = vsel %vm717, %v1250, 0
      %v1286 = vsel %vm717, %v1251, 0
      %v1289 = vsel %vm717, %v1252, 0
      %v1292 = vsel %vm717, %v1253, 0
      %v1295 = vsel %vm717, %v1254, 0
      %v1298 = vsel %vm717, %v1255, 0
      %v1301 = vsel %vm717, %v1256, 0
      %v1304 = vsel %vm717, %v1257, 0
      %v1307 = vsel %vm766, %v275, 0
      %1309 = vmatpush.bf16.msra.mxu0 0
      %1310 = vmatpush.bf16.msra.mxu0 0
      %1311 = vmatpush.bf16.msra.mxu0 0
      %1312 = vmatpush.bf16.msra.mxu0 0
      %1313 = vmatpush.bf16.msra.mxu0 0
      %1314 = vmatpush.bf16.msra.mxu0 0
      %1315 = vmatpush.bf16.msra.mxu0 0
      %1316 = vmatpush.bf16.msra.mxu0 %v1307
      %1317 = vmatmul.bf16.gmra.mxu0 %v1259
      %v1318 = vpop.f32.mrf.mxu0
      %v1319 = vadd.f32 0.0, %v1318
      %v1320 = vpop.f32.mrf.mxu0
      %v1321 = vadd.f32 0.0, %v1320
      %1322 = vmatmul.bf16.gmra.mxu0 %v1262
      %v1323 = vpop.f32.mrf.mxu0
      %v1324 = vadd.f32 0.0, %v1323
      %v1325 = vpop.f32.mrf.mxu0
      %v1326 = vadd.f32 0.0, %v1325
      %1327 = vmatmul.bf16.gmra.mxu0 %v1265
      %v1328 = vpop.f32.mrf.mxu0
      %v1329 = vadd.f32 0.0, %v1328
      %v1330 = vpop.f32.mrf.mxu0
      %v1331 = vadd.f32 0.0, %v1330
      %1332 = vmatmul.bf16.gmra.mxu0 %v1268
      %v1333 = vpop.f32.mrf.mxu0
      %v1334 = vadd.f32 0.0, %v1333
      %v1335 = vpop.f32.mrf.mxu0
      %v1336 = vadd.f32 0.0, %v1335
      %1337 = vmatmul.bf16.gmra.mxu0 %v1271
      %v1338 = vpop.f32.mrf.mxu0
      %v1339 = vadd.f32 0.0, %v1338
      %v1340 = vpop.f32.mrf.mxu0
      %v1341 = vadd.f32 0.0, %v1340
      %1342 = vmatmul.bf16.gmra.mxu0 %v1274
      %v1343 = vpop.f32.mrf.mxu0
      %v1344 = vadd.f32 0.0, %v1343
      %v1345 = vpop.f32.mrf.mxu0
      %v1346 = vadd.f32 0.0, %v1345
      %1347 = vmatmul.bf16.gmra.mxu0 %v1277
      %v1348 = vpop.f32.mrf.mxu0
      %v1349 = vadd.f32 0.0, %v1348
      %v1350 = vpop.f32.mrf.mxu0
      %v1351 = vadd.f32 0.0, %v1350
      %1352 = vmatmul.bf16.gmra.mxu0 %v1280
      %v1353 = vpop.f32.mrf.mxu0
      %v1354 = vadd.f32 0.0, %v1353
      %v1355 = vpop.f32.mrf.mxu0
      %v1356 = vadd.f32 0.0, %v1355
      %1357 = vmatmul.bf16.gmra.mxu0 %v1283
      %v1358 = vpop.f32.mrf.mxu0
      %v1359 = vadd.f32 0.0, %v1358
      %v1360 = vpop.f32.mrf.mxu0
      %v1361 = vadd.f32 0.0, %v1360
      %1362 = vmatmul.bf16.gmra.mxu0 %v1286
      %v1363 = vpop.f32.mrf.mxu0
      %v1364 = vadd.f32 0.0, %v1363
      %v1365 = vpop.f32.mrf.mxu0
      %v1366 = vadd.f32 0.0, %v1365
      %1367 = vmatmul.bf16.gmra.mxu0 %v1289
      %v1368 = vpop.f32.mrf.mxu0
      %v1369 = vadd.f32 0.0, %v1368
      %v1370 = vpop.f32.mrf.mxu0
      %v1371 = vadd.f32 0.0, %v1370
      %1372 = vmatmul.bf16.gmra.mxu0 %v1292
      %v1373 = vpop.f32.mrf.mxu0
      %v1374 = vadd.f32 0.0, %v1373
      %v1375 = vpop.f32.mrf.mxu0
      %v1376 = vadd.f32 0.0, %v1375
      %1377 = vmatmul.bf16.gmra.mxu0 %v1295
      %v1378 = vpop.f32.mrf.mxu0
      %v1379 = vadd.f32 0.0, %v1378
      %v1380 = vpop.f32.mrf.mxu0
      %v1381 = vadd.f32 0.0, %v1380
      %1382 = vmatmul.bf16.gmra.mxu0 %v1298
      %v1383 = vpop.f32.mrf.mxu0
      %v1384 = vadd.f32 0.0, %v1383
      %v1385 = vpop.f32.mrf.mxu0
      %v1386 = vadd.f32 0.0, %v1385
      %1387 = vmatmul.bf16.gmra.mxu0 %v1301
      %v1388 = vpop.f32.mrf.mxu0
      %v1389 = vadd.f32 0.0, %v1388
      %v1390 = vpop.f32.mrf.mxu0
      %v1391 = vadd.f32 0.0, %v1390
      %1392 = vmatmul.bf16.gmra.mxu0 %v1304
      %v1393 = vpop.f32.mrf.mxu0
      %v1394 = vadd.f32 0.0, %v1393
      %v1395 = vpop.f32.mrf.mxu0
      %v1396 = vadd.f32 0.0, %v1395
      %1397 = vdwg.mxu0
      %v1398 = vadd.f32 %v1000, %v1319
      %v1399 = vadd.f32 %v1002, %v1321
      %v1400 = vadd.f32 %v1005, %v1324
      %v1401 = vadd.f32 %v1007, %v1326
      %v1402 = vadd.f32 %v1010, %v1329
      %v1403 = vadd.f32 %v1012, %v1331
      %v1404 = vadd.f32 %v1015, %v1334
      %v1405 = vadd.f32 %v1017, %v1336
      %v1406 = vadd.f32 %v1020, %v1339
      %v1407 = vadd.f32 %v1022, %v1341
      %v1408 = vadd.f32 %v1025, %v1344
      %v1409 = vadd.f32 %v1027, %v1346
      %v1410 = vadd.f32 %v1030, %v1349
      %v1411 = vadd.f32 %v1032, %v1351
      %v1412 = vadd.f32 %v1035, %v1354
      %v1413 = vadd.f32 %v1037, %v1356
      %v1414 = vadd.f32 %v1040, %v1359
      %v1415 = vadd.f32 %v1042, %v1361
      %v1416 = vadd.f32 %v1045, %v1364
      %v1417 = vadd.f32 %v1047, %v1366
      %v1418 = vadd.f32 %v1050, %v1369
      %v1419 = vadd.f32 %v1052, %v1371
      %v1420 = vadd.f32 %v1055, %v1374
      %v1421 = vadd.f32 %v1057, %v1376
      %v1422 = vadd.f32 %v1060, %v1379
      %v1423 = vadd.f32 %v1062, %v1381
      %v1424 = vadd.f32 %v1065, %v1384
      %v1425 = vadd.f32 %v1067, %v1386
      %v1426 = vadd.f32 %v1070, %v1389
      %v1427 = vadd.f32 %v1072, %v1391
      %v1428 = vadd.f32 %v1075, %v1394
      %v1429 = vadd.f32 %v1077, %v1396
      %v1432 = vunpack.c.l.b16 %v267
      %v1433 = vunpack.c.l.b16 %v268
      %v1434 = vpack.c.b16 %v1433, %v1432
      %v1436 = vsel %vm717, %v1434, 0
      %v1439 = vsel %vm766, %v276, 0
      %1441 = vmatpush.bf16.msra.mxu0 0
      %1442 = vmatpush.bf16.msra.mxu0 0
      %1443 = vmatpush.bf16.msra.mxu0 0
      %1444 = vmatpush.bf16.msra.mxu0 0
      %1445 = vmatpush.bf16.msra.mxu0 0
      %1446 = vmatpush.bf16.msra.mxu0 0
      %1447 = vmatpush.bf16.msra.mxu0 0
      %1448 = vmatpush.bf16.msra.mxu0 %v1439
      %1449 = vmatmul.bf16.gmra.mxu0 %v943
      %v1450 = vpop.f32.mrf.mxu0
      %v1451 = vadd.f32 0.0, %v1450
      %v1452 = vpop.f32.mrf.mxu0
      %v1453 = vadd.f32 0.0, %v1452
      %1454 = vmatmul.bf16.gmra.mxu0 %v946
      %v1455 = vpop.f32.mrf.mxu0
      %v1456 = vadd.f32 0.0, %v1455
      %v1457 = vpop.f32.mrf.mxu0
      %v1458 = vadd.f32 0.0, %v1457
      %1459 = vmatmul.bf16.gmra.mxu0 %v949
      %v1460 = vpop.f32.mrf.mxu0
      %v1461 = vadd.f32 0.0, %v1460
      %v1462 = vpop.f32.mrf.mxu0
      %v1463 = vadd.f32 0.0, %v1462
      %1464 = vmatmul.bf16.gmra.mxu0 %v952
      %v1465 = vpop.f32.mrf.mxu0
      %v1466 = vadd.f32 0.0, %v1465
      %v1467 = vpop.f32.mrf.mxu0
      %v1468 = vadd.f32 0.0, %v1467
      %1469 = vmatmul.bf16.gmra.mxu0 %v955
      %v1470 = vpop.f32.mrf.mxu0
      %v1471 = vadd.f32 0.0, %v1470
      %v1472 = vpop.f32.mrf.mxu0
      %v1473 = vadd.f32 0.0, %v1472
      %1474 = vmatmul.bf16.gmra.mxu0 %v958
      %v1475 = vpop.f32.mrf.mxu0
      %v1476 = vadd.f32 0.0, %v1475
      %v1477 = vpop.f32.mrf.mxu0
      %v1478 = vadd.f32 0.0, %v1477
      %1479 = vmatmul.bf16.gmra.mxu0 %v961
      %v1480 = vpop.f32.mrf.mxu0
      %v1481 = vadd.f32 0.0, %v1480
      %v1482 = vpop.f32.mrf.mxu0
      %v1483 = vadd.f32 0.0, %v1482
      %1484 = vmatmul.bf16.gmra.mxu0 %v964
      %v1485 = vpop.f32.mrf.mxu0
      %v1486 = vadd.f32 0.0, %v1485
      %v1487 = vpop.f32.mrf.mxu0
      %v1488 = vadd.f32 0.0, %v1487
      %1489 = vmatmul.bf16.gmra.mxu0 %v967
      %v1490 = vpop.f32.mrf.mxu0
      %v1491 = vadd.f32 0.0, %v1490
      %v1492 = vpop.f32.mrf.mxu0
      %v1493 = vadd.f32 0.0, %v1492
      %1494 = vmatmul.bf16.gmra.mxu0 %v970
      %v1495 = vpop.f32.mrf.mxu0
      %v1496 = vadd.f32 0.0, %v1495
      %v1497 = vpop.f32.mrf.mxu0
      %v1498 = vadd.f32 0.0, %v1497
      %1499 = vmatmul.bf16.gmra.mxu0 %v973
      %v1500 = vpop.f32.mrf.mxu0
      %v1501 = vadd.f32 0.0, %v1500
      %v1502 = vpop.f32.mrf.mxu0
      %v1503 = vadd.f32 0.0, %v1502
      %1504 = vmatmul.bf16.gmra.mxu0 %v976
      %v1505 = vpop.f32.mrf.mxu0
      %v1506 = vadd.f32 0.0, %v1505
      %v1507 = vpop.f32.mrf.mxu0
      %v1508 = vadd.f32 0.0, %v1507
      %1509 = vmatmul.bf16.gmra.mxu0 %v979
      %v1510 = vpop.f32.mrf.mxu0
      %v1511 = vadd.f32 0.0, %v1510
      %v1512 = vpop.f32.mrf.mxu0
      %v1513 = vadd.f32 0.0, %v1512
      %1514 = vmatmul.bf16.gmra.mxu0 %v982
      %v1515 = vpop.f32.mrf.mxu0
      %v1516 = vadd.f32 0.0, %v1515
      %v1517 = vpop.f32.mrf.mxu0
      %v1518 = vadd.f32 0.0, %v1517
      %1519 = vmatmul.bf16.gmra.mxu0 %v985
      %v1520 = vpop.f32.mrf.mxu0
      %v1521 = vadd.f32 0.0, %v1520
      %v1522 = vpop.f32.mrf.mxu0
      %v1523 = vadd.f32 0.0, %v1522
      %1524 = vmatmul.bf16.gmra.mxu0 %v1436
      %v1525 = vpop.f32.mrf.mxu0
      %v1526 = vadd.f32 0.0, %v1525
      %v1527 = vpop.f32.mrf.mxu0
      %v1528 = vadd.f32 0.0, %v1527
      %1529 = vdwg.mxu0
      %v1530 = vadd.f32 %v1398, %v1451
      %v1531 = vadd.f32 %v1399, %v1453
      %v1532 = vadd.f32 %v1400, %v1456
      %v1533 = vadd.f32 %v1401, %v1458
      %v1534 = vadd.f32 %v1402, %v1461
      %v1535 = vadd.f32 %v1403, %v1463
      %v1536 = vadd.f32 %v1404, %v1466
      %v1537 = vadd.f32 %v1405, %v1468
      %v1538 = vadd.f32 %v1406, %v1471
      %v1539 = vadd.f32 %v1407, %v1473
      %v1540 = vadd.f32 %v1408, %v1476
      %v1541 = vadd.f32 %v1409, %v1478
      %v1542 = vadd.f32 %v1410, %v1481
      %v1543 = vadd.f32 %v1411, %v1483
      %v1544 = vadd.f32 %v1412, %v1486
      %v1545 = vadd.f32 %v1413, %v1488
      %v1546 = vadd.f32 %v1414, %v1491
      %v1547 = vadd.f32 %v1415, %v1493
      %v1548 = vadd.f32 %v1416, %v1496
      %v1549 = vadd.f32 %v1417, %v1498
      %v1550 = vadd.f32 %v1418, %v1501
      %v1551 = vadd.f32 %v1419, %v1503
      %v1552 = vadd.f32 %v1420, %v1506
      %v1553 = vadd.f32 %v1421, %v1508
      %v1554 = vadd.f32 %v1422, %v1511
      %v1555 = vadd.f32 %v1423, %v1513
      %v1556 = vadd.f32 %v1424, %v1516
      %v1557 = vadd.f32 %v1425, %v1518
      %v1558 = vadd.f32 %v1426, %v1521
      %v1559 = vadd.f32 %v1427, %v1523
      %v1560 = vadd.f32 %v1428, %v1526
      %v1561 = vadd.f32 %v1429, %v1528
      %v1563 = vshrl.u32 %v267, 16
      %v1565 = vrot.slane %v1563, 4
      %v1566 = vshll.u32 %v267, 16
      %v1568 = vrot.slane %v1566, 5
      %v1569 = vor.u32 %v1565, %v1568
      %v1570 = vrot.slane %v1569, 4
      %v1572 = vshll.u32 %v268, 16
      %v1574 = vrot.slane %v1572, 5
      %v1575 = vsel %vm284, %v1570, %v1574
      %v1576 = vshrl.u32 %v268, 16
      %v1578 = vrot.slane %v1576, 4
      %v1579 = vor.u32 %v1578, %v1574
      %v1580 = vrot.slane %v1579, 4
      %v1582 = vshll.u32 %v269, 16
      %v1584 = vrot.slane %v1582, 5
      %v1585 = vsel %vm284, %v1580, %v1584
      %v1586 = vunpack.c.l.b16 %v1575
      %v1587 = vunpack.c.l.b16 %v1585
      %v1588 = vpack.c.b16 %v1587, %v1586
      %v1590 = vsel %vm717, %v1588, 0
      %v1593 = vsel %vm766, %v277, 0
      %1595 = vmatpush.bf16.msra.mxu0 0
      %1596 = vmatpush.bf16.msra.mxu0 0
      %1597 = vmatpush.bf16.msra.mxu0 0
      %1598 = vmatpush.bf16.msra.mxu0 0
      %1599 = vmatpush.bf16.msra.mxu0 0
      %1600 = vmatpush.bf16.msra.mxu0 0
      %1601 = vmatpush.bf16.msra.mxu0 0
      %1602 = vmatpush.bf16.msra.mxu0 %v1593
      %1603 = vmatmul.bf16.gmra.mxu0 %v722
      %v1604 = vpop.f32.mrf.mxu0
      %v1605 = vadd.f32 0.0, %v1604
      %v1606 = vpop.f32.mrf.mxu0
      %v1607 = vadd.f32 0.0, %v1606
      %1608 = vmatmul.bf16.gmra.mxu0 %v725
      %v1609 = vpop.f32.mrf.mxu0
      %v1610 = vadd.f32 0.0, %v1609
      %v1611 = vpop.f32.mrf.mxu0
      %v1612 = vadd.f32 0.0, %v1611
      %1613 = vmatmul.bf16.gmra.mxu0 %v728
      %v1614 = vpop.f32.mrf.mxu0
      %v1615 = vadd.f32 0.0, %v1614
      %v1616 = vpop.f32.mrf.mxu0
      %v1617 = vadd.f32 0.0, %v1616
      %1618 = vmatmul.bf16.gmra.mxu0 %v731
      %v1619 = vpop.f32.mrf.mxu0
      %v1620 = vadd.f32 0.0, %v1619
      %v1621 = vpop.f32.mrf.mxu0
      %v1622 = vadd.f32 0.0, %v1621
      %1623 = vmatmul.bf16.gmra.mxu0 %v734
      %v1624 = vpop.f32.mrf.mxu0
      %v1625 = vadd.f32 0.0, %v1624
      %v1626 = vpop.f32.mrf.mxu0
      %v1627 = vadd.f32 0.0, %v1626
      %1628 = vmatmul.bf16.gmra.mxu0 %v737
      %v1629 = vpop.f32.mrf.mxu0
      %v1630 = vadd.f32 0.0, %v1629
      %v1631 = vpop.f32.mrf.mxu0
      %v1632 = vadd.f32 0.0, %v1631
      %1633 = vmatmul.bf16.gmra.mxu0 %v740
      %v1634 = vpop.f32.mrf.mxu0
      %v1635 = vadd.f32 0.0, %v1634
      %v1636 = vpop.f32.mrf.mxu0
      %v1637 = vadd.f32 0.0, %v1636
      %1638 = vmatmul.bf16.gmra.mxu0 %v743
      %v1639 = vpop.f32.mrf.mxu0
      %v1640 = vadd.f32 0.0, %v1639
      %v1641 = vpop.f32.mrf.mxu0
      %v1642 = vadd.f32 0.0, %v1641
      %1643 = vmatmul.bf16.gmra.mxu0 %v746
      %v1644 = vpop.f32.mrf.mxu0
      %v1645 = vadd.f32 0.0, %v1644
      %v1646 = vpop.f32.mrf.mxu0
      %v1647 = vadd.f32 0.0, %v1646
      %1648 = vmatmul.bf16.gmra.mxu0 %v749
      %v1649 = vpop.f32.mrf.mxu0
      %v1650 = vadd.f32 0.0, %v1649
      %v1651 = vpop.f32.mrf.mxu0
      %v1652 = vadd.f32 0.0, %v1651
      %1653 = vmatmul.bf16.gmra.mxu0 %v752
      %v1654 = vpop.f32.mrf.mxu0
      %v1655 = vadd.f32 0.0, %v1654
      %v1656 = vpop.f32.mrf.mxu0
      %v1657 = vadd.f32 0.0, %v1656
      %1658 = vmatmul.bf16.gmra.mxu0 %v755
      %v1659 = vpop.f32.mrf.mxu0
      %v1660 = vadd.f32 0.0, %v1659
      %v1661 = vpop.f32.mrf.mxu0
      %v1662 = vadd.f32 0.0, %v1661
      %1663 = vmatmul.bf16.gmra.mxu0 %v758
      %v1664 = vpop.f32.mrf.mxu0
      %v1665 = vadd.f32 0.0, %v1664
      %v1666 = vpop.f32.mrf.mxu0
      %v1667 = vadd.f32 0.0, %v1666
      %1668 = vmatmul.bf16.gmra.mxu0 %v761
      %v1669 = vpop.f32.mrf.mxu0
      %v1670 = vadd.f32 0.0, %v1669
      %v1671 = vpop.f32.mrf.mxu0
      %v1672 = vadd.f32 0.0, %v1671
      %1673 = vmatmul.bf16.gmra.mxu0 %v764
      %v1674 = vpop.f32.mrf.mxu0
      %v1675 = vadd.f32 0.0, %v1674
      %v1676 = vpop.f32.mrf.mxu0
      %v1677 = vadd.f32 0.0, %v1676
      %1678 = vmatmul.bf16.gmra.mxu0 %v1590
      %v1679 = vpop.f32.mrf.mxu0
      %v1680 = vadd.f32 0.0, %v1679
      %v1681 = vpop.f32.mrf.mxu0
      %v1682 = vadd.f32 0.0, %v1681
      %1683 = vdwg.mxu0
      %v1684 = vadd.f32 %v1530, %v1605
      %v1685 = vadd.f32 %v1531, %v1607
      %v1686 = vadd.f32 %v1532, %v1610
      %v1687 = vadd.f32 %v1533, %v1612
      %v1688 = vadd.f32 %v1534, %v1615
      %v1689 = vadd.f32 %v1535, %v1617
      %v1690 = vadd.f32 %v1536, %v1620
      %v1691 = vadd.f32 %v1537, %v1622
      %v1692 = vadd.f32 %v1538, %v1625
      %v1693 = vadd.f32 %v1539, %v1627
      %v1694 = vadd.f32 %v1540, %v1630
      %v1695 = vadd.f32 %v1541, %v1632
      %v1696 = vadd.f32 %v1542, %v1635
      %v1697 = vadd.f32 %v1543, %v1637
      %v1698 = vadd.f32 %v1544, %v1640
      %v1699 = vadd.f32 %v1545, %v1642
      %v1700 = vadd.f32 %v1546, %v1645
      %v1701 = vadd.f32 %v1547, %v1647
      %v1702 = vadd.f32 %v1548, %v1650
      %v1703 = vadd.f32 %v1549, %v1652
      %v1704 = vadd.f32 %v1550, %v1655
      %v1705 = vadd.f32 %v1551, %v1657
      %v1706 = vadd.f32 %v1552, %v1660
      %v1707 = vadd.f32 %v1553, %v1662
      %v1708 = vadd.f32 %v1554, %v1665
      %v1709 = vadd.f32 %v1555, %v1667
      %v1710 = vadd.f32 %v1556, %v1670
      %v1711 = vadd.f32 %v1557, %v1672
      %v1712 = vadd.f32 %v1558, %v1675
      %v1713 = vadd.f32 %v1559, %v1677
      %v1714 = vadd.f32 %v1560, %v1680
      %v1715 = vadd.f32 %v1561, %v1682
      %v1717 = vrot.slane %v267, 5
      %v1718 = vrot.slane %v1717, 4
      %v1719 = vrot.slane %v268, 5
      %v1720 = vsel %vm1097, %v1718, %v1719
      %v1721 = vrot.slane %v1719, 4
      %v1722 = vrot.slane %v269, 5
      %v1723 = vsel %vm1097, %v1721, %v1722
      %v1724 = vunpack.c.l.b16 %v1720
      %v1725 = vunpack.c.l.b16 %v1723
      %v1726 = vpack.c.b16 %v1725, %v1724
      %v1728 = vsel %vm717, %v1726, 0
      %v1731 = vsel %vm766, %v278, 0
      %1733 = vmatpush.bf16.msra.mxu0 0
      %1734 = vmatpush.bf16.msra.mxu0 0
      %1735 = vmatpush.bf16.msra.mxu0 0
      %1736 = vmatpush.bf16.msra.mxu0 0
      %1737 = vmatpush.bf16.msra.mxu0 0
      %1738 = vmatpush.bf16.msra.mxu0 0
      %1739 = vmatpush.bf16.msra.mxu0 0
      %1740 = vmatpush.bf16.msra.mxu0 %v1731
      %1741 = vmatmul.bf16.gmra.mxu0 %v1262
      %v1742 = vpop.f32.mrf.mxu0
      %v1743 = vadd.f32 0.0, %v1742
      %v1744 = vpop.f32.mrf.mxu0
      %v1745 = vadd.f32 0.0, %v1744
      %1746 = vmatmul.bf16.gmra.mxu0 %v1265
      %v1747 = vpop.f32.mrf.mxu0
      %v1748 = vadd.f32 0.0, %v1747
      %v1749 = vpop.f32.mrf.mxu0
      %v1750 = vadd.f32 0.0, %v1749
      %1751 = vmatmul.bf16.gmra.mxu0 %v1268
      %v1752 = vpop.f32.mrf.mxu0
      %v1753 = vadd.f32 0.0, %v1752
      %v1754 = vpop.f32.mrf.mxu0
      %v1755 = vadd.f32 0.0, %v1754
      %1756 = vmatmul.bf16.gmra.mxu0 %v1271
      %v1757 = vpop.f32.mrf.mxu0
      %v1758 = vadd.f32 0.0, %v1757
      %v1759 = vpop.f32.mrf.mxu0
      %v1760 = vadd.f32 0.0, %v1759
      %1761 = vmatmul.bf16.gmra.mxu0 %v1274
      %v1762 = vpop.f32.mrf.mxu0
      %v1763 = vadd.f32 0.0, %v1762
      %v1764 = vpop.f32.mrf.mxu0
      %v1765 = vadd.f32 0.0, %v1764
      %1766 = vmatmul.bf16.gmra.mxu0 %v1277
      %v1767 = vpop.f32.mrf.mxu0
      %v1768 = vadd.f32 0.0, %v1767
      %v1769 = vpop.f32.mrf.mxu0
      %v1770 = vadd.f32 0.0, %v1769
      %1771 = vmatmul.bf16.gmra.mxu0 %v1280
      %v1772 = vpop.f32.mrf.mxu0
      %v1773 = vadd.f32 0.0, %v1772
      %v1774 = vpop.f32.mrf.mxu0
      %v1775 = vadd.f32 0.0, %v1774
      %1776 = vmatmul.bf16.gmra.mxu0 %v1283
      %v1777 = vpop.f32.mrf.mxu0
      %v1778 = vadd.f32 0.0, %v1777
      %v1779 = vpop.f32.mrf.mxu0
      %v1780 = vadd.f32 0.0, %v1779
      %1781 = vmatmul.bf16.gmra.mxu0 %v1286
      %v1782 = vpop.f32.mrf.mxu0
      %v1783 = vadd.f32 0.0, %v1782
      %v1784 = vpop.f32.mrf.mxu0
      %v1785 = vadd.f32 0.0, %v1784
      %1786 = vmatmul.bf16.gmra.mxu0 %v1289
      %v1787 = vpop.f32.mrf.mxu0
      %v1788 = vadd.f32 0.0, %v1787
      %v1789 = vpop.f32.mrf.mxu0
      %v1790 = vadd.f32 0.0, %v1789
      %1791 = vmatmul.bf16.gmra.mxu0 %v1292
      %v1792 = vpop.f32.mrf.mxu0
      %v1793 = vadd.f32 0.0, %v1792
      %v1794 = vpop.f32.mrf.mxu0
      %v1795 = vadd.f32 0.0, %v1794
      %1796 = vmatmul.bf16.gmra.mxu0 %v1295
      %v1797 = vpop.f32.mrf.mxu0
      %v1798 = vadd.f32 0.0, %v1797
      %v1799 = vpop.f32.mrf.mxu0
      %v1800 = vadd.f32 0.0, %v1799
      %1801 = vmatmul.bf16.gmra.mxu0 %v1298
      %v1802 = vpop.f32.mrf.mxu0
      %v1803 = vadd.f32 0.0, %v1802
      %v1804 = vpop.f32.mrf.mxu0
      %v1805 = vadd.f32 0.0, %v1804
      %1806 = vmatmul.bf16.gmra.mxu0 %v1301
      %v1807 = vpop.f32.mrf.mxu0
      %v1808 = vadd.f32 0.0, %v1807
      %v1809 = vpop.f32.mrf.mxu0
      %v1810 = vadd.f32 0.0, %v1809
      %1811 = vmatmul.bf16.gmra.mxu0 %v1304
      %v1812 = vpop.f32.mrf.mxu0
      %v1813 = vadd.f32 0.0, %v1812
      %v1814 = vpop.f32.mrf.mxu0
      %v1815 = vadd.f32 0.0, %v1814
      %1816 = vmatmul.bf16.gmra.mxu0 %v1728
      %v1817 = vpop.f32.mrf.mxu0
      %v1818 = vadd.f32 0.0, %v1817
      %v1819 = vpop.f32.mrf.mxu0
      %v1820 = vadd.f32 0.0, %v1819
      %1821 = vdwg.mxu0
      %v1822 = vadd.f32 %v1684, %v1743
      %v1823 = vadd.f32 %v1685, %v1745
      %v1824 = vadd.f32 %v1686, %v1748
      %v1825 = vadd.f32 %v1687, %v1750
      %v1826 = vadd.f32 %v1688, %v1753
      %v1827 = vadd.f32 %v1689, %v1755
      %v1828 = vadd.f32 %v1690, %v1758
      %v1829 = vadd.f32 %v1691, %v1760
      %v1830 = vadd.f32 %v1692, %v1763
      %v1831 = vadd.f32 %v1693, %v1765
      %v1832 = vadd.f32 %v1694, %v1768
      %v1833 = vadd.f32 %v1695, %v1770
      %v1834 = vadd.f32 %v1696, %v1773
      %v1835 = vadd.f32 %v1697, %v1775
      %v1836 = vadd.f32 %v1698, %v1778
      %v1837 = vadd.f32 %v1699, %v1780
      %v1838 = vadd.f32 %v1700, %v1783
      %v1839 = vadd.f32 %v1701, %v1785
      %v1840 = vadd.f32 %v1702, %v1788
      %v1841 = vadd.f32 %v1703, %v1790
      %v1842 = vadd.f32 %v1704, %v1793
      %v1843 = vadd.f32 %v1705, %v1795
      %v1844 = vadd.f32 %v1706, %v1798
      %v1845 = vadd.f32 %v1707, %v1800
      %v1846 = vadd.f32 %v1708, %v1803
      %v1847 = vadd.f32 %v1709, %v1805
      %v1848 = vadd.f32 %v1710, %v1808
      %v1849 = vadd.f32 %v1711, %v1810
      %v1850 = vadd.f32 %v1712, %v1813
      %v1851 = vadd.f32 %v1713, %v1815
      %v1852 = vadd.f32 %v1714, %v1818
      %v1853 = vadd.f32 %v1715, %v1820
      %v1856 = vunpack.c.l.b16 %v270
      %v1857 = vunpack.c.l.b16 %v271
      %v1858 = vpack.c.b16 %v1857, %v1856
      %v1860 = vsel %vm717, %v1858, 0
      %v1863 = vsel %vm766, %v279, 0
      %1865 = vmatpush.bf16.msra.mxu0 0
      %1866 = vmatpush.bf16.msra.mxu0 0
      %1867 = vmatpush.bf16.msra.mxu0 0
      %1868 = vmatpush.bf16.msra.mxu0 0
      %1869 = vmatpush.bf16.msra.mxu0 0
      %1870 = vmatpush.bf16.msra.mxu0 0
      %1871 = vmatpush.bf16.msra.mxu0 0
      %1872 = vmatpush.bf16.msra.mxu0 %v1863
      %1873 = vmatmul.bf16.gmra.mxu0 %v946
      %v1874 = vpop.f32.mrf.mxu0
      %v1875 = vadd.f32 0.0, %v1874
      %v1876 = vpop.f32.mrf.mxu0
      %v1877 = vadd.f32 0.0, %v1876
      %1878 = vmatmul.bf16.gmra.mxu0 %v949
      %v1879 = vpop.f32.mrf.mxu0
      %v1880 = vadd.f32 0.0, %v1879
      %v1881 = vpop.f32.mrf.mxu0
      %v1882 = vadd.f32 0.0, %v1881
      %1883 = vmatmul.bf16.gmra.mxu0 %v952
      %v1884 = vpop.f32.mrf.mxu0
      %v1885 = vadd.f32 0.0, %v1884
      %v1886 = vpop.f32.mrf.mxu0
      %v1887 = vadd.f32 0.0, %v1886
      %1888 = vmatmul.bf16.gmra.mxu0 %v955
      %v1889 = vpop.f32.mrf.mxu0
      %v1890 = vadd.f32 0.0, %v1889
      %v1891 = vpop.f32.mrf.mxu0
      %v1892 = vadd.f32 0.0, %v1891
      %1893 = vmatmul.bf16.gmra.mxu0 %v958
      %v1894 = vpop.f32.mrf.mxu0
      %v1895 = vadd.f32 0.0, %v1894
      %v1896 = vpop.f32.mrf.mxu0
      %v1897 = vadd.f32 0.0, %v1896
      %1898 = vmatmul.bf16.gmra.mxu0 %v961
      %v1899 = vpop.f32.mrf.mxu0
      %v1900 = vadd.f32 0.0, %v1899
      %v1901 = vpop.f32.mrf.mxu0
      %v1902 = vadd.f32 0.0, %v1901
      %1903 = vmatmul.bf16.gmra.mxu0 %v964
      %v1904 = vpop.f32.mrf.mxu0
      %v1905 = vadd.f32 0.0, %v1904
      %v1906 = vpop.f32.mrf.mxu0
      %v1907 = vadd.f32 0.0, %v1906
      %1908 = vmatmul.bf16.gmra.mxu0 %v967
      %v1909 = vpop.f32.mrf.mxu0
      %v1910 = vadd.f32 0.0, %v1909
      %v1911 = vpop.f32.mrf.mxu0
      %v1912 = vadd.f32 0.0, %v1911
      %1913 = vmatmul.bf16.gmra.mxu0 %v970
      %v1914 = vpop.f32.mrf.mxu0
      %v1915 = vadd.f32 0.0, %v1914
      %v1916 = vpop.f32.mrf.mxu0
      %v1917 = vadd.f32 0.0, %v1916
      %1918 = vmatmul.bf16.gmra.mxu0 %v973
      %v1919 = vpop.f32.mrf.mxu0
      %v1920 = vadd.f32 0.0, %v1919
      %v1921 = vpop.f32.mrf.mxu0
      %v1922 = vadd.f32 0.0, %v1921
      %1923 = vmatmul.bf16.gmra.mxu0 %v976
      %v1924 = vpop.f32.mrf.mxu0
      %v1925 = vadd.f32 0.0, %v1924
      %v1926 = vpop.f32.mrf.mxu0
      %v1927 = vadd.f32 0.0, %v1926
      %1928 = vmatmul.bf16.gmra.mxu0 %v979
      %v1929 = vpop.f32.mrf.mxu0
      %v1930 = vadd.f32 0.0, %v1929
      %v1931 = vpop.f32.mrf.mxu0
      %v1932 = vadd.f32 0.0, %v1931
      %1933 = vmatmul.bf16.gmra.mxu0 %v982
      %v1934 = vpop.f32.mrf.mxu0
      %v1935 = vadd.f32 0.0, %v1934
      %v1936 = vpop.f32.mrf.mxu0
      %v1937 = vadd.f32 0.0, %v1936
      %1938 = vmatmul.bf16.gmra.mxu0 %v985
      %v1939 = vpop.f32.mrf.mxu0
      %v1940 = vadd.f32 0.0, %v1939
      %v1941 = vpop.f32.mrf.mxu0
      %v1942 = vadd.f32 0.0, %v1941
      %1943 = vmatmul.bf16.gmra.mxu0 %v1436
      %v1944 = vpop.f32.mrf.mxu0
      %v1945 = vadd.f32 0.0, %v1944
      %v1946 = vpop.f32.mrf.mxu0
      %v1947 = vadd.f32 0.0, %v1946
      %1948 = vmatmul.bf16.gmra.mxu0 %v1860
      %v1949 = vpop.f32.mrf.mxu0
      %v1950 = vadd.f32 0.0, %v1949
      %v1951 = vpop.f32.mrf.mxu0
      %v1952 = vadd.f32 0.0, %v1951
      %1953 = vdwg.mxu0
      %v1954 = vadd.f32 %v1822, %v1875
      %v1955 = vadd.f32 %v1823, %v1877
      %v1956 = vadd.f32 %v1824, %v1880
      %v1957 = vadd.f32 %v1825, %v1882
      %v1958 = vadd.f32 %v1826, %v1885
      %v1959 = vadd.f32 %v1827, %v1887
      %v1960 = vadd.f32 %v1828, %v1890
      %v1961 = vadd.f32 %v1829, %v1892
      %v1962 = vadd.f32 %v1830, %v1895
      %v1963 = vadd.f32 %v1831, %v1897
      %v1964 = vadd.f32 %v1832, %v1900
      %v1965 = vadd.f32 %v1833, %v1902
      %v1966 = vadd.f32 %v1834, %v1905
      %v1967 = vadd.f32 %v1835, %v1907
      %v1968 = vadd.f32 %v1836, %v1910
      %v1969 = vadd.f32 %v1837, %v1912
      %v1970 = vadd.f32 %v1838, %v1915
      %v1971 = vadd.f32 %v1839, %v1917
      %v1972 = vadd.f32 %v1840, %v1920
      %v1973 = vadd.f32 %v1841, %v1922
      %v1974 = vadd.f32 %v1842, %v1925
      %v1975 = vadd.f32 %v1843, %v1927
      %v1976 = vadd.f32 %v1844, %v1930
      %v1977 = vadd.f32 %v1845, %v1932
      %v1978 = vadd.f32 %v1846, %v1935
      %v1979 = vadd.f32 %v1847, %v1937
      %v1980 = vadd.f32 %v1848, %v1940
      %v1981 = vadd.f32 %v1849, %v1942
      %v1982 = vadd.f32 %v1850, %v1945
      %v1983 = vadd.f32 %v1851, %v1947
      %v1984 = vadd.f32 %v1852, %v1950
      %v1985 = vadd.f32 %v1853, %v1952
      %v1987 = vshrl.u32 %v270, 16
      %v1989 = vrot.slane %v1987, 4
      %v1990 = vshll.u32 %v270, 16
      %v1992 = vrot.slane %v1990, 5
      %v1993 = vor.u32 %v1989, %v1992
      %v1994 = vrot.slane %v1993, 4
      %v1996 = vshll.u32 %v271, 16
      %v1998 = vrot.slane %v1996, 5
      %v1999 = vsel %vm284, %v1994, %v1998
      %v2000 = vshrl.u32 %v271, 16
      %v2002 = vrot.slane %v2000, 4
      %v2003 = vor.u32 %v2002, %v1998
      %v2004 = vrot.slane %v2003, 4
      %v2006 = vshll.u32 %v272, 16
      %v2008 = vrot.slane %v2006, 5
      %v2009 = vsel %vm284, %v2004, %v2008
      %v2010 = vunpack.c.l.b16 %v1999
      %v2011 = vunpack.c.l.b16 %v2009
      %v2012 = vpack.c.b16 %v2011, %v2010
      %v2014 = vsel %vm717, %v2012, 0
      %v2017 = vsel %vm766, %v280, 0
      %2019 = vmatpush.bf16.msra.mxu0 0
      %2020 = vmatpush.bf16.msra.mxu0 0
      %2021 = vmatpush.bf16.msra.mxu0 0
      %2022 = vmatpush.bf16.msra.mxu0 0
      %2023 = vmatpush.bf16.msra.mxu0 0
      %2024 = vmatpush.bf16.msra.mxu0 0
      %2025 = vmatpush.bf16.msra.mxu0 0
      %2026 = vmatpush.bf16.msra.mxu0 %v2017
      %2027 = vmatmul.bf16.gmra.mxu0 %v725
      %v2028 = vpop.f32.mrf.mxu0
      %v2029 = vadd.f32 0.0, %v2028
      %v2030 = vpop.f32.mrf.mxu0
      %v2031 = vadd.f32 0.0, %v2030
      %2032 = vmatmul.bf16.gmra.mxu0 %v728
      %v2033 = vpop.f32.mrf.mxu0
      %v2034 = vadd.f32 0.0, %v2033
      %v2035 = vpop.f32.mrf.mxu0
      %v2036 = vadd.f32 0.0, %v2035
      %2037 = vmatmul.bf16.gmra.mxu0 %v731
      %v2038 = vpop.f32.mrf.mxu0
      %v2039 = vadd.f32 0.0, %v2038
      %v2040 = vpop.f32.mrf.mxu0
      %v2041 = vadd.f32 0.0, %v2040
      %2042 = vmatmul.bf16.gmra.mxu0 %v734
      %v2043 = vpop.f32.mrf.mxu0
      %v2044 = vadd.f32 0.0, %v2043
      %v2045 = vpop.f32.mrf.mxu0
      %v2046 = vadd.f32 0.0, %v2045
      %2047 = vmatmul.bf16.gmra.mxu0 %v737
      %v2048 = vpop.f32.mrf.mxu0
      %v2049 = vadd.f32 0.0, %v2048
      %v2050 = vpop.f32.mrf.mxu0
      %v2051 = vadd.f32 0.0, %v2050
      %2052 = vmatmul.bf16.gmra.mxu0 %v740
      %v2053 = vpop.f32.mrf.mxu0
      %v2054 = vadd.f32 0.0, %v2053
      %v2055 = vpop.f32.mrf.mxu0
      %v2056 = vadd.f32 0.0, %v2055
      %2057 = vmatmul.bf16.gmra.mxu0 %v743
      %v2058 = vpop.f32.mrf.mxu0
      %v2059 = vadd.f32 0.0, %v2058
      %v2060 = vpop.f32.mrf.mxu0
      %v2061 = vadd.f32 0.0, %v2060
      %2062 = vmatmul.bf16.gmra.mxu0 %v746
      %v2063 = vpop.f32.mrf.mxu0
      %v2064 = vadd.f32 0.0, %v2063
      %v2065 = vpop.f32.mrf.mxu0
      %v2066 = vadd.f32 0.0, %v2065
      %2067 = vmatmul.bf16.gmra.mxu0 %v749
      %v2068 = vpop.f32.mrf.mxu0
      %v2069 = vadd.f32 0.0, %v2068
      %v2070 = vpop.f32.mrf.mxu0
      %v2071 = vadd.f32 0.0, %v2070
      %2072 = vmatmul.bf16.gmra.mxu0 %v752
      %v2073 = vpop.f32.mrf.mxu0
      %v2074 = vadd.f32 0.0, %v2073
      %v2075 = vpop.f32.mrf.mxu0
      %v2076 = vadd.f32 0.0, %v2075
      %2077 = vmatmul.bf16.gmra.mxu0 %v755
      %v2078 = vpop.f32.mrf.mxu0
      %v2079 = vadd.f32 0.0, %v2078
      %v2080 = vpop.f32.mrf.mxu0
      %v2081 = vadd.f32 0.0, %v2080
      %2082 = vmatmul.bf16.gmra.mxu0 %v758
      %v2083 = vpop.f32.mrf.mxu0
      %v2084 = vadd.f32 0.0, %v2083
      %v2085 = vpop.f32.mrf.mxu0
      %v2086 = vadd.f32 0.0, %v2085
      %2087 = vmatmul.bf16.gmra.mxu0 %v761
      %v2088 = vpop.f32.mrf.mxu0
      %v2089 = vadd.f32 0.0, %v2088
      %v2090 = vpop.f32.mrf.mxu0
      %v2091 = vadd.f32 0.0, %v2090
      %2092 = vmatmul.bf16.gmra.mxu0 %v764
      %v2093 = vpop.f32.mrf.mxu0
      %v2094 = vadd.f32 0.0, %v2093
      %v2095 = vpop.f32.mrf.mxu0
      %v2096 = vadd.f32 0.0, %v2095
      %2097 = vmatmul.bf16.gmra.mxu0 %v1590
      %v2098 = vpop.f32.mrf.mxu0
      %v2099 = vadd.f32 0.0, %v2098
      %v2100 = vpop.f32.mrf.mxu0
      %v2101 = vadd.f32 0.0, %v2100
      %2102 = vmatmul.bf16.gmra.mxu0 %v2014
      %v2103 = vpop.f32.mrf.mxu0
      %v2104 = vadd.f32 0.0, %v2103
      %v2105 = vpop.f32.mrf.mxu0
      %v2106 = vadd.f32 0.0, %v2105
      %2107 = vdwg.mxu0
      %v2108 = vadd.f32 %v1954, %v2029
      %v2109 = vadd.f32 %v1955, %v2031
      %v2110 = vadd.f32 %v1956, %v2034
      %v2111 = vadd.f32 %v1957, %v2036
      %v2112 = vadd.f32 %v1958, %v2039
      %v2113 = vadd.f32 %v1959, %v2041
      %v2114 = vadd.f32 %v1960, %v2044
      %v2115 = vadd.f32 %v1961, %v2046
      %v2116 = vadd.f32 %v1962, %v2049
      %v2117 = vadd.f32 %v1963, %v2051
      %v2118 = vadd.f32 %v1964, %v2054
      %v2119 = vadd.f32 %v1965, %v2056
      %v2120 = vadd.f32 %v1966, %v2059
      %v2121 = vadd.f32 %v1967, %v2061
      %v2122 = vadd.f32 %v1968, %v2064
      %v2123 = vadd.f32 %v1969, %v2066
      %v2124 = vadd.f32 %v1970, %v2069
      %v2125 = vadd.f32 %v1971, %v2071
      %v2126 = vadd.f32 %v1972, %v2074
      %v2127 = vadd.f32 %v1973, %v2076
      %v2128 = vadd.f32 %v1974, %v2079
      %v2129 = vadd.f32 %v1975, %v2081
      %v2130 = vadd.f32 %v1976, %v2084
      %v2131 = vadd.f32 %v1977, %v2086
      %v2132 = vadd.f32 %v1978, %v2089
      %v2133 = vadd.f32 %v1979, %v2091
      %v2134 = vadd.f32 %v1980, %v2094
      %v2135 = vadd.f32 %v1981, %v2096
      %v2136 = vadd.f32 %v1982, %v2099
      %v2137 = vadd.f32 %v1983, %v2101
      %v2138 = vadd.f32 %v1984, %v2104
      %v2139 = vadd.f32 %v1985, %v2106
      %v2141 = vrot.slane %v270, 5
      %v2142 = vrot.slane %v2141, 4
      %v2143 = vrot.slane %v271, 5
      %v2144 = vsel %vm1097, %v2142, %v2143
      %v2145 = vrot.slane %v2143, 4
      %v2146 = vrot.slane %v272, 5
      %v2147 = vsel %vm1097, %v2145, %v2146
      %v2148 = vunpack.c.l.b16 %v2144
      %v2149 = vunpack.c.l.b16 %v2147
      %v2150 = vpack.c.b16 %v2149, %v2148
      %v2152 = vsel %vm717, %v2150, 0
      %v2155 = vsel %vm766, %v281, 0
      %2157 = vmatpush.bf16.msra.mxu0 0
      %2158 = vmatpush.bf16.msra.mxu0 0
      %2159 = vmatpush.bf16.msra.mxu0 0
      %2160 = vmatpush.bf16.msra.mxu0 0
      %2161 = vmatpush.bf16.msra.mxu0 0
      %2162 = vmatpush.bf16.msra.mxu0 0
      %2163 = vmatpush.bf16.msra.mxu0 0
      %2164 = vmatpush.bf16.msra.mxu0 %v2155
      %2165 = vmatmul.bf16.gmra.mxu0 %v1265
      %v2166 = vpop.f32.mrf.mxu0
      %v2167 = vadd.f32 0.0, %v2166
      %v2168 = vpop.f32.mrf.mxu0
      %v2169 = vadd.f32 0.0, %v2168
      %2170 = vmatmul.bf16.gmra.mxu0 %v1268
      %v2171 = vpop.f32.mrf.mxu0
      %v2172 = vadd.f32 0.0, %v2171
      %v2173 = vpop.f32.mrf.mxu0
      %v2174 = vadd.f32 0.0, %v2173
      %2175 = vmatmul.bf16.gmra.mxu0 %v1271
      %v2176 = vpop.f32.mrf.mxu0
      %v2177 = vadd.f32 0.0, %v2176
      %v2178 = vpop.f32.mrf.mxu0
      %v2179 = vadd.f32 0.0, %v2178
      %2180 = vmatmul.bf16.gmra.mxu0 %v1274
      %v2181 = vpop.f32.mrf.mxu0
      %v2182 = vadd.f32 0.0, %v2181
      %v2183 = vpop.f32.mrf.mxu0
      %v2184 = vadd.f32 0.0, %v2183
      %2185 = vmatmul.bf16.gmra.mxu0 %v1277
      %v2186 = vpop.f32.mrf.mxu0
      %v2187 = vadd.f32 0.0, %v2186
      %v2188 = vpop.f32.mrf.mxu0
      %v2189 = vadd.f32 0.0, %v2188
      %2190 = vmatmul.bf16.gmra.mxu0 %v1280
      %v2191 = vpop.f32.mrf.mxu0
      %v2192 = vadd.f32 0.0, %v2191
      %v2193 = vpop.f32.mrf.mxu0
      %v2194 = vadd.f32 0.0, %v2193
      %2195 = vmatmul.bf16.gmra.mxu0 %v1283
      %v2196 = vpop.f32.mrf.mxu0
      %v2197 = vadd.f32 0.0, %v2196
      %v2198 = vpop.f32.mrf.mxu0
      %v2199 = vadd.f32 0.0, %v2198
      %2200 = vmatmul.bf16.gmra.mxu0 %v1286
      %v2201 = vpop.f32.mrf.mxu0
      %v2202 = vadd.f32 0.0, %v2201
      %v2203 = vpop.f32.mrf.mxu0
      %v2204 = vadd.f32 0.0, %v2203
      %2205 = vmatmul.bf16.gmra.mxu0 %v1289
      %v2206 = vpop.f32.mrf.mxu0
      %v2207 = vadd.f32 0.0, %v2206
      %v2208 = vpop.f32.mrf.mxu0
      %v2209 = vadd.f32 0.0, %v2208
      %2210 = vmatmul.bf16.gmra.mxu0 %v1292
      %v2211 = vpop.f32.mrf.mxu0
      %v2212 = vadd.f32 0.0, %v2211
      %v2213 = vpop.f32.mrf.mxu0
      %v2214 = vadd.f32 0.0, %v2213
      %2215 = vmatmul.bf16.gmra.mxu0 %v1295
      %v2216 = vpop.f32.mrf.mxu0
      %v2217 = vadd.f32 0.0, %v2216
      %v2218 = vpop.f32.mrf.mxu0
      %v2219 = vadd.f32 0.0, %v2218
      %2220 = vmatmul.bf16.gmra.mxu0 %v1298
      %v2221 = vpop.f32.mrf.mxu0
      %v2222 = vadd.f32 0.0, %v2221
      %v2223 = vpop.f32.mrf.mxu0
      %v2224 = vadd.f32 0.0, %v2223
      %2225 = vmatmul.bf16.gmra.mxu0 %v1301
      %v2226 = vpop.f32.mrf.mxu0
      %v2227 = vadd.f32 0.0, %v2226
      %v2228 = vpop.f32.mrf.mxu0
      %v2229 = vadd.f32 0.0, %v2228
      %2230 = vmatmul.bf16.gmra.mxu0 %v1304
      %v2231 = vpop.f32.mrf.mxu0
      %v2232 = vadd.f32 0.0, %v2231
      %v2233 = vpop.f32.mrf.mxu0
      %v2234 = vadd.f32 0.0, %v2233
      %2235 = vmatmul.bf16.gmra.mxu0 %v1728
      %v2236 = vpop.f32.mrf.mxu0
      %v2237 = vadd.f32 0.0, %v2236
      %v2238 = vpop.f32.mrf.mxu0
      %v2239 = vadd.f32 0.0, %v2238
      %2240 = vmatmul.bf16.gmra.mxu0 %v2152
      %v2241 = vpop.f32.mrf.mxu0
      %v2242 = vadd.f32 0.0, %v2241
      %v2243 = vpop.f32.mrf.mxu0
      %v2244 = vadd.f32 0.0, %v2243
      %2245 = vdwg.mxu0
      %v2246 = vadd.f32 %v2108, %v2167
      %v2247 = vadd.f32 %v2109, %v2169
      %v2248 = vadd.f32 %v2110, %v2172
      %v2249 = vadd.f32 %v2111, %v2174
      %v2250 = vadd.f32 %v2112, %v2177
      %v2251 = vadd.f32 %v2113, %v2179
      %v2252 = vadd.f32 %v2114, %v2182
      %v2253 = vadd.f32 %v2115, %v2184
      %v2254 = vadd.f32 %v2116, %v2187
      %v2255 = vadd.f32 %v2117, %v2189
      %v2256 = vadd.f32 %v2118, %v2192
      %v2257 = vadd.f32 %v2119, %v2194
      %v2258 = vadd.f32 %v2120, %v2197
      %v2259 = vadd.f32 %v2121, %v2199
      %v2260 = vadd.f32 %v2122, %v2202
      %v2261 = vadd.f32 %v2123, %v2204
      %v2262 = vadd.f32 %v2124, %v2207
      %v2263 = vadd.f32 %v2125, %v2209
      %v2264 = vadd.f32 %v2126, %v2212
      %v2265 = vadd.f32 %v2127, %v2214
      %v2266 = vadd.f32 %v2128, %v2217
      %v2267 = vadd.f32 %v2129, %v2219
      %v2268 = vadd.f32 %v2130, %v2222
      %v2269 = vadd.f32 %v2131, %v2224
      %v2270 = vadd.f32 %v2132, %v2227
      %v2271 = vadd.f32 %v2133, %v2229
      %v2272 = vadd.f32 %v2134, %v2232
      %v2273 = vadd.f32 %v2135, %v2234
      %v2274 = vadd.f32 %v2136, %v2237
      %v2275 = vadd.f32 %v2137, %v2239
      %v2276 = vadd.f32 %v2138, %v2242
      %v2277 = vadd.f32 %v2139, %v2244
      %v2278 = vld [vmem:[%s2] sm:$0x1]
      %v2280 = vperm.slane %v2278, 0
      %v2282 = vadd.f32 %v2246, %v2280
      %v2283 = vadd.f32 %v2247, %v2280
      %v2284 = vadd.f32 %v2248, %v2280
      %v2285 = vadd.f32 %v2249, %v2280
      %v2286 = vadd.f32 %v2250, %v2280
      %v2287 = vadd.f32 %v2251, %v2280
      %v2288 = vadd.f32 %v2252, %v2280
      %v2289 = vadd.f32 %v2253, %v2280
      %v2290 = vadd.f32 %v2254, %v2280
      %v2291 = vadd.f32 %v2255, %v2280
      %v2292 = vadd.f32 %v2256, %v2280
      %v2293 = vadd.f32 %v2257, %v2280
      %v2294 = vadd.f32 %v2258, %v2280
      %v2295 = vadd.f32 %v2259, %v2280
      %v2296 = vadd.f32 %v2260, %v2280
      %v2297 = vadd.f32 %v2261, %v2280
      %v2298 = vadd.f32 %v2262, %v2280
      %v2299 = vadd.f32 %v2263, %v2280
      %v2300 = vadd.f32 %v2264, %v2280
      %v2301 = vadd.f32 %v2265, %v2280
      %v2302 = vadd.f32 %v2266, %v2280
      %v2303 = vadd.f32 %v2267, %v2280
      %v2304 = vadd.f32 %v2268, %v2280
      %v2305 = vadd.f32 %v2269, %v2280
      %v2306 = vadd.f32 %v2270, %v2280
      %v2307 = vadd.f32 %v2271, %v2280
      %v2308 = vadd.f32 %v2272, %v2280
      %v2309 = vadd.f32 %v2273, %v2280
      %v2310 = vadd.f32 %v2274, %v2280
      %v2311 = vadd.f32 %v2275, %v2280
      %v2312 = vadd.f32 %v2276, %v2280
      %v2313 = vadd.f32 %v2277, %v2280
      %v2314 = vxor.u32 %v2282, 2147483648
      %v2315 = vxor.u32 %v2283, 2147483648
      %v2316 = vxor.u32 %v2284, 2147483648
      %v2317 = vxor.u32 %v2285, 2147483648
      %v2318 = vxor.u32 %v2286, 2147483648
      %v2319 = vxor.u32 %v2287, 2147483648
      %v2320 = vxor.u32 %v2288, 2147483648
      %v2321 = vxor.u32 %v2289, 2147483648
      %v2322 = vxor.u32 %v2290, 2147483648
      %v2323 = vxor.u32 %v2291, 2147483648
      %v2324 = vxor.u32 %v2292, 2147483648
      %v2325 = vxor.u32 %v2293, 2147483648
      %v2326 = vxor.u32 %v2294, 2147483648
      %v2327 = vxor.u32 %v2295, 2147483648
      %v2328 = vxor.u32 %v2296, 2147483648
      %v2329 = vxor.u32 %v2297, 2147483648
      %v2330 = vxor.u32 %v2298, 2147483648
      %v2331 = vxor.u32 %v2299, 2147483648
      %v2332 = vxor.u32 %v2300, 2147483648
      %v2333 = vxor.u32 %v2301, 2147483648
      %v2334 = vxor.u32 %v2302, 2147483648
      %v2335 = vxor.u32 %v2303, 2147483648
      %v2336 = vxor.u32 %v2304, 2147483648
      %v2337 = vxor.u32 %v2305, 2147483648
      %v2338 = vxor.u32 %v2306, 2147483648
      %v2339 = vxor.u32 %v2307, 2147483648
      %v2340 = vxor.u32 %v2308, 2147483648
      %v2341 = vxor.u32 %v2309, 2147483648
      %v2342 = vxor.u32 %v2310, 2147483648
      %v2343 = vxor.u32 %v2311, 2147483648
      %v2344 = vxor.u32 %v2312, 2147483648
      %v2345 = vxor.u32 %v2313, 2147483648
      %v2346 = vmul.f32 %v2314, 1.442695
      %v2347 = vpow.pop %v2346
      %v2348 = vmul.f32 %v2315, 1.442695
      %v2349 = vpow.pop %v2348
      %v2350 = vmul.f32 %v2316, 1.442695
      %v2351 = vpow.pop %v2350
      %v2352 = vmul.f32 %v2317, 1.442695
      %v2353 = vpow.pop %v2352
      %v2354 = vmul.f32 %v2318, 1.442695
      %v2355 = vpow.pop %v2354
      %v2356 = vmul.f32 %v2319, 1.442695
      %v2357 = vpow.pop %v2356
      %v2358 = vmul.f32 %v2320, 1.442695
      %v2359 = vpow.pop %v2358
      %v2360 = vmul.f32 %v2321, 1.442695
      %v2361 = vpow.pop %v2360
      %v2362 = vmul.f32 %v2322, 1.442695
      %v2363 = vpow.pop %v2362
      %v2364 = vmul.f32 %v2323, 1.442695
      %v2365 = vpow.pop %v2364
      %v2366 = vmul.f32 %v2324, 1.442695
      %v2367 = vpow.pop %v2366
      %v2368 = vmul.f32 %v2325, 1.442695
      %v2369 = vpow.pop %v2368
      %v2370 = vmul.f32 %v2326, 1.442695
      %v2371 = vpow.pop %v2370
      %v2372 = vmul.f32 %v2327, 1.442695
      %v2373 = vpow.pop %v2372
      %v2374 = vmul.f32 %v2328, 1.442695
      %v2375 = vpow.pop %v2374
      %v2376 = vmul.f32 %v2329, 1.442695
      %v2377 = vpow.pop %v2376
      %v2378 = vmul.f32 %v2330, 1.442695
      %v2379 = vpow.pop %v2378
      %v2380 = vmul.f32 %v2331, 1.442695
      %v2381 = vpow.pop %v2380
      %v2382 = vmul.f32 %v2332, 1.442695
      %v2383 = vpow.pop %v2382
      %v2384 = vmul.f32 %v2333, 1.442695
      %v2385 = vpow.pop %v2384
      %v2386 = vmul.f32 %v2334, 1.442695
      %v2387 = vpow.pop %v2386
      %v2388 = vmul.f32 %v2335, 1.442695
      %v2389 = vpow.pop %v2388
      %v2390 = vmul.f32 %v2336, 1.442695
      %v2391 = vpow.pop %v2390
      %v2392 = vmul.f32 %v2337, 1.442695
      %v2393 = vpow.pop %v2392
      %v2394 = vmul.f32 %v2338, 1.442695
      %v2395 = vpow.pop %v2394
      %v2396 = vmul.f32 %v2339, 1.442695
      %v2397 = vpow.pop %v2396
      %v2398 = vmul.f32 %v2340, 1.442695
      %v2399 = vpow.pop %v2398
      %v2400 = vmul.f32 %v2341, 1.442695
      %v2401 = vpow.pop %v2400
      %v2402 = vmul.f32 %v2342, 1.442695
      %v2403 = vpow.pop %v2402
      %v2404 = vmul.f32 %v2343, 1.442695
      %v2405 = vpow.pop %v2404
      %v2406 = vmul.f32 %v2344, 1.442695
      %v2407 = vpow.pop %v2406
      %v2408 = vmul.f32 %v2345, 1.442695
      %v2409 = vpow.pop %v2408
      %v2410 = vadd.f32 %v2347, 1.0
      %v2411 = vadd.f32 %v2349, 1.0
      %v2412 = vadd.f32 %v2351, 1.0
      %v2413 = vadd.f32 %v2353, 1.0
      %v2414 = vadd.f32 %v2355, 1.0
      %v2415 = vadd.f32 %v2357, 1.0
      %v2416 = vadd.f32 %v2359, 1.0
      %v2417 = vadd.f32 %v2361, 1.0
      %v2418 = vadd.f32 %v2363, 1.0
      %v2419 = vadd.f32 %v2365, 1.0
      %v2420 = vadd.f32 %v2367, 1.0
      %v2421 = vadd.f32 %v2369, 1.0
      %v2422 = vadd.f32 %v2371, 1.0
      %v2423 = vadd.f32 %v2373, 1.0
      %v2424 = vadd.f32 %v2375, 1.0
      %v2425 = vadd.f32 %v2377, 1.0
      %v2426 = vadd.f32 %v2379, 1.0
      %v2427 = vadd.f32 %v2381, 1.0
      %v2428 = vadd.f32 %v2383, 1.0
      %v2429 = vadd.f32 %v2385, 1.0
      %v2430 = vadd.f32 %v2387, 1.0
      %v2431 = vadd.f32 %v2389, 1.0
      %v2432 = vadd.f32 %v2391, 1.0
      %v2433 = vadd.f32 %v2393, 1.0
      %v2434 = vadd.f32 %v2395, 1.0
      %v2435 = vadd.f32 %v2397, 1.0
      %v2436 = vadd.f32 %v2399, 1.0
      %v2437 = vadd.f32 %v2401, 1.0
      %v2438 = vadd.f32 %v2403, 1.0
      %v2439 = vadd.f32 %v2405, 1.0
      %v2440 = vadd.f32 %v2407, 1.0
      %v2441 = vadd.f32 %v2409, 1.0
      %v2442 = vrcp.pop %v2410
      %v2443 = vmul.f32 %v2410, %v2442
      %v2444 = vsub.f32 1.0, %v2443
      %v2445 = vmul.f32 %v2442, %v2444
      %v2446 = vadd.f32 %v2442, %v2445
      %vm2447 = vweird.f32 %v2410
      %vm2448 = vweird.f32 %v2442
      %vm2449 = vmor %vm2447, %vm2448
      %v2450 = vsel %vm2449, %v2442, %v2446
      %v2451 = vand.u32 2147483647, %v2410
      %vm2452 = vcmp.eq.f32.partialorder %v2451, 8.507059e+37
      %v2453 = vand.u32 %v2410, 2147483648
      %v2454 = vor.u32 1.1754944e-38, %v2453
      %v2455 = vsel %vm2452, %v2454, %v2450
      %v2456 = vmul.f32 1.0, %v2455
      %v2457 = vrcp.pop %v2411
      %v2458 = vmul.f32 %v2411, %v2457
      %v2459 = vsub.f32 1.0, %v2458
      %v2460 = vmul.f32 %v2457, %v2459
      %v2461 = vadd.f32 %v2457, %v2460
      %vm2462 = vweird.f32 %v2411
      %vm2463 = vweird.f32 %v2457
      %vm2464 = vmor %vm2462, %vm2463
      %v2465 = vsel %vm2464, %v2457, %v2461
      %v2466 = vand.u32 2147483647, %v2411
      %vm2467 = vcmp.eq.f32.partialorder %v2466, 8.507059e+37
      %v2468 = vand.u32 %v2411, 2147483648
      %v2469 = vor.u32 1.1754944e-38, %v2468
      %v2470 = vsel %vm2467, %v2469, %v2465
      %v2471 = vmul.f32 1.0, %v2470
      %v2472 = vrcp.pop %v2412
      %v2473 = vmul.f32 %v2412, %v2472
      %v2474 = vsub.f32 1.0, %v2473
      %v2475 = vmul.f32 %v2472, %v2474
      %v2476 = vadd.f32 %v2472, %v2475
      %vm2477 = vweird.f32 %v2412
      %vm2478 = vweird.f32 %v2472
      %vm2479 = vmor %vm2477, %vm2478
      %v2480 = vsel %vm2479, %v2472, %v2476
      %v2481 = vand.u32 2147483647, %v2412
      %vm2482 = vcmp.eq.f32.partialorder %v2481, 8.507059e+37
      %v2483 = vand.u32 %v2412, 2147483648
      %v2484 = vor.u32 1.1754944e-38, %v2483
      %v2485 = vsel %vm2482, %v2484, %v2480
      %v2486 = vmul.f32 1.0, %v2485
      %v2487 = vrcp.pop %v2413
      %v2488 = vmul.f32 %v2413, %v2487
      %v2489 = vsub.f32 1.0, %v2488
      %v2490 = vmul.f32 %v2487, %v2489
      %v2491 = vadd.f32 %v2487, %v2490
      %vm2492 = vweird.f32 %v2413
      %vm2493 = vweird.f32 %v2487
      %vm2494 = vmor %vm2492, %vm2493
      %v2495 = vsel %vm2494, %v2487, %v2491
      %v2496 = vand.u32 2147483647, %v2413
      %vm2497 = vcmp.eq.f32.partialorder %v2496, 8.507059e+37
      %v2498 = vand.u32 %v2413, 2147483648
      %v2499 = vor.u32 1.1754944e-38, %v2498
      %v2500 = vsel %vm2497, %v2499, %v2495
      %v2501 = vmul.f32 1.0, %v2500
      %v2502 = vrcp.pop %v2414
      %v2503 = vmul.f32 %v2414, %v2502
      %v2504 = vsub.f32 1.0, %v2503
      %v2505 = vmul.f32 %v2502, %v2504
      %v2506 = vadd.f32 %v2502, %v2505
      %vm2507 = vweird.f32 %v2414
      %vm2508 = vweird.f32 %v2502
      %vm2509 = vmor %vm2507, %vm2508
      %v2510 = vsel %vm2509, %v2502, %v2506
      %v2511 = vand.u32 2147483647, %v2414
      %vm2512 = vcmp.eq.f32.partialorder %v2511, 8.507059e+37
      %v2513 = vand.u32 %v2414, 2147483648
      %v2514 = vor.u32 1.1754944e-38, %v2513
      %v2515 = vsel %vm2512, %v2514, %v2510
      %v2516 = vmul.f32 1.0, %v2515
      %v2517 = vrcp.pop %v2415
      %v2518 = vmul.f32 %v2415, %v2517
      %v2519 = vsub.f32 1.0, %v2518
      %v2520 = vmul.f32 %v2517, %v2519
      %v2521 = vadd.f32 %v2517, %v2520
      %vm2522 = vweird.f32 %v2415
      %vm2523 = vweird.f32 %v2517
      %vm2524 = vmor %vm2522, %vm2523
      %v2525 = vsel %vm2524, %v2517, %v2521
      %v2526 = vand.u32 2147483647, %v2415
      %vm2527 = vcmp.eq.f32.partialorder %v2526, 8.507059e+37
      %v2528 = vand.u32 %v2415, 2147483648
      %v2529 = vor.u32 1.1754944e-38, %v2528
      %v2530 = vsel %vm2527, %v2529, %v2525
      %v2531 = vmul.f32 1.0, %v2530
      %v2532 = vrcp.pop %v2416
      %v2533 = vmul.f32 %v2416, %v2532
      %v2534 = vsub.f32 1.0, %v2533
      %v2535 = vmul.f32 %v2532, %v2534
      %v2536 = vadd.f32 %v2532, %v2535
      %vm2537 = vweird.f32 %v2416
      %vm2538 = vweird.f32 %v2532
      %vm2539 = vmor %vm2537, %vm2538
      %v2540 = vsel %vm2539, %v2532, %v2536
      %v2541 = vand.u32 2147483647, %v2416
      %vm2542 = vcmp.eq.f32.partialorder %v2541, 8.507059e+37
      %v2543 = vand.u32 %v2416, 2147483648
      %v2544 = vor.u32 1.1754944e-38, %v2543
      %v2545 = vsel %vm2542, %v2544, %v2540
      %v2546 = vmul.f32 1.0, %v2545
      %v2547 = vrcp.pop %v2417
      %v2548 = vmul.f32 %v2417, %v2547
      %v2549 = vsub.f32 1.0, %v2548
      %v2550 = vmul.f32 %v2547, %v2549
      %v2551 = vadd.f32 %v2547, %v2550
      %vm2552 = vweird.f32 %v2417
      %vm2553 = vweird.f32 %v2547
      %vm2554 = vmor %vm2552, %vm2553
      %v2555 = vsel %vm2554, %v2547, %v2551
      %v2556 = vand.u32 2147483647, %v2417
      %vm2557 = vcmp.eq.f32.partialorder %v2556, 8.507059e+37
      %v2558 = vand.u32 %v2417, 2147483648
      %v2559 = vor.u32 1.1754944e-38, %v2558
      %v2560 = vsel %vm2557, %v2559, %v2555
      %v2561 = vmul.f32 1.0, %v2560
      %v2562 = vrcp.pop %v2418
      %v2563 = vmul.f32 %v2418, %v2562
      %v2564 = vsub.f32 1.0, %v2563
      %v2565 = vmul.f32 %v2562, %v2564
      %v2566 = vadd.f32 %v2562, %v2565
      %vm2567 = vweird.f32 %v2418
      %vm2568 = vweird.f32 %v2562
      %vm2569 = vmor %vm2567, %vm2568
      %v2570 = vsel %vm2569, %v2562, %v2566
      %v2571 = vand.u32 2147483647, %v2418
      %vm2572 = vcmp.eq.f32.partialorder %v2571, 8.507059e+37
      %v2573 = vand.u32 %v2418, 2147483648
      %v2574 = vor.u32 1.1754944e-38, %v2573
      %v2575 = vsel %vm2572, %v2574, %v2570
      %v2576 = vmul.f32 1.0, %v2575
      %v2577 = vrcp.pop %v2419
      %v2578 = vmul.f32 %v2419, %v2577
      %v2579 = vsub.f32 1.0, %v2578
      %v2580 = vmul.f32 %v2577, %v2579
      %v2581 = vadd.f32 %v2577, %v2580
      %vm2582 = vweird.f32 %v2419
      %vm2583 = vweird.f32 %v2577
      %vm2584 = vmor %vm2582, %vm2583
      %v2585 = vsel %vm2584, %v2577, %v2581
      %v2586 = vand.u32 2147483647, %v2419
      %vm2587 = vcmp.eq.f32.partialorder %v2586, 8.507059e+37
      %v2588 = vand.u32 %v2419, 2147483648
      %v2589 = vor.u32 1.1754944e-38, %v2588
      %v2590 = vsel %vm2587, %v2589, %v2585
      %v2591 = vmul.f32 1.0, %v2590
      %v2592 = vrcp.pop %v2420
      %v2593 = vmul.f32 %v2420, %v2592
      %v2594 = vsub.f32 1.0, %v2593
      %v2595 = vmul.f32 %v2592, %v2594
      %v2596 = vadd.f32 %v2592, %v2595
      %vm2597 = vweird.f32 %v2420
      %vm2598 = vweird.f32 %v2592
      %vm2599 = vmor %vm2597, %vm2598
      %v2600 = vsel %vm2599, %v2592, %v2596
      %v2601 = vand.u32 2147483647, %v2420
      %vm2602 = vcmp.eq.f32.partialorder %v2601, 8.507059e+37
      %v2603 = vand.u32 %v2420, 2147483648
      %v2604 = vor.u32 1.1754944e-38, %v2603
      %v2605 = vsel %vm2602, %v2604, %v2600
      %v2606 = vmul.f32 1.0, %v2605
      %v2607 = vrcp.pop %v2421
      %v2608 = vmul.f32 %v2421, %v2607
      %v2609 = vsub.f32 1.0, %v2608
      %v2610 = vmul.f32 %v2607, %v2609
      %v2611 = vadd.f32 %v2607, %v2610
      %vm2612 = vweird.f32 %v2421
      %vm2613 = vweird.f32 %v2607
      %vm2614 = vmor %vm2612, %vm2613
      %v2615 = vsel %vm2614, %v2607, %v2611
      %v2616 = vand.u32 2147483647, %v2421
      %vm2617 = vcmp.eq.f32.partialorder %v2616, 8.507059e+37
      %v2618 = vand.u32 %v2421, 2147483648
      %v2619 = vor.u32 1.1754944e-38, %v2618
      %v2620 = vsel %vm2617, %v2619, %v2615
      %v2621 = vmul.f32 1.0, %v2620
      %v2622 = vrcp.pop %v2422
      %v2623 = vmul.f32 %v2422, %v2622
      %v2624 = vsub.f32 1.0, %v2623
      %v2625 = vmul.f32 %v2622, %v2624
      %v2626 = vadd.f32 %v2622, %v2625
      %vm2627 = vweird.f32 %v2422
      %vm2628 = vweird.f32 %v2622
      %vm2629 = vmor %vm2627, %vm2628
      %v2630 = vsel %vm2629, %v2622, %v2626
      %v2631 = vand.u32 2147483647, %v2422
      %vm2632 = vcmp.eq.f32.partialorder %v2631, 8.507059e+37
      %v2633 = vand.u32 %v2422, 2147483648
      %v2634 = vor.u32 1.1754944e-38, %v2633
      %v2635 = vsel %vm2632, %v2634, %v2630
      %v2636 = vmul.f32 1.0, %v2635
      %v2637 = vrcp.pop %v2423
      %v2638 = vmul.f32 %v2423, %v2637
      %v2639 = vsub.f32 1.0, %v2638
      %v2640 = vmul.f32 %v2637, %v2639
      %v2641 = vadd.f32 %v2637, %v2640
      %vm2642 = vweird.f32 %v2423
      %vm2643 = vweird.f32 %v2637
      %vm2644 = vmor %vm2642, %vm2643
      %v2645 = vsel %vm2644, %v2637, %v2641
      %v2646 = vand.u32 2147483647, %v2423
      %vm2647 = vcmp.eq.f32.partialorder %v2646, 8.507059e+37
      %v2648 = vand.u32 %v2423, 2147483648
      %v2649 = vor.u32 1.1754944e-38, %v2648
      %v2650 = vsel %vm2647, %v2649, %v2645
      %v2651 = vmul.f32 1.0, %v2650
      %v2652 = vrcp.pop %v2424
      %v2653 = vmul.f32 %v2424, %v2652
      %v2654 = vsub.f32 1.0, %v2653
      %v2655 = vmul.f32 %v2652, %v2654
      %v2656 = vadd.f32 %v2652, %v2655
      %vm2657 = vweird.f32 %v2424
      %vm2658 = vweird.f32 %v2652
      %vm2659 = vmor %vm2657, %vm2658
      %v2660 = vsel %vm2659, %v2652, %v2656
      %v2661 = vand.u32 2147483647, %v2424
      %vm2662 = vcmp.eq.f32.partialorder %v2661, 8.507059e+37
      %v2663 = vand.u32 %v2424, 2147483648
      %v2664 = vor.u32 1.1754944e-38, %v2663
      %v2665 = vsel %vm2662, %v2664, %v2660
      %v2666 = vmul.f32 1.0, %v2665
      %v2667 = vrcp.pop %v2425
      %v2668 = vmul.f32 %v2425, %v2667
      %v2669 = vsub.f32 1.0, %v2668
      %v2670 = vmul.f32 %v2667, %v2669
      %v2671 = vadd.f32 %v2667, %v2670
      %vm2672 = vweird.f32 %v2425
      %vm2673 = vweird.f32 %v2667
      %vm2674 = vmor %vm2672, %vm2673
      %v2675 = vsel %vm2674, %v2667, %v2671
      %v2676 = vand.u32 2147483647, %v2425
      %vm2677 = vcmp.eq.f32.partialorder %v2676, 8.507059e+37
      %v2678 = vand.u32 %v2425, 2147483648
      %v2679 = vor.u32 1.1754944e-38, %v2678
      %v2680 = vsel %vm2677, %v2679, %v2675
      %v2681 = vmul.f32 1.0, %v2680
      %v2682 = vrcp.pop %v2426
      %v2683 = vmul.f32 %v2426, %v2682
      %v2684 = vsub.f32 1.0, %v2683
      %v2685 = vmul.f32 %v2682, %v2684
      %v2686 = vadd.f32 %v2682, %v2685
      %vm2687 = vweird.f32 %v2426
      %vm2688 = vweird.f32 %v2682
      %vm2689 = vmor %vm2687, %vm2688
      %v2690 = vsel %vm2689, %v2682, %v2686
      %v2691 = vand.u32 2147483647, %v2426
      %vm2692 = vcmp.eq.f32.partialorder %v2691, 8.507059e+37
      %v2693 = vand.u32 %v2426, 2147483648
      %v2694 = vor.u32 1.1754944e-38, %v2693
      %v2695 = vsel %vm2692, %v2694, %v2690
      %v2696 = vmul.f32 1.0, %v2695
      %v2697 = vrcp.pop %v2427
      %v2698 = vmul.f32 %v2427, %v2697
      %v2699 = vsub.f32 1.0, %v2698
      %v2700 = vmul.f32 %v2697, %v2699
      %v2701 = vadd.f32 %v2697, %v2700
      %vm2702 = vweird.f32 %v2427
      %vm2703 = vweird.f32 %v2697
      %vm2704 = vmor %vm2702, %vm2703
      %v2705 = vsel %vm2704, %v2697, %v2701
      %v2706 = vand.u32 2147483647, %v2427
      %vm2707 = vcmp.eq.f32.partialorder %v2706, 8.507059e+37
      %v2708 = vand.u32 %v2427, 2147483648
      %v2709 = vor.u32 1.1754944e-38, %v2708
      %v2710 = vsel %vm2707, %v2709, %v2705
      %v2711 = vmul.f32 1.0, %v2710
      %v2712 = vrcp.pop %v2428
      %v2713 = vmul.f32 %v2428, %v2712
      %v2714 = vsub.f32 1.0, %v2713
      %v2715 = vmul.f32 %v2712, %v2714
      %v2716 = vadd.f32 %v2712, %v2715
      %vm2717 = vweird.f32 %v2428
      %vm2718 = vweird.f32 %v2712
      %vm2719 = vmor %vm2717, %vm2718
      %v2720 = vsel %vm2719, %v2712, %v2716
      %v2721 = vand.u32 2147483647, %v2428
      %vm2722 = vcmp.eq.f32.partialorder %v2721, 8.507059e+37
      %v2723 = vand.u32 %v2428, 2147483648
      %v2724 = vor.u32 1.1754944e-38, %v2723
      %v2725 = vsel %vm2722, %v2724, %v2720
      %v2726 = vmul.f32 1.0, %v2725
      %v2727 = vrcp.pop %v2429
      %v2728 = vmul.f32 %v2429, %v2727
      %v2729 = vsub.f32 1.0, %v2728
      %v2730 = vmul.f32 %v2727, %v2729
      %v2731 = vadd.f32 %v2727, %v2730
      %vm2732 = vweird.f32 %v2429
      %vm2733 = vweird.f32 %v2727
      %vm2734 = vmor %vm2732, %vm2733
      %v2735 = vsel %vm2734, %v2727, %v2731
      %v2736 = vand.u32 2147483647, %v2429
      %vm2737 = vcmp.eq.f32.partialorder %v2736, 8.507059e+37
      %v2738 = vand.u32 %v2429, 2147483648
      %v2739 = vor.u32 1.1754944e-38, %v2738
      %v2740 = vsel %vm2737, %v2739, %v2735
      %v2741 = vmul.f32 1.0, %v2740
      %v2742 = vrcp.pop %v2430
      %v2743 = vmul.f32 %v2430, %v2742
      %v2744 = vsub.f32 1.0, %v2743
      %v2745 = vmul.f32 %v2742, %v2744
      %v2746 = vadd.f32 %v2742, %v2745
      %vm2747 = vweird.f32 %v2430
      %vm2748 = vweird.f32 %v2742
      %vm2749 = vmor %vm2747, %vm2748
      %v2750 = vsel %vm2749, %v2742, %v2746
      %v2751 = vand.u32 2147483647, %v2430
      %vm2752 = vcmp.eq.f32.partialorder %v2751, 8.507059e+37
      %v2753 = vand.u32 %v2430, 2147483648
      %v2754 = vor.u32 1.1754944e-38, %v2753
      %v2755 = vsel %vm2752, %v2754, %v2750
      %v2756 = vmul.f32 1.0, %v2755
      %v2757 = vrcp.pop %v2431
      %v2758 = vmul.f32 %v2431, %v2757
      %v2759 = vsub.f32 1.0, %v2758
      %v2760 = vmul.f32 %v2757, %v2759
      %v2761 = vadd.f32 %v2757, %v2760
      %vm2762 = vweird.f32 %v2431
      %vm2763 = vweird.f32 %v2757
      %vm2764 = vmor %vm2762, %vm2763
      %v2765 = vsel %vm2764, %v2757, %v2761
      %v2766 = vand.u32 2147483647, %v2431
      %vm2767 = vcmp.eq.f32.partialorder %v2766, 8.507059e+37
      %v2768 = vand.u32 %v2431, 2147483648
      %v2769 = vor.u32 1.1754944e-38, %v2768
      %v2770 = vsel %vm2767, %v2769, %v2765
      %v2771 = vmul.f32 1.0, %v2770
      %v2772 = vrcp.pop %v2432
      %v2773 = vmul.f32 %v2432, %v2772
      %v2774 = vsub.f32 1.0, %v2773
      %v2775 = vmul.f32 %v2772, %v2774
      %v2776 = vadd.f32 %v2772, %v2775
      %vm2777 = vweird.f32 %v2432
      %vm2778 = vweird.f32 %v2772
      %vm2779 = vmor %vm2777, %vm2778
      %v2780 = vsel %vm2779, %v2772, %v2776
      %v2781 = vand.u32 2147483647, %v2432
      %vm2782 = vcmp.eq.f32.partialorder %v2781, 8.507059e+37
      %v2783 = vand.u32 %v2432, 2147483648
      %v2784 = vor.u32 1.1754944e-38, %v2783
      %v2785 = vsel %vm2782, %v2784, %v2780
      %v2786 = vmul.f32 1.0, %v2785
      %v2787 = vrcp.pop %v2433
      %v2788 = vmul.f32 %v2433, %v2787
      %v2789 = vsub.f32 1.0, %v2788
      %v2790 = vmul.f32 %v2787, %v2789
      %v2791 = vadd.f32 %v2787, %v2790
      %vm2792 = vweird.f32 %v2433
      %vm2793 = vweird.f32 %v2787
      %vm2794 = vmor %vm2792, %vm2793
      %v2795 = vsel %vm2794, %v2787, %v2791
      %v2796 = vand.u32 2147483647, %v2433
      %vm2797 = vcmp.eq.f32.partialorder %v2796, 8.507059e+37
      %v2798 = vand.u32 %v2433, 2147483648
      %v2799 = vor.u32 1.1754944e-38, %v2798
      %v2800 = vsel %vm2797, %v2799, %v2795
      %v2801 = vmul.f32 1.0, %v2800
      %v2802 = vrcp.pop %v2434
      %v2803 = vmul.f32 %v2434, %v2802
      %v2804 = vsub.f32 1.0, %v2803
      %v2805 = vmul.f32 %v2802, %v2804
      %v2806 = vadd.f32 %v2802, %v2805
      %vm2807 = vweird.f32 %v2434
      %vm2808 = vweird.f32 %v2802
      %vm2809 = vmor %vm2807, %vm2808
      %v2810 = vsel %vm2809, %v2802, %v2806
      %v2811 = vand.u32 2147483647, %v2434
      %vm2812 = vcmp.eq.f32.partialorder %v2811, 8.507059e+37
      %v2813 = vand.u32 %v2434, 2147483648
      %v2814 = vor.u32 1.1754944e-38, %v2813
      %v2815 = vsel %vm2812, %v2814, %v2810
      %v2816 = vmul.f32 1.0, %v2815
      %v2817 = vrcp.pop %v2435
      %v2818 = vmul.f32 %v2435, %v2817
      %v2819 = vsub.f32 1.0, %v2818
      %v2820 = vmul.f32 %v2817, %v2819
      %v2821 = vadd.f32 %v2817, %v2820
      %vm2822 = vweird.f32 %v2435
      %vm2823 = vweird.f32 %v2817
      %vm2824 = vmor %vm2822, %vm2823
      %v2825 = vsel %vm2824, %v2817, %v2821
      %v2826 = vand.u32 2147483647, %v2435
      %vm2827 = vcmp.eq.f32.partialorder %v2826, 8.507059e+37
      %v2828 = vand.u32 %v2435, 2147483648
      %v2829 = vor.u32 1.1754944e-38, %v2828
      %v2830 = vsel %vm2827, %v2829, %v2825
      %v2831 = vmul.f32 1.0, %v2830
      %v2832 = vrcp.pop %v2436
      %v2833 = vmul.f32 %v2436, %v2832
      %v2834 = vsub.f32 1.0, %v2833
      %v2835 = vmul.f32 %v2832, %v2834
      %v2836 = vadd.f32 %v2832, %v2835
      %vm2837 = vweird.f32 %v2436
      %vm2838 = vweird.f32 %v2832
      %vm2839 = vmor %vm2837, %vm2838
      %v2840 = vsel %vm2839, %v2832, %v2836
      %v2841 = vand.u32 2147483647, %v2436
      %vm2842 = vcmp.eq.f32.partialorder %v2841, 8.507059e+37
      %v2843 = vand.u32 %v2436, 2147483648
      %v2844 = vor.u32 1.1754944e-38, %v2843
      %v2845 = vsel %vm2842, %v2844, %v2840
      %v2846 = vmul.f32 1.0, %v2845
      %v2847 = vrcp.pop %v2437
      %v2848 = vmul.f32 %v2437, %v2847
      %v2849 = vsub.f32 1.0, %v2848
      %v2850 = vmul.f32 %v2847, %v2849
      %v2851 = vadd.f32 %v2847, %v2850
      %vm2852 = vweird.f32 %v2437
      %vm2853 = vweird.f32 %v2847
      %vm2854 = vmor %vm2852, %vm2853
      %v2855 = vsel %vm2854, %v2847, %v2851
      %v2856 = vand.u32 2147483647, %v2437
      %vm2857 = vcmp.eq.f32.partialorder %v2856, 8.507059e+37
      %v2858 = vand.u32 %v2437, 2147483648
      %v2859 = vor.u32 1.1754944e-38, %v2858
      %v2860 = vsel %vm2857, %v2859, %v2855
      %v2861 = vmul.f32 1.0, %v2860
      %v2862 = vrcp.pop %v2438
      %v2863 = vmul.f32 %v2438, %v2862
      %v2864 = vsub.f32 1.0, %v2863
      %v2865 = vmul.f32 %v2862, %v2864
      %v2866 = vadd.f32 %v2862, %v2865
      %vm2867 = vweird.f32 %v2438
      %vm2868 = vweird.f32 %v2862
      %vm2869 = vmor %vm2867, %vm2868
      %v2870 = vsel %vm2869, %v2862, %v2866
      %v2871 = vand.u32 2147483647, %v2438
      %vm2872 = vcmp.eq.f32.partialorder %v2871, 8.507059e+37
      %v2873 = vand.u32 %v2438, 2147483648
      %v2874 = vor.u32 1.1754944e-38, %v2873
      %v2875 = vsel %vm2872, %v2874, %v2870
      %v2876 = vmul.f32 1.0, %v2875
      %v2877 = vrcp.pop %v2439
      %v2878 = vmul.f32 %v2439, %v2877
      %v2879 = vsub.f32 1.0, %v2878
      %v2880 = vmul.f32 %v2877, %v2879
      %v2881 = vadd.f32 %v2877, %v2880
      %vm2882 = vweird.f32 %v2439
      %vm2883 = vweird.f32 %v2877
      %vm2884 = vmor %vm2882, %vm2883
      %v2885 = vsel %vm2884, %v2877, %v2881
      %v2886 = vand.u32 2147483647, %v2439
      %vm2887 = vcmp.eq.f32.partialorder %v2886, 8.507059e+37
      %v2888 = vand.u32 %v2439, 2147483648
      %v2889 = vor.u32 1.1754944e-38, %v2888
      %v2890 = vsel %vm2887, %v2889, %v2885
      %v2891 = vmul.f32 1.0, %v2890
      %v2892 = vrcp.pop %v2440
      %v2893 = vmul.f32 %v2440, %v2892
      %v2894 = vsub.f32 1.0, %v2893
      %v2895 = vmul.f32 %v2892, %v2894
      %v2896 = vadd.f32 %v2892, %v2895
      %vm2897 = vweird.f32 %v2440
      %vm2898 = vweird.f32 %v2892
      %vm2899 = vmor %vm2897, %vm2898
      %v2900 = vsel %vm2899, %v2892, %v2896
      %v2901 = vand.u32 2147483647, %v2440
      %vm2902 = vcmp.eq.f32.partialorder %v2901, 8.507059e+37
      %v2903 = vand.u32 %v2440, 2147483648
      %v2904 = vor.u32 1.1754944e-38, %v2903
      %v2905 = vsel %vm2902, %v2904, %v2900
      %v2906 = vmul.f32 1.0, %v2905
      %v2907 = vrcp.pop %v2441
      %v2908 = vmul.f32 %v2441, %v2907
      %v2909 = vsub.f32 1.0, %v2908
      %v2910 = vmul.f32 %v2907, %v2909
      %v2911 = vadd.f32 %v2907, %v2910
      %vm2912 = vweird.f32 %v2441
      %vm2913 = vweird.f32 %v2907
      %vm2914 = vmor %vm2912, %vm2913
      %v2915 = vsel %vm2914, %v2907, %v2911
      %v2916 = vand.u32 2147483647, %v2441
      %vm2917 = vcmp.eq.f32.partialorder %v2916, 8.507059e+37
      %v2918 = vand.u32 %v2441, 2147483648
      %v2919 = vor.u32 1.1754944e-38, %v2918
      %v2920 = vsel %vm2917, %v2919, %v2915
      %v2921 = vmul.f32 1.0, %v2920
      %v2922 = vmul.f32 %v2282, %v2456
      %v2923 = vmul.f32 %v2283, %v2471
      %v2924 = vmul.f32 %v2284, %v2486
      %v2925 = vmul.f32 %v2285, %v2501
      %v2926 = vmul.f32 %v2286, %v2516
      %v2927 = vmul.f32 %v2287, %v2531
      %v2928 = vmul.f32 %v2288, %v2546
      %v2929 = vmul.f32 %v2289, %v2561
      %v2930 = vmul.f32 %v2290, %v2576
      %v2931 = vmul.f32 %v2291, %v2591
      %v2932 = vmul.f32 %v2292, %v2606
      %v2933 = vmul.f32 %v2293, %v2621
      %v2934 = vmul.f32 %v2294, %v2636
      %v2935 = vmul.f32 %v2295, %v2651
      %v2936 = vmul.f32 %v2296, %v2666
      %v2937 = vmul.f32 %v2297, %v2681
      %v2938 = vmul.f32 %v2298, %v2696
      %v2939 = vmul.f32 %v2299, %v2711
      %v2940 = vmul.f32 %v2300, %v2726
      %v2941 = vmul.f32 %v2301, %v2741
      %v2942 = vmul.f32 %v2302, %v2756
      %v2943 = vmul.f32 %v2303, %v2771
      %v2944 = vmul.f32 %v2304, %v2786
      %v2945 = vmul.f32 %v2305, %v2801
      %v2946 = vmul.f32 %v2306, %v2816
      %v2947 = vmul.f32 %v2307, %v2831
      %v2948 = vmul.f32 %v2308, %v2846
      %v2949 = vmul.f32 %v2309, %v2861
      %v2950 = vmul.f32 %v2310, %v2876
      %v2951 = vmul.f32 %v2311, %v2891
      %v2952 = vmul.f32 %v2312, %v2906
      %v2953 = vmul.f32 %v2313, %v2921
      %v2954 = vld [vmem:[%s212] sm:$0xff]
      %v2955 = vld [vmem:[%s212 + $0x8] sm:$0xff]
      %v2956 = vld [vmem:[%s212 + $0x10] sm:$0xff]
      %v2957 = vld [vmem:[%s212 + $0x18] sm:$0xff]
      %v2958 = vld [vmem:[%s212 + $0x20] sm:$0xff]
      %v2959 = vld [vmem:[%s212 + $0x28] sm:$0xff]
      %v2960 = vld [vmem:[%s212 + $0x30] sm:$0xff]
      %v2961 = vld [vmem:[%s212 + $0x38] sm:$0xff]
      %v2962 = vld [vmem:[%s212 + $0x40] sm:$0xff]
      %v2963 = vld [vmem:[%s212 + $0x48] sm:$0xff]
      %v2964 = vld [vmem:[%s212 + $0x50] sm:$0xff]
      %v2965 = vld [vmem:[%s212 + $0x58] sm:$0xff]
      %v2966 = vld [vmem:[%s212 + $0x60] sm:$0xff]
      %v2967 = vld [vmem:[%s212 + $0x68] sm:$0xff]
      %v2968 = vld [vmem:[%s212 + $0x70] sm:$0xff]
      %v2969 = vld [vmem:[%s212 + $0x78] sm:$0xff]
      %v2970 = vld [vmem:[%s212 + $0x80] sm:$0xff]
      %v2971 = vld [vmem:[%s212 + $0x88] sm:$0xff]
      %v2972 = vld [vmem:[%s212 + $0x90] sm:$0xff]
      %v2973 = vld [vmem:[%s212 + $0x98] sm:$0xff]
      %v2974 = vld [vmem:[%s212 + $0xa0] sm:$0xff]
      %v2975 = vld [vmem:[%s212 + $0xa8] sm:$0xff]
      %v2976 = vld [vmem:[%s212 + $0xb0] sm:$0xff]
      %v2977 = vld [vmem:[%s212 + $0xb8] sm:$0xff]
      %v2978 = vld [vmem:[%s212 + $0xc0] sm:$0xff]
      %v2979 = vld [vmem:[%s212 + $0xc8] sm:$0xff]
      %v2980 = vld [vmem:[%s212 + $0xd0] sm:$0xff]
      %v2981 = vld [vmem:[%s212 + $0xd8] sm:$0xff]
      %v2982 = vld [vmem:[%s212 + $0xe0] sm:$0xff]
      %v2983 = vld [vmem:[%s212 + $0xe8] sm:$0xff]
      %v2984 = vld [vmem:[%s212 + $0xf0] sm:$0xff]
      %v2985 = vld [vmem:[%s212 + $0xf8] sm:$0xff]
      %v2986 = vadd.f32 %v2922, %v2954
      %v2987 = vadd.f32 %v2923, %v2955
      %v2988 = vadd.f32 %v2924, %v2956
      %v2989 = vadd.f32 %v2925, %v2957
      %v2990 = vadd.f32 %v2926, %v2958
      %v2991 = vadd.f32 %v2927, %v2959
      %v2992 = vadd.f32 %v2928, %v2960
      %v2993 = vadd.f32 %v2929, %v2961
      %v2994 = vadd.f32 %v2930, %v2962
      %v2995 = vadd.f32 %v2931, %v2963
      %v2996 = vadd.f32 %v2932, %v2964
      %v2997 = vadd.f32 %v2933, %v2965
      %v2998 = vadd.f32 %v2934, %v2966
      %v2999 = vadd.f32 %v2935, %v2967
      %v3000 = vadd.f32 %v2936, %v2968
      %v3001 = vadd.f32 %v2937, %v2969
      %v3002 = vadd.f32 %v2938, %v2970
      %v3003 = vadd.f32 %v2939, %v2971
      %v3004 = vadd.f32 %v2940, %v2972
      %v3005 = vadd.f32 %v2941, %v2973
      %v3006 = vadd.f32 %v2942, %v2974
      %v3007 = vadd.f32 %v2943, %v2975
      %v3008 = vadd.f32 %v2944, %v2976
      %v3009 = vadd.f32 %v2945, %v2977
      %v3010 = vadd.f32 %v2946, %v2978
      %v3011 = vadd.f32 %v2947, %v2979
      %v3012 = vadd.f32 %v2948, %v2980
      %v3013 = vadd.f32 %v2949, %v2981
      %v3014 = vadd.f32 %v2950, %v2982
      %v3015 = vadd.f32 %v2951, %v2983
      %v3016 = vadd.f32 %v2952, %v2984
      %v3017 = vadd.f32 %v2953, %v2985
      %3018 = vst.msk [vmem:[%s217] sm:$0xff] %vm717, %v2986
      %3019 = vst.msk [vmem:[%s217 + $0x8] sm:$0xff] %vm717, %v2987
      %3020 = vst.msk [vmem:[%s217 + $0x10] sm:$0xff] %vm717, %v2988
      %3021 = vst.msk [vmem:[%s217 + $0x18] sm:$0xff] %vm717, %v2989
      %3022 = vst.msk [vmem:[%s217 + $0x20] sm:$0xff] %vm717, %v2990
      %3023 = vst.msk [vmem:[%s217 + $0x28] sm:$0xff] %vm717, %v2991
      %3024 = vst.msk [vmem:[%s217 + $0x30] sm:$0xff] %vm717, %v2992
      %3025 = vst.msk [vmem:[%s217 + $0x38] sm:$0xff] %vm717, %v2993
      %3026 = vst.msk [vmem:[%s217 + $0x40] sm:$0xff] %vm717, %v2994
      %3027 = vst.msk [vmem:[%s217 + $0x48] sm:$0xff] %vm717, %v2995
      %3028 = vst.msk [vmem:[%s217 + $0x50] sm:$0xff] %vm717, %v2996
      %3029 = vst.msk [vmem:[%s217 + $0x58] sm:$0xff] %vm717, %v2997
      %3030 = vst.msk [vmem:[%s217 + $0x60] sm:$0xff] %vm717, %v2998
      %3031 = vst.msk [vmem:[%s217 + $0x68] sm:$0xff] %vm717, %v2999
      %3032 = vst.msk [vmem:[%s217 + $0x70] sm:$0xff] %vm717, %v3000
      %3033 = vst.msk [vmem:[%s217 + $0x78] sm:$0xff] %vm717, %v3001
      %3034 = vst.msk [vmem:[%s217 + $0x80] sm:$0xff] %vm717, %v3002
      %3035 = vst.msk [vmem:[%s217 + $0x88] sm:$0xff] %vm717, %v3003
      %3036 = vst.msk [vmem:[%s217 + $0x90] sm:$0xff] %vm717, %v3004
      %3037 = vst.msk [vmem:[%s217 + $0x98] sm:$0xff] %vm717, %v3005
      %3038 = vst.msk [vmem:[%s217 + $0xa0] sm:$0xff] %vm717, %v3006
      %3039 = vst.msk [vmem:[%s217 + $0xa8] sm:$0xff] %vm717, %v3007
      %3040 = vst.msk [vmem:[%s217 + $0xb0] sm:$0xff] %vm717, %v3008
      %3041 = vst.msk [vmem:[%s217 + $0xb8] sm:$0xff] %vm717, %v3009
      %3042 = vst.msk [vmem:[%s217 + $0xc0] sm:$0xff] %vm717, %v3010
      %3043 = vst.msk [vmem:[%s217 + $0xc8] sm:$0xff] %vm717, %v3011
      %3044 = vst.msk [vmem:[%s217 + $0xd0] sm:$0xff] %vm717, %v3012
      %3045 = vst.msk [vmem:[%s217 + $0xd8] sm:$0xff] %vm717, %v3013
      %3046 = vst.msk [vmem:[%s217 + $0xe0] sm:$0xff] %vm717, %v3014
      %3047 = vst.msk [vmem:[%s217 + $0xe8] sm:$0xff] %vm717, %v3015
      %3048 = vst.msk [vmem:[%s217 + $0xf0] sm:$0xff] %vm717, %v3016
      %3049 = vst.msk [vmem:[%s217 + $0xf8] sm:$0xff] %vm717, %v3017
      %p3050 = scmp.lt.s32.totalorder %s15, 1
      %s3051 = scalar_select %p3050, %s15, 1
      %s3052 = smul.addr %s3051, 32
      %s3053 = smul.addr %s3052, 8
      %s3054 = scalar_lea.vmem %s4, %s3053
      // Predicated region
      $region37: #{c3_forward.6} parent=35 // pred_check
        %p3055 = pneg %p127
      $region38: #{c3_forward.6} parent=35 // pred_check_branch
        %3057 = sbr.rel (%p3055) target = $region40
      $region39: #{c3_forward.6} parent=35 // pred_region
        _
      $region40: #{c3_forward.6} parent=35 // pred_fallthru
        _
    $region36: #{c3_forward.6} parent=5 // pred_fallthru
      _
    %p3058 = scmp.le.s32.totalorder 2, %s10
    // Predicated region
    $region41: #{c3_forward.6} parent=5 // pred_check
      %p3059 = pneg %p3058
    $region42: #{c3_forward.6} parent=5 // pred_check_branch
      %3061 = sbr.rel (%p3059) target = $region44
    $region43: #{c3_forward.6} parent=5 // pred_region
      %s3062 = ssub.s32 %s10, 2
      // Predicated region
      $region45: #{c3_forward.6} parent=43 // pred_check
        %p3063 = pneg %p133
      $region46: #{c3_forward.6} parent=43 // pred_check_branch
        %3065 = sbr.rel (%p3063) target = $region48
      $region47: #{c3_forward.6} parent=43 // pred_region
        %p3066 = scmp.lt.s32.totalorder %s16, 1
        %s3067 = scalar_select %p3066, %s16, 1
        %s3068 = smul.addr %s3067, 32
        %s3069 = smul.addr %s3068, 8
        %s3070 = scalar_lea.vmem %s4, %s3069
      $region48: #{c3_forward.6} parent=43 // pred_fallthru
        _
    $region44: #{c3_forward.6} parent=5 // pred_fallthru
      _
  $region6: #{c3_forward.6} parent=0 // loop_footer
    %s14 = sadd.s32 1, %s10
  $region7: #{c3_forward.6} parent=0 // loop_footer_branch
    %9 = sbr.rel target = $region3
  $region8: #{c3_forward.6} parent=0 // loop_exit
    _

</llo_original>
